<compile_context>
chip_gen: v7x
topology: tpu7x:2x2x1
jax: 0.10.0
libtpu: 0.0.40
codegen_flags: <defaults>
</compile_context>

<pallas_src>
import jax
import jax.numpy as jnp
from jax import lax
from jax.experimental import pallas as pl
from jax.experimental.pallas import tpu as pltpu


def _make_dense_block_kernel(num_layers, c0, growth, H, W):
    """Builds the fused DenseBlock kernel (one grid step == one image)."""
    HW = H * W
    nine_g = 9 * growth

    def kernel(*refs):
        x_ref = refs[0]
        w_refs = refs[1:1 + 6 * num_layers]
        out_ref = refs[1 + 6 * num_layers]          # (1, H, W, c0 + L*g)
        cpad_ref = refs[2 + 6 * num_layers]         # (1, H+2, W+2, 9*g)

        # Zero the padded scratch; only its interior is overwritten later, so
        # the 1-pixel border stays zero for every layer of this grid step.
        cpad_ref[...] = jnp.zeros_like(cpad_ref)

        # Seed the growing feature map (lives in the output VMEM block).
        out_ref[:, :, :, 0:c0] = x_ref[...]

        for i in range(num_layers):
            cin = c0 + i * growth
            s1, b1, w1, s2, b2, w2w = w_refs[6 * i:6 * i + 6]

            # --- BN1 (folded running stats) + ReLU, f32 elementwise --------
            t = out_ref[:, :, :, 0:cin].reshape(HW, cin)
            t = jnp.maximum(t * s1[...] + b1[...], 0.0)

            # --- 1x1 conv == channel matmul on the MXU (bf16 in, f32 acc) --
            h = jnp.dot(t.astype(jnp.bfloat16), w1[...],
                        preferred_element_type=jnp.float32)       # (HW, mid)

            # --- BN2 (folded) + ReLU, f32 elementwise ----------------------
            h = jnp.maximum(h * s2[...] + b2[...], 0.0)

            # --- 3x3 conv, pad=1: ONE wide matmul over all 9 taps ----------
            c = jnp.dot(h.astype(jnp.bfloat16), w2w[...],
                        preferred_element_type=jnp.float32)       # (HW, 9*g)
            cpad_ref[:, 1:H + 1, 1:W + 1, :] = c.reshape(1, H, W, nine_g)

            # ... then 9 shifted narrow window reads from the zero-padded
            # scratch, summed in registers and stored once.
            acc = cpad_ref[:, 0:H, 0:W, 0:growth]                 # tap (0,0)
            for tap in range(1, 9):
                kh, kw = divmod(tap, 3)
                acc = acc + cpad_ref[:, kh:kh + H, kw:kw + W,
                                     tap * growth:(tap + 1) * growth]

            # Append the new features == torch.cat((x, out), dim=1).
            out_ref[:, :, :, cin:cin + growth] = acc

    return kernel


def dense_block_pallas(x_nchw, params):
    """DenseBlock forward: (N, C, H, W) f32 -> (N, C + L*growth, H, W)."""
    N, c0, H, W = x_nchw.shape
    num_layers = len(params)
    mid = params[0]["w1"].shape[1]
    growth = params[0]["w2"].shape[-1]
    c_out = c0 + num_layers * growth

    x = jnp.transpose(x_nchw, (0, 2, 3, 1)).astype(jnp.float32)   # NHWC

    const2d = lambda n: (0, 0)                 # weights stay VMEM-resident
    weight_args = []
    in_specs = [pl.BlockSpec((1, H, W, c0), lambda n: (n, 0, 0, 0))]
    for p in params:
        w1 = p["w1"].astype(jnp.bfloat16)                          # (cin, mid)
        # (3, 3, mid, g) HWIO -> (mid, 9*g); column block tap*g:(tap+1)*g
        # holds the weights of tap = kh*3 + kw.
        w2w = jnp.transpose(p["w2"], (2, 0, 1, 3)).reshape(mid, 9 * growth)
        w2w = w2w.astype(jnp.bfloat16)
        layer = [p["s1"], p["b1"], w1, p["s2"], p["b2"], w2w]
        weight_args += layer
        in_specs += [pl.BlockSpec(a.shape, const2d) for a in layer]

    kernel = _make_dense_block_kernel(num_layers, c0, growth, H, W)
    out_nhwc = pl.pallas_call(
        kernel,
        out_shape=jax.ShapeDtypeStruct((N, H, W, c_out), jnp.float32),
        grid=(N,),
        in_specs=in_specs,
        out_specs=pl.BlockSpec((1, H, W, c_out), lambda n: (n, 0, 0, 0)),
        scratch_shapes=[
            pltpu.VMEM((1, H + 2, W + 2, 9 * growth), jnp.float32)],
        compiler_params=pltpu.CompilerParams(
            dimension_semantics=("parallel",),
            vmem_limit_bytes=32 * 1024 * 1024),
    )(x, *weight_args)
    return jnp.transpose(out_nhwc, (0, 3, 1, 2))                  # -> NCHW


# ------------------------- parameter construction ----------------------------
def init_dense_block_params(key, in_channels, growth_rate, num_layers,
                            eps=1e-5):
    """Deterministic synthetic parameters (shapes follow the PyTorch module)."""
    params = []
    for i in range(num_layers):
        cin = in_channels + i * growth_rate
        mid = 4 * growth_rate
        ks = jax.random.split(jax.random.fold_in(key, i), 10)

        gamma1 = jax.random.uniform(ks[0], (cin,), jnp.float32, 0.5, 1.5)
        beta1 = 0.1 * jax.random.normal(ks[1], (cin,), jnp.float32)
        mean1 = 0.1 * jax.random.normal(ks[2], (cin,), jnp.float32)
        var1 = jax.random.uniform(ks[3], (cin,), jnp.float32, 0.5, 1.5)

        # PyTorch conv1.weight (mid, cin, 1, 1) -> stored as (cin, mid).
        w1 = jax.random.normal(ks[4], (cin, mid), jnp.float32) / jnp.sqrt(cin)

        gamma2 = jax.random.uniform(ks[5], (mid,), jnp.float32, 0.5, 1.5)
        beta2 = 0.1 * jax.random.normal(ks[6], (mid,), jnp.float32)
        mean2 = 0.1 * jax.random.normal(ks[7], (mid,), jnp.float32)
        var2 = jax.random.uniform(ks[8], (mid,), jnp.float32, 0.5, 1.5)

        # PyTorch conv2.weight (g, mid, 3, 3) -> stored HWIO (3, 3, mid, g).
        w2 = jax.random.normal(ks[9], (3, 3, mid, growth_rate),
                               jnp.float32) / jnp.sqrt(9.0 * mid)

        s1 = gamma1 / jnp.sqrt(var1 + eps)
        b1 = beta1 - mean1 * s1
        s2 = gamma2 / jnp.sqrt(var2 + eps)
        b2 = beta2 - mean2 * s2

        params.append(dict(
            s1=s1.reshape(1, cin), b1=b1.reshape(1, cin), w1=w1,
            s2=s2.reshape(1, mid), b2=b2.reshape(1, mid), w2=w2))
    return params


# ------------------------- pure-JAX reference (for checking) -----------------
def dense_block_ref(x_nhwc, params):
    for p in params:
        cin, mid = p["w1"].shape
        t = jnp.maximum(x_nhwc * p["s1"] + p["b1"], 0.0)
        t = lax.conv_general_dilated(
            t, p["w1"].reshape(1, 1, cin, mid), (1, 1), "VALID",
            dimension_numbers=("NHWC", "HWIO", "NHWC"))
        t = jnp.maximum(t * p["s2"] + p["b2"], 0.0)
        out = lax.conv_general_dilated(
            t, p["w2"], (1, 1), "SAME",
            dimension_numbers=("NHWC", "HWIO", "NHWC"))
        x_nhwc = jnp.concatenate([x_nhwc, out], axis=-1)
    return x_nhwc


if __name__ == "__main__":
    key = jax.random.PRNGKey(0)
    kx, kp = jax.random.split(key)

    N, C0, H, W = 2, 4, 16, 16
    growth_rate, num_layers = 4, 3

    x_nchw = jax.random.normal(kx, (N, C0, H, W), jnp.float32)
    params = init_dense_block_params(kp, C0, growth_rate, num_layers)

    out = jax.jit(dense_block_pallas)(x_nchw, params)
    out = jax.block_until_ready(out)

    assert out.shape == (N, C0 + num_layers * growth_rate, H, W), out.shape

    ref = dense_block_ref(jnp.transpose(x_nchw, (0, 2, 3, 1)), params)
    ref = jnp.transpose(ref, (0, 3, 1, 2))
    max_err = float(jnp.max(jnp.abs(out - ref)))
    # bf16 matmul operands (f32 accumulation) vs. an all-f32 reference, so the
    # tolerance is loosened accordingly.
    assert jnp.allclose(out, ref, atol=5e-2, rtol=5e-2), max_err

    print("KERNEL_OK")
</pallas_src>

<mosaic_0001>
module attributes {stable_mosaic.version = 11 : i64} {
  func.func @kernel(%arg0: i32, %arg1: memref<1x16x16x4xf32, #tpu.memory_space<vmem>>, %arg2: memref<1x4xf32, #tpu.memory_space<vmem>>, %arg3: memref<1x4xf32, #tpu.memory_space<vmem>>, %arg4: memref<4x16xbf16, #tpu.memory_space<vmem>>, %arg5: memref<1x16xf32, #tpu.memory_space<vmem>>, %arg6: memref<1x16xf32, #tpu.memory_space<vmem>>, %arg7: memref<16x36xbf16, #tpu.memory_space<vmem>>, %arg8: memref<1x8xf32, #tpu.memory_space<vmem>>, %arg9: memref<1x8xf32, #tpu.memory_space<vmem>>, %arg10: memref<8x16xbf16, #tpu.memory_space<vmem>>, %arg11: memref<1x16xf32, #tpu.memory_space<vmem>>, %arg12: memref<1x16xf32, #tpu.memory_space<vmem>>, %arg13: memref<16x36xbf16, #tpu.memory_space<vmem>>, %arg14: memref<1x12xf32, #tpu.memory_space<vmem>>, %arg15: memref<1x12xf32, #tpu.memory_space<vmem>>, %arg16: memref<12x16xbf16, #tpu.memory_space<vmem>>, %arg17: memref<1x16xf32, #tpu.memory_space<vmem>>, %arg18: memref<1x16xf32, #tpu.memory_space<vmem>>, %arg19: memref<16x36xbf16, #tpu.memory_space<vmem>>, %arg20: memref<1x16x16x16xf32, #tpu.memory_space<vmem>>, %arg21: memref<1x18x18x36xf32, #tpu.memory_space<vmem>>) attributes {dimension_semantics = [#tpu.dimension_semantics<parallel>], iteration_bounds = array<i64: 2>, scalar_prefetch = 0 : i64, scratch_operands = 1 : i64, tpu.core_type = #tpu.core_type<tc>, window_params = [{transform_indices = @transform_0, window_bounds = array<i64: 1, 16, 16, 4>}, {pipeline_mode = #tpu.pipeline_mode<synchronous>, transform_indices = @transform_1, window_bounds = array<i64: 1, 4>}, {pipeline_mode = #tpu.pipeline_mode<synchronous>, transform_indices = @transform_2, window_bounds = array<i64: 1, 4>}, {pipeline_mode = #tpu.pipeline_mode<synchronous>, transform_indices = @transform_3, window_bounds = array<i64: 4, 16>}, {pipeline_mode = #tpu.pipeline_mode<synchronous>, transform_indices = @transform_4, window_bounds = array<i64: 1, 16>}, {pipeline_mode = #tpu.pipeline_mode<synchronous>, transform_indices = @transform_5, window_bounds = array<i64: 1, 16>}, {pipeline_mode = #tpu.pipeline_mode<synchronous>, transform_indices = @transform_6, window_bounds = array<i64: 16, 36>}, {pipeline_mode = #tpu.pipeline_mode<synchronous>, transform_indices = @transform_7, window_bounds = array<i64: 1, 8>}, {pipeline_mode = #tpu.pipeline_mode<synchronous>, transform_indices = @transform_8, window_bounds = array<i64: 1, 8>}, {pipeline_mode = #tpu.pipeline_mode<synchronous>, transform_indices = @transform_9, window_bounds = array<i64: 8, 16>}, {pipeline_mode = #tpu.pipeline_mode<synchronous>, transform_indices = @transform_10, window_bounds = array<i64: 1, 16>}, {pipeline_mode = #tpu.pipeline_mode<synchronous>, transform_indices = @transform_11, window_bounds = array<i64: 1, 16>}, {pipeline_mode = #tpu.pipeline_mode<synchronous>, transform_indices = @transform_12, window_bounds = array<i64: 16, 36>}, {pipeline_mode = #tpu.pipeline_mode<synchronous>, transform_indices = @transform_13, window_bounds = array<i64: 1, 12>}, {pipeline_mode = #tpu.pipeline_mode<synchronous>, transform_indices = @transform_14, window_bounds = array<i64: 1, 12>}, {pipeline_mode = #tpu.pipeline_mode<synchronous>, transform_indices = @transform_15, window_bounds = array<i64: 12, 16>}, {pipeline_mode = #tpu.pipeline_mode<synchronous>, transform_indices = @transform_16, window_bounds = array<i64: 1, 16>}, {pipeline_mode = #tpu.pipeline_mode<synchronous>, transform_indices = @transform_17, window_bounds = array<i64: 1, 16>}, {pipeline_mode = #tpu.pipeline_mode<synchronous>, transform_indices = @transform_18, window_bounds = array<i64: 16, 36>}, {transform_indices = @transform_19, window_bounds = array<i64: 1, 16, 16, 16>}]} {
    %cst = arith.constant 0.000000e+00 : f32
    %0 = vector.broadcast %cst : f32 to vector<1x18x18x36xf32>
    %c0 = arith.constant 0 : index
    %c0_0 = arith.constant 0 : index
    %c0_1 = arith.constant 0 : index
    %c0_2 = arith.constant 0 : index
    %1 = vector.load %arg21[%c0, %c0_0, %c0_1, %c0_2] : memref<1x18x18x36xf32, #tpu.memory_space<vmem>>, vector<1x18x18x36xf32>
    tpu.vector_store %arg21[%c0, %c0_0, %c0_1, %c0_2], %0 {strides = array<i32>} : memref<1x18x18x36xf32, #tpu.memory_space<vmem>>, vector<1x18x18x36xf32>,
    %c0_3 = arith.constant 0 : index
    %c0_4 = arith.constant 0 : index
    %c0_5 = arith.constant 0 : index
    %c0_6 = arith.constant 0 : index
    %2 = vector.load %arg1[%c0_3, %c0_4, %c0_5, %c0_6] : memref<1x16x16x4xf32, #tpu.memory_space<vmem>>, vector<1x16x16x4xf32>
    %c0_7 = arith.constant 0 : index
    %c0_8 = arith.constant 0 : index
    %c0_9 = arith.constant 0 : index
    %c0_10 = arith.constant 0 : index
    %3 = vector.load %arg20[%c0_7, %c0_8, %c0_9, %c0_10] : memref<1x16x16x16xf32, #tpu.memory_space<vmem>>, vector<1x16x16x4xf32>
    tpu.vector_store %arg20[%c0_7, %c0_8, %c0_9, %c0_10], %2 {strides = array<i32>} : memref<1x16x16x16xf32, #tpu.memory_space<vmem>>, vector<1x16x16x4xf32>,
    %c0_11 = arith.constant 0 : index
    %c0_12 = arith.constant 0 : index
    %c0_13 = arith.constant 0 : index
    %c0_14 = arith.constant 0 : index
    %4 = vector.load %arg20[%c0_11, %c0_12, %c0_13, %c0_14] : memref<1x16x16x16xf32, #tpu.memory_space<vmem>>, vector<1x16x16x4xf32>
    %5 = vector.shape_cast %4 : vector<1x16x16x4xf32> to vector<256x4xf32>
    %c0_15 = arith.constant 0 : index
    %c0_16 = arith.constant 0 : index
    %6 = vector.load %arg2[%c0_15, %c0_16] : memref<1x4xf32, #tpu.memory_space<vmem>>, vector<1x4xf32>
    %7 = vector.broadcast %6 : vector<1x4xf32> to vector<256x4xf32>
    %8 = arith.mulf %5, %7 : vector<256x4xf32>
    %c0_17 = arith.constant 0 : index
    %c0_18 = arith.constant 0 : index
    %9 = vector.load %arg3[%c0_17, %c0_18] : memref<1x4xf32, #tpu.memory_space<vmem>>, vector<1x4xf32>
    %10 = vector.broadcast %9 : vector<1x4xf32> to vector<256x4xf32>
    %11 = arith.addf %8, %10 : vector<256x4xf32>
    %cst_19 = arith.constant 0.000000e+00 : f32
    %12 = vector.broadcast %cst_19 : f32 to vector<256x4xf32>
    %13 = arith.maximumf %11, %12 : vector<256x4xf32>
    %14 = arith.truncf %13 : vector<256x4xf32> to vector<256x4xbf16>
    %c0_20 = arith.constant 0 : index
    %c0_21 = arith.constant 0 : index
    %15 = vector.load %arg4[%c0_20, %c0_21] : memref<4x16xbf16, #tpu.memory_space<vmem>>, vector<4x16xbf16>
    %cst_22 = arith.constant dense<0.000000e+00> : vector<256x16xf32>
    %16 = tpu.matmul %14, %15, %cst_22 {dimension_numbers = #tpu.dot_dimension_numbers<[1], [0], [0], [1], [0, 0, 1, 1], [], []>} : vector<256x4xbf16>, vector<4x16xbf16>, vector<256x16xf32> -> vector<256x16xf32>
    %c0_23 = arith.constant 0 : index
    %c0_24 = arith.constant 0 : index
    %17 = vector.load %arg5[%c0_23, %c0_24] : memref<1x16xf32, #tpu.memory_space<vmem>>, vector<1x16xf32>
    %18 = vector.broadcast %17 : vector<1x16xf32> to vector<256x16xf32>
    %19 = arith.mulf %16, %18 : vector<256x16xf32>
    %c0_25 = arith.constant 0 : index
    %c0_26 = arith.constant 0 : index
    %20 = vector.load %arg6[%c0_25, %c0_26] : memref<1x16xf32, #tpu.memory_space<vmem>>, vector<1x16xf32>
    %21 = vector.broadcast %20 : vector<1x16xf32> to vector<256x16xf32>
    %22 = arith.addf %19, %21 : vector<256x16xf32>
    %cst_27 = arith.constant 0.000000e+00 : f32
    %23 = vector.broadcast %cst_27 : f32 to vector<256x16xf32>
    %24 = arith.maximumf %22, %23 : vector<256x16xf32>
    %25 = arith.truncf %24 : vector<256x16xf32> to vector<256x16xbf16>
    %c0_28 = arith.constant 0 : index
    %c0_29 = arith.constant 0 : index
    %26 = vector.load %arg7[%c0_28, %c0_29] : memref<16x36xbf16, #tpu.memory_space<vmem>>, vector<16x36xbf16>
    %cst_30 = arith.constant dense<0.000000e+00> : vector<256x36xf32>
    %27 = tpu.matmul %25, %26, %cst_30 {dimension_numbers = #tpu.dot_dimension_numbers<[1], [0], [0], [1], [0, 0, 1, 1], [], []>} : vector<256x16xbf16>, vector<16x36xbf16>, vector<256x36xf32> -> vector<256x36xf32>
    %28 = vector.shape_cast %27 : vector<256x36xf32> to vector<1x16x16x36xf32>
    %c0_31 = arith.constant 0 : index
    %c1 = arith.constant 1 : index
    %c1_32 = arith.constant 1 : index
    %c0_33 = arith.constant 0 : index
    %29 = vector.load %arg21[%c0_31, %c1, %c1_32, %c0_33] : memref<1x18x18x36xf32, #tpu.memory_space<vmem>>, vector<1x16x16x36xf32>
    tpu.vector_store %arg21[%c0_31, %c1, %c1_32, %c0_33], %28 {strides = array<i32>} : memref<1x18x18x36xf32, #tpu.memory_space<vmem>>, vector<1x16x16x36xf32>,
    %c0_34 = arith.constant 0 : index
    %c0_35 = arith.constant 0 : index
    %c0_36 = arith.constant 0 : index
    %c0_37 = arith.constant 0 : index
    %30 = vector.load %arg21[%c0_34, %c0_35, %c0_36, %c0_37] : memref<1x18x18x36xf32, #tpu.memory_space<vmem>>, vector<1x16x16x4xf32>
    %c0_38 = arith.constant 0 : index
    %c0_39 = arith.constant 0 : index
    %c1_40 = arith.constant 1 : index
    %c4 = arith.constant 4 : index
    %31 = vector.load %arg21[%c0_38, %c0_39, %c1_40, %c4] : memref<1x18x18x36xf32, #tpu.memory_space<vmem>>, vector<1x16x16x4xf32>
    %32 = arith.addf %30, %31 : vector<1x16x16x4xf32>
    %c0_41 = arith.constant 0 : index
    %c0_42 = arith.constant 0 : index
    %c2 = arith.constant 2 : index
    %c8 = arith.constant 8 : index
    %33 = vector.load %arg21[%c0_41, %c0_42, %c2, %c8] : memref<1x18x18x36xf32, #tpu.memory_space<vmem>>, vector<1x16x16x4xf32>
    %34 = arith.addf %32, %33 : vector<1x16x16x4xf32>
    %c0_43 = arith.constant 0 : index
    %c1_44 = arith.constant 1 : index
    %c0_45 = arith.constant 0 : index
    %c12 = arith.constant 12 : index
    %35 = vector.load %arg21[%c0_43, %c1_44, %c0_45, %c12] : memref<1x18x18x36xf32, #tpu.memory_space<vmem>>, vector<1x16x16x4xf32>
    %36 = arith.addf %34, %35 : vector<1x16x16x4xf32>
    %c0_46 = arith.constant 0 : index
    %c1_47 = arith.constant 1 : index
    %c1_48 = arith.constant 1 : index
    %c16 = arith.constant 16 : index
    %37 = vector.load %arg21[%c0_46, %c1_47, %c1_48, %c16] : memref<1x18x18x36xf32, #tpu.memory_space<vmem>>, vector<1x16x16x4xf32>
    %38 = arith.addf %36, %37 : vector<1x16x16x4xf32>
    %c0_49 = arith.constant 0 : index
    %c1_50 = arith.constant 1 : index
    %c2_51 = arith.constant 2 : index
    %c20 = arith.constant 20 : index
    %39 = vector.load %arg21[%c0_49, %c1_50, %c2_51, %c20] : memref<1x18x18x36xf32, #tpu.memory_space<vmem>>, vector<1x16x16x4xf32>
    %40 = arith.addf %38, %39 : vector<1x16x16x4xf32>
    %c0_52 = arith.constant 0 : index
    %c2_53 = arith.constant 2 : index
    %c0_54 = arith.constant 0 : index
    %c24 = arith.constant 24 : index
    %41 = vector.load %arg21[%c0_52, %c2_53, %c0_54, %c24] : memref<1x18x18x36xf32, #tpu.memory_space<vmem>>, vector<1x16x16x4xf32>
    %42 = arith.addf %40, %41 : vector<1x16x16x4xf32>
    %c0_55 = arith.constant 0 : index
    %c2_56 = arith.constant 2 : index
    %c1_57 = arith.constant 1 : index
    %c28 = arith.constant 28 : index
    %43 = vector.load %arg21[%c0_55, %c2_56, %c1_57, %c28] : memref<1x18x18x36xf32, #tpu.memory_space<vmem>>, vector<1x16x16x4xf32>
    %44 = arith.addf %42, %43 : vector<1x16x16x4xf32>
    %c0_58 = arith.constant 0 : index
    %c2_59 = arith.constant 2 : index
    %c2_60 = arith.constant 2 : index
    %c32 = arith.constant 32 : index
    %45 = vector.load %arg21[%c0_58, %c2_59, %c2_60, %c32] : memref<1x18x18x36xf32, #tpu.memory_space<vmem>>, vector<1x16x16x4xf32>
    %46 = arith.addf %44, %45 : vector<1x16x16x4xf32>
    %c0_61 = arith.constant 0 : index
    %c0_62 = arith.constant 0 : index
    %c0_63 = arith.constant 0 : index
    %c4_64 = arith.constant 4 : index
    %47 = vector.load %arg20[%c0_61, %c0_62, %c0_63, %c4_64] : memref<1x16x16x16xf32, #tpu.memory_space<vmem>>, vector<1x16x16x4xf32>
    tpu.vector_store %arg20[%c0_61, %c0_62, %c0_63, %c4_64], %46 {strides = array<i32>} : memref<1x16x16x16xf32, #tpu.memory_space<vmem>>, vector<1x16x16x4xf32>,
    %c0_65 = arith.constant 0 : index
    %c0_66 = arith.constant 0 : index
    %c0_67 = arith.constant 0 : index
    %c0_68 = arith.constant 0 : index
    %48 = vector.load %arg20[%c0_65, %c0_66, %c0_67, %c0_68] : memref<1x16x16x16xf32, #tpu.memory_space<vmem>>, vector<1x16x16x8xf32>
    %49 = vector.shape_cast %48 : vector<1x16x16x8xf32> to vector<256x8xf32>
    %c0_69 = arith.constant 0 : index
    %c0_70 = arith.constant 0 : index
    %50 = vector.load %arg8[%c0_69, %c0_70] : memref<1x8xf32, #tpu.memory_space<vmem>>, vector<1x8xf32>
    %51 = vector.broadcast %50 : vector<1x8xf32> to vector<256x8xf32>
    %52 = arith.mulf %49, %51 : vector<256x8xf32>
    %c0_71 = arith.constant 0 : index
    %c0_72 = arith.constant 0 : index
    %53 = vector.load %arg9[%c0_71, %c0_72] : memref<1x8xf32, #tpu.memory_space<vmem>>, vector<1x8xf32>
    %54 = vector.broadcast %53 : vector<1x8xf32> to vector<256x8xf32>
    %55 = arith.addf %52, %54 : vector<256x8xf32>
    %cst_73 = arith.constant 0.000000e+00 : f32
    %56 = vector.broadcast %cst_73 : f32 to vector<256x8xf32>
    %57 = arith.maximumf %55, %56 : vector<256x8xf32>
    %58 = arith.truncf %57 : vector<256x8xf32> to vector<256x8xbf16>
    %c0_74 = arith.constant 0 : index
    %c0_75 = arith.constant 0 : index
    %59 = vector.load %arg10[%c0_74, %c0_75] : memref<8x16xbf16, #tpu.memory_space<vmem>>, vector<8x16xbf16>
    %cst_76 = arith.constant dense<0.000000e+00> : vector<256x16xf32>
    %60 = tpu.matmul %58, %59, %cst_76 {dimension_numbers = #tpu.dot_dimension_numbers<[1], [0], [0], [1], [0, 0, 1, 1], [], []>} : vector<256x8xbf16>, vector<8x16xbf16>, vector<256x16xf32> -> vector<256x16xf32>
    %c0_77 = arith.constant 0 : index
    %c0_78 = arith.constant 0 : index
    %61 = vector.load %arg11[%c0_77, %c0_78] : memref<1x16xf32, #tpu.memory_space<vmem>>, vector<1x16xf32>
    %62 = vector.broadcast %61 : vector<1x16xf32> to vector<256x16xf32>
    %63 = arith.mulf %60, %62 : vector<256x16xf32>
    %c0_79 = arith.constant 0 : index
    %c0_80 = arith.constant 0 : index
    %64 = vector.load %arg12[%c0_79, %c0_80] : memref<1x16xf32, #tpu.memory_space<vmem>>, vector<1x16xf32>
    %65 = vector.broadcast %64 : vector<1x16xf32> to vector<256x16xf32>
    %66 = arith.addf %63, %65 : vector<256x16xf32>
    %cst_81 = arith.constant 0.000000e+00 : f32
    %67 = vector.broadcast %cst_81 : f32 to vector<256x16xf32>
    %68 = arith.maximumf %66, %67 : vector<256x16xf32>
    %69 = arith.truncf %68 : vector<256x16xf32> to vector<256x16xbf16>
    %c0_82 = arith.constant 0 : index
    %c0_83 = arith.constant 0 : index
    %70 = vector.load %arg13[%c0_82, %c0_83] : memref<16x36xbf16, #tpu.memory_space<vmem>>, vector<16x36xbf16>
    %cst_84 = arith.constant dense<0.000000e+00> : vector<256x36xf32>
    %71 = tpu.matmul %69, %70, %cst_84 {dimension_numbers = #tpu.dot_dimension_numbers<[1], [0], [0], [1], [0, 0, 1, 1], [], []>} : vector<256x16xbf16>, vector<16x36xbf16>, vector<256x36xf32> -> vector<256x36xf32>
    %72 = vector.shape_cast %71 : vector<256x36xf32> to vector<1x16x16x36xf32>
    %c0_85 = arith.constant 0 : index
    %c1_86 = arith.constant 1 : index
    %c1_87 = arith.constant 1 : index
    %c0_88 = arith.constant 0 : index
    %73 = vector.load %arg21[%c0_85, %c1_86, %c1_87, %c0_88] : memref<1x18x18x36xf32, #tpu.memory_space<vmem>>, vector<1x16x16x36xf32>
    tpu.vector_store %arg21[%c0_85, %c1_86, %c1_87, %c0_88], %72 {strides = array<i32>} : memref<1x18x18x36xf32, #tpu.memory_space<vmem>>, vector<1x16x16x36xf32>,
    %c0_89 = arith.constant 0 : index
    %c0_90 = arith.constant 0 : index
    %c0_91 = arith.constant 0 : index
    %c0_92 = arith.constant 0 : index
    %74 = vector.load %arg21[%c0_89, %c0_90, %c0_91, %c0_92] : memref<1x18x18x36xf32, #tpu.memory_space<vmem>>, vector<1x16x16x4xf32>
    %c0_93 = arith.constant 0 : index
    %c0_94 = arith.constant 0 : index
    %c1_95 = arith.constant 1 : index
    %c4_96 = arith.constant 4 : index
    %75 = vector.load %arg21[%c0_93, %c0_94, %c1_95, %c4_96] : memref<1x18x18x36xf32, #tpu.memory_space<vmem>>, vector<1x16x16x4xf32>
    %76 = arith.addf %74, %75 : vector<1x16x16x4xf32>
    %c0_97 = arith.constant 0 : index
    %c0_98 = arith.constant 0 : index
    %c2_99 = arith.constant 2 : index
    %c8_100 = arith.constant 8 : index
    %77 = vector.load %arg21[%c0_97, %c0_98, %c2_99, %c8_100] : memref<1x18x18x36xf32, #tpu.memory_space<vmem>>, vector<1x16x16x4xf32>
    %78 = arith.addf %76, %77 : vector<1x16x16x4xf32>
    %c0_101 = arith.constant 0 : index
    %c1_102 = arith.constant 1 : index
    %c0_103 = arith.constant 0 : index
    %c12_104 = arith.constant 12 : index
    %79 = vector.load %arg21[%c0_101, %c1_102, %c0_103, %c12_104] : memref<1x18x18x36xf32, #tpu.memory_space<vmem>>, vector<1x16x16x4xf32>
    %80 = arith.addf %78, %79 : vector<1x16x16x4xf32>
    %c0_105 = arith.constant 0 : index
    %c1_106 = arith.constant 1 : index
    %c1_107 = arith.constant 1 : index
    %c16_108 = arith.constant 16 : index
    %81 = vector.load %arg21[%c0_105, %c1_106, %c1_107, %c16_108] : memref<1x18x18x36xf32, #tpu.memory_space<vmem>>, vector<1x16x16x4xf32>
    %82 = arith.addf %80, %81 : vector<1x16x16x4xf32>
    %c0_109 = arith.constant 0 : index
    %c1_110 = arith.constant 1 : index
    %c2_111 = arith.constant 2 : index
    %c20_112 = arith.constant 20 : index
    %83 = vector.load %arg21[%c0_109, %c1_110, %c2_111, %c20_112] : memref<1x18x18x36xf32, #tpu.memory_space<vmem>>, vector<1x16x16x4xf32>
    %84 = arith.addf %82, %83 : vector<1x16x16x4xf32>
    %c0_113 = arith.constant 0 : index
    %c2_114 = arith.constant 2 : index
    %c0_115 = arith.constant 0 : index
    %c24_116 = arith.constant 24 : index
    %85 = vector.load %arg21[%c0_113, %c2_114, %c0_115, %c24_116] : memref<1x18x18x36xf32, #tpu.memory_space<vmem>>, vector<1x16x16x4xf32>
    %86 = arith.addf %84, %85 : vector<1x16x16x4xf32>
    %c0_117 = arith.constant 0 : index
    %c2_118 = arith.constant 2 : index
    %c1_119 = arith.constant 1 : index
    %c28_120 = arith.constant 28 : index
    %87 = vector.load %arg21[%c0_117, %c2_118, %c1_119, %c28_120] : memref<1x18x18x36xf32, #tpu.memory_space<vmem>>, vector<1x16x16x4xf32>
    %88 = arith.addf %86, %87 : vector<1x16x16x4xf32>
    %c0_121 = arith.constant 0 : index
    %c2_122 = arith.constant 2 : index
    %c2_123 = arith.constant 2 : index
    %c32_124 = arith.constant 32 : index
    %89 = vector.load %arg21[%c0_121, %c2_122, %c2_123, %c32_124] : memref<1x18x18x36xf32, #tpu.memory_space<vmem>>, vector<1x16x16x4xf32>
    %90 = arith.addf %88, %89 : vector<1x16x16x4xf32>
    %c0_125 = arith.constant 0 : index
    %c0_126 = arith.constant 0 : index
    %c0_127 = arith.constant 0 : index
    %c8_128 = arith.constant 8 : index
    %91 = vector.load %arg20[%c0_125, %c0_126, %c0_127, %c8_128] : memref<1x16x16x16xf32, #tpu.memory_space<vmem>>, vector<1x16x16x4xf32>
    tpu.vector_store %arg20[%c0_125, %c0_126, %c0_127, %c8_128], %90 {strides = array<i32>} : memref<1x16x16x16xf32, #tpu.memory_space<vmem>>, vector<1x16x16x4xf32>,
    %c0_129 = arith.constant 0 : index
    %c0_130 = arith.constant 0 : index
    %c0_131 = arith.constant 0 : index
    %c0_132 = arith.constant 0 : index
    %92 = vector.load %arg20[%c0_129, %c0_130, %c0_131, %c0_132] : memref<1x16x16x16xf32, #tpu.memory_space<vmem>>, vector<1x16x16x12xf32>
    %93 = vector.shape_cast %92 : vector<1x16x16x12xf32> to vector<256x12xf32>
    %c0_133 = arith.constant 0 : index
    %c0_134 = arith.constant 0 : index
    %94 = vector.load %arg14[%c0_133, %c0_134] : memref<1x12xf32, #tpu.memory_space<vmem>>, vector<1x12xf32>
    %95 = vector.broadcast %94 : vector<1x12xf32> to vector<256x12xf32>
    %96 = arith.mulf %93, %95 : vector<256x12xf32>
    %c0_135 = arith.constant 0 : index
    %c0_136 = arith.constant 0 : index
    %97 = vector.load %arg15[%c0_135, %c0_136] : memref<1x12xf32, #tpu.memory_space<vmem>>, vector<1x12xf32>
    %98 = vector.broadcast %97 : vector<1x12xf32> to vector<256x12xf32>
    %99 = arith.addf %96, %98 : vector<256x12xf32>
    %cst_137 = arith.constant 0.000000e+00 : f32
    %100 = vector.broadcast %cst_137 : f32 to vector<256x12xf32>
    %101 = arith.maximumf %99, %100 : vector<256x12xf32>
    %102 = arith.truncf %101 : vector<256x12xf32> to vector<256x12xbf16>
    %c0_138 = arith.constant 0 : index
    %c0_139 = arith.constant 0 : index
    %103 = vector.load %arg16[%c0_138, %c0_139] : memref<12x16xbf16, #tpu.memory_space<vmem>>, vector<12x16xbf16>
    %cst_140 = arith.constant dense<0.000000e+00> : vector<256x16xf32>
    %104 = tpu.matmul %102, %103, %cst_140 {dimension_numbers = #tpu.dot_dimension_numbers<[1], [0], [0], [1], [0, 0, 1, 1], [], []>} : vector<256x12xbf16>, vector<12x16xbf16>, vector<256x16xf32> -> vector<256x16xf32>
    %c0_141 = arith.constant 0 : index
    %c0_142 = arith.constant 0 : index
    %105 = vector.load %arg17[%c0_141, %c0_142] : memref<1x16xf32, #tpu.memory_space<vmem>>, vector<1x16xf32>
    %106 = vector.broadcast %105 : vector<1x16xf32> to vector<256x16xf32>
    %107 = arith.mulf %104, %106 : vector<256x16xf32>
    %c0_143 = arith.constant 0 : index
    %c0_144 = arith.constant 0 : index
    %108 = vector.load %arg18[%c0_143, %c0_144] : memref<1x16xf32, #tpu.memory_space<vmem>>, vector<1x16xf32>
    %109 = vector.broadcast %108 : vector<1x16xf32> to vector<256x16xf32>
    %110 = arith.addf %107, %109 : vector<256x16xf32>
    %cst_145 = arith.constant 0.000000e+00 : f32
    %111 = vector.broadcast %cst_145 : f32 to vector<256x16xf32>
    %112 = arith.maximumf %110, %111 : vector<256x16xf32>
    %113 = arith.truncf %112 : vector<256x16xf32> to vector<256x16xbf16>
    %c0_146 = arith.constant 0 : index
    %c0_147 = arith.constant 0 : index
    %114 = vector.load %arg19[%c0_146, %c0_147] : memref<16x36xbf16, #tpu.memory_space<vmem>>, vector<16x36xbf16>
    %cst_148 = arith.constant dense<0.000000e+00> : vector<256x36xf32>
    %115 = tpu.matmul %113, %114, %cst_148 {dimension_numbers = #tpu.dot_dimension_numbers<[1], [0], [0], [1], [0, 0, 1, 1], [], []>} : vector<256x16xbf16>, vector<16x36xbf16>, vector<256x36xf32> -> vector<256x36xf32>
    %116 = vector.shape_cast %115 : vector<256x36xf32> to vector<1x16x16x36xf32>
    %c0_149 = arith.constant 0 : index
    %c1_150 = arith.constant 1 : index
    %c1_151 = arith.constant 1 : index
    %c0_152 = arith.constant 0 : index
    %117 = vector.load %arg21[%c0_149, %c1_150, %c1_151, %c0_152] : memref<1x18x18x36xf32, #tpu.memory_space<vmem>>, vector<1x16x16x36xf32>
    tpu.vector_store %arg21[%c0_149, %c1_150, %c1_151, %c0_152], %116 {strides = array<i32>} : memref<1x18x18x36xf32, #tpu.memory_space<vmem>>, vector<1x16x16x36xf32>,
    %c0_153 = arith.constant 0 : index
    %c0_154 = arith.constant 0 : index
    %c0_155 = arith.constant 0 : index
    %c0_156 = arith.constant 0 : index
    %118 = vector.load %arg21[%c0_153, %c0_154, %c0_155, %c0_156] : memref<1x18x18x36xf32, #tpu.memory_space<vmem>>, vector<1x16x16x4xf32>
    %c0_157 = arith.constant 0 : index
    %c0_158 = arith.constant 0 : index
    %c1_159 = arith.constant 1 : index
    %c4_160 = arith.constant 4 : index
    %119 = vector.load %arg21[%c0_157, %c0_158, %c1_159, %c4_160] : memref<1x18x18x36xf32, #tpu.memory_space<vmem>>, vector<1x16x16x4xf32>
    %120 = arith.addf %118, %119 : vector<1x16x16x4xf32>
    %c0_161 = arith.constant 0 : index
    %c0_162 = arith.constant 0 : index
    %c2_163 = arith.constant 2 : index
    %c8_164 = arith.constant 8 : index
    %121 = vector.load %arg21[%c0_161, %c0_162, %c2_163, %c8_164] : memref<1x18x18x36xf32, #tpu.memory_space<vmem>>, vector<1x16x16x4xf32>
    %122 = arith.addf %120, %121 : vector<1x16x16x4xf32>
    %c0_165 = arith.constant 0 : index
    %c1_166 = arith.constant 1 : index
    %c0_167 = arith.constant 0 : index
    %c12_168 = arith.constant 12 : index
    %123 = vector.load %arg21[%c0_165, %c1_166, %c0_167, %c12_168] : memref<1x18x18x36xf32, #tpu.memory_space<vmem>>, vector<1x16x16x4xf32>
    %124 = arith.addf %122, %123 : vector<1x16x16x4xf32>
    %c0_169 = arith.constant 0 : index
    %c1_170 = arith.constant 1 : index
    %c1_171 = arith.constant 1 : index
    %c16_172 = arith.constant 16 : index
    %125 = vector.load %arg21[%c0_169, %c1_170, %c1_171, %c16_172] : memref<1x18x18x36xf32, #tpu.memory_space<vmem>>, vector<1x16x16x4xf32>
    %126 = arith.addf %124, %125 : vector<1x16x16x4xf32>
    %c0_173 = arith.constant 0 : index
    %c1_174 = arith.constant 1 : index
    %c2_175 = arith.constant 2 : index
    %c20_176 = arith.constant 20 : index
    %127 = vector.load %arg21[%c0_173, %c1_174, %c2_175, %c20_176] : memref<1x18x18x36xf32, #tpu.memory_space<vmem>>, vector<1x16x16x4xf32>
    %128 = arith.addf %126, %127 : vector<1x16x16x4xf32>
    %c0_177 = arith.constant 0 : index
    %c2_178 = arith.constant 2 : index
    %c0_179 = arith.constant 0 : index
    %c24_180 = arith.constant 24 : index
    %129 = vector.load %arg21[%c0_177, %c2_178, %c0_179, %c24_180] : memref<1x18x18x36xf32, #tpu.memory_space<vmem>>, vector<1x16x16x4xf32>
    %130 = arith.addf %128, %129 : vector<1x16x16x4xf32>
    %c0_181 = arith.constant 0 : index
    %c2_182 = arith.constant 2 : index
    %c1_183 = arith.constant 1 : index
    %c28_184 = arith.constant 28 : index
    %131 = vector.load %arg21[%c0_181, %c2_182, %c1_183, %c28_184] : memref<1x18x18x36xf32, #tpu.memory_space<vmem>>, vector<1x16x16x4xf32>
    %132 = arith.addf %130, %131 : vector<1x16x16x4xf32>
    %c0_185 = arith.constant 0 : index
    %c2_186 = arith.constant 2 : index
    %c2_187 = arith.constant 2 : index
    %c32_188 = arith.constant 32 : index
    %133 = vector.load %arg21[%c0_185, %c2_186, %c2_187, %c32_188] : memref<1x18x18x36xf32, #tpu.memory_space<vmem>>, vector<1x16x16x4xf32>
    %134 = arith.addf %132, %133 : vector<1x16x16x4xf32>
    %c0_189 = arith.constant 0 : index
    %c0_190 = arith.constant 0 : index
    %c0_191 = arith.constant 0 : index
    %c12_192 = arith.constant 12 : index
    %135 = vector.load %arg20[%c0_189, %c0_190, %c0_191, %c12_192] : memref<1x16x16x16xf32, #tpu.memory_space<vmem>>, vector<1x16x16x4xf32>
    tpu.vector_store %arg20[%c0_189, %c0_190, %c0_191, %c12_192], %134 {strides = array<i32>} : memref<1x16x16x16xf32, #tpu.memory_space<vmem>>, vector<1x16x16x4xf32>,
    return
  }
  func.func @transform_0(%arg0: i32) -> (i32, i32, i32, i32) {
    %c0_i32 = arith.constant 0 : i32
    %c0_i32_0 = arith.constant 0 : i32
    %c0_i32_1 = arith.constant 0 : i32
    %c0_i32_2 = arith.constant 0 : i32
    return %arg0, %c0_i32, %c0_i32_0, %c0_i32_1 : i32, i32, i32, i32
  }
  func.func @transform_1(%arg0: i32) -> (i32, i32) {
    %c0_i32 = arith.constant 0 : i32
    %c0_i32_0 = arith.constant 0 : i32
    %c0_i32_1 = arith.constant 0 : i32
    return %c0_i32, %c0_i32_0 : i32, i32
  }
  func.func @transform_2(%arg0: i32) -> (i32, i32) {
    %c0_i32 = arith.constant 0 : i32
    %c0_i32_0 = arith.constant 0 : i32
    %c0_i32_1 = arith.constant 0 : i32
    return %c0_i32, %c0_i32_0 : i32, i32
  }
  func.func @transform_3(%arg0: i32) -> (i32, i32) {
    %c0_i32 = arith.constant 0 : i32
    %c0_i32_0 = arith.constant 0 : i32
    %c0_i32_1 = arith.constant 0 : i32
    return %c0_i32, %c0_i32_0 : i32, i32
  }
  func.func @transform_4(%arg0: i32) -> (i32, i32) {
    %c0_i32 = arith.constant 0 : i32
    %c0_i32_0 = arith.constant 0 : i32
    %c0_i32_1 = arith.constant 0 : i32
    return %c0_i32, %c0_i32_0 : i32, i32
  }
  func.func @transform_5(%arg0: i32) -> (i32, i32) {
    %c0_i32 = arith.constant 0 : i32
    %c0_i32_0 = arith.constant 0 : i32
    %c0_i32_1 = arith.constant 0 : i32
    return %c0_i32, %c0_i32_0 : i32, i32
  }
  func.func @transform_6(%arg0: i32) -> (i32, i32) {
    %c0_i32 = arith.constant 0 : i32
    %c0_i32_0 = arith.constant 0 : i32
    %c0_i32_1 = arith.constant 0 : i32
    return %c0_i32, %c0_i32_0 : i32, i32
  }
  func.func @transform_7(%arg0: i32) -> (i32, i32) {
    %c0_i32 = arith.constant 0 : i32
    %c0_i32_0 = arith.constant 0 : i32
    %c0_i32_1 = arith.constant 0 : i32
    return %c0_i32, %c0_i32_0 : i32, i32
  }
  func.func @transform_8(%arg0: i32) -> (i32, i32) {
    %c0_i32 = arith.constant 0 : i32
    %c0_i32_0 = arith.constant 0 : i32
    %c0_i32_1 = arith.constant 0 : i32
    return %c0_i32, %c0_i32_0 : i32, i32
  }
  func.func @transform_9(%arg0: i32) -> (i32, i32) {
    %c0_i32 = arith.constant 0 : i32
    %c0_i32_0 = arith.constant 0 : i32
    %c0_i32_1 = arith.constant 0 : i32
    return %c0_i32, %c0_i32_0 : i32, i32
  }
  func.func @transform_10(%arg0: i32) -> (i32, i32) {
    %c0_i32 = arith.constant 0 : i32
    %c0_i32_0 = arith.constant 0 : i32
    %c0_i32_1 = arith.constant 0 : i32
    return %c0_i32, %c0_i32_0 : i32, i32
  }
  func.func @transform_11(%arg0: i32) -> (i32, i32) {
    %c0_i32 = arith.constant 0 : i32
    %c0_i32_0 = arith.constant 0 : i32
    %c0_i32_1 = arith.constant 0 : i32
    return %c0_i32, %c0_i32_0 : i32, i32
  }
  func.func @transform_12(%arg0: i32) -> (i32, i32) {
    %c0_i32 = arith.constant 0 : i32
    %c0_i32_0 = arith.constant 0 : i32
    %c0_i32_1 = arith.constant 0 : i32
    return %c0_i32, %c0_i32_0 : i32, i32
  }
  func.func @transform_13(%arg0: i32) -> (i32, i32) {
    %c0_i32 = arith.constant 0 : i32
    %c0_i32_0 = arith.constant 0 : i32
    %c0_i32_1 = arith.constant 0 : i32
    return %c0_i32, %c0_i32_0 : i32, i32
  }
  func.func @transform_14(%arg0: i32) -> (i32, i32) {
    %c0_i32 = arith.constant 0 : i32
    %c0_i32_0 = arith.constant 0 : i32
    %c0_i32_1 = arith.constant 0 : i32
    return %c0_i32, %c0_i32_0 : i32, i32
  }
  func.func @transform_15(%arg0: i32) -> (i32, i32) {
    %c0_i32 = arith.constant 0 : i32
    %c0_i32_0 = arith.constant 0 : i32
    %c0_i32_1 = arith.constant 0 : i32
    return %c0_i32, %c0_i32_0 : i32, i32
  }
  func.func @transform_16(%arg0: i32) -> (i32, i32) {
    %c0_i32 = arith.constant 0 : i32
    %c0_i32_0 = arith.constant 0 : i32
    %c0_i32_1 = arith.constant 0 : i32
    return %c0_i32, %c0_i32_0 : i32, i32
  }
  func.func @transform_17(%arg0: i32) -> (i32, i32) {
    %c0_i32 = arith.constant 0 : i32
    %c0_i32_0 = arith.constant 0 : i32
    %c0_i32_1 = arith.constant 0 : i32
    return %c0_i32, %c0_i32_0 : i32, i32
  }
  func.func @transform_18(%arg0: i32) -> (i32, i32) {
    %c0_i32 = arith.constant 0 : i32
    %c0_i32_0 = arith.constant 0 : i32
    %c0_i32_1 = arith.constant 0 : i32
    return %c0_i32, %c0_i32_0 : i32, i32
  }
  func.func @transform_19(%arg0: i32) -> (i32, i32, i32, i32) {
    %c0_i32 = arith.constant 0 : i32
    %c0_i32_0 = arith.constant 0 : i32
    %c0_i32_1 = arith.constant 0 : i32
    %c0_i32_2 = arith.constant 0 : i32
    return %arg0, %c0_i32, %c0_i32_0, %c0_i32_1 : i32, i32, i32, i32
  }
}

</mosaic_0001>

<llo_original>
// kernel: dense_block_pallas.1
$region0: #{dense_block_pallas.1}
  #allocation0 [shape = 'u32[]', space=smem, size = 0x4, offset = 0x4, fixed_abs, tag = 'smem constant byte address 0x4 - core index']
  #allocation1 [shape = 'u32[144,128]{1,0:T(1,128)}', space=vmem, size = 0x12000, scoped, tag = 'internal scratch']
  #allocation2 [shape = 'f32[1,18,18,36]{3,2,1,0:T(8,128)}', space=vmem, size = 0x36000, scoped, tag = 'scratch operand']
  %s0 = inlined_call_operand.vmem [shape: f32[2,16,16,4], index: 0, kind: input, shape index: {}]
  %s1 = inlined_call_operand.vmem [shape: f32[1,4], index: 1, kind: input, shape index: {}]
  %s2 = inlined_call_operand.vmem [shape: f32[1,4], index: 2, kind: input, shape index: {}]
  %s3 = inlined_call_operand.vmem [shape: bf16[4,16], index: 3, kind: input, shape index: {}]
  %s4 = inlined_call_operand.vmem [shape: f32[1,16], index: 4, kind: input, shape index: {}]
  %s5 = inlined_call_operand.vmem [shape: f32[1,16], index: 5, kind: input, shape index: {}]
  %s6 = inlined_call_operand.vmem [shape: bf16[16,36], index: 6, kind: input, shape index: {}]
  %s7 = inlined_call_operand.vmem [shape: f32[1,8], index: 7, kind: input, shape index: {}]
  %s8 = inlined_call_operand.vmem [shape: f32[1,8], index: 8, kind: input, shape index: {}]
  %s9 = inlined_call_operand.vmem [shape: bf16[8,16], index: 9, kind: input, shape index: {}]
  %s10 = inlined_call_operand.vmem [shape: f32[1,16], index: 10, kind: input, shape index: {}]
  %s11 = inlined_call_operand.vmem [shape: f32[1,16], index: 11, kind: input, shape index: {}]
  %s12 = inlined_call_operand.vmem [shape: bf16[16,36], index: 12, kind: input, shape index: {}]
  %s13 = inlined_call_operand.vmem [shape: f32[1,12], index: 13, kind: input, shape index: {}]
  %s14 = inlined_call_operand.vmem [shape: f32[1,12], index: 14, kind: input, shape index: {}]
  %s15 = inlined_call_operand.vmem [shape: bf16[12,16], index: 15, kind: input, shape index: {}]
  %s16 = inlined_call_operand.vmem [shape: f32[1,16], index: 16, kind: input, shape index: {}]
  %s17 = inlined_call_operand.vmem [shape: f32[1,16], index: 17, kind: input, shape index: {}]
  %s18 = inlined_call_operand.vmem [shape: bf16[16,36], index: 18, kind: input, shape index: {}]
  %s19 = inlined_call_operand.vmem [shape: f32[2,16,16,16], index: 19, kind: output, shape index: {}]
  %s20 = sld [smem:[#allocation0]]
  $region109: #{dense_block_pallas.1} parent=0
    _
  %s22 = ssub.s32 1, %s20
  %s23 = scalar_select 0, %s22, %s20
  loop: start=0, step=1, limit=4
  $region2: #{dense_block_pallas.1} parent=0 // loop_pre_header
    _
  $region3: #{dense_block_pallas.1} parent=0 // loop_header
    %s25 = sphi 0, %s29
    %p26 = scmp.ge.s32.totalorder %s25, 4
    %s35 = sphi 0, %s37
    %s38 = sphi 0, %s35
    %s39 = sphi 0, %s38
    %s55 = sphi 0, %s39
    %s59 = sphi 0, %s59
    %s61 = sphi 0, %s59
    %s62 = sphi 0, %s61
    %s76 = sphi 0, %s62
    %s80 = sphi 0, %s80
    %s82 = sphi 0, %s80
    %s83 = sphi 0, %s82
    %s97 = sphi 0, %s83
    %s101 = sphi 0, %s101
    %s103 = sphi 0, %s101
    %s104 = sphi 0, %s103
    %s118 = sphi 0, %s104
    %s122 = sphi 0, %s122
    %s124 = sphi 0, %s122
    %s125 = sphi 0, %s124
    %s139 = sphi 0, %s125
    %s143 = sphi 0, %s143
    %s145 = sphi 0, %s143
    %s146 = sphi 0, %s145
    %s160 = sphi 0, %s146
    %s164 = sphi 0, %s164
    %s166 = sphi 0, %s164
    %s167 = sphi 0, %s166
    %s181 = sphi 0, %s167
    %s185 = sphi 0, %s185
    %s187 = sphi 0, %s185
    %s188 = sphi 0, %s187
    %s202 = sphi 0, %s188
    %s206 = sphi 0, %s206
    %s208 = sphi 0, %s206
    %s209 = sphi 0, %s208
    %s223 = sphi 0, %s209
    %s227 = sphi 0, %s227
    %s229 = sphi 0, %s227
    %s230 = sphi 0, %s229
    %s244 = sphi 0, %s230
    %s248 = sphi 0, %s248
    %s250 = sphi 0, %s248
    %s251 = sphi 0, %s250
    %s265 = sphi 0, %s251
    %s269 = sphi 0, %s269
    %s271 = sphi 0, %s269
    %s272 = sphi 0, %s271
    %s286 = sphi 0, %s272
    %s290 = sphi 0, %s290
    %s292 = sphi 0, %s290
    %s293 = sphi 0, %s292
    %s307 = sphi 0, %s293
    %s311 = sphi 0, %s311
    %s313 = sphi 0, %s311
    %s314 = sphi 0, %s313
    %s328 = sphi 0, %s314
    %s332 = sphi 0, %s332
    %s334 = sphi 0, %s332
    %s335 = sphi 0, %s334
    %s349 = sphi 0, %s335
    %s353 = sphi 0, %s353
    %s355 = sphi 0, %s353
    %s356 = sphi 0, %s355
    %s370 = sphi 0, %s356
    %s374 = sphi 0, %s374
    %s376 = sphi 0, %s374
    %s377 = sphi 0, %s376
    %s391 = sphi 0, %s377
    %s395 = sphi 0, %s395
    %s397 = sphi 0, %s395
    %s398 = sphi 0, %s397
    %s412 = sphi 0, %s398
    %s416 = sphi 0, %s416
    %s418 = sphi 0, %s416
    %s419 = sphi 0, %s418
    %s433 = sphi 0, %s419
    %s439 = sphi 0, %s441
    %s442 = sphi 0, %s439
    %s443 = sphi 0, %s442
    %s459 = sphi 0, %s443
  $region4: #{dense_block_pallas.1} parent=0 // loop_header_branch
    %28 = sbr.rel (%p26) target = $region8
  $region5: #{dense_block_pallas.1} parent=0 // loop_body
    %s30 = ssub.s32 %s25, 1
    %s31 = ssub.s32 %s25, 2
    %s32 = sadd.s32 %s25, 1
    %s33 = ssub.s32 %s25, %s32
    %p34 = scmp.eq.s32.totalorder %s33, 0
    %s36 = sadd.s32 %s35, 1
    %s37 = scalar_select %p34, %s35, %s36
    %p40 = pneg %p34
    %p41 = scmp.eq.s32.totalorder %s25, 1
    %p42 = por %p40, %p41
    %p43 = scmp.ne.s32.totalorder %s35, %s38
    %p44 = scmp.eq.s32.totalorder %s25, 0
    %p45 = por %p43, %p44
    %p46 = scmp.ne.s32.totalorder %s35, %s38
    %p47 = scmp.eq.s32.totalorder %s30, 1
    %p48 = por %p46, %p47
    %p49 = scmp.ne.s32.totalorder %s38, %s39
    %p50 = scmp.eq.s32.totalorder %s30, 0
    %p51 = por %p49, %p50
    %p52 = scmp.ne.s32.totalorder %s38, %s39
    %p53 = scmp.eq.s32.totalorder %s31, 1
    %p54 = por %p52, %p53
    %p56 = scmp.ne.s32.totalorder %s39, %s55
    %p57 = scmp.eq.s32.totalorder %s31, 0
    %p58 = por %p56, %p57
    %s60 = sadd.s32 %s59, 1
    %p63 = scmp.eq.s32.totalorder %s25, 1
    %p64 = scmp.ne.s32.totalorder %s59, %s61
    %p65 = scmp.eq.s32.totalorder %s25, 0
    %p66 = por %p64, %p65
    %p67 = scmp.ne.s32.totalorder %s59, %s61
    %p68 = scmp.eq.s32.totalorder %s30, 1
    %p69 = por %p67, %p68
    %p70 = scmp.ne.s32.totalorder %s61, %s62
    %p71 = scmp.eq.s32.totalorder %s30, 0
    %p72 = por %p70, %p71
    %p73 = scmp.ne.s32.totalorder %s61, %s62
    %p74 = scmp.eq.s32.totalorder %s31, 1
    %p75 = por %p73, %p74
    %p77 = scmp.ne.s32.totalorder %s62, %s76
    %p78 = scmp.eq.s32.totalorder %s31, 0
    %p79 = por %p77, %p78
    %s81 = sadd.s32 %s80, 1
    %p84 = scmp.eq.s32.totalorder %s25, 1
    %p85 = scmp.ne.s32.totalorder %s80, %s82
    %p86 = scmp.eq.s32.totalorder %s25, 0
    %p87 = por %p85, %p86
    %p88 = scmp.ne.s32.totalorder %s80, %s82
    %p89 = scmp.eq.s32.totalorder %s30, 1
    %p90 = por %p88, %p89
    %p91 = scmp.ne.s32.totalorder %s82, %s83
    %p92 = scmp.eq.s32.totalorder %s30, 0
    %p93 = por %p91, %p92
    %p94 = scmp.ne.s32.totalorder %s82, %s83
    %p95 = scmp.eq.s32.totalorder %s31, 1
    %p96 = por %p94, %p95
    %p98 = scmp.ne.s32.totalorder %s83, %s97
    %p99 = scmp.eq.s32.totalorder %s31, 0
    %p100 = por %p98, %p99
    %s102 = sadd.s32 %s101, 1
    %p105 = scmp.eq.s32.totalorder %s25, 1
    %p106 = scmp.ne.s32.totalorder %s101, %s103
    %p107 = scmp.eq.s32.totalorder %s25, 0
    %p108 = por %p106, %p107
    %p109 = scmp.ne.s32.totalorder %s101, %s103
    %p110 = scmp.eq.s32.totalorder %s30, 1
    %p111 = por %p109, %p110
    %p112 = scmp.ne.s32.totalorder %s103, %s104
    %p113 = scmp.eq.s32.totalorder %s30, 0
    %p114 = por %p112, %p113
    %p115 = scmp.ne.s32.totalorder %s103, %s104
    %p116 = scmp.eq.s32.totalorder %s31, 1
    %p117 = por %p115, %p116
    %p119 = scmp.ne.s32.totalorder %s104, %s118
    %p120 = scmp.eq.s32.totalorder %s31, 0
    %p121 = por %p119, %p120
    %s123 = sadd.s32 %s122, 1
    %p126 = scmp.eq.s32.totalorder %s25, 1
    %p127 = scmp.ne.s32.totalorder %s122, %s124
    %p128 = scmp.eq.s32.totalorder %s25, 0
    %p129 = por %p127, %p128
    %p130 = scmp.ne.s32.totalorder %s122, %s124
    %p131 = scmp.eq.s32.totalorder %s30, 1
    %p132 = por %p130, %p131
    %p133 = scmp.ne.s32.totalorder %s124, %s125
    %p134 = scmp.eq.s32.totalorder %s30, 0
    %p135 = por %p133, %p134
    %p136 = scmp.ne.s32.totalorder %s124, %s125
    %p137 = scmp.eq.s32.totalorder %s31, 1
    %p138 = por %p136, %p137
    %p140 = scmp.ne.s32.totalorder %s125, %s139
    %p141 = scmp.eq.s32.totalorder %s31, 0
    %p142 = por %p140, %p141
    %s144 = sadd.s32 %s143, 1
    %p147 = scmp.eq.s32.totalorder %s25, 1
    %p148 = scmp.ne.s32.totalorder %s143, %s145
    %p149 = scmp.eq.s32.totalorder %s25, 0
    %p150 = por %p148, %p149
    %p151 = scmp.ne.s32.totalorder %s143, %s145
    %p152 = scmp.eq.s32.totalorder %s30, 1
    %p153 = por %p151, %p152
    %p154 = scmp.ne.s32.totalorder %s145, %s146
    %p155 = scmp.eq.s32.totalorder %s30, 0
    %p156 = por %p154, %p155
    %p157 = scmp.ne.s32.totalorder %s145, %s146
    %p158 = scmp.eq.s32.totalorder %s31, 1
    %p159 = por %p157, %p158
    %p161 = scmp.ne.s32.totalorder %s146, %s160
    %p162 = scmp.eq.s32.totalorder %s31, 0
    %p163 = por %p161, %p162
    %s165 = sadd.s32 %s164, 1
    %p168 = scmp.eq.s32.totalorder %s25, 1
    %p169 = scmp.ne.s32.totalorder %s164, %s166
    %p170 = scmp.eq.s32.totalorder %s25, 0
    %p171 = por %p169, %p170
    %p172 = scmp.ne.s32.totalorder %s164, %s166
    %p173 = scmp.eq.s32.totalorder %s30, 1
    %p174 = por %p172, %p173
    %p175 = scmp.ne.s32.totalorder %s166, %s167
    %p176 = scmp.eq.s32.totalorder %s30, 0
    %p177 = por %p175, %p176
    %p178 = scmp.ne.s32.totalorder %s166, %s167
    %p179 = scmp.eq.s32.totalorder %s31, 1
    %p180 = por %p178, %p179
    %p182 = scmp.ne.s32.totalorder %s167, %s181
    %p183 = scmp.eq.s32.totalorder %s31, 0
    %p184 = por %p182, %p183
    %s186 = sadd.s32 %s185, 1
    %p189 = scmp.eq.s32.totalorder %s25, 1
    %p190 = scmp.ne.s32.totalorder %s185, %s187
    %p191 = scmp.eq.s32.totalorder %s25, 0
    %p192 = por %p190, %p191
    %p193 = scmp.ne.s32.totalorder %s185, %s187
    %p194 = scmp.eq.s32.totalorder %s30, 1
    %p195 = por %p193, %p194
    %p196 = scmp.ne.s32.totalorder %s187, %s188
    %p197 = scmp.eq.s32.totalorder %s30, 0
    %p198 = por %p196, %p197
    %p199 = scmp.ne.s32.totalorder %s187, %s188
    %p200 = scmp.eq.s32.totalorder %s31, 1
    %p201 = por %p199, %p200
    %p203 = scmp.ne.s32.totalorder %s188, %s202
    %p204 = scmp.eq.s32.totalorder %s31, 0
    %p205 = por %p203, %p204
    %s207 = sadd.s32 %s206, 1
    %p210 = scmp.eq.s32.totalorder %s25, 1
    %p211 = scmp.ne.s32.totalorder %s206, %s208
    %p212 = scmp.eq.s32.totalorder %s25, 0
    %p213 = por %p211, %p212
    %p214 = scmp.ne.s32.totalorder %s206, %s208
    %p215 = scmp.eq.s32.totalorder %s30, 1
    %p216 = por %p214, %p215
    %p217 = scmp.ne.s32.totalorder %s208, %s209
    %p218 = scmp.eq.s32.totalorder %s30, 0
    %p219 = por %p217, %p218
    %p220 = scmp.ne.s32.totalorder %s208, %s209
    %p221 = scmp.eq.s32.totalorder %s31, 1
    %p222 = por %p220, %p221
    %p224 = scmp.ne.s32.totalorder %s209, %s223
    %p225 = scmp.eq.s32.totalorder %s31, 0
    %p226 = por %p224, %p225
    %s228 = sadd.s32 %s227, 1
    %p231 = scmp.eq.s32.totalorder %s25, 1
    %p232 = scmp.ne.s32.totalorder %s227, %s229
    %p233 = scmp.eq.s32.totalorder %s25, 0
    %p234 = por %p232, %p233
    %p235 = scmp.ne.s32.totalorder %s227, %s229
    %p236 = scmp.eq.s32.totalorder %s30, 1
    %p237 = por %p235, %p236
    %p238 = scmp.ne.s32.totalorder %s229, %s230
    %p239 = scmp.eq.s32.totalorder %s30, 0
    %p240 = por %p238, %p239
    %p241 = scmp.ne.s32.totalorder %s229, %s230
    %p242 = scmp.eq.s32.totalorder %s31, 1
    %p243 = por %p241, %p242
    %p245 = scmp.ne.s32.totalorder %s230, %s244
    %p246 = scmp.eq.s32.totalorder %s31, 0
    %p247 = por %p245, %p246
    %s249 = sadd.s32 %s248, 1
    %p252 = scmp.eq.s32.totalorder %s25, 1
    %p253 = scmp.ne.s32.totalorder %s248, %s250
    %p254 = scmp.eq.s32.totalorder %s25, 0
    %p255 = por %p253, %p254
    %p256 = scmp.ne.s32.totalorder %s248, %s250
    %p257 = scmp.eq.s32.totalorder %s30, 1
    %p258 = por %p256, %p257
    %p259 = scmp.ne.s32.totalorder %s250, %s251
    %p260 = scmp.eq.s32.totalorder %s30, 0
    %p261 = por %p259, %p260
    %p262 = scmp.ne.s32.totalorder %s250, %s251
    %p263 = scmp.eq.s32.totalorder %s31, 1
    %p264 = por %p262, %p263
    %p266 = scmp.ne.s32.totalorder %s251, %s265
    %p267 = scmp.eq.s32.totalorder %s31, 0
    %p268 = por %p266, %p267
    %s270 = sadd.s32 %s269, 1
    %p273 = scmp.eq.s32.totalorder %s25, 1
    %p274 = scmp.ne.s32.totalorder %s269, %s271
    %p275 = scmp.eq.s32.totalorder %s25, 0
    %p276 = por %p274, %p275
    %p277 = scmp.ne.s32.totalorder %s269, %s271
    %p278 = scmp.eq.s32.totalorder %s30, 1
    %p279 = por %p277, %p278
    %p280 = scmp.ne.s32.totalorder %s271, %s272
    %p281 = scmp.eq.s32.totalorder %s30, 0
    %p282 = por %p280, %p281
    %p283 = scmp.ne.s32.totalorder %s271, %s272
    %p284 = scmp.eq.s32.totalorder %s31, 1
    %p285 = por %p283, %p284
    %p287 = scmp.ne.s32.totalorder %s272, %s286
    %p288 = scmp.eq.s32.totalorder %s31, 0
    %p289 = por %p287, %p288
    %s291 = sadd.s32 %s290, 1
    %p294 = scmp.eq.s32.totalorder %s25, 1
    %p295 = scmp.ne.s32.totalorder %s290, %s292
    %p296 = scmp.eq.s32.totalorder %s25, 0
    %p297 = por %p295, %p296
    %p298 = scmp.ne.s32.totalorder %s290, %s292
    %p299 = scmp.eq.s32.totalorder %s30, 1
    %p300 = por %p298, %p299
    %p301 = scmp.ne.s32.totalorder %s292, %s293
    %p302 = scmp.eq.s32.totalorder %s30, 0
    %p303 = por %p301, %p302
    %p304 = scmp.ne.s32.totalorder %s292, %s293
    %p305 = scmp.eq.s32.totalorder %s31, 1
    %p306 = por %p304, %p305
    %p308 = scmp.ne.s32.totalorder %s293, %s307
    %p309 = scmp.eq.s32.totalorder %s31, 0
    %p310 = por %p308, %p309
    %s312 = sadd.s32 %s311, 1
    %p315 = scmp.eq.s32.totalorder %s25, 1
    %p316 = scmp.ne.s32.totalorder %s311, %s313
    %p317 = scmp.eq.s32.totalorder %s25, 0
    %p318 = por %p316, %p317
    %p319 = scmp.ne.s32.totalorder %s311, %s313
    %p320 = scmp.eq.s32.totalorder %s30, 1
    %p321 = por %p319, %p320
    %p322 = scmp.ne.s32.totalorder %s313, %s314
    %p323 = scmp.eq.s32.totalorder %s30, 0
    %p324 = por %p322, %p323
    %p325 = scmp.ne.s32.totalorder %s313, %s314
    %p326 = scmp.eq.s32.totalorder %s31, 1
    %p327 = por %p325, %p326
    %p329 = scmp.ne.s32.totalorder %s314, %s328
    %p330 = scmp.eq.s32.totalorder %s31, 0
    %p331 = por %p329, %p330
    %s333 = sadd.s32 %s332, 1
    %p336 = scmp.eq.s32.totalorder %s25, 1
    %p337 = scmp.ne.s32.totalorder %s332, %s334
    %p338 = scmp.eq.s32.totalorder %s25, 0
    %p339 = por %p337, %p338
    %p340 = scmp.ne.s32.totalorder %s332, %s334
    %p341 = scmp.eq.s32.totalorder %s30, 1
    %p342 = por %p340, %p341
    %p343 = scmp.ne.s32.totalorder %s334, %s335
    %p344 = scmp.eq.s32.totalorder %s30, 0
    %p345 = por %p343, %p344
    %p346 = scmp.ne.s32.totalorder %s334, %s335
    %p347 = scmp.eq.s32.totalorder %s31, 1
    %p348 = por %p346, %p347
    %p350 = scmp.ne.s32.totalorder %s335, %s349
    %p351 = scmp.eq.s32.totalorder %s31, 0
    %p352 = por %p350, %p351
    %s354 = sadd.s32 %s353, 1
    %p357 = scmp.eq.s32.totalorder %s25, 1
    %p358 = scmp.ne.s32.totalorder %s353, %s355
    %p359 = scmp.eq.s32.totalorder %s25, 0
    %p360 = por %p358, %p359
    %p361 = scmp.ne.s32.totalorder %s353, %s355
    %p362 = scmp.eq.s32.totalorder %s30, 1
    %p363 = por %p361, %p362
    %p364 = scmp.ne.s32.totalorder %s355, %s356
    %p365 = scmp.eq.s32.totalorder %s30, 0
    %p366 = por %p364, %p365
    %p367 = scmp.ne.s32.totalorder %s355, %s356
    %p368 = scmp.eq.s32.totalorder %s31, 1
    %p369 = por %p367, %p368
    %p371 = scmp.ne.s32.totalorder %s356, %s370
    %p372 = scmp.eq.s32.totalorder %s31, 0
    %p373 = por %p371, %p372
    %s375 = sadd.s32 %s374, 1
    %p378 = scmp.eq.s32.totalorder %s25, 1
    %p379 = scmp.ne.s32.totalorder %s374, %s376
    %p380 = scmp.eq.s32.totalorder %s25, 0
    %p381 = por %p379, %p380
    %p382 = scmp.ne.s32.totalorder %s374, %s376
    %p383 = scmp.eq.s32.totalorder %s30, 1
    %p384 = por %p382, %p383
    %p385 = scmp.ne.s32.totalorder %s376, %s377
    %p386 = scmp.eq.s32.totalorder %s30, 0
    %p387 = por %p385, %p386
    %p388 = scmp.ne.s32.totalorder %s376, %s377
    %p389 = scmp.eq.s32.totalorder %s31, 1
    %p390 = por %p388, %p389
    %p392 = scmp.ne.s32.totalorder %s377, %s391
    %p393 = scmp.eq.s32.totalorder %s31, 0
    %p394 = por %p392, %p393
    %s396 = sadd.s32 %s395, 1
    %p399 = scmp.eq.s32.totalorder %s25, 1
    %p400 = scmp.ne.s32.totalorder %s395, %s397
    %p401 = scmp.eq.s32.totalorder %s25, 0
    %p402 = por %p400, %p401
    %p403 = scmp.ne.s32.totalorder %s395, %s397
    %p404 = scmp.eq.s32.totalorder %s30, 1
    %p405 = por %p403, %p404
    %p406 = scmp.ne.s32.totalorder %s397, %s398
    %p407 = scmp.eq.s32.totalorder %s30, 0
    %p408 = por %p406, %p407
    %p409 = scmp.ne.s32.totalorder %s397, %s398
    %p410 = scmp.eq.s32.totalorder %s31, 1
    %p411 = por %p409, %p410
    %p413 = scmp.ne.s32.totalorder %s398, %s412
    %p414 = scmp.eq.s32.totalorder %s31, 0
    %p415 = por %p413, %p414
    %s417 = sadd.s32 %s416, 1
    %p420 = scmp.eq.s32.totalorder %s25, 1
    %p421 = scmp.ne.s32.totalorder %s416, %s418
    %p422 = scmp.eq.s32.totalorder %s25, 0
    %p423 = por %p421, %p422
    %p424 = scmp.ne.s32.totalorder %s416, %s418
    %p425 = scmp.eq.s32.totalorder %s30, 1
    %p426 = por %p424, %p425
    %p427 = scmp.ne.s32.totalorder %s418, %s419
    %p428 = scmp.eq.s32.totalorder %s30, 0
    %p429 = por %p427, %p428
    %p430 = scmp.ne.s32.totalorder %s418, %s419
    %p431 = scmp.eq.s32.totalorder %s31, 1
    %p432 = por %p430, %p431
    %p434 = scmp.ne.s32.totalorder %s419, %s433
    %p435 = scmp.eq.s32.totalorder %s31, 0
    %p436 = por %p434, %p435
    %s437 = ssub.s32 %s25, %s32
    %p438 = scmp.eq.s32.totalorder %s437, 0
    %s440 = sadd.s32 %s439, 1
    %s441 = scalar_select %p438, %s439, %s440
    %p444 = pneg %p438
    %p445 = scmp.eq.s32.totalorder %s25, 1
    %p446 = por %p444, %p445
    %p447 = scmp.ne.s32.totalorder %s439, %s442
    %p448 = scmp.eq.s32.totalorder %s25, 0
    %p449 = por %p447, %p448
    %p450 = scmp.ne.s32.totalorder %s439, %s442
    %p451 = scmp.eq.s32.totalorder %s30, 1
    %p452 = por %p450, %p451
    %p453 = scmp.ne.s32.totalorder %s442, %s443
    %p454 = scmp.eq.s32.totalorder %s30, 0
    %p455 = por %p453, %p454
    %p456 = scmp.ne.s32.totalorder %s442, %s443
    %p457 = scmp.eq.s32.totalorder %s31, 1
    %p458 = por %p456, %p457
    %p460 = scmp.ne.s32.totalorder %s443, %s459
    %p461 = scmp.eq.s32.totalorder %s31, 0
    %p462 = por %p460, %p461
    %p463 = scmp.le.s32.totalorder 1, %s25
    %p464 = scmp.lt.s32.totalorder %s25, 3
    %p465 = pnand %p463, %p464
    %p466 = pneg %p465
    // Predicated region
    $region9: #{dense_block_pallas.1} parent=5 // pred_check
      _
    $region10: #{dense_block_pallas.1} parent=5 // pred_check_branch
      %468 = sbr.rel (%p465) target = $region12
    $region11: #{dense_block_pallas.1} parent=5 // pred_region
      %s469 = ssub.s32 %s25, 1
      // Predicated region
      $region13: #{dense_block_pallas.1} parent=11 // pred_check
        %p470 = pneg %p72
      $region14: #{dense_block_pallas.1} parent=11 // pred_check_branch
        %472 = sbr.rel (%p470) target = $region16
      $region15: #{dense_block_pallas.1} parent=11 // pred_region
        _
      $region16: #{dense_block_pallas.1} parent=11 // pred_fallthru
        _
      // Predicated region
      $region17: #{dense_block_pallas.1} parent=11 // pred_check
        %p473 = pneg %p93
      $region18: #{dense_block_pallas.1} parent=11 // pred_check_branch
        %475 = sbr.rel (%p473) target = $region20
      $region19: #{dense_block_pallas.1} parent=11 // pred_region
        _
      $region20: #{dense_block_pallas.1} parent=11 // pred_fallthru
        _
      // Predicated region
      $region21: #{dense_block_pallas.1} parent=11 // pred_check
        %p476 = pneg %p114
      $region22: #{dense_block_pallas.1} parent=11 // pred_check_branch
        %478 = sbr.rel (%p476) target = $region24
      $region23: #{dense_block_pallas.1} parent=11 // pred_region
        _
      $region24: #{dense_block_pallas.1} parent=11 // pred_fallthru
        _
      // Predicated region
      $region25: #{dense_block_pallas.1} parent=11 // pred_check
        %p479 = pneg %p135
      $region26: #{dense_block_pallas.1} parent=11 // pred_check_branch
        %481 = sbr.rel (%p479) target = $region28
      $region27: #{dense_block_pallas.1} parent=11 // pred_region
        _
      $region28: #{dense_block_pallas.1} parent=11 // pred_fallthru
        _
      // Predicated region
      $region29: #{dense_block_pallas.1} parent=11 // pred_check
        %p482 = pneg %p156
      $region30: #{dense_block_pallas.1} parent=11 // pred_check_branch
        %484 = sbr.rel (%p482) target = $region32
      $region31: #{dense_block_pallas.1} parent=11 // pred_region
        _
      $region32: #{dense_block_pallas.1} parent=11 // pred_fallthru
        _
      // Predicated region
      $region33: #{dense_block_pallas.1} parent=11 // pred_check
        %p485 = pneg %p177
      $region34: #{dense_block_pallas.1} parent=11 // pred_check_branch
        %487 = sbr.rel (%p485) target = $region36
      $region35: #{dense_block_pallas.1} parent=11 // pred_region
        _
      $region36: #{dense_block_pallas.1} parent=11 // pred_fallthru
        _
      // Predicated region
      $region37: #{dense_block_pallas.1} parent=11 // pred_check
        %p488 = pneg %p198
      $region38: #{dense_block_pallas.1} parent=11 // pred_check_branch
        %490 = sbr.rel (%p488) target = $region40
      $region39: #{dense_block_pallas.1} parent=11 // pred_region
        _
      $region40: #{dense_block_pallas.1} parent=11 // pred_fallthru
        _
      // Predicated region
      $region41: #{dense_block_pallas.1} parent=11 // pred_check
        %p491 = pneg %p219
      $region42: #{dense_block_pallas.1} parent=11 // pred_check_branch
        %493 = sbr.rel (%p491) target = $region44
      $region43: #{dense_block_pallas.1} parent=11 // pred_region
        _
      $region44: #{dense_block_pallas.1} parent=11 // pred_fallthru
        _
      // Predicated region
      $region45: #{dense_block_pallas.1} parent=11 // pred_check
        %p494 = pneg %p240
      $region46: #{dense_block_pallas.1} parent=11 // pred_check_branch
        %496 = sbr.rel (%p494) target = $region48
      $region47: #{dense_block_pallas.1} parent=11 // pred_region
        _
      $region48: #{dense_block_pallas.1} parent=11 // pred_fallthru
        _
      // Predicated region
      $region49: #{dense_block_pallas.1} parent=11 // pred_check
        %p497 = pneg %p261
      $region50: #{dense_block_pallas.1} parent=11 // pred_check_branch
        %499 = sbr.rel (%p497) target = $region52
      $region51: #{dense_block_pallas.1} parent=11 // pred_region
        _
      $region52: #{dense_block_pallas.1} parent=11 // pred_fallthru
        _
      // Predicated region
      $region53: #{dense_block_pallas.1} parent=11 // pred_check
        %p500 = pneg %p282
      $region54: #{dense_block_pallas.1} parent=11 // pred_check_branch
        %502 = sbr.rel (%p500) target = $region56
      $region55: #{dense_block_pallas.1} parent=11 // pred_region
        _
      $region56: #{dense_block_pallas.1} parent=11 // pred_fallthru
        _
      // Predicated region
      $region57: #{dense_block_pallas.1} parent=11 // pred_check
        %p503 = pneg %p303
      $region58: #{dense_block_pallas.1} parent=11 // pred_check_branch
        %505 = sbr.rel (%p503) target = $region60
      $region59: #{dense_block_pallas.1} parent=11 // pred_region
        _
      $region60: #{dense_block_pallas.1} parent=11 // pred_fallthru
        _
      // Predicated region
      $region61: #{dense_block_pallas.1} parent=11 // pred_check
        %p506 = pneg %p324
      $region62: #{dense_block_pallas.1} parent=11 // pred_check_branch
        %508 = sbr.rel (%p506) target = $region64
      $region63: #{dense_block_pallas.1} parent=11 // pred_region
        _
      $region64: #{dense_block_pallas.1} parent=11 // pred_fallthru
        _
      // Predicated region
      $region65: #{dense_block_pallas.1} parent=11 // pred_check
        %p509 = pneg %p345
      $region66: #{dense_block_pallas.1} parent=11 // pred_check_branch
        %511 = sbr.rel (%p509) target = $region68
      $region67: #{dense_block_pallas.1} parent=11 // pred_region
        _
      $region68: #{dense_block_pallas.1} parent=11 // pred_fallthru
        _
      // Predicated region
      $region69: #{dense_block_pallas.1} parent=11 // pred_check
        %p512 = pneg %p366
      $region70: #{dense_block_pallas.1} parent=11 // pred_check_branch
        %514 = sbr.rel (%p512) target = $region72
      $region71: #{dense_block_pallas.1} parent=11 // pred_region
        _
      $region72: #{dense_block_pallas.1} parent=11 // pred_fallthru
        _
      // Predicated region
      $region73: #{dense_block_pallas.1} parent=11 // pred_check
        %p515 = pneg %p387
      $region74: #{dense_block_pallas.1} parent=11 // pred_check_branch
        %517 = sbr.rel (%p515) target = $region76
      $region75: #{dense_block_pallas.1} parent=11 // pred_region
        _
      $region76: #{dense_block_pallas.1} parent=11 // pred_fallthru
        _
      // Predicated region
      $region77: #{dense_block_pallas.1} parent=11 // pred_check
        %p518 = pneg %p408
      $region78: #{dense_block_pallas.1} parent=11 // pred_check_branch
        %520 = sbr.rel (%p518) target = $region80
      $region79: #{dense_block_pallas.1} parent=11 // pred_region
        _
      $region80: #{dense_block_pallas.1} parent=11 // pred_fallthru
        _
      // Predicated region
      $region81: #{dense_block_pallas.1} parent=11 // pred_check
        %p521 = pneg %p429
      $region82: #{dense_block_pallas.1} parent=11 // pred_check_branch
        %523 = sbr.rel (%p521) target = $region84
      $region83: #{dense_block_pallas.1} parent=11 // pred_region
        _
      $region84: #{dense_block_pallas.1} parent=11 // pred_fallthru
        _
    $region12: #{dense_block_pallas.1} parent=5 // pred_fallthru
      _
    %p524 = scmp.lt.s32.totalorder %s25, 2
    // Predicated region
    $region85: #{dense_block_pallas.1} parent=5 // pred_check
      %p525 = pneg %p524
    $region86: #{dense_block_pallas.1} parent=5 // pred_check_branch
      %527 = sbr.rel (%p525) target = $region88
    $region87: #{dense_block_pallas.1} parent=5 // pred_region
      // Predicated region
      $region89: #{dense_block_pallas.1} parent=87 // pred_check
        %p528 = pneg %p45
      $region90: #{dense_block_pallas.1} parent=87 // pred_check_branch
        %530 = sbr.rel (%p528) target = $region92
      $region91: #{dense_block_pallas.1} parent=87 // pred_region
        %p531 = scmp.lt.s32.totalorder %s25, 1
        %s532 = scalar_select %p531, %s25, 1
        %s533 = smul.addr %s532, 32
        %s534 = smul.addr %s533, 8
        %s535 = scalar_lea.vmem %s0, %s534
      $region92: #{dense_block_pallas.1} parent=87 // pred_fallthru
        _
    $region88: #{dense_block_pallas.1} parent=5 // pred_fallthru
      _
    %p536 = scmp.le.s32.totalorder 1, %s25
    %p537 = scmp.lt.s32.totalorder %s25, 3
    %p538 = pnand %p536, %p537
    %p539 = pneg %p538
    // Predicated region
    $region93: #{dense_block_pallas.1} parent=5 // pred_check
      _
    $region94: #{dense_block_pallas.1} parent=5 // pred_check_branch
      %541 = sbr.rel (%p538) target = $region96
    $region95: #{dense_block_pallas.1} parent=5 // pred_region
      %s542 = ssub.s32 %s25, 1
      %p543 = scmp.lt.s32.totalorder %s30, 1
      %s544 = scalar_select %p543, %s30, 1
      %s545 = smul.addr %s544, 32
      %s546 = smul.addr %s545, 8
      %s547 = scalar_lea.vmem %s0, %s546
      %p548 = pneg %p51
      %p549 = pneg %p48
      %p550 = pneg %p72
      %p551 = pneg %p69
      %p552 = pneg %p93
      %p553 = pneg %p90
      %p554 = pneg %p114
      %p555 = pneg %p111
      %p556 = pneg %p135
      %p557 = pneg %p132
      %p558 = pneg %p156
      %p559 = pneg %p153
      %p560 = pneg %p177
      %p561 = pneg %p174
      %p562 = pneg %p198
      %p563 = pneg %p195
      %p564 = pneg %p219
      %p565 = pneg %p216
      %p566 = pneg %p240
      %p567 = pneg %p237
      %p568 = pneg %p261
      %p569 = pneg %p258
      %p570 = pneg %p282
      %p571 = pneg %p279
      %p572 = pneg %p303
      %p573 = pneg %p300
      %p574 = pneg %p324
      %p575 = pneg %p321
      %p576 = pneg %p345
      %p577 = pneg %p342
      %p578 = pneg %p366
      %p579 = pneg %p363
      %p580 = pneg %p387
      %p581 = pneg %p384
      %p582 = pneg %p408
      %p583 = pneg %p405
      %p584 = pneg %p429
      %p585 = pneg %p426
      %p586 = pneg %p455
      %p587 = pneg %p452
      %p588 = scmp.lt.s32.totalorder %s30, 1
      %s589 = scalar_select %p588, %s30, 1
      %s590 = smul.addr %s589, 32
      %s591 = smul.addr %s590, 8
      %s592 = scalar_lea.vmem %s19, %s591
      %p593 = scmp.lt.s32.totalorder %s30, 1
      %s594 = scalar_select %p593, %s30, 1
      %s595 = smul.addr %s594, 32
      %s596 = smul.addr %s595, 8
      %s597 = scalar_lea.vmem %s0, %s596
      %p598 = scmp.lt.s32.totalorder %s30, 1
      %s599 = scalar_select %p598, %s30, 1
      %s600 = smul.addr %s599, 32
      %s601 = smul.addr %s600, 8
      %s602 = scalar_lea.vmem %s19, %s601
      %vm604 = vcmask 293888
      %605 = vst.msk [vmem:[#allocation2] sm:$0xff] %vm604, 0.0
      %606 = vst.msk [vmem:[#allocation2 + $0x8] sm:$0xff] %vm604, 0.0
      %vm607 = vcmask 287744
      %608 = vst.msk [vmem:[#allocation2 + $0x10] sm:$0x3] %vm607, 0.0
      %609 = vst.msk [vmem:[#allocation2 + $0x18] sm:$0xff] %vm604, 0.0
      %610 = vst.msk [vmem:[#allocation2 + $0x20] sm:$0xff] %vm604, 0.0
      %611 = vst.msk [vmem:[#allocation2 + $0x28] sm:$0x3] %vm607, 0.0
      %612 = vst.msk [vmem:[#allocation2 + $0x30] sm:$0xff] %vm604, 0.0
      %613 = vst.msk [vmem:[#allocation2 + $0x38] sm:$0xff] %vm604, 0.0
      %614 = vst.msk [vmem:[#allocation2 + $0x40] sm:$0x3] %vm607, 0.0
      %615 = vst.msk [vmem:[#allocation2 + $0x48] sm:$0xff] %vm604, 0.0
      %616 = vst.msk [vmem:[#allocation2 + $0x50] sm:$0xff] %vm604, 0.0
      %617 = vst.msk [vmem:[#allocation2 + $0x58] sm:$0x3] %vm607, 0.0
      %618 = vst.msk [vmem:[#allocation2 + $0x60] sm:$0xff] %vm604, 0.0
      %619 = vst.msk [vmem:[#allocation2 + $0x68] sm:$0xff] %vm604, 0.0
      %620 = vst.msk [vmem:[#allocation2 + $0x70] sm:$0x3] %vm607, 0.0
      %621 = vst.msk [vmem:[#allocation2 + $0x78] sm:$0xff] %vm604, 0.0
      %622 = vst.msk [vmem:[#allocation2 + $0x80] sm:$0xff] %vm604, 0.0
      %623 = vst.msk [vmem:[#allocation2 + $0x88] sm:$0x3] %vm607, 0.0
      %624 = vst.msk [vmem:[#allocation2 + $0x90] sm:$0xff] %vm604, 0.0
      %625 = vst.msk [vmem:[#allocation2 + $0x98] sm:$0xff] %vm604, 0.0
      %626 = vst.msk [vmem:[#allocation2 + $0xa0] sm:$0x3] %vm607, 0.0
      %627 = vst.msk [vmem:[#allocation2 + $0xa8] sm:$0xff] %vm604, 0.0
      %628 = vst.msk [vmem:[#allocation2 + $0xb0] sm:$0xff] %vm604, 0.0
      %629 = vst.msk [vmem:[#allocation2 + $0xb8] sm:$0x3] %vm607, 0.0
      %630 = vst.msk [vmem:[#allocation2 + $0xc0] sm:$0xff] %vm604, 0.0
      %631 = vst.msk [vmem:[#allocation2 + $0xc8] sm:$0xff] %vm604, 0.0
      %632 = vst.msk [vmem:[#allocation2 + $0xd0] sm:$0x3] %vm607, 0.0
      %633 = vst.msk [vmem:[#allocation2 + $0xd8] sm:$0xff] %vm604, 0.0
      %634 = vst.msk [vmem:[#allocation2 + $0xe0] sm:$0xff] %vm604, 0.0
      %635 = vst.msk [vmem:[#allocation2 + $0xe8] sm:$0x3] %vm607, 0.0
      %636 = vst.msk [vmem:[#allocation2 + $0xf0] sm:$0xff] %vm604, 0.0
      %637 = vst.msk [vmem:[#allocation2 + $0xf8] sm:$0xff] %vm604, 0.0
      %638 = vst.msk [vmem:[#allocation2 + $0x100] sm:$0x3] %vm607, 0.0
      %639 = vst.msk [vmem:[#allocation2 + $0x108] sm:$0xff] %vm604, 0.0
      %640 = vst.msk [vmem:[#allocation2 + $0x110] sm:$0xff] %vm604, 0.0
      %641 = vst.msk [vmem:[#allocation2 + $0x118] sm:$0x3] %vm607, 0.0
      %642 = vst.msk [vmem:[#allocation2 + $0x120] sm:$0xff] %vm604, 0.0
      %643 = vst.msk [vmem:[#allocation2 + $0x128] sm:$0xff] %vm604, 0.0
      %644 = vst.msk [vmem:[#allocation2 + $0x130] sm:$0x3] %vm607, 0.0
      %645 = vst.msk [vmem:[#allocation2 + $0x138] sm:$0xff] %vm604, 0.0
      %646 = vst.msk [vmem:[#allocation2 + $0x140] sm:$0xff] %vm604, 0.0
      %647 = vst.msk [vmem:[#allocation2 + $0x148] sm:$0x3] %vm607, 0.0
      %648 = vst.msk [vmem:[#allocation2 + $0x150] sm:$0xff] %vm604, 0.0
      %649 = vst.msk [vmem:[#allocation2 + $0x158] sm:$0xff] %vm604, 0.0
      %650 = vst.msk [vmem:[#allocation2 + $0x160] sm:$0x3] %vm607, 0.0
      %651 = vst.msk [vmem:[#allocation2 + $0x168] sm:$0xff] %vm604, 0.0
      %652 = vst.msk [vmem:[#allocation2 + $0x170] sm:$0xff] %vm604, 0.0
      %653 = vst.msk [vmem:[#allocation2 + $0x178] sm:$0x3] %vm607, 0.0
      %654 = vst.msk [vmem:[#allocation2 + $0x180] sm:$0xff] %vm604, 0.0
      %655 = vst.msk [vmem:[#allocation2 + $0x188] sm:$0xff] %vm604, 0.0
      %656 = vst.msk [vmem:[#allocation2 + $0x190] sm:$0x3] %vm607, 0.0
      %657 = vst.msk [vmem:[#allocation2 + $0x198] sm:$0xff] %vm604, 0.0
      %658 = vst.msk [vmem:[#allocation2 + $0x1a0] sm:$0xff] %vm604, 0.0
      %659 = vst.msk [vmem:[#allocation2 + $0x1a8] sm:$0x3] %vm607, 0.0
      %v660 = vld [vmem:[%s597] sm:$0xff]
      %v661 = vld [vmem:[%s597 + $0x8] sm:$0xff]
      %v662 = vld [vmem:[%s597 + $0x10] sm:$0xff]
      %v663 = vld [vmem:[%s597 + $0x18] sm:$0xff]
      %v664 = vld [vmem:[%s597 + $0x20] sm:$0xff]
      %v665 = vld [vmem:[%s597 + $0x28] sm:$0xff]
      %v666 = vld [vmem:[%s597 + $0x30] sm:$0xff]
      %v667 = vld [vmem:[%s597 + $0x38] sm:$0xff]
      %v668 = vld [vmem:[%s597 + $0x40] sm:$0xff]
      %v669 = vld [vmem:[%s597 + $0x48] sm:$0xff]
      %v670 = vld [vmem:[%s597 + $0x50] sm:$0xff]
      %v671 = vld [vmem:[%s597 + $0x58] sm:$0xff]
      %v672 = vld [vmem:[%s597 + $0x60] sm:$0xff]
      %v673 = vld [vmem:[%s597 + $0x68] sm:$0xff]
      %v674 = vld [vmem:[%s597 + $0x70] sm:$0xff]
      %v675 = vld [vmem:[%s597 + $0x78] sm:$0xff]
      %v676 = vld [vmem:[%s597 + $0x80] sm:$0xff]
      %v677 = vld [vmem:[%s597 + $0x88] sm:$0xff]
      %v678 = vld [vmem:[%s597 + $0x90] sm:$0xff]
      %v679 = vld [vmem:[%s597 + $0x98] sm:$0xff]
      %v680 = vld [vmem:[%s597 + $0xa0] sm:$0xff]
      %v681 = vld [vmem:[%s597 + $0xa8] sm:$0xff]
      %v682 = vld [vmem:[%s597 + $0xb0] sm:$0xff]
      %v683 = vld [vmem:[%s597 + $0xb8] sm:$0xff]
      %v684 = vld [vmem:[%s597 + $0xc0] sm:$0xff]
      %v685 = vld [vmem:[%s597 + $0xc8] sm:$0xff]
      %v686 = vld [vmem:[%s597 + $0xd0] sm:$0xff]
      %v687 = vld [vmem:[%s597 + $0xd8] sm:$0xff]
      %v688 = vld [vmem:[%s597 + $0xe0] sm:$0xff]
      %v689 = vld [vmem:[%s597 + $0xe8] sm:$0xff]
      %v690 = vld [vmem:[%s597 + $0xf0] sm:$0xff]
      %v691 = vld [vmem:[%s597 + $0xf8] sm:$0xff]
      %vm692 = vcmask 31744
      %693 = vst.msk [vmem:[%s602] sm:$0xff] %vm692, %v660
      %694 = vst.msk [vmem:[%s602 + $0x8] sm:$0xff] %vm692, %v661
      %695 = vst.msk [vmem:[%s602 + $0x10] sm:$0xff] %vm692, %v662
      %696 = vst.msk [vmem:[%s602 + $0x18] sm:$0xff] %vm692, %v663
      %697 = vst.msk [vmem:[%s602 + $0x20] sm:$0xff] %vm692, %v664
      %698 = vst.msk [vmem:[%s602 + $0x28] sm:$0xff] %vm692, %v665
      %699 = vst.msk [vmem:[%s602 + $0x30] sm:$0xff] %vm692, %v666
      %700 = vst.msk [vmem:[%s602 + $0x38] sm:$0xff] %vm692, %v667
      %701 = vst.msk [vmem:[%s602 + $0x40] sm:$0xff] %vm692, %v668
      %702 = vst.msk [vmem:[%s602 + $0x48] sm:$0xff] %vm692, %v669
      %703 = vst.msk [vmem:[%s602 + $0x50] sm:$0xff] %vm692, %v670
      %704 = vst.msk [vmem:[%s602 + $0x58] sm:$0xff] %vm692, %v671
      %705 = vst.msk [vmem:[%s602 + $0x60] sm:$0xff] %vm692, %v672
      %706 = vst.msk [vmem:[%s602 + $0x68] sm:$0xff] %vm692, %v673
      %707 = vst.msk [vmem:[%s602 + $0x70] sm:$0xff] %vm692, %v674
      %708 = vst.msk [vmem:[%s602 + $0x78] sm:$0xff] %vm692, %v675
      %709 = vst.msk [vmem:[%s602 + $0x80] sm:$0xff] %vm692, %v676
      %710 = vst.msk [vmem:[%s602 + $0x88] sm:$0xff] %vm692, %v677
      %711 = vst.msk [vmem:[%s602 + $0x90] sm:$0xff] %vm692, %v678
      %712 = vst.msk [vmem:[%s602 + $0x98] sm:$0xff] %vm692, %v679
      %713 = vst.msk [vmem:[%s602 + $0xa0] sm:$0xff] %vm692, %v680
      %714 = vst.msk [vmem:[%s602 + $0xa8] sm:$0xff] %vm692, %v681
      %715 = vst.msk [vmem:[%s602 + $0xb0] sm:$0xff] %vm692, %v682
      %716 = vst.msk [vmem:[%s602 + $0xb8] sm:$0xff] %vm692, %v683
      %717 = vst.msk [vmem:[%s602 + $0xc0] sm:$0xff] %vm692, %v684
      %718 = vst.msk [vmem:[%s602 + $0xc8] sm:$0xff] %vm692, %v685
      %719 = vst.msk [vmem:[%s602 + $0xd0] sm:$0xff] %vm692, %v686
      %720 = vst.msk [vmem:[%s602 + $0xd8] sm:$0xff] %vm692, %v687
      %721 = vst.msk [vmem:[%s602 + $0xe0] sm:$0xff] %vm692, %v688
      %722 = vst.msk [vmem:[%s602 + $0xe8] sm:$0xff] %vm692, %v689
      %723 = vst.msk [vmem:[%s602 + $0xf0] sm:$0xff] %vm692, %v690
      %724 = vst.msk [vmem:[%s602 + $0xf8] sm:$0xff] %vm692, %v691
      %v725 = vld [vmem:[%s602] sm:$0xff]
      %v726 = vld [vmem:[%s602 + $0x8] sm:$0xff]
      %v727 = vld [vmem:[%s602 + $0x10] sm:$0xff]
      %v728 = vld [vmem:[%s602 + $0x18] sm:$0xff]
      %v729 = vld [vmem:[%s602 + $0x20] sm:$0xff]
      %v730 = vld [vmem:[%s602 + $0x28] sm:$0xff]
      %v731 = vld [vmem:[%s602 + $0x30] sm:$0xff]
      %v732 = vld [vmem:[%s602 + $0x38] sm:$0xff]
      %v733 = vld [vmem:[%s602 + $0x40] sm:$0xff]
      %v734 = vld [vmem:[%s602 + $0x48] sm:$0xff]
      %v735 = vld [vmem:[%s602 + $0x50] sm:$0xff]
      %v736 = vld [vmem:[%s602 + $0x58] sm:$0xff]
      %v737 = vld [vmem:[%s602 + $0x60] sm:$0xff]
      %v738 = vld [vmem:[%s602 + $0x68] sm:$0xff]
      %v739 = vld [vmem:[%s602 + $0x70] sm:$0xff]
      %v740 = vld [vmem:[%s602 + $0x78] sm:$0xff]
      %v741 = vld [vmem:[%s602 + $0x80] sm:$0xff]
      %v742 = vld [vmem:[%s602 + $0x88] sm:$0xff]
      %v743 = vld [vmem:[%s602 + $0x90] sm:$0xff]
      %v744 = vld [vmem:[%s602 + $0x98] sm:$0xff]
      %v745 = vld [vmem:[%s602 + $0xa0] sm:$0xff]
      %v746 = vld [vmem:[%s602 + $0xa8] sm:$0xff]
      %v747 = vld [vmem:[%s602 + $0xb0] sm:$0xff]
      %v748 = vld [vmem:[%s602 + $0xb8] sm:$0xff]
      %v749 = vld [vmem:[%s602 + $0xc0] sm:$0xff]
      %v750 = vld [vmem:[%s602 + $0xc8] sm:$0xff]
      %v751 = vld [vmem:[%s602 + $0xd0] sm:$0xff]
      %v752 = vld [vmem:[%s602 + $0xd8] sm:$0xff]
      %v753 = vld [vmem:[%s602 + $0xe0] sm:$0xff]
      %v754 = vld [vmem:[%s602 + $0xe8] sm:$0xff]
      %v755 = vld [vmem:[%s602 + $0xf0] sm:$0xff]
      %v756 = vld [vmem:[%s602 + $0xf8] sm:$0xff]
      %v757 = vld [vmem:[%s1] sm:$0x1]
      %v759 = vlaneseq
      %v760 = vshrl.u32 %v759, 7
      %v761 = vsub.s32 0, %v760
      %v762 = vrot.slane %v757, %v761
      %v764 = vmul.f32 %v725, %v762
      %v765 = vmul.f32 %v726, %v762
      %v766 = vmul.f32 %v727, %v762
      %v767 = vmul.f32 %v728, %v762
      %v768 = vmul.f32 %v729, %v762
      %v769 = vmul.f32 %v730, %v762
      %v770 = vmul.f32 %v731, %v762
      %v771 = vmul.f32 %v732, %v762
      %v772 = vmul.f32 %v733, %v762
      %v773 = vmul.f32 %v734, %v762
      %v774 = vmul.f32 %v735, %v762
      %v775 = vmul.f32 %v736, %v762
      %v776 = vmul.f32 %v737, %v762
      %v777 = vmul.f32 %v738, %v762
      %v778 = vmul.f32 %v739, %v762
      %v779 = vmul.f32 %v740, %v762
      %v780 = vmul.f32 %v741, %v762
      %v781 = vmul.f32 %v742, %v762
      %v782 = vmul.f32 %v743, %v762
      %v783 = vmul.f32 %v744, %v762
      %v784 = vmul.f32 %v745, %v762
      %v785 = vmul.f32 %v746, %v762
      %v786 = vmul.f32 %v747, %v762
      %v787 = vmul.f32 %v748, %v762
      %v788 = vmul.f32 %v749, %v762
      %v789 = vmul.f32 %v750, %v762
      %v790 = vmul.f32 %v751, %v762
      %v791 = vmul.f32 %v752, %v762
      %v792 = vmul.f32 %v753, %v762
      %v793 = vmul.f32 %v754, %v762
      %v794 = vmul.f32 %v755, %v762
      %v795 = vmul.f32 %v756, %v762
      %v796 = vld [vmem:[%s2] sm:$0x1]
      %v798 = vlaneseq
      %v799 = vshrl.u32 %v798, 7
      %v800 = vsub.s32 0, %v799
      %v801 = vrot.slane %v796, %v800
      %v803 = vadd.f32 %v764, %v801
      %v804 = vadd.f32 %v765, %v801
      %v805 = vadd.f32 %v766, %v801
      %v806 = vadd.f32 %v767, %v801
      %v807 = vadd.f32 %v768, %v801
      %v808 = vadd.f32 %v769, %v801
      %v809 = vadd.f32 %v770, %v801
      %v810 = vadd.f32 %v771, %v801
      %v811 = vadd.f32 %v772, %v801
      %v812 = vadd.f32 %v773, %v801
      %v813 = vadd.f32 %v774, %v801
      %v814 = vadd.f32 %v775, %v801
      %v815 = vadd.f32 %v776, %v801
      %v816 = vadd.f32 %v777, %v801
      %v817 = vadd.f32 %v778, %v801
      %v818 = vadd.f32 %v779, %v801
      %v819 = vadd.f32 %v780, %v801
      %v820 = vadd.f32 %v781, %v801
      %v821 = vadd.f32 %v782, %v801
      %v822 = vadd.f32 %v783, %v801
      %v823 = vadd.f32 %v784, %v801
      %v824 = vadd.f32 %v785, %v801
      %v825 = vadd.f32 %v786, %v801
      %v826 = vadd.f32 %v787, %v801
      %v827 = vadd.f32 %v788, %v801
      %v828 = vadd.f32 %v789, %v801
      %v829 = vadd.f32 %v790, %v801
      %v830 = vadd.f32 %v791, %v801
      %v831 = vadd.f32 %v792, %v801
      %v832 = vadd.f32 %v793, %v801
      %v833 = vadd.f32 %v794, %v801
      %v834 = vadd.f32 %v795, %v801
      %v835 = vmax.f32 %v803, 0.0
      %v836 = vmax.f32 %v804, 0.0
      %v837 = vmax.f32 %v805, 0.0
      %v838 = vmax.f32 %v806, 0.0
      %v839 = vmax.f32 %v807, 0.0
      %v840 = vmax.f32 %v808, 0.0
      %v841 = vmax.f32 %v809, 0.0
      %v842 = vmax.f32 %v810, 0.0
      %v843 = vmax.f32 %v811, 0.0
      %v844 = vmax.f32 %v812, 0.0
      %v845 = vmax.f32 %v813, 0.0
      %v846 = vmax.f32 %v814, 0.0
      %v847 = vmax.f32 %v815, 0.0
      %v848 = vmax.f32 %v816, 0.0
      %v849 = vmax.f32 %v817, 0.0
      %v850 = vmax.f32 %v818, 0.0
      %v851 = vmax.f32 %v819, 0.0
      %v852 = vmax.f32 %v820, 0.0
      %v853 = vmax.f32 %v821, 0.0
      %v854 = vmax.f32 %v822, 0.0
      %v855 = vmax.f32 %v823, 0.0
      %v856 = vmax.f32 %v824, 0.0
      %v857 = vmax.f32 %v825, 0.0
      %v858 = vmax.f32 %v826, 0.0
      %v859 = vmax.f32 %v827, 0.0
      %v860 = vmax.f32 %v828, 0.0
      %v861 = vmax.f32 %v829, 0.0
      %v862 = vmax.f32 %v830, 0.0
      %v863 = vmax.f32 %v831, 0.0
      %v864 = vmax.f32 %v832, 0.0
      %v865 = vmax.f32 %v833, 0.0
      %v866 = vmax.f32 %v834, 0.0
      %v867 = vpack.c.bf16 %v836, %v835
      %v868 = vpack.c.bf16 %v838, %v837
      %v869 = vpack.c.bf16 %v840, %v839
      %v870 = vpack.c.bf16 %v842, %v841
      %v871 = vpack.c.bf16 %v844, %v843
      %v872 = vpack.c.bf16 %v846, %v845
      %v873 = vpack.c.bf16 %v848, %v847
      %v874 = vpack.c.bf16 %v850, %v849
      %v875 = vpack.c.bf16 %v852, %v851
      %v876 = vpack.c.bf16 %v854, %v853
      %v877 = vpack.c.bf16 %v856, %v855
      %v878 = vpack.c.bf16 %v858, %v857
      %v879 = vpack.c.bf16 %v860, %v859
      %v880 = vpack.c.bf16 %v862, %v861
      %v881 = vpack.c.bf16 %v864, %v863
      %v882 = vpack.c.bf16 %v866, %v865
      %v883 = vld [vmem:[%s3] sm:$0x3]
      %v885 = vsel %vm692, %v867, 0
      %v888 = vsel %vm692, %v868, 0
      %v891 = vsel %vm692, %v869, 0
      %v894 = vsel %vm692, %v870, 0
      %v897 = vsel %vm692, %v871, 0
      %v900 = vsel %vm692, %v872, 0
      %v903 = vsel %vm692, %v873, 0
      %v906 = vsel %vm692, %v874, 0
      %v909 = vsel %vm692, %v875, 0
      %v912 = vsel %vm692, %v876, 0
      %v915 = vsel %vm692, %v877, 0
      %v918 = vsel %vm692, %v878, 0
      %v921 = vsel %vm692, %v879, 0
      %v924 = vsel %vm692, %v880, 0
      %v927 = vsel %vm692, %v881, 0
      %v930 = vsel %vm692, %v882, 0
      %vm932 = vcmask 1041408
      %v934 = vsel %vm932, %v883, 0
      %936 = vmatprep.subr.bf16.mxu0 0
      %937 = vmatpush1.bf16.msra.mxu0 %v934
      %938 = vmatprep.subr.bf16.mxu0 0
      %939 = vmatpush1.bf16.msra.mxu0 0
      %940 = vmatprep.subr.bf16.mxu0 0
      %941 = vmatpush1.bf16.msra.mxu0 0
      %942 = vmatprep.subr.bf16.mxu0 0
      %943 = vmatpush1.bf16.msra.mxu0 0
      %944 = vmatprep.subr.bf16.mxu0 0
      %945 = vmatpush1.bf16.msra.mxu0 0
      %946 = vmatprep.subr.bf16.mxu0 0
      %947 = vmatpush1.bf16.msra.mxu0 0
      %948 = vmatprep.subr.bf16.mxu0 0
      %949 = vmatpush1.bf16.msra.mxu0 0
      %950 = vmatprep.subr.bf16.mxu0 0
      %951 = vmatpush1.bf16.msra.mxu0 0
      %952 = vmatprep.subr.bf16.mxu0 0
      %953 = vmatpush1.bf16.msra.mxu0 0
      %954 = vmatprep.subr.bf16.mxu0 0
      %955 = vmatpush1.bf16.msra.mxu0 0
      %956 = vmatprep.subr.bf16.mxu0 0
      %957 = vmatpush1.bf16.msra.mxu0 0
      %958 = vmatprep.subr.bf16.mxu0 0
      %959 = vmatpush1.bf16.msra.mxu0 0
      %960 = vmatprep.subr.bf16.mxu0 0
      %961 = vmatpush1.bf16.msra.mxu0 0
      %962 = vmatprep.subr.bf16.mxu0 0
      %963 = vmatpush1.bf16.msra.mxu0 0
      %964 = vmatprep.subr.bf16.mxu0 0
      %965 = vmatpush1.bf16.msra.mxu0 0
      %966 = vmatprep.subr.bf16.mxu0 0
      %967 = vmatpush1.bf16.msra.mxu0 0
      %968 = vmatprep.mubr.bf16.mxu0 0
      %969 = vmatmul.mubr.bf16.gmra.mrb[0].mxu0 %v885
      %v970 = vpop.f32.mrb[0].mxu0
      %v971 = vadd.f32 0.0, %v970
      %v972 = vpop.f32.mrb[0].mxu0
      %v973 = vpop.f32.mrb[0].mxu0
      %v974 = vadd.f32 0.0, %v973
      %v975 = vpop.f32.mrb[0].mxu0
      %976 = vmatprep.mubr.bf16.mxu0 0
      %977 = vmatmul.mubr.bf16.gmra.mrb[0].mxu0 %v888
      %v978 = vpop.f32.mrb[0].mxu0
      %v979 = vadd.f32 0.0, %v978
      %v980 = vpop.f32.mrb[0].mxu0
      %v981 = vpop.f32.mrb[0].mxu0
      %v982 = vadd.f32 0.0, %v981
      %v983 = vpop.f32.mrb[0].mxu0
      %984 = vmatprep.mubr.bf16.mxu0 0
      %985 = vmatmul.mubr.bf16.gmra.mrb[0].mxu0 %v891
      %v986 = vpop.f32.mrb[0].mxu0
      %v987 = vadd.f32 0.0, %v986
      %v988 = vpop.f32.mrb[0].mxu0
      %v989 = vpop.f32.mrb[0].mxu0
      %v990 = vadd.f32 0.0, %v989
      %v991 = vpop.f32.mrb[0].mxu0
      %992 = vmatprep.mubr.bf16.mxu0 0
      %993 = vmatmul.mubr.bf16.gmra.mrb[0].mxu0 %v894
      %v994 = vpop.f32.mrb[0].mxu0
      %v995 = vadd.f32 0.0, %v994
      %v996 = vpop.f32.mrb[0].mxu0
      %v997 = vpop.f32.mrb[0].mxu0
      %v998 = vadd.f32 0.0, %v997
      %v999 = vpop.f32.mrb[0].mxu0
      %1000 = vmatprep.mubr.bf16.mxu0 0
      %1001 = vmatmul.mubr.bf16.gmra.mrb[0].mxu0 %v897
      %v1002 = vpop.f32.mrb[0].mxu0
      %v1003 = vadd.f32 0.0, %v1002
      %v1004 = vpop.f32.mrb[0].mxu0
      %v1005 = vpop.f32.mrb[0].mxu0
      %v1006 = vadd.f32 0.0, %v1005
      %v1007 = vpop.f32.mrb[0].mxu0
      %1008 = vmatprep.mubr.bf16.mxu0 0
      %1009 = vmatmul.mubr.bf16.gmra.mrb[0].mxu0 %v900
      %v1010 = vpop.f32.mrb[0].mxu0
      %v1011 = vadd.f32 0.0, %v1010
      %v1012 = vpop.f32.mrb[0].mxu0
      %v1013 = vpop.f32.mrb[0].mxu0
      %v1014 = vadd.f32 0.0, %v1013
      %v1015 = vpop.f32.mrb[0].mxu0
      %1016 = vmatprep.mubr.bf16.mxu0 0
      %1017 = vmatmul.mubr.bf16.gmra.mrb[0].mxu0 %v903
      %v1018 = vpop.f32.mrb[0].mxu0
      %v1019 = vadd.f32 0.0, %v1018
      %v1020 = vpop.f32.mrb[0].mxu0
      %v1021 = vpop.f32.mrb[0].mxu0
      %v1022 = vadd.f32 0.0, %v1021
      %v1023 = vpop.f32.mrb[0].mxu0
      %1024 = vmatprep.mubr.bf16.mxu0 0
      %1025 = vmatmul.mubr.bf16.gmra.mrb[0].mxu0 %v906
      %v1026 = vpop.f32.mrb[0].mxu0
      %v1027 = vadd.f32 0.0, %v1026
      %v1028 = vpop.f32.mrb[0].mxu0
      %v1029 = vpop.f32.mrb[0].mxu0
      %v1030 = vadd.f32 0.0, %v1029
      %v1031 = vpop.f32.mrb[0].mxu0
      %1032 = vmatprep.mubr.bf16.mxu0 0
      %1033 = vmatmul.mubr.bf16.gmra.mrb[0].mxu0 %v909
      %v1034 = vpop.f32.mrb[0].mxu0
      %v1035 = vadd.f32 0.0, %v1034
      %v1036 = vpop.f32.mrb[0].mxu0
      %v1037 = vpop.f32.mrb[0].mxu0
      %v1038 = vadd.f32 0.0, %v1037
      %v1039 = vpop.f32.mrb[0].mxu0
      %1040 = vmatprep.mubr.bf16.mxu0 0
      %1041 = vmatmul.mubr.bf16.gmra.mrb[0].mxu0 %v912
      %v1042 = vpop.f32.mrb[0].mxu0
      %v1043 = vadd.f32 0.0, %v1042
      %v1044 = vpop.f32.mrb[0].mxu0
      %v1045 = vpop.f32.mrb[0].mxu0
      %v1046 = vadd.f32 0.0, %v1045
      %v1047 = vpop.f32.mrb[0].mxu0
      %1048 = vmatprep.mubr.bf16.mxu0 0
      %1049 = vmatmul.mubr.bf16.gmra.mrb[0].mxu0 %v915
      %v1050 = vpop.f32.mrb[0].mxu0
      %v1051 = vadd.f32 0.0, %v1050
      %v1052 = vpop.f32.mrb[0].mxu0
      %v1053 = vpop.f32.mrb[0].mxu0
      %v1054 = vadd.f32 0.0, %v1053
      %v1055 = vpop.f32.mrb[0].mxu0
      %1056 = vmatprep.mubr.bf16.mxu0 0
      %1057 = vmatmul.mubr.bf16.gmra.mrb[0].mxu0 %v918
      %v1058 = vpop.f32.mrb[0].mxu0
      %v1059 = vadd.f32 0.0, %v1058
      %v1060 = vpop.f32.mrb[0].mxu0
      %v1061 = vpop.f32.mrb[0].mxu0
      %v1062 = vadd.f32 0.0, %v1061
      %v1063 = vpop.f32.mrb[0].mxu0
      %1064 = vmatprep.mubr.bf16.mxu0 0
      %1065 = vmatmul.mubr.bf16.gmra.mrb[0].mxu0 %v921
      %v1066 = vpop.f32.mrb[0].mxu0
      %v1067 = vadd.f32 0.0, %v1066
      %v1068 = vpop.f32.mrb[0].mxu0
      %v1069 = vpop.f32.mrb[0].mxu0
      %v1070 = vadd.f32 0.0, %v1069
      %v1071 = vpop.f32.mrb[0].mxu0
      %1072 = vmatprep.mubr.bf16.mxu0 0
      %1073 = vmatmul.mubr.bf16.gmra.mrb[0].mxu0 %v924
      %v1074 = vpop.f32.mrb[0].mxu0
      %v1075 = vadd.f32 0.0, %v1074
      %v1076 = vpop.f32.mrb[0].mxu0
      %v1077 = vpop.f32.mrb[0].mxu0
      %v1078 = vadd.f32 0.0, %v1077
      %v1079 = vpop.f32.mrb[0].mxu0
      %1080 = vmatprep.mubr.bf16.mxu0 0
      %1081 = vmatmul.mubr.bf16.gmra.mrb[0].mxu0 %v927
      %v1082 = vpop.f32.mrb[0].mxu0
      %v1083 = vadd.f32 0.0, %v1082
      %v1084 = vpop.f32.mrb[0].mxu0
      %v1085 = vpop.f32.mrb[0].mxu0
      %v1086 = vadd.f32 0.0, %v1085
      %v1087 = vpop.f32.mrb[0].mxu0
      %1088 = vmatprep.mubr.bf16.mxu0 0
      %1089 = vmatmul.mubr.bf16.gmra.mrb[0].mxu0 %v930
      %v1090 = vpop.f32.mrb[0].mxu0
      %v1091 = vadd.f32 0.0, %v1090
      %v1092 = vpop.f32.mrb[0].mxu0
      %v1093 = vpop.f32.mrb[0].mxu0
      %v1094 = vadd.f32 0.0, %v1093
      %v1095 = vpop.f32.mrb[0].mxu0
      %1096 = vdwg.mxu0
      %v1097 = vld [vmem:[%s4] sm:$0x1]
      %v1099 = vlaneseq
      %v1100 = vshrl.u32 %v1099, 7
      %v1101 = vsub.s32 0, %v1100
      %v1102 = vrot.slane %v1097, %v1101
      %v1104 = vmul.f32 %v971, %v1102
      %v1105 = vmul.f32 %v974, %v1102
      %v1106 = vmul.f32 %v979, %v1102
      %v1107 = vmul.f32 %v982, %v1102
      %v1108 = vmul.f32 %v987, %v1102
      %v1109 = vmul.f32 %v990, %v1102
      %v1110 = vmul.f32 %v995, %v1102
      %v1111 = vmul.f32 %v998, %v1102
      %v1112 = vmul.f32 %v1003, %v1102
      %v1113 = vmul.f32 %v1006, %v1102
      %v1114 = vmul.f32 %v1011, %v1102
      %v1115 = vmul.f32 %v1014, %v1102
      %v1116 = vmul.f32 %v1019, %v1102
      %v1117 = vmul.f32 %v1022, %v1102
      %v1118 = vmul.f32 %v1027, %v1102
      %v1119 = vmul.f32 %v1030, %v1102
      %v1120 = vmul.f32 %v1035, %v1102
      %v1121 = vmul.f32 %v1038, %v1102
      %v1122 = vmul.f32 %v1043, %v1102
      %v1123 = vmul.f32 %v1046, %v1102
      %v1124 = vmul.f32 %v1051, %v1102
      %v1125 = vmul.f32 %v1054, %v1102
      %v1126 = vmul.f32 %v1059, %v1102
      %v1127 = vmul.f32 %v1062, %v1102
      %v1128 = vmul.f32 %v1067, %v1102
      %v1129 = vmul.f32 %v1070, %v1102
      %v1130 = vmul.f32 %v1075, %v1102
      %v1131 = vmul.f32 %v1078, %v1102
      %v1132 = vmul.f32 %v1083, %v1102
      %v1133 = vmul.f32 %v1086, %v1102
      %v1134 = vmul.f32 %v1091, %v1102
      %v1135 = vmul.f32 %v1094, %v1102
      %v1136 = vld [vmem:[%s5] sm:$0x1]
      %v1138 = vlaneseq
      %v1139 = vshrl.u32 %v1138, 7
      %v1140 = vsub.s32 0, %v1139
      %v1141 = vrot.slane %v1136, %v1140
      %v1143 = vadd.f32 %v1104, %v1141
      %v1144 = vadd.f32 %v1105, %v1141
      %v1145 = vadd.f32 %v1106, %v1141
      %v1146 = vadd.f32 %v1107, %v1141
      %v1147 = vadd.f32 %v1108, %v1141
      %v1148 = vadd.f32 %v1109, %v1141
      %v1149 = vadd.f32 %v1110, %v1141
      %v1150 = vadd.f32 %v1111, %v1141
      %v1151 = vadd.f32 %v1112, %v1141
      %v1152 = vadd.f32 %v1113, %v1141
      %v1153 = vadd.f32 %v1114, %v1141
      %v1154 = vadd.f32 %v1115, %v1141
      %v1155 = vadd.f32 %v1116, %v1141
      %v1156 = vadd.f32 %v1117, %v1141
      %v1157 = vadd.f32 %v1118, %v1141
      %v1158 = vadd.f32 %v1119, %v1141
      %v1159 = vadd.f32 %v1120, %v1141
      %v1160 = vadd.f32 %v1121, %v1141
      %v1161 = vadd.f32 %v1122, %v1141
      %v1162 = vadd.f32 %v1123, %v1141
      %v1163 = vadd.f32 %v1124, %v1141
      %v1164 = vadd.f32 %v1125, %v1141
      %v1165 = vadd.f32 %v1126, %v1141
      %v1166 = vadd.f32 %v1127, %v1141
      %v1167 = vadd.f32 %v1128, %v1141
      %v1168 = vadd.f32 %v1129, %v1141
      %v1169 = vadd.f32 %v1130, %v1141
      %v1170 = vadd.f32 %v1131, %v1141
      %v1171 = vadd.f32 %v1132, %v1141
      %v1172 = vadd.f32 %v1133, %v1141
      %v1173 = vadd.f32 %v1134, %v1141
      %v1174 = vadd.f32 %v1135, %v1141
      %v1175 = vmax.f32 %v1143, 0.0
      %v1176 = vmax.f32 %v1144, 0.0
      %v1177 = vmax.f32 %v1145, 0.0
      %v1178 = vmax.f32 %v1146, 0.0
      %v1179 = vmax.f32 %v1147, 0.0
      %v1180 = vmax.f32 %v1148, 0.0
      %v1181 = vmax.f32 %v1149, 0.0
      %v1182 = vmax.f32 %v1150, 0.0
      %v1183 = vmax.f32 %v1151, 0.0
      %v1184 = vmax.f32 %v1152, 0.0
      %v1185 = vmax.f32 %v1153, 0.0
      %v1186 = vmax.f32 %v1154, 0.0
      %v1187 = vmax.f32 %v1155, 0.0
      %v1188 = vmax.f32 %v1156, 0.0
      %v1189 = vmax.f32 %v1157, 0.0
      %v1190 = vmax.f32 %v1158, 0.0
      %v1191 = vmax.f32 %v1159, 0.0
      %v1192 = vmax.f32 %v1160, 0.0
      %v1193 = vmax.f32 %v1161, 0.0
      %v1194 = vmax.f32 %v1162, 0.0
      %v1195 = vmax.f32 %v1163, 0.0
      %v1196 = vmax.f32 %v1164, 0.0
      %v1197 = vmax.f32 %v1165, 0.0
      %v1198 = vmax.f32 %v1166, 0.0
      %v1199 = vmax.f32 %v1167, 0.0
      %v1200 = vmax.f32 %v1168, 0.0
      %v1201 = vmax.f32 %v1169, 0.0
      %v1202 = vmax.f32 %v1170, 0.0
      %v1203 = vmax.f32 %v1171, 0.0
      %v1204 = vmax.f32 %v1172, 0.0
      %v1205 = vmax.f32 %v1173, 0.0
      %v1206 = vmax.f32 %v1174, 0.0
      %v1207 = vpack.c.bf16 %v1176, %v1175
      %v1208 = vpack.c.bf16 %v1178, %v1177
      %v1209 = vpack.c.bf16 %v1180, %v1179
      %v1210 = vpack.c.bf16 %v1182, %v1181
      %v1211 = vpack.c.bf16 %v1184, %v1183
      %v1212 = vpack.c.bf16 %v1186, %v1185
      %v1213 = vpack.c.bf16 %v1188, %v1187
      %v1214 = vpack.c.bf16 %v1190, %v1189
      %v1215 = vpack.c.bf16 %v1192, %v1191
      %v1216 = vpack.c.bf16 %v1194, %v1193
      %v1217 = vpack.c.bf16 %v1196, %v1195
      %v1218 = vpack.c.bf16 %v1198, %v1197
      %v1219 = vpack.c.bf16 %v1200, %v1199
      %v1220 = vpack.c.bf16 %v1202, %v1201
      %v1221 = vpack.c.bf16 %v1204, %v1203
      %v1222 = vpack.c.bf16 %v1206, %v1205
      %v1223 = vld [vmem:[%s6] sm:$0xf]
      %v1224 = vld [vmem:[%s6 + $0x4] sm:$0xf]
      %v1227 = vunpack.c.l.b16 %v1223
      %v1228 = vunpack.c.l.b16 %v1224
      %v1229 = vpack.c.b16 %v1228, %v1227
      %vm1231 = vcmask 130048
      %v1233 = vsel %vm1231, %v1207, 0
      %v1236 = vsel %vm1231, %v1208, 0
      %v1239 = vsel %vm1231, %v1209, 0
      %v1242 = vsel %vm1231, %v1210, 0
      %v1245 = vsel %vm1231, %v1211, 0
      %v1248 = vsel %vm1231, %v1212, 0
      %v1251 = vsel %vm1231, %v1213, 0
      %v1254 = vsel %vm1231, %v1214, 0
      %v1257 = vsel %vm1231, %v1215, 0
      %v1260 = vsel %vm1231, %v1216, 0
      %v1263 = vsel %vm1231, %v1217, 0
      %v1266 = vsel %vm1231, %v1218, 0
      %v1269 = vsel %vm1231, %v1219, 0
      %v1272 = vsel %vm1231, %v1220, 0
      %v1275 = vsel %vm1231, %v1221, 0
      %v1278 = vsel %vm1231, %v1222, 0
      %1280 = vmatprep.subr.bf16.mxu0 0
      %1281 = vmatpush1.bf16.msra.mxu0 %v1229
      %1282 = vmatprep.subr.bf16.mxu0 0
      %1283 = vmatpush1.bf16.msra.mxu0 0
      %1284 = vmatprep.subr.bf16.mxu0 0
      %1285 = vmatpush1.bf16.msra.mxu0 0
      %1286 = vmatprep.subr.bf16.mxu0 0
      %1287 = vmatpush1.bf16.msra.mxu0 0
      %1288 = vmatprep.subr.bf16.mxu0 0
      %1289 = vmatpush1.bf16.msra.mxu0 0
      %1290 = vmatprep.subr.bf16.mxu0 0
      %1291 = vmatpush1.bf16.msra.mxu0 0
      %1292 = vmatprep.subr.bf16.mxu0 0
      %1293 = vmatpush1.bf16.msra.mxu0 0
      %1294 = vmatprep.subr.bf16.mxu0 0
      %1295 = vmatpush1.bf16.msra.mxu0 0
      %1296 = vmatprep.subr.bf16.mxu0 0
      %1297 = vmatpush1.bf16.msra.mxu0 0
      %1298 = vmatprep.subr.bf16.mxu0 0
      %1299 = vmatpush1.bf16.msra.mxu0 0
      %1300 = vmatprep.subr.bf16.mxu0 0
      %1301 = vmatpush1.bf16.msra.mxu0 0
      %1302 = vmatprep.subr.bf16.mxu0 0
      %1303 = vmatpush1.bf16.msra.mxu0 0
      %1304 = vmatprep.subr.bf16.mxu0 0
      %1305 = vmatpush1.bf16.msra.mxu0 0
      %1306 = vmatprep.subr.bf16.mxu0 0
      %1307 = vmatpush1.bf16.msra.mxu0 0
      %1308 = vmatprep.subr.bf16.mxu0 0
      %1309 = vmatpush1.bf16.msra.mxu0 0
      %1310 = vmatprep.subr.bf16.mxu0 0
      %1311 = vmatpush1.bf16.msra.mxu0 0
      %1312 = vmatprep.mubr.bf16.mxu0 0
      %1313 = vmatmul.mubr.bf16.gmra.mrb[0].mxu0 %v1233
      %v1314 = vpop.f32.mrb[0].mxu0
      %v1315 = vadd.f32 0.0, %v1314
      %v1316 = vpop.f32.mrb[0].mxu0
      %v1317 = vpop.f32.mrb[0].mxu0
      %v1318 = vadd.f32 0.0, %v1317
      %v1319 = vpop.f32.mrb[0].mxu0
      %1320 = vmatprep.mubr.bf16.mxu0 0
      %1321 = vmatmul.mubr.bf16.gmra.mrb[0].mxu0 %v1236
      %v1322 = vpop.f32.mrb[0].mxu0
      %v1323 = vadd.f32 0.0, %v1322
      %v1324 = vpop.f32.mrb[0].mxu0
      %v1325 = vpop.f32.mrb[0].mxu0
      %v1326 = vadd.f32 0.0, %v1325
      %v1327 = vpop.f32.mrb[0].mxu0
      %1328 = vmatprep.mubr.bf16.mxu0 0
      %1329 = vmatmul.mubr.bf16.gmra.mrb[0].mxu0 %v1239
      %v1330 = vpop.f32.mrb[0].mxu0
      %v1331 = vadd.f32 0.0, %v1330
      %v1332 = vpop.f32.mrb[0].mxu0
      %v1333 = vpop.f32.mrb[0].mxu0
      %v1334 = vadd.f32 0.0, %v1333
      %v1335 = vpop.f32.mrb[0].mxu0
      %1336 = vmatprep.mubr.bf16.mxu0 0
      %1337 = vmatmul.mubr.bf16.gmra.mrb[0].mxu0 %v1242
      %v1338 = vpop.f32.mrb[0].mxu0
      %v1339 = vadd.f32 0.0, %v1338
      %v1340 = vpop.f32.mrb[0].mxu0
      %v1341 = vpop.f32.mrb[0].mxu0
      %v1342 = vadd.f32 0.0, %v1341
      %v1343 = vpop.f32.mrb[0].mxu0
      %1344 = vmatprep.mubr.bf16.mxu0 0
      %1345 = vmatmul.mubr.bf16.gmra.mrb[0].mxu0 %v1245
      %v1346 = vpop.f32.mrb[0].mxu0
      %v1347 = vadd.f32 0.0, %v1346
      %v1348 = vpop.f32.mrb[0].mxu0
      %v1349 = vpop.f32.mrb[0].mxu0
      %v1350 = vadd.f32 0.0, %v1349
      %v1351 = vpop.f32.mrb[0].mxu0
      %1352 = vmatprep.mubr.bf16.mxu0 0
      %1353 = vmatmul.mubr.bf16.gmra.mrb[0].mxu0 %v1248
      %v1354 = vpop.f32.mrb[0].mxu0
      %v1355 = vadd.f32 0.0, %v1354
      %v1356 = vpop.f32.mrb[0].mxu0
      %v1357 = vpop.f32.mrb[0].mxu0
      %v1358 = vadd.f32 0.0, %v1357
      %v1359 = vpop.f32.mrb[0].mxu0
      %1360 = vmatprep.mubr.bf16.mxu0 0
      %1361 = vmatmul.mubr.bf16.gmra.mrb[0].mxu0 %v1251
      %v1362 = vpop.f32.mrb[0].mxu0
      %v1363 = vadd.f32 0.0, %v1362
      %v1364 = vpop.f32.mrb[0].mxu0
      %v1365 = vpop.f32.mrb[0].mxu0
      %v1366 = vadd.f32 0.0, %v1365
      %v1367 = vpop.f32.mrb[0].mxu0
      %1368 = vmatprep.mubr.bf16.mxu0 0
      %1369 = vmatmul.mubr.bf16.gmra.mrb[0].mxu0 %v1254
      %v1370 = vpop.f32.mrb[0].mxu0
      %v1371 = vadd.f32 0.0, %v1370
      %v1372 = vpop.f32.mrb[0].mxu0
      %v1373 = vpop.f32.mrb[0].mxu0
      %v1374 = vadd.f32 0.0, %v1373
      %v1375 = vpop.f32.mrb[0].mxu0
      %1376 = vmatprep.mubr.bf16.mxu0 0
      %1377 = vmatmul.mubr.bf16.gmra.mrb[0].mxu0 %v1257
      %v1378 = vpop.f32.mrb[0].mxu0
      %v1379 = vadd.f32 0.0, %v1378
      %v1380 = vpop.f32.mrb[0].mxu0
      %v1381 = vpop.f32.mrb[0].mxu0
      %v1382 = vadd.f32 0.0, %v1381
      %v1383 = vpop.f32.mrb[0].mxu0
      %1384 = vmatprep.mubr.bf16.mxu0 0
      %1385 = vmatmul.mubr.bf16.gmra.mrb[0].mxu0 %v1260
      %v1386 = vpop.f32.mrb[0].mxu0
      %v1387 = vadd.f32 0.0, %v1386
      %v1388 = vpop.f32.mrb[0].mxu0
      %v1389 = vpop.f32.mrb[0].mxu0
      %v1390 = vadd.f32 0.0, %v1389
      %v1391 = vpop.f32.mrb[0].mxu0
      %1392 = vmatprep.mubr.bf16.mxu0 0
      %1393 = vmatmul.mubr.bf16.gmra.mrb[0].mxu0 %v1263
      %v1394 = vpop.f32.mrb[0].mxu0
      %v1395 = vadd.f32 0.0, %v1394
      %v1396 = vpop.f32.mrb[0].mxu0
      %v1397 = vpop.f32.mrb[0].mxu0
      %v1398 = vadd.f32 0.0, %v1397
      %v1399 = vpop.f32.mrb[0].mxu0
      %1400 = vmatprep.mubr.bf16.mxu0 0
      %1401 = vmatmul.mubr.bf16.gmra.mrb[0].mxu0 %v1266
      %v1402 = vpop.f32.mrb[0].mxu0
      %v1403 = vadd.f32 0.0, %v1402
      %v1404 = vpop.f32.mrb[0].mxu0
      %v1405 = vpop.f32.mrb[0].mxu0
      %v1406 = vadd.f32 0.0, %v1405
      %v1407 = vpop.f32.mrb[0].mxu0
      %1408 = vmatprep.mubr.bf16.mxu0 0
      %1409 = vmatmul.mubr.bf16.gmra.mrb[0].mxu0 %v1269
      %v1410 = vpop.f32.mrb[0].mxu0
      %v1411 = vadd.f32 0.0, %v1410
      %v1412 = vpop.f32.mrb[0].mxu0
      %v1413 = vpop.f32.mrb[0].mxu0
      %v1414 = vadd.f32 0.0, %v1413
      %v1415 = vpop.f32.mrb[0].mxu0
      %1416 = vmatprep.mubr.bf16.mxu0 0
      %1417 = vmatmul.mubr.bf16.gmra.mrb[0].mxu0 %v1272
      %v1418 = vpop.f32.mrb[0].mxu0
      %v1419 = vadd.f32 0.0, %v1418
      %v1420 = vpop.f32.mrb[0].mxu0
      %v1421 = vpop.f32.mrb[0].mxu0
      %v1422 = vadd.f32 0.0, %v1421
      %v1423 = vpop.f32.mrb[0].mxu0
      %1424 = vmatprep.mubr.bf16.mxu0 0
      %1425 = vmatmul.mubr.bf16.gmra.mrb[0].mxu0 %v1275
      %v1426 = vpop.f32.mrb[0].mxu0
      %v1427 = vadd.f32 0.0, %v1426
      %v1428 = vpop.f32.mrb[0].mxu0
      %v1429 = vpop.f32.mrb[0].mxu0
      %v1430 = vadd.f32 0.0, %v1429
      %v1431 = vpop.f32.mrb[0].mxu0
      %1432 = vmatprep.mubr.bf16.mxu0 0
      %1433 = vmatmul.mubr.bf16.gmra.mrb[0].mxu0 %v1278
      %v1434 = vpop.f32.mrb[0].mxu0
      %v1435 = vadd.f32 0.0, %v1434
      %v1436 = vpop.f32.mrb[0].mxu0
      %v1437 = vpop.f32.mrb[0].mxu0
      %v1438 = vadd.f32 0.0, %v1437
      %v1439 = vpop.f32.mrb[0].mxu0
      %1440 = vdwg.mxu0
      %s1441 = scalar_lea.vmem [#allocation2], 24
      %1442 = vst.msk [vmem:[%s1441 + $0x1] sm:$0xff] %vm604, %v1315
      %1443 = vst.msk [vmem:[%s1441 + $0x9] sm:$0xff] %vm604, %v1318
      %1444 = vst.msk [vmem:[%s1441 + $0x19] sm:$0xff] %vm604, %v1323
      %1445 = vst.msk [vmem:[%s1441 + $0x21] sm:$0xff] %vm604, %v1326
      %1446 = vst.msk [vmem:[%s1441 + $0x31] sm:$0xff] %vm604, %v1331
      %1447 = vst.msk [vmem:[%s1441 + $0x39] sm:$0xff] %vm604, %v1334
      %1448 = vst.msk [vmem:[%s1441 + $0x49] sm:$0xff] %vm604, %v1339
      %1449 = vst.msk [vmem:[%s1441 + $0x51] sm:$0xff] %vm604, %v1342
      %1450 = vst.msk [vmem:[%s1441 + $0x61] sm:$0xff] %vm604, %v1347
      %1451 = vst.msk [vmem:[%s1441 + $0x69] sm:$0xff] %vm604, %v1350
      %1452 = vst.msk [vmem:[%s1441 + $0x79] sm:$0xff] %vm604, %v1355
      %1453 = vst.msk [vmem:[%s1441 + $0x81] sm:$0xff] %vm604, %v1358
      %1454 = vst.msk [vmem:[%s1441 + $0x91] sm:$0xff] %vm604, %v1363
      %1455 = vst.msk [vmem:[%s1441 + $0x99] sm:$0xff] %vm604, %v1366
      %1456 = vst.msk [vmem:[%s1441 + $0xa9] sm:$0xff] %vm604, %v1371
      %1457 = vst.msk [vmem:[%s1441 + $0xb1] sm:$0xff] %vm604, %v1374
      %1458 = vst.msk [vmem:[%s1441 + $0xc1] sm:$0xff] %vm604, %v1379
      %1459 = vst.msk [vmem:[%s1441 + $0xc9] sm:$0xff] %vm604, %v1382
      %1460 = vst.msk [vmem:[%s1441 + $0xd9] sm:$0xff] %vm604, %v1387
      %1461 = vst.msk [vmem:[%s1441 + $0xe1] sm:$0xff] %vm604, %v1390
      %1462 = vst.msk [vmem:[%s1441 + $0xf1] sm:$0xff] %vm604, %v1395
      %1463 = vst.msk [vmem:[%s1441 + $0xf9] sm:$0xff] %vm604, %v1398
      %1464 = vst.msk [vmem:[%s1441 + $0x109] sm:$0xff] %vm604, %v1403
      %1465 = vst.msk [vmem:[%s1441 + $0x111] sm:$0xff] %vm604, %v1406
      %1466 = vst.msk [vmem:[%s1441 + $0x121] sm:$0xff] %vm604, %v1411
      %1467 = vst.msk [vmem:[%s1441 + $0x129] sm:$0xff] %vm604, %v1414
      %1468 = vst.msk [vmem:[%s1441 + $0x139] sm:$0xff] %vm604, %v1419
      %1469 = vst.msk [vmem:[%s1441 + $0x141] sm:$0xff] %vm604, %v1422
      %1470 = vst.msk [vmem:[%s1441 + $0x151] sm:$0xff] %vm604, %v1427
      %1471 = vst.msk [vmem:[%s1441 + $0x159] sm:$0xff] %vm604, %v1430
      %1472 = vst.msk [vmem:[%s1441 + $0x169] sm:$0xff] %vm604, %v1435
      %1473 = vst.msk [vmem:[%s1441 + $0x171] sm:$0xff] %vm604, %v1438
      %v1474 = vld [vmem:[#allocation2] sm:$0xff]
      %v1475 = vld [vmem:[#allocation2 + $0x8] sm:$0xff]
      %v1476 = vld [vmem:[#allocation2 + $0x18] sm:$0xff]
      %v1477 = vld [vmem:[#allocation2 + $0x20] sm:$0xff]
      %v1478 = vld [vmem:[#allocation2 + $0x30] sm:$0xff]
      %v1479 = vld [vmem:[#allocation2 + $0x38] sm:$0xff]
      %v1480 = vld [vmem:[#allocation2 + $0x48] sm:$0xff]
      %v1481 = vld [vmem:[#allocation2 + $0x50] sm:$0xff]
      %v1482 = vld [vmem:[#allocation2 + $0x60] sm:$0xff]
      %v1483 = vld [vmem:[#allocation2 + $0x68] sm:$0xff]
      %v1484 = vld [vmem:[#allocation2 + $0x78] sm:$0xff]
      %v1485 = vld [vmem:[#allocation2 + $0x80] sm:$0xff]
      %v1486 = vld [vmem:[#allocation2 + $0x90] sm:$0xff]
      %v1487 = vld [vmem:[#allocation2 + $0x98] sm:$0xff]
      %v1488 = vld [vmem:[#allocation2 + $0xa8] sm:$0xff]
      %v1489 = vld [vmem:[#allocation2 + $0xb0] sm:$0xff]
      %v1490 = vld [vmem:[#allocation2 + $0xc0] sm:$0xff]
      %v1491 = vld [vmem:[#allocation2 + $0xc8] sm:$0xff]
      %v1492 = vld [vmem:[#allocation2 + $0xd8] sm:$0xff]
      %v1493 = vld [vmem:[#allocation2 + $0xe0] sm:$0xff]
      %v1494 = vld [vmem:[#allocation2 + $0xf0] sm:$0xff]
      %v1495 = vld [vmem:[#allocation2 + $0xf8] sm:$0xff]
      %v1496 = vld [vmem:[#allocation2 + $0x108] sm:$0xff]
      %v1497 = vld [vmem:[#allocation2 + $0x110] sm:$0xff]
      %v1498 = vld [vmem:[#allocation2 + $0x120] sm:$0xff]
      %v1499 = vld [vmem:[#allocation2 + $0x128] sm:$0xff]
      %v1500 = vld [vmem:[#allocation2 + $0x138] sm:$0xff]
      %v1501 = vld [vmem:[#allocation2 + $0x140] sm:$0xff]
      %v1502 = vld [vmem:[#allocation2 + $0x150] sm:$0xff]
      %v1503 = vld [vmem:[#allocation2 + $0x158] sm:$0xff]
      %v1504 = vld [vmem:[#allocation2 + $0x168] sm:$0xff]
      %v1505 = vld [vmem:[#allocation2 + $0x170] sm:$0xff]
      %v1506 = vld [vmem:[#allocation2 + $0x1] sm:$0xff]
      %v1507 = vld [vmem:[#allocation2 + $0x9] sm:$0xff]
      %v1508 = vld [vmem:[#allocation2 + $0x19] sm:$0xff]
      %v1509 = vld [vmem:[#allocation2 + $0x21] sm:$0xff]
      %v1510 = vld [vmem:[#allocation2 + $0x31] sm:$0xff]
      %v1511 = vld [vmem:[#allocation2 + $0x39] sm:$0xff]
      %v1512 = vld [vmem:[#allocation2 + $0x49] sm:$0xff]
      %v1513 = vld [vmem:[#allocation2 + $0x51] sm:$0xff]
      %v1514 = vld [vmem:[#allocation2 + $0x61] sm:$0xff]
      %v1515 = vld [vmem:[#allocation2 + $0x69] sm:$0xff]
      %v1516 = vld [vmem:[#allocation2 + $0x79] sm:$0xff]
      %v1517 = vld [vmem:[#allocation2 + $0x81] sm:$0xff]
      %v1518 = vld [vmem:[#allocation2 + $0x91] sm:$0xff]
      %v1519 = vld [vmem:[#allocation2 + $0x99] sm:$0xff]
      %v1520 = vld [vmem:[#allocation2 + $0xa9] sm:$0xff]
      %v1521 = vld [vmem:[#allocation2 + $0xb1] sm:$0xff]
      %v1522 = vld [vmem:[#allocation2 + $0xc1] sm:$0xff]
      %v1523 = vld [vmem:[#allocation2 + $0xc9] sm:$0xff]
      %v1524 = vld [vmem:[#allocation2 + $0xd9] sm:$0xff]
      %v1525 = vld [vmem:[#allocation2 + $0xe1] sm:$0xff]
      %v1526 = vld [vmem:[#allocation2 + $0xf1] sm:$0xff]
      %v1527 = vld [vmem:[#allocation2 + $0xf9] sm:$0xff]
      %v1528 = vld [vmem:[#allocation2 + $0x109] sm:$0xff]
      %v1529 = vld [vmem:[#allocation2 + $0x111] sm:$0xff]
      %v1530 = vld [vmem:[#allocation2 + $0x121] sm:$0xff]
      %v1531 = vld [vmem:[#allocation2 + $0x129] sm:$0xff]
      %v1532 = vld [vmem:[#allocation2 + $0x139] sm:$0xff]
      %v1533 = vld [vmem:[#allocation2 + $0x141] sm:$0xff]
      %v1534 = vld [vmem:[#allocation2 + $0x151] sm:$0xff]
      %v1535 = vld [vmem:[#allocation2 + $0x159] sm:$0xff]
      %v1536 = vld [vmem:[#allocation2 + $0x169] sm:$0xff]
      %v1537 = vld [vmem:[#allocation2 + $0x171] sm:$0xff]
      %1570 = vrot.lane.b32.xlu0 %v1506, 124
      %v1571 = vpop.permute.xlu0 %1570
      %1572 = vrot.lane.b32.xlu0 %v1507, 124
      %v1573 = vpop.permute.xlu0 %1572
      %1574 = vrot.lane.b32.xlu0 %v1508, 124
      %v1575 = vpop.permute.xlu0 %1574
      %1576 = vrot.lane.b32.xlu0 %v1509, 124
      %v1577 = vpop.permute.xlu0 %1576
      %1578 = vrot.lane.b32.xlu0 %v1510, 124
      %v1579 = vpop.permute.xlu0 %1578
      %1580 = vrot.lane.b32.xlu0 %v1511, 124
      %v1581 = vpop.permute.xlu0 %1580
      %1582 = vrot.lane.b32.xlu0 %v1512, 124
      %v1583 = vpop.permute.xlu0 %1582
      %1584 = vrot.lane.b32.xlu0 %v1513, 124
      %v1585 = vpop.permute.xlu0 %1584
      %1586 = vrot.lane.b32.xlu0 %v1514, 124
      %v1587 = vpop.permute.xlu0 %1586
      %1588 = vrot.lane.b32.xlu0 %v1515, 124
      %v1589 = vpop.permute.xlu0 %1588
      %1590 = vrot.lane.b32.xlu0 %v1516, 124
      %v1591 = vpop.permute.xlu0 %1590
      %1592 = vrot.lane.b32.xlu0 %v1517, 124
      %v1593 = vpop.permute.xlu0 %1592
      %1594 = vrot.lane.b32.xlu0 %v1518, 124
      %v1595 = vpop.permute.xlu0 %1594
      %1596 = vrot.lane.b32.xlu0 %v1519, 124
      %v1597 = vpop.permute.xlu0 %1596
      %1598 = vrot.lane.b32.xlu0 %v1520, 124
      %v1599 = vpop.permute.xlu0 %1598
      %1600 = vrot.lane.b32.xlu0 %v1521, 124
      %v1601 = vpop.permute.xlu0 %1600
      %1602 = vrot.lane.b32.xlu0 %v1522, 124
      %v1603 = vpop.permute.xlu0 %1602
      %1604 = vrot.lane.b32.xlu0 %v1523, 124
      %v1605 = vpop.permute.xlu0 %1604
      %1606 = vrot.lane.b32.xlu0 %v1524, 124
      %v1607 = vpop.permute.xlu0 %1606
      %1608 = vrot.lane.b32.xlu0 %v1525, 124
      %v1609 = vpop.permute.xlu0 %1608
      %1610 = vrot.lane.b32.xlu0 %v1526, 124
      %v1611 = vpop.permute.xlu0 %1610
      %1612 = vrot.lane.b32.xlu0 %v1527, 124
      %v1613 = vpop.permute.xlu0 %1612
      %1614 = vrot.lane.b32.xlu0 %v1528, 124
      %v1615 = vpop.permute.xlu0 %1614
      %1616 = vrot.lane.b32.xlu0 %v1529, 124
      %v1617 = vpop.permute.xlu0 %1616
      %1618 = vrot.lane.b32.xlu0 %v1530, 124
      %v1619 = vpop.permute.xlu0 %1618
      %1620 = vrot.lane.b32.xlu0 %v1531, 124
      %v1621 = vpop.permute.xlu0 %1620
      %1622 = vrot.lane.b32.xlu0 %v1532, 124
      %v1623 = vpop.permute.xlu0 %1622
      %1624 = vrot.lane.b32.xlu0 %v1533, 124
      %v1625 = vpop.permute.xlu0 %1624
      %1626 = vrot.lane.b32.xlu0 %v1534, 124
      %v1627 = vpop.permute.xlu0 %1626
      %1628 = vrot.lane.b32.xlu0 %v1535, 124
      %v1629 = vpop.permute.xlu0 %1628
      %1630 = vrot.lane.b32.xlu0 %v1536, 124
      %v1631 = vpop.permute.xlu0 %1630
      %1632 = vrot.lane.b32.xlu0 %v1537, 124
      %v1633 = vpop.permute.xlu0 %1632
      %v1666 = vadd.f32 %v1474, %v1571
      %v1667 = vadd.f32 %v1475, %v1573
      %v1668 = vadd.f32 %v1476, %v1575
      %v1669 = vadd.f32 %v1477, %v1577
      %v1670 = vadd.f32 %v1478, %v1579
      %v1671 = vadd.f32 %v1479, %v1581
      %v1672 = vadd.f32 %v1480, %v1583
      %v1673 = vadd.f32 %v1481, %v1585
      %v1674 = vadd.f32 %v1482, %v1587
      %v1675 = vadd.f32 %v1483, %v1589
      %v1676 = vadd.f32 %v1484, %v1591
      %v1677 = vadd.f32 %v1485, %v1593
      %v1678 = vadd.f32 %v1486, %v1595
      %v1679 = vadd.f32 %v1487, %v1597
      %v1680 = vadd.f32 %v1488, %v1599
      %v1681 = vadd.f32 %v1489, %v1601
      %v1682 = vadd.f32 %v1490, %v1603
      %v1683 = vadd.f32 %v1491, %v1605
      %v1684 = vadd.f32 %v1492, %v1607
      %v1685 = vadd.f32 %v1493, %v1609
      %v1686 = vadd.f32 %v1494, %v1611
      %v1687 = vadd.f32 %v1495, %v1613
      %v1688 = vadd.f32 %v1496, %v1615
      %v1689 = vadd.f32 %v1497, %v1617
      %v1690 = vadd.f32 %v1498, %v1619
      %v1691 = vadd.f32 %v1499, %v1621
      %v1692 = vadd.f32 %v1500, %v1623
      %v1693 = vadd.f32 %v1501, %v1625
      %v1694 = vadd.f32 %v1502, %v1627
      %v1695 = vadd.f32 %v1503, %v1629
      %v1696 = vadd.f32 %v1504, %v1631
      %v1697 = vadd.f32 %v1505, %v1633
      %v1698 = vld [vmem:[#allocation2 + $0x2] sm:$0xff]
      %v1699 = vld [vmem:[#allocation2 + $0xa] sm:$0xff]
      %v1700 = vld [vmem:[#allocation2 + $0x1a] sm:$0xff]
      %v1701 = vld [vmem:[#allocation2 + $0x22] sm:$0xff]
      %v1702 = vld [vmem:[#allocation2 + $0x32] sm:$0xff]
      %v1703 = vld [vmem:[#allocation2 + $0x3a] sm:$0xff]
      %v1704 = vld [vmem:[#allocation2 + $0x4a] sm:$0xff]
      %v1705 = vld [vmem:[#allocation2 + $0x52] sm:$0xff]
      %v1706 = vld [vmem:[#allocation2 + $0x62] sm:$0xff]
      %v1707 = vld [vmem:[#allocation2 + $0x6a] sm:$0xff]
      %v1708 = vld [vmem:[#allocation2 + $0x7a] sm:$0xff]
      %v1709 = vld [vmem:[#allocation2 + $0x82] sm:$0xff]
      %v1710 = vld [vmem:[#allocation2 + $0x92] sm:$0xff]
      %v1711 = vld [vmem:[#allocation2 + $0x9a] sm:$0xff]
      %v1712 = vld [vmem:[#allocation2 + $0xaa] sm:$0xff]
      %v1713 = vld [vmem:[#allocation2 + $0xb2] sm:$0xff]
      %v1714 = vld [vmem:[#allocation2 + $0xc2] sm:$0xff]
      %v1715 = vld [vmem:[#allocation2 + $0xca] sm:$0xff]
      %v1716 = vld [vmem:[#allocation2 + $0xda] sm:$0xff]
      %v1717 = vld [vmem:[#allocation2 + $0xe2] sm:$0xff]
      %v1718 = vld [vmem:[#allocation2 + $0xf2] sm:$0xff]
      %v1719 = vld [vmem:[#allocation2 + $0xfa] sm:$0xff]
      %v1720 = vld [vmem:[#allocation2 + $0x10a] sm:$0xff]
      %v1721 = vld [vmem:[#allocation2 + $0x112] sm:$0xff]
      %v1722 = vld [vmem:[#allocation2 + $0x122] sm:$0xff]
      %v1723 = vld [vmem:[#allocation2 + $0x12a] sm:$0xff]
      %v1724 = vld [vmem:[#allocation2 + $0x13a] sm:$0xff]
      %v1725 = vld [vmem:[#allocation2 + $0x142] sm:$0xff]
      %v1726 = vld [vmem:[#allocation2 + $0x152] sm:$0xff]
      %v1727 = vld [vmem:[#allocation2 + $0x15a] sm:$0xff]
      %v1728 = vld [vmem:[#allocation2 + $0x16a] sm:$0xff]
      %v1729 = vld [vmem:[#allocation2 + $0x172] sm:$0xff]
      %1762 = vrot.lane.b32.xlu0 %v1698, 120
      %v1763 = vpop.permute.xlu0 %1762
      %1764 = vrot.lane.b32.xlu0 %v1699, 120
      %v1765 = vpop.permute.xlu0 %1764
      %1766 = vrot.lane.b32.xlu0 %v1700, 120
      %v1767 = vpop.permute.xlu0 %1766
      %1768 = vrot.lane.b32.xlu0 %v1701, 120
      %v1769 = vpop.permute.xlu0 %1768
      %1770 = vrot.lane.b32.xlu0 %v1702, 120
      %v1771 = vpop.permute.xlu0 %1770
      %1772 = vrot.lane.b32.xlu0 %v1703, 120
      %v1773 = vpop.permute.xlu0 %1772
      %1774 = vrot.lane.b32.xlu0 %v1704, 120
      %v1775 = vpop.permute.xlu0 %1774
      %1776 = vrot.lane.b32.xlu0 %v1705, 120
      %v1777 = vpop.permute.xlu0 %1776
      %1778 = vrot.lane.b32.xlu0 %v1706, 120
      %v1779 = vpop.permute.xlu0 %1778
      %1780 = vrot.lane.b32.xlu0 %v1707, 120
      %v1781 = vpop.permute.xlu0 %1780
      %1782 = vrot.lane.b32.xlu0 %v1708, 120
      %v1783 = vpop.permute.xlu0 %1782
      %1784 = vrot.lane.b32.xlu0 %v1709, 120
      %v1785 = vpop.permute.xlu0 %1784
      %1786 = vrot.lane.b32.xlu0 %v1710, 120
      %v1787 = vpop.permute.xlu0 %1786
      %1788 = vrot.lane.b32.xlu0 %v1711, 120
      %v1789 = vpop.permute.xlu0 %1788
      %1790 = vrot.lane.b32.xlu0 %v1712, 120
      %v1791 = vpop.permute.xlu0 %1790
      %1792 = vrot.lane.b32.xlu0 %v1713, 120
      %v1793 = vpop.permute.xlu0 %1792
      %1794 = vrot.lane.b32.xlu0 %v1714, 120
      %v1795 = vpop.permute.xlu0 %1794
      %1796 = vrot.lane.b32.xlu0 %v1715, 120
      %v1797 = vpop.permute.xlu0 %1796
      %1798 = vrot.lane.b32.xlu0 %v1716, 120
      %v1799 = vpop.permute.xlu0 %1798
      %1800 = vrot.lane.b32.xlu0 %v1717, 120
      %v1801 = vpop.permute.xlu0 %1800
      %1802 = vrot.lane.b32.xlu0 %v1718, 120
      %v1803 = vpop.permute.xlu0 %1802
      %1804 = vrot.lane.b32.xlu0 %v1719, 120
      %v1805 = vpop.permute.xlu0 %1804
      %1806 = vrot.lane.b32.xlu0 %v1720, 120
      %v1807 = vpop.permute.xlu0 %1806
      %1808 = vrot.lane.b32.xlu0 %v1721, 120
      %v1809 = vpop.permute.xlu0 %1808
      %1810 = vrot.lane.b32.xlu0 %v1722, 120
      %v1811 = vpop.permute.xlu0 %1810
      %1812 = vrot.lane.b32.xlu0 %v1723, 120
      %v1813 = vpop.permute.xlu0 %1812
      %1814 = vrot.lane.b32.xlu0 %v1724, 120
      %v1815 = vpop.permute.xlu0 %1814
      %1816 = vrot.lane.b32.xlu0 %v1725, 120
      %v1817 = vpop.permute.xlu0 %1816
      %1818 = vrot.lane.b32.xlu0 %v1726, 120
      %v1819 = vpop.permute.xlu0 %1818
      %1820 = vrot.lane.b32.xlu0 %v1727, 120
      %v1821 = vpop.permute.xlu0 %1820
      %1822 = vrot.lane.b32.xlu0 %v1728, 120
      %v1823 = vpop.permute.xlu0 %1822
      %1824 = vrot.lane.b32.xlu0 %v1729, 120
      %v1825 = vpop.permute.xlu0 %1824
      %v1858 = vadd.f32 %v1666, %v1763
      %v1859 = vadd.f32 %v1667, %v1765
      %v1860 = vadd.f32 %v1668, %v1767
      %v1861 = vadd.f32 %v1669, %v1769
      %v1862 = vadd.f32 %v1670, %v1771
      %v1863 = vadd.f32 %v1671, %v1773
      %v1864 = vadd.f32 %v1672, %v1775
      %v1865 = vadd.f32 %v1673, %v1777
      %v1866 = vadd.f32 %v1674, %v1779
      %v1867 = vadd.f32 %v1675, %v1781
      %v1868 = vadd.f32 %v1676, %v1783
      %v1869 = vadd.f32 %v1677, %v1785
      %v1870 = vadd.f32 %v1678, %v1787
      %v1871 = vadd.f32 %v1679, %v1789
      %v1872 = vadd.f32 %v1680, %v1791
      %v1873 = vadd.f32 %v1681, %v1793
      %v1874 = vadd.f32 %v1682, %v1795
      %v1875 = vadd.f32 %v1683, %v1797
      %v1876 = vadd.f32 %v1684, %v1799
      %v1877 = vadd.f32 %v1685, %v1801
      %v1878 = vadd.f32 %v1686, %v1803
      %v1879 = vadd.f32 %v1687, %v1805
      %v1880 = vadd.f32 %v1688, %v1807
      %v1881 = vadd.f32 %v1689, %v1809
      %v1882 = vadd.f32 %v1690, %v1811
      %v1883 = vadd.f32 %v1691, %v1813
      %v1884 = vadd.f32 %v1692, %v1815
      %v1885 = vadd.f32 %v1693, %v1817
      %v1886 = vadd.f32 %v1694, %v1819
      %v1887 = vadd.f32 %v1695, %v1821
      %v1888 = vadd.f32 %v1696, %v1823
      %v1889 = vadd.f32 %v1697, %v1825
      %v1890 = vld [vmem:[%s1441] sm:$0xff]
      %v1891 = vld [vmem:[%s1441 + $0x8] sm:$0xff]
      %v1892 = vld [vmem:[%s1441 + $0x18] sm:$0xff]
      %v1893 = vld [vmem:[%s1441 + $0x20] sm:$0xff]
      %v1894 = vld [vmem:[%s1441 + $0x30] sm:$0xff]
      %v1895 = vld [vmem:[%s1441 + $0x38] sm:$0xff]
      %v1896 = vld [vmem:[%s1441 + $0x48] sm:$0xff]
      %v1897 = vld [vmem:[%s1441 + $0x50] sm:$0xff]
      %v1898 = vld [vmem:[%s1441 + $0x60] sm:$0xff]
      %v1899 = vld [vmem:[%s1441 + $0x68] sm:$0xff]
      %v1900 = vld [vmem:[%s1441 + $0x78] sm:$0xff]
      %v1901 = vld [vmem:[%s1441 + $0x80] sm:$0xff]
      %v1902 = vld [vmem:[%s1441 + $0x90] sm:$0xff]
      %v1903 = vld [vmem:[%s1441 + $0x98] sm:$0xff]
      %v1904 = vld [vmem:[%s1441 + $0xa8] sm:$0xff]
      %v1905 = vld [vmem:[%s1441 + $0xb0] sm:$0xff]
      %v1906 = vld [vmem:[%s1441 + $0xc0] sm:$0xff]
      %v1907 = vld [vmem:[%s1441 + $0xc8] sm:$0xff]
      %v1908 = vld [vmem:[%s1441 + $0xd8] sm:$0xff]
      %v1909 = vld [vmem:[%s1441 + $0xe0] sm:$0xff]
      %v1910 = vld [vmem:[%s1441 + $0xf0] sm:$0xff]
      %v1911 = vld [vmem:[%s1441 + $0xf8] sm:$0xff]
      %v1912 = vld [vmem:[%s1441 + $0x108] sm:$0xff]
      %v1913 = vld [vmem:[%s1441 + $0x110] sm:$0xff]
      %v1914 = vld [vmem:[%s1441 + $0x120] sm:$0xff]
      %v1915 = vld [vmem:[%s1441 + $0x128] sm:$0xff]
      %v1916 = vld [vmem:[%s1441 + $0x138] sm:$0xff]
      %v1917 = vld [vmem:[%s1441 + $0x140] sm:$0xff]
      %v1918 = vld [vmem:[%s1441 + $0x150] sm:$0xff]
      %v1919 = vld [vmem:[%s1441 + $0x158] sm:$0xff]
      %v1920 = vld [vmem:[%s1441 + $0x168] sm:$0xff]
      %v1921 = vld [vmem:[%s1441 + $0x170] sm:$0xff]
      %1954 = vrot.lane.b32.xlu0 %v1890, 116
      %v1955 = vpop.permute.xlu0 %1954
      %1956 = vrot.lane.b32.xlu0 %v1891, 116
      %v1957 = vpop.permute.xlu0 %1956
      %1958 = vrot.lane.b32.xlu0 %v1892, 116
      %v1959 = vpop.permute.xlu0 %1958
      %1960 = vrot.lane.b32.xlu0 %v1893, 116
      %v1961 = vpop.permute.xlu0 %1960
      %1962 = vrot.lane.b32.xlu0 %v1894, 116
      %v1963 = vpop.permute.xlu0 %1962
      %1964 = vrot.lane.b32.xlu0 %v1895, 116
      %v1965 = vpop.permute.xlu0 %1964
      %1966 = vrot.lane.b32.xlu0 %v1896, 116
      %v1967 = vpop.permute.xlu0 %1966
      %1968 = vrot.lane.b32.xlu0 %v1897, 116
      %v1969 = vpop.permute.xlu0 %1968
      %1970 = vrot.lane.b32.xlu0 %v1898, 116
      %v1971 = vpop.permute.xlu0 %1970
      %1972 = vrot.lane.b32.xlu0 %v1899, 116
      %v1973 = vpop.permute.xlu0 %1972
      %1974 = vrot.lane.b32.xlu0 %v1900, 116
      %v1975 = vpop.permute.xlu0 %1974
      %1976 = vrot.lane.b32.xlu0 %v1901, 116
      %v1977 = vpop.permute.xlu0 %1976
      %1978 = vrot.lane.b32.xlu0 %v1902, 116
      %v1979 = vpop.permute.xlu0 %1978
      %1980 = vrot.lane.b32.xlu0 %v1903, 116
      %v1981 = vpop.permute.xlu0 %1980
      %1982 = vrot.lane.b32.xlu0 %v1904, 116
      %v1983 = vpop.permute.xlu0 %1982
      %1984 = vrot.lane.b32.xlu0 %v1905, 116
      %v1985 = vpop.permute.xlu0 %1984
      %1986 = vrot.lane.b32.xlu0 %v1906, 116
      %v1987 = vpop.permute.xlu0 %1986
      %1988 = vrot.lane.b32.xlu0 %v1907, 116
      %v1989 = vpop.permute.xlu0 %1988
      %1990 = vrot.lane.b32.xlu0 %v1908, 116
      %v1991 = vpop.permute.xlu0 %1990
      %1992 = vrot.lane.b32.xlu0 %v1909, 116
      %v1993 = vpop.permute.xlu0 %1992
      %1994 = vrot.lane.b32.xlu0 %v1910, 116
      %v1995 = vpop.permute.xlu0 %1994
      %1996 = vrot.lane.b32.xlu0 %v1911, 116
      %v1997 = vpop.permute.xlu0 %1996
      %1998 = vrot.lane.b32.xlu0 %v1912, 116
      %v1999 = vpop.permute.xlu0 %1998
      %2000 = vrot.lane.b32.xlu0 %v1913, 116
      %v2001 = vpop.permute.xlu0 %2000
      %2002 = vrot.lane.b32.xlu0 %v1914, 116
      %v2003 = vpop.permute.xlu0 %2002
      %2004 = vrot.lane.b32.xlu0 %v1915, 116
      %v2005 = vpop.permute.xlu0 %2004
      %2006 = vrot.lane.b32.xlu0 %v1916, 116
      %v2007 = vpop.permute.xlu0 %2006
      %2008 = vrot.lane.b32.xlu0 %v1917, 116
      %v2009 = vpop.permute.xlu0 %2008
      %2010 = vrot.lane.b32.xlu0 %v1918, 116
      %v2011 = vpop.permute.xlu0 %2010
      %2012 = vrot.lane.b32.xlu0 %v1919, 116
      %v2013 = vpop.permute.xlu0 %2012
      %2014 = vrot.lane.b32.xlu0 %v1920, 116
      %v2015 = vpop.permute.xlu0 %2014
      %2016 = vrot.lane.b32.xlu0 %v1921, 116
      %v2017 = vpop.permute.xlu0 %2016
      %v2050 = vadd.f32 %v1858, %v1955
      %v2051 = vadd.f32 %v1859, %v1957
      %v2052 = vadd.f32 %v1860, %v1959
      %v2053 = vadd.f32 %v1861, %v1961
      %v2054 = vadd.f32 %v1862, %v1963
      %v2055 = vadd.f32 %v1863, %v1965
      %v2056 = vadd.f32 %v1864, %v1967
      %v2057 = vadd.f32 %v1865, %v1969
      %v2058 = vadd.f32 %v1866, %v1971
      %v2059 = vadd.f32 %v1867, %v1973
      %v2060 = vadd.f32 %v1868, %v1975
      %v2061 = vadd.f32 %v1869, %v1977
      %v2062 = vadd.f32 %v1870, %v1979
      %v2063 = vadd.f32 %v1871, %v1981
      %v2064 = vadd.f32 %v1872, %v1983
      %v2065 = vadd.f32 %v1873, %v1985
      %v2066 = vadd.f32 %v1874, %v1987
      %v2067 = vadd.f32 %v1875, %v1989
      %v2068 = vadd.f32 %v1876, %v1991
      %v2069 = vadd.f32 %v1877, %v1993
      %v2070 = vadd.f32 %v1878, %v1995
      %v2071 = vadd.f32 %v1879, %v1997
      %v2072 = vadd.f32 %v1880, %v1999
      %v2073 = vadd.f32 %v1881, %v2001
      %v2074 = vadd.f32 %v1882, %v2003
      %v2075 = vadd.f32 %v1883, %v2005
      %v2076 = vadd.f32 %v1884, %v2007
      %v2077 = vadd.f32 %v1885, %v2009
      %v2078 = vadd.f32 %v1886, %v2011
      %v2079 = vadd.f32 %v1887, %v2013
      %v2080 = vadd.f32 %v1888, %v2015
      %v2081 = vadd.f32 %v1889, %v2017
      %v2082 = vld [vmem:[%s1441 + $0x1] sm:$0xff]
      %v2083 = vld [vmem:[%s1441 + $0x9] sm:$0xff]
      %v2084 = vld [vmem:[%s1441 + $0x19] sm:$0xff]
      %v2085 = vld [vmem:[%s1441 + $0x21] sm:$0xff]
      %v2086 = vld [vmem:[%s1441 + $0x31] sm:$0xff]
      %v2087 = vld [vmem:[%s1441 + $0x39] sm:$0xff]
      %v2088 = vld [vmem:[%s1441 + $0x49] sm:$0xff]
      %v2089 = vld [vmem:[%s1441 + $0x51] sm:$0xff]
      %v2090 = vld [vmem:[%s1441 + $0x61] sm:$0xff]
      %v2091 = vld [vmem:[%s1441 + $0x69] sm:$0xff]
      %v2092 = vld [vmem:[%s1441 + $0x79] sm:$0xff]
      %v2093 = vld [vmem:[%s1441 + $0x81] sm:$0xff]
      %v2094 = vld [vmem:[%s1441 + $0x91] sm:$0xff]
      %v2095 = vld [vmem:[%s1441 + $0x99] sm:$0xff]
      %v2096 = vld [vmem:[%s1441 + $0xa9] sm:$0xff]
      %v2097 = vld [vmem:[%s1441 + $0xb1] sm:$0xff]
      %v2098 = vld [vmem:[%s1441 + $0xc1] sm:$0xff]
      %v2099 = vld [vmem:[%s1441 + $0xc9] sm:$0xff]
      %v2100 = vld [vmem:[%s1441 + $0xd9] sm:$0xff]
      %v2101 = vld [vmem:[%s1441 + $0xe1] sm:$0xff]
      %v2102 = vld [vmem:[%s1441 + $0xf1] sm:$0xff]
      %v2103 = vld [vmem:[%s1441 + $0xf9] sm:$0xff]
      %v2104 = vld [vmem:[%s1441 + $0x109] sm:$0xff]
      %v2105 = vld [vmem:[%s1441 + $0x111] sm:$0xff]
      %v2106 = vld [vmem:[%s1441 + $0x121] sm:$0xff]
      %v2107 = vld [vmem:[%s1441 + $0x129] sm:$0xff]
      %v2108 = vld [vmem:[%s1441 + $0x139] sm:$0xff]
      %v2109 = vld [vmem:[%s1441 + $0x141] sm:$0xff]
      %v2110 = vld [vmem:[%s1441 + $0x151] sm:$0xff]
      %v2111 = vld [vmem:[%s1441 + $0x159] sm:$0xff]
      %v2112 = vld [vmem:[%s1441 + $0x169] sm:$0xff]
      %v2113 = vld [vmem:[%s1441 + $0x171] sm:$0xff]
      %2146 = vrot.lane.b32.xlu0 %v2082, 112
      %v2147 = vpop.permute.xlu0 %2146
      %2148 = vrot.lane.b32.xlu0 %v2083, 112
      %v2149 = vpop.permute.xlu0 %2148
      %2150 = vrot.lane.b32.xlu0 %v2084, 112
      %v2151 = vpop.permute.xlu0 %2150
      %2152 = vrot.lane.b32.xlu0 %v2085, 112
      %v2153 = vpop.permute.xlu0 %2152
      %2154 = vrot.lane.b32.xlu0 %v2086, 112
      %v2155 = vpop.permute.xlu0 %2154
      %2156 = vrot.lane.b32.xlu0 %v2087, 112
      %v2157 = vpop.permute.xlu0 %2156
      %2158 = vrot.lane.b32.xlu0 %v2088, 112
      %v2159 = vpop.permute.xlu0 %2158
      %2160 = vrot.lane.b32.xlu0 %v2089, 112
      %v2161 = vpop.permute.xlu0 %2160
      %2162 = vrot.lane.b32.xlu0 %v2090, 112
      %v2163 = vpop.permute.xlu0 %2162
      %2164 = vrot.lane.b32.xlu0 %v2091, 112
      %v2165 = vpop.permute.xlu0 %2164
      %2166 = vrot.lane.b32.xlu0 %v2092, 112
      %v2167 = vpop.permute.xlu0 %2166
      %2168 = vrot.lane.b32.xlu0 %v2093, 112
      %v2169 = vpop.permute.xlu0 %2168
      %2170 = vrot.lane.b32.xlu0 %v2094, 112
      %v2171 = vpop.permute.xlu0 %2170
      %2172 = vrot.lane.b32.xlu0 %v2095, 112
      %v2173 = vpop.permute.xlu0 %2172
      %2174 = vrot.lane.b32.xlu0 %v2096, 112
      %v2175 = vpop.permute.xlu0 %2174
      %2176 = vrot.lane.b32.xlu0 %v2097, 112
      %v2177 = vpop.permute.xlu0 %2176
      %2178 = vrot.lane.b32.xlu0 %v2098, 112
      %v2179 = vpop.permute.xlu0 %2178
      %2180 = vrot.lane.b32.xlu0 %v2099, 112
      %v2181 = vpop.permute.xlu0 %2180
      %2182 = vrot.lane.b32.xlu0 %v2100, 112
      %v2183 = vpop.permute.xlu0 %2182
      %2184 = vrot.lane.b32.xlu0 %v2101, 112
      %v2185 = vpop.permute.xlu0 %2184
      %2186 = vrot.lane.b32.xlu0 %v2102, 112
      %v2187 = vpop.permute.xlu0 %2186
      %2188 = vrot.lane.b32.xlu0 %v2103, 112
      %v2189 = vpop.permute.xlu0 %2188
      %2190 = vrot.lane.b32.xlu0 %v2104, 112
      %v2191 = vpop.permute.xlu0 %2190
      %2192 = vrot.lane.b32.xlu0 %v2105, 112
      %v2193 = vpop.permute.xlu0 %2192
      %2194 = vrot.lane.b32.xlu0 %v2106, 112
      %v2195 = vpop.permute.xlu0 %2194
      %2196 = vrot.lane.b32.xlu0 %v2107, 112
      %v2197 = vpop.permute.xlu0 %2196
      %2198 = vrot.lane.b32.xlu0 %v2108, 112
      %v2199 = vpop.permute.xlu0 %2198
      %2200 = vrot.lane.b32.xlu0 %v2109, 112
      %v2201 = vpop.permute.xlu0 %2200
      %2202 = vrot.lane.b32.xlu0 %v2110, 112
      %v2203 = vpop.permute.xlu0 %2202
      %2204 = vrot.lane.b32.xlu0 %v2111, 112
      %v2205 = vpop.permute.xlu0 %2204
      %2206 = vrot.lane.b32.xlu0 %v2112, 112
      %v2207 = vpop.permute.xlu0 %2206
      %2208 = vrot.lane.b32.xlu0 %v2113, 112
      %v2209 = vpop.permute.xlu0 %2208
      %v2242 = vadd.f32 %v2050, %v2147
      %v2243 = vadd.f32 %v2051, %v2149
      %v2244 = vadd.f32 %v2052, %v2151
      %v2245 = vadd.f32 %v2053, %v2153
      %v2246 = vadd.f32 %v2054, %v2155
      %v2247 = vadd.f32 %v2055, %v2157
      %v2248 = vadd.f32 %v2056, %v2159
      %v2249 = vadd.f32 %v2057, %v2161
      %v2250 = vadd.f32 %v2058, %v2163
      %v2251 = vadd.f32 %v2059, %v2165
      %v2252 = vadd.f32 %v2060, %v2167
      %v2253 = vadd.f32 %v2061, %v2169
      %v2254 = vadd.f32 %v2062, %v2171
      %v2255 = vadd.f32 %v2063, %v2173
      %v2256 = vadd.f32 %v2064, %v2175
      %v2257 = vadd.f32 %v2065, %v2177
      %v2258 = vadd.f32 %v2066, %v2179
      %v2259 = vadd.f32 %v2067, %v2181
      %v2260 = vadd.f32 %v2068, %v2183
      %v2261 = vadd.f32 %v2069, %v2185
      %v2262 = vadd.f32 %v2070, %v2187
      %v2263 = vadd.f32 %v2071, %v2189
      %v2264 = vadd.f32 %v2072, %v2191
      %v2265 = vadd.f32 %v2073, %v2193
      %v2266 = vadd.f32 %v2074, %v2195
      %v2267 = vadd.f32 %v2075, %v2197
      %v2268 = vadd.f32 %v2076, %v2199
      %v2269 = vadd.f32 %v2077, %v2201
      %v2270 = vadd.f32 %v2078, %v2203
      %v2271 = vadd.f32 %v2079, %v2205
      %v2272 = vadd.f32 %v2080, %v2207
      %v2273 = vadd.f32 %v2081, %v2209
      %v2274 = vld [vmem:[%s1441 + $0x2] sm:$0xff]
      %v2275 = vld [vmem:[%s1441 + $0xa] sm:$0xff]
      %v2276 = vld [vmem:[%s1441 + $0x1a] sm:$0xff]
      %v2277 = vld [vmem:[%s1441 + $0x22] sm:$0xff]
      %v2278 = vld [vmem:[%s1441 + $0x32] sm:$0xff]
      %v2279 = vld [vmem:[%s1441 + $0x3a] sm:$0xff]
      %v2280 = vld [vmem:[%s1441 + $0x4a] sm:$0xff]
      %v2281 = vld [vmem:[%s1441 + $0x52] sm:$0xff]
      %v2282 = vld [vmem:[%s1441 + $0x62] sm:$0xff]
      %v2283 = vld [vmem:[%s1441 + $0x6a] sm:$0xff]
      %v2284 = vld [vmem:[%s1441 + $0x7a] sm:$0xff]
      %v2285 = vld [vmem:[%s1441 + $0x82] sm:$0xff]
      %v2286 = vld [vmem:[%s1441 + $0x92] sm:$0xff]
      %v2287 = vld [vmem:[%s1441 + $0x9a] sm:$0xff]
      %v2288 = vld [vmem:[%s1441 + $0xaa] sm:$0xff]
      %v2289 = vld [vmem:[%s1441 + $0xb2] sm:$0xff]
      %v2290 = vld [vmem:[%s1441 + $0xc2] sm:$0xff]
      %v2291 = vld [vmem:[%s1441 + $0xca] sm:$0xff]
      %v2292 = vld [vmem:[%s1441 + $0xda] sm:$0xff]
      %v2293 = vld [vmem:[%s1441 + $0xe2] sm:$0xff]
      %v2294 = vld [vmem:[%s1441 + $0xf2] sm:$0xff]
      %v2295 = vld [vmem:[%s1441 + $0xfa] sm:$0xff]
      %v2296 = vld [vmem:[%s1441 + $0x10a] sm:$0xff]
      %v2297 = vld [vmem:[%s1441 + $0x112] sm:$0xff]
      %v2298 = vld [vmem:[%s1441 + $0x122] sm:$0xff]
      %v2299 = vld [vmem:[%s1441 + $0x12a] sm:$0xff]
      %v2300 = vld [vmem:[%s1441 + $0x13a] sm:$0xff]
      %v2301 = vld [vmem:[%s1441 + $0x142] sm:$0xff]
      %v2302 = vld [vmem:[%s1441 + $0x152] sm:$0xff]
      %v2303 = vld [vmem:[%s1441 + $0x15a] sm:$0xff]
      %v2304 = vld [vmem:[%s1441 + $0x16a] sm:$0xff]
      %v2305 = vld [vmem:[%s1441 + $0x172] sm:$0xff]
      %2338 = vrot.lane.b32.xlu0 %v2274, 108
      %v2339 = vpop.permute.xlu0 %2338
      %2340 = vrot.lane.b32.xlu0 %v2275, 108
      %v2341 = vpop.permute.xlu0 %2340
      %2342 = vrot.lane.b32.xlu0 %v2276, 108
      %v2343 = vpop.permute.xlu0 %2342
      %2344 = vrot.lane.b32.xlu0 %v2277, 108
      %v2345 = vpop.permute.xlu0 %2344
      %2346 = vrot.lane.b32.xlu0 %v2278, 108
      %v2347 = vpop.permute.xlu0 %2346
      %2348 = vrot.lane.b32.xlu0 %v2279, 108
      %v2349 = vpop.permute.xlu0 %2348
      %2350 = vrot.lane.b32.xlu0 %v2280, 108
      %v2351 = vpop.permute.xlu0 %2350
      %2352 = vrot.lane.b32.xlu0 %v2281, 108
      %v2353 = vpop.permute.xlu0 %2352
      %2354 = vrot.lane.b32.xlu0 %v2282, 108
      %v2355 = vpop.permute.xlu0 %2354
      %2356 = vrot.lane.b32.xlu0 %v2283, 108
      %v2357 = vpop.permute.xlu0 %2356
      %2358 = vrot.lane.b32.xlu0 %v2284, 108
      %v2359 = vpop.permute.xlu0 %2358
      %2360 = vrot.lane.b32.xlu0 %v2285, 108
      %v2361 = vpop.permute.xlu0 %2360
      %2362 = vrot.lane.b32.xlu0 %v2286, 108
      %v2363 = vpop.permute.xlu0 %2362
      %2364 = vrot.lane.b32.xlu0 %v2287, 108
      %v2365 = vpop.permute.xlu0 %2364
      %2366 = vrot.lane.b32.xlu0 %v2288, 108
      %v2367 = vpop.permute.xlu0 %2366
      %2368 = vrot.lane.b32.xlu0 %v2289, 108
      %v2369 = vpop.permute.xlu0 %2368
      %2370 = vrot.lane.b32.xlu0 %v2290, 108
      %v2371 = vpop.permute.xlu0 %2370
      %2372 = vrot.lane.b32.xlu0 %v2291, 108
      %v2373 = vpop.permute.xlu0 %2372
      %2374 = vrot.lane.b32.xlu0 %v2292, 108
      %v2375 = vpop.permute.xlu0 %2374
      %2376 = vrot.lane.b32.xlu0 %v2293, 108
      %v2377 = vpop.permute.xlu0 %2376
      %2378 = vrot.lane.b32.xlu0 %v2294, 108
      %v2379 = vpop.permute.xlu0 %2378
      %2380 = vrot.lane.b32.xlu0 %v2295, 108
      %v2381 = vpop.permute.xlu0 %2380
      %2382 = vrot.lane.b32.xlu0 %v2296, 108
      %v2383 = vpop.permute.xlu0 %2382
      %2384 = vrot.lane.b32.xlu0 %v2297, 108
      %v2385 = vpop.permute.xlu0 %2384
      %2386 = vrot.lane.b32.xlu0 %v2298, 108
      %v2387 = vpop.permute.xlu0 %2386
      %2388 = vrot.lane.b32.xlu0 %v2299, 108
      %v2389 = vpop.permute.xlu0 %2388
      %2390 = vrot.lane.b32.xlu0 %v2300, 108
      %v2391 = vpop.permute.xlu0 %2390
      %2392 = vrot.lane.b32.xlu0 %v2301, 108
      %v2393 = vpop.permute.xlu0 %2392
      %2394 = vrot.lane.b32.xlu0 %v2302, 108
      %v2395 = vpop.permute.xlu0 %2394
      %2396 = vrot.lane.b32.xlu0 %v2303, 108
      %v2397 = vpop.permute.xlu0 %2396
      %2398 = vrot.lane.b32.xlu0 %v2304, 108
      %v2399 = vpop.permute.xlu0 %2398
      %2400 = vrot.lane.b32.xlu0 %v2305, 108
      %v2401 = vpop.permute.xlu0 %2400
      %v2434 = vadd.f32 %v2242, %v2339
      %v2435 = vadd.f32 %v2243, %v2341
      %v2436 = vadd.f32 %v2244, %v2343
      %v2437 = vadd.f32 %v2245, %v2345
      %v2438 = vadd.f32 %v2246, %v2347
      %v2439 = vadd.f32 %v2247, %v2349
      %v2440 = vadd.f32 %v2248, %v2351
      %v2441 = vadd.f32 %v2249, %v2353
      %v2442 = vadd.f32 %v2250, %v2355
      %v2443 = vadd.f32 %v2251, %v2357
      %v2444 = vadd.f32 %v2252, %v2359
      %v2445 = vadd.f32 %v2253, %v2361
      %v2446 = vadd.f32 %v2254, %v2363
      %v2447 = vadd.f32 %v2255, %v2365
      %v2448 = vadd.f32 %v2256, %v2367
      %v2449 = vadd.f32 %v2257, %v2369
      %v2450 = vadd.f32 %v2258, %v2371
      %v2451 = vadd.f32 %v2259, %v2373
      %v2452 = vadd.f32 %v2260, %v2375
      %v2453 = vadd.f32 %v2261, %v2377
      %v2454 = vadd.f32 %v2262, %v2379
      %v2455 = vadd.f32 %v2263, %v2381
      %v2456 = vadd.f32 %v2264, %v2383
      %v2457 = vadd.f32 %v2265, %v2385
      %v2458 = vadd.f32 %v2266, %v2387
      %v2459 = vadd.f32 %v2267, %v2389
      %v2460 = vadd.f32 %v2268, %v2391
      %v2461 = vadd.f32 %v2269, %v2393
      %v2462 = vadd.f32 %v2270, %v2395
      %v2463 = vadd.f32 %v2271, %v2397
      %v2464 = vadd.f32 %v2272, %v2399
      %v2465 = vadd.f32 %v2273, %v2401
      %s2466 = scalar_lea.vmem [#allocation2], 48
      %v2467 = vld [vmem:[%s2466] sm:$0xff]
      %v2468 = vld [vmem:[%s2466 + $0x8] sm:$0xff]
      %v2469 = vld [vmem:[%s2466 + $0x18] sm:$0xff]
      %v2470 = vld [vmem:[%s2466 + $0x20] sm:$0xff]
      %v2471 = vld [vmem:[%s2466 + $0x30] sm:$0xff]
      %v2472 = vld [vmem:[%s2466 + $0x38] sm:$0xff]
      %v2473 = vld [vmem:[%s2466 + $0x48] sm:$0xff]
      %v2474 = vld [vmem:[%s2466 + $0x50] sm:$0xff]
      %v2475 = vld [vmem:[%s2466 + $0x60] sm:$0xff]
      %v2476 = vld [vmem:[%s2466 + $0x68] sm:$0xff]
      %v2477 = vld [vmem:[%s2466 + $0x78] sm:$0xff]
      %v2478 = vld [vmem:[%s2466 + $0x80] sm:$0xff]
      %v2479 = vld [vmem:[%s2466 + $0x90] sm:$0xff]
      %v2480 = vld [vmem:[%s2466 + $0x98] sm:$0xff]
      %v2481 = vld [vmem:[%s2466 + $0xa8] sm:$0xff]
      %v2482 = vld [vmem:[%s2466 + $0xb0] sm:$0xff]
      %v2483 = vld [vmem:[%s2466 + $0xc0] sm:$0xff]
      %v2484 = vld [vmem:[%s2466 + $0xc8] sm:$0xff]
      %v2485 = vld [vmem:[%s2466 + $0xd8] sm:$0xff]
      %v2486 = vld [vmem:[%s2466 + $0xe0] sm:$0xff]
      %v2487 = vld [vmem:[%s2466 + $0xf0] sm:$0xff]
      %v2488 = vld [vmem:[%s2466 + $0xf8] sm:$0xff]
      %v2489 = vld [vmem:[%s2466 + $0x108] sm:$0xff]
      %v2490 = vld [vmem:[%s2466 + $0x110] sm:$0xff]
      %v2491 = vld [vmem:[%s2466 + $0x120] sm:$0xff]
      %v2492 = vld [vmem:[%s2466 + $0x128] sm:$0xff]
      %v2493 = vld [vmem:[%s2466 + $0x138] sm:$0xff]
      %v2494 = vld [vmem:[%s2466 + $0x140] sm:$0xff]
      %v2495 = vld [vmem:[%s2466 + $0x150] sm:$0xff]
      %v2496 = vld [vmem:[%s2466 + $0x158] sm:$0xff]
      %v2497 = vld [vmem:[%s2466 + $0x168] sm:$0xff]
      %v2498 = vld [vmem:[%s2466 + $0x170] sm:$0xff]
      %2531 = vrot.lane.b32.xlu0 %v2467, 104
      %v2532 = vpop.permute.xlu0 %2531
      %2533 = vrot.lane.b32.xlu0 %v2468, 104
      %v2534 = vpop.permute.xlu0 %2533
      %2535 = vrot.lane.b32.xlu0 %v2469, 104
      %v2536 = vpop.permute.xlu0 %2535
      %2537 = vrot.lane.b32.xlu0 %v2470, 104
      %v2538 = vpop.permute.xlu0 %2537
      %2539 = vrot.lane.b32.xlu0 %v2471, 104
      %v2540 = vpop.permute.xlu0 %2539
      %2541 = vrot.lane.b32.xlu0 %v2472, 104
      %v2542 = vpop.permute.xlu0 %2541
      %2543 = vrot.lane.b32.xlu0 %v2473, 104
      %v2544 = vpop.permute.xlu0 %2543
      %2545 = vrot.lane.b32.xlu0 %v2474, 104
      %v2546 = vpop.permute.xlu0 %2545
      %2547 = vrot.lane.b32.xlu0 %v2475, 104
      %v2548 = vpop.permute.xlu0 %2547
      %2549 = vrot.lane.b32.xlu0 %v2476, 104
      %v2550 = vpop.permute.xlu0 %2549
      %2551 = vrot.lane.b32.xlu0 %v2477, 104
      %v2552 = vpop.permute.xlu0 %2551
      %2553 = vrot.lane.b32.xlu0 %v2478, 104
      %v2554 = vpop.permute.xlu0 %2553
      %2555 = vrot.lane.b32.xlu0 %v2479, 104
      %v2556 = vpop.permute.xlu0 %2555
      %2557 = vrot.lane.b32.xlu0 %v2480, 104
      %v2558 = vpop.permute.xlu0 %2557
      %2559 = vrot.lane.b32.xlu0 %v2481, 104
      %v2560 = vpop.permute.xlu0 %2559
      %2561 = vrot.lane.b32.xlu0 %v2482, 104
      %v2562 = vpop.permute.xlu0 %2561
      %2563 = vrot.lane.b32.xlu0 %v2483, 104
      %v2564 = vpop.permute.xlu0 %2563
      %2565 = vrot.lane.b32.xlu0 %v2484, 104
      %v2566 = vpop.permute.xlu0 %2565
      %2567 = vrot.lane.b32.xlu0 %v2485, 104
      %v2568 = vpop.permute.xlu0 %2567
      %2569 = vrot.lane.b32.xlu0 %v2486, 104
      %v2570 = vpop.permute.xlu0 %2569
      %2571 = vrot.lane.b32.xlu0 %v2487, 104
      %v2572 = vpop.permute.xlu0 %2571
      %2573 = vrot.lane.b32.xlu0 %v2488, 104
      %v2574 = vpop.permute.xlu0 %2573
      %2575 = vrot.lane.b32.xlu0 %v2489, 104
      %v2576 = vpop.permute.xlu0 %2575
      %2577 = vrot.lane.b32.xlu0 %v2490, 104
      %v2578 = vpop.permute.xlu0 %2577
      %2579 = vrot.lane.b32.xlu0 %v2491, 104
      %v2580 = vpop.permute.xlu0 %2579
      %2581 = vrot.lane.b32.xlu0 %v2492, 104
      %v2582 = vpop.permute.xlu0 %2581
      %2583 = vrot.lane.b32.xlu0 %v2493, 104
      %v2584 = vpop.permute.xlu0 %2583
      %2585 = vrot.lane.b32.xlu0 %v2494, 104
      %v2586 = vpop.permute.xlu0 %2585
      %2587 = vrot.lane.b32.xlu0 %v2495, 104
      %v2588 = vpop.permute.xlu0 %2587
      %2589 = vrot.lane.b32.xlu0 %v2496, 104
      %v2590 = vpop.permute.xlu0 %2589
      %2591 = vrot.lane.b32.xlu0 %v2497, 104
      %v2592 = vpop.permute.xlu0 %2591
      %2593 = vrot.lane.b32.xlu0 %v2498, 104
      %v2594 = vpop.permute.xlu0 %2593
      %v2627 = vadd.f32 %v2434, %v2532
      %v2628 = vadd.f32 %v2435, %v2534
      %v2629 = vadd.f32 %v2436, %v2536
      %v2630 = vadd.f32 %v2437, %v2538
      %v2631 = vadd.f32 %v2438, %v2540
      %v2632 = vadd.f32 %v2439, %v2542
      %v2633 = vadd.f32 %v2440, %v2544
      %v2634 = vadd.f32 %v2441, %v2546
      %v2635 = vadd.f32 %v2442, %v2548
      %v2636 = vadd.f32 %v2443, %v2550
      %v2637 = vadd.f32 %v2444, %v2552
      %v2638 = vadd.f32 %v2445, %v2554
      %v2639 = vadd.f32 %v2446, %v2556
      %v2640 = vadd.f32 %v2447, %v2558
      %v2641 = vadd.f32 %v2448, %v2560
      %v2642 = vadd.f32 %v2449, %v2562
      %v2643 = vadd.f32 %v2450, %v2564
      %v2644 = vadd.f32 %v2451, %v2566
      %v2645 = vadd.f32 %v2452, %v2568
      %v2646 = vadd.f32 %v2453, %v2570
      %v2647 = vadd.f32 %v2454, %v2572
      %v2648 = vadd.f32 %v2455, %v2574
      %v2649 = vadd.f32 %v2456, %v2576
      %v2650 = vadd.f32 %v2457, %v2578
      %v2651 = vadd.f32 %v2458, %v2580
      %v2652 = vadd.f32 %v2459, %v2582
      %v2653 = vadd.f32 %v2460, %v2584
      %v2654 = vadd.f32 %v2461, %v2586
      %v2655 = vadd.f32 %v2462, %v2588
      %v2656 = vadd.f32 %v2463, %v2590
      %v2657 = vadd.f32 %v2464, %v2592
      %v2658 = vadd.f32 %v2465, %v2594
      %v2659 = vld [vmem:[%s2466 + $0x1] sm:$0xff]
      %v2660 = vld [vmem:[%s2466 + $0x9] sm:$0xff]
      %v2661 = vld [vmem:[%s2466 + $0x19] sm:$0xff]
      %v2662 = vld [vmem:[%s2466 + $0x21] sm:$0xff]
      %v2663 = vld [vmem:[%s2466 + $0x31] sm:$0xff]
      %v2664 = vld [vmem:[%s2466 + $0x39] sm:$0xff]
      %v2665 = vld [vmem:[%s2466 + $0x49] sm:$0xff]
      %v2666 = vld [vmem:[%s2466 + $0x51] sm:$0xff]
      %v2667 = vld [vmem:[%s2466 + $0x61] sm:$0xff]
      %v2668 = vld [vmem:[%s2466 + $0x69] sm:$0xff]
      %v2669 = vld [vmem:[%s2466 + $0x79] sm:$0xff]
      %v2670 = vld [vmem:[%s2466 + $0x81] sm:$0xff]
      %v2671 = vld [vmem:[%s2466 + $0x91] sm:$0xff]
      %v2672 = vld [vmem:[%s2466 + $0x99] sm:$0xff]
      %v2673 = vld [vmem:[%s2466 + $0xa9] sm:$0xff]
      %v2674 = vld [vmem:[%s2466 + $0xb1] sm:$0xff]
      %v2675 = vld [vmem:[%s2466 + $0xc1] sm:$0xff]
      %v2676 = vld [vmem:[%s2466 + $0xc9] sm:$0xff]
      %v2677 = vld [vmem:[%s2466 + $0xd9] sm:$0xff]
      %v2678 = vld [vmem:[%s2466 + $0xe1] sm:$0xff]
      %v2679 = vld [vmem:[%s2466 + $0xf1] sm:$0xff]
      %v2680 = vld [vmem:[%s2466 + $0xf9] sm:$0xff]
      %v2681 = vld [vmem:[%s2466 + $0x109] sm:$0xff]
      %v2682 = vld [vmem:[%s2466 + $0x111] sm:$0xff]
      %v2683 = vld [vmem:[%s2466 + $0x121] sm:$0xff]
      %v2684 = vld [vmem:[%s2466 + $0x129] sm:$0xff]
      %v2685 = vld [vmem:[%s2466 + $0x139] sm:$0xff]
      %v2686 = vld [vmem:[%s2466 + $0x141] sm:$0xff]
      %v2687 = vld [vmem:[%s2466 + $0x151] sm:$0xff]
      %v2688 = vld [vmem:[%s2466 + $0x159] sm:$0xff]
      %v2689 = vld [vmem:[%s2466 + $0x169] sm:$0xff]
      %v2690 = vld [vmem:[%s2466 + $0x171] sm:$0xff]
      %2723 = vrot.lane.b32.xlu0 %v2659, 100
      %v2724 = vpop.permute.xlu0 %2723
      %2725 = vrot.lane.b32.xlu0 %v2660, 100
      %v2726 = vpop.permute.xlu0 %2725
      %2727 = vrot.lane.b32.xlu0 %v2661, 100
      %v2728 = vpop.permute.xlu0 %2727
      %2729 = vrot.lane.b32.xlu0 %v2662, 100
      %v2730 = vpop.permute.xlu0 %2729
      %2731 = vrot.lane.b32.xlu0 %v2663, 100
      %v2732 = vpop.permute.xlu0 %2731
      %2733 = vrot.lane.b32.xlu0 %v2664, 100
      %v2734 = vpop.permute.xlu0 %2733
      %2735 = vrot.lane.b32.xlu0 %v2665, 100
      %v2736 = vpop.permute.xlu0 %2735
      %2737 = vrot.lane.b32.xlu0 %v2666, 100
      %v2738 = vpop.permute.xlu0 %2737
      %2739 = vrot.lane.b32.xlu0 %v2667, 100
      %v2740 = vpop.permute.xlu0 %2739
      %2741 = vrot.lane.b32.xlu0 %v2668, 100
      %v2742 = vpop.permute.xlu0 %2741
      %2743 = vrot.lane.b32.xlu0 %v2669, 100
      %v2744 = vpop.permute.xlu0 %2743
      %2745 = vrot.lane.b32.xlu0 %v2670, 100
      %v2746 = vpop.permute.xlu0 %2745
      %2747 = vrot.lane.b32.xlu0 %v2671, 100
      %v2748 = vpop.permute.xlu0 %2747
      %2749 = vrot.lane.b32.xlu0 %v2672, 100
      %v2750 = vpop.permute.xlu0 %2749
      %2751 = vrot.lane.b32.xlu0 %v2673, 100
      %v2752 = vpop.permute.xlu0 %2751
      %2753 = vrot.lane.b32.xlu0 %v2674, 100
      %v2754 = vpop.permute.xlu0 %2753
      %2755 = vrot.lane.b32.xlu0 %v2675, 100
      %v2756 = vpop.permute.xlu0 %2755
      %2757 = vrot.lane.b32.xlu0 %v2676, 100
      %v2758 = vpop.permute.xlu0 %2757
      %2759 = vrot.lane.b32.xlu0 %v2677, 100
      %v2760 = vpop.permute.xlu0 %2759
      %2761 = vrot.lane.b32.xlu0 %v2678, 100
      %v2762 = vpop.permute.xlu0 %2761
      %2763 = vrot.lane.b32.xlu0 %v2679, 100
      %v2764 = vpop.permute.xlu0 %2763
      %2765 = vrot.lane.b32.xlu0 %v2680, 100
      %v2766 = vpop.permute.xlu0 %2765
      %2767 = vrot.lane.b32.xlu0 %v2681, 100
      %v2768 = vpop.permute.xlu0 %2767
      %2769 = vrot.lane.b32.xlu0 %v2682, 100
      %v2770 = vpop.permute.xlu0 %2769
      %2771 = vrot.lane.b32.xlu0 %v2683, 100
      %v2772 = vpop.permute.xlu0 %2771
      %2773 = vrot.lane.b32.xlu0 %v2684, 100
      %v2774 = vpop.permute.xlu0 %2773
      %2775 = vrot.lane.b32.xlu0 %v2685, 100
      %v2776 = vpop.permute.xlu0 %2775
      %2777 = vrot.lane.b32.xlu0 %v2686, 100
      %v2778 = vpop.permute.xlu0 %2777
      %2779 = vrot.lane.b32.xlu0 %v2687, 100
      %v2780 = vpop.permute.xlu0 %2779
      %2781 = vrot.lane.b32.xlu0 %v2688, 100
      %v2782 = vpop.permute.xlu0 %2781
      %2783 = vrot.lane.b32.xlu0 %v2689, 100
      %v2784 = vpop.permute.xlu0 %2783
      %2785 = vrot.lane.b32.xlu0 %v2690, 100
      %v2786 = vpop.permute.xlu0 %2785
      %v2819 = vadd.f32 %v2627, %v2724
      %v2820 = vadd.f32 %v2628, %v2726
      %v2821 = vadd.f32 %v2629, %v2728
      %v2822 = vadd.f32 %v2630, %v2730
      %v2823 = vadd.f32 %v2631, %v2732
      %v2824 = vadd.f32 %v2632, %v2734
      %v2825 = vadd.f32 %v2633, %v2736
      %v2826 = vadd.f32 %v2634, %v2738
      %v2827 = vadd.f32 %v2635, %v2740
      %v2828 = vadd.f32 %v2636, %v2742
      %v2829 = vadd.f32 %v2637, %v2744
      %v2830 = vadd.f32 %v2638, %v2746
      %v2831 = vadd.f32 %v2639, %v2748
      %v2832 = vadd.f32 %v2640, %v2750
      %v2833 = vadd.f32 %v2641, %v2752
      %v2834 = vadd.f32 %v2642, %v2754
      %v2835 = vadd.f32 %v2643, %v2756
      %v2836 = vadd.f32 %v2644, %v2758
      %v2837 = vadd.f32 %v2645, %v2760
      %v2838 = vadd.f32 %v2646, %v2762
      %v2839 = vadd.f32 %v2647, %v2764
      %v2840 = vadd.f32 %v2648, %v2766
      %v2841 = vadd.f32 %v2649, %v2768
      %v2842 = vadd.f32 %v2650, %v2770
      %v2843 = vadd.f32 %v2651, %v2772
      %v2844 = vadd.f32 %v2652, %v2774
      %v2845 = vadd.f32 %v2653, %v2776
      %v2846 = vadd.f32 %v2654, %v2778
      %v2847 = vadd.f32 %v2655, %v2780
      %v2848 = vadd.f32 %v2656, %v2782
      %v2849 = vadd.f32 %v2657, %v2784
      %v2850 = vadd.f32 %v2658, %v2786
      %v2851 = vld [vmem:[%s2466 + $0x2] sm:$0xff]
      %v2852 = vld [vmem:[%s2466 + $0xa] sm:$0xff]
      %v2853 = vld [vmem:[%s2466 + $0x1a] sm:$0xff]
      %v2854 = vld [vmem:[%s2466 + $0x22] sm:$0xff]
      %v2855 = vld [vmem:[%s2466 + $0x32] sm:$0xff]
      %v2856 = vld [vmem:[%s2466 + $0x3a] sm:$0xff]
      %v2857 = vld [vmem:[%s2466 + $0x4a] sm:$0xff]
      %v2858 = vld [vmem:[%s2466 + $0x52] sm:$0xff]
      %v2859 = vld [vmem:[%s2466 + $0x62] sm:$0xff]
      %v2860 = vld [vmem:[%s2466 + $0x6a] sm:$0xff]
      %v2861 = vld [vmem:[%s2466 + $0x7a] sm:$0xff]
      %v2862 = vld [vmem:[%s2466 + $0x82] sm:$0xff]
      %v2863 = vld [vmem:[%s2466 + $0x92] sm:$0xff]
      %v2864 = vld [vmem:[%s2466 + $0x9a] sm:$0xff]
      %v2865 = vld [vmem:[%s2466 + $0xaa] sm:$0xff]
      %v2866 = vld [vmem:[%s2466 + $0xb2] sm:$0xff]
      %v2867 = vld [vmem:[%s2466 + $0xc2] sm:$0xff]
      %v2868 = vld [vmem:[%s2466 + $0xca] sm:$0xff]
      %v2869 = vld [vmem:[%s2466 + $0xda] sm:$0xff]
      %v2870 = vld [vmem:[%s2466 + $0xe2] sm:$0xff]
      %v2871 = vld [vmem:[%s2466 + $0xf2] sm:$0xff]
      %v2872 = vld [vmem:[%s2466 + $0xfa] sm:$0xff]
      %v2873 = vld [vmem:[%s2466 + $0x10a] sm:$0xff]
      %v2874 = vld [vmem:[%s2466 + $0x112] sm:$0xff]
      %v2875 = vld [vmem:[%s2466 + $0x122] sm:$0xff]
      %v2876 = vld [vmem:[%s2466 + $0x12a] sm:$0xff]
      %v2877 = vld [vmem:[%s2466 + $0x13a] sm:$0xff]
      %v2878 = vld [vmem:[%s2466 + $0x142] sm:$0xff]
      %v2879 = vld [vmem:[%s2466 + $0x152] sm:$0xff]
      %v2880 = vld [vmem:[%s2466 + $0x15a] sm:$0xff]
      %v2881 = vld [vmem:[%s2466 + $0x16a] sm:$0xff]
      %v2882 = vld [vmem:[%s2466 + $0x172] sm:$0xff]
      %2915 = vrot.lane.b32.xlu0 %v2851, 96
      %v2916 = vpop.permute.xlu0 %2915
      %2917 = vrot.lane.b32.xlu0 %v2852, 96
      %v2918 = vpop.permute.xlu0 %2917
      %2919 = vrot.lane.b32.xlu0 %v2853, 96
      %v2920 = vpop.permute.xlu0 %2919
      %2921 = vrot.lane.b32.xlu0 %v2854, 96
      %v2922 = vpop.permute.xlu0 %2921
      %2923 = vrot.lane.b32.xlu0 %v2855, 96
      %v2924 = vpop.permute.xlu0 %2923
      %2925 = vrot.lane.b32.xlu0 %v2856, 96
      %v2926 = vpop.permute.xlu0 %2925
      %2927 = vrot.lane.b32.xlu0 %v2857, 96
      %v2928 = vpop.permute.xlu0 %2927
      %2929 = vrot.lane.b32.xlu0 %v2858, 96
      %v2930 = vpop.permute.xlu0 %2929
      %2931 = vrot.lane.b32.xlu0 %v2859, 96
      %v2932 = vpop.permute.xlu0 %2931
      %2933 = vrot.lane.b32.xlu0 %v2860, 96
      %v2934 = vpop.permute.xlu0 %2933
      %2935 = vrot.lane.b32.xlu0 %v2861, 96
      %v2936 = vpop.permute.xlu0 %2935
      %2937 = vrot.lane.b32.xlu0 %v2862, 96
      %v2938 = vpop.permute.xlu0 %2937
      %2939 = vrot.lane.b32.xlu0 %v2863, 96
      %v2940 = vpop.permute.xlu0 %2939
      %2941 = vrot.lane.b32.xlu0 %v2864, 96
      %v2942 = vpop.permute.xlu0 %2941
      %2943 = vrot.lane.b32.xlu0 %v2865, 96
      %v2944 = vpop.permute.xlu0 %2943
      %2945 = vrot.lane.b32.xlu0 %v2866, 96
      %v2946 = vpop.permute.xlu0 %2945
      %2947 = vrot.lane.b32.xlu0 %v2867, 96
      %v2948 = vpop.permute.xlu0 %2947
      %2949 = vrot.lane.b32.xlu0 %v2868, 96
      %v2950 = vpop.permute.xlu0 %2949
      %2951 = vrot.lane.b32.xlu0 %v2869, 96
      %v2952 = vpop.permute.xlu0 %2951
      %2953 = vrot.lane.b32.xlu0 %v2870, 96
      %v2954 = vpop.permute.xlu0 %2953
      %2955 = vrot.lane.b32.xlu0 %v2871, 96
      %v2956 = vpop.permute.xlu0 %2955
      %2957 = vrot.lane.b32.xlu0 %v2872, 96
      %v2958 = vpop.permute.xlu0 %2957
      %2959 = vrot.lane.b32.xlu0 %v2873, 96
      %v2960 = vpop.permute.xlu0 %2959
      %2961 = vrot.lane.b32.xlu0 %v2874, 96
      %v2962 = vpop.permute.xlu0 %2961
      %2963 = vrot.lane.b32.xlu0 %v2875, 96
      %v2964 = vpop.permute.xlu0 %2963
      %2965 = vrot.lane.b32.xlu0 %v2876, 96
      %v2966 = vpop.permute.xlu0 %2965
      %2967 = vrot.lane.b32.xlu0 %v2877, 96
      %v2968 = vpop.permute.xlu0 %2967
      %2969 = vrot.lane.b32.xlu0 %v2878, 96
      %v2970 = vpop.permute.xlu0 %2969
      %2971 = vrot.lane.b32.xlu0 %v2879, 96
      %v2972 = vpop.permute.xlu0 %2971
      %2973 = vrot.lane.b32.xlu0 %v2880, 96
      %v2974 = vpop.permute.xlu0 %2973
      %2975 = vrot.lane.b32.xlu0 %v2881, 96
      %v2976 = vpop.permute.xlu0 %2975
      %2977 = vrot.lane.b32.xlu0 %v2882, 96
      %v2978 = vpop.permute.xlu0 %2977
      %v3011 = vadd.f32 %v2819, %v2916
      %v3012 = vadd.f32 %v2820, %v2918
      %v3013 = vadd.f32 %v2821, %v2920
      %v3014 = vadd.f32 %v2822, %v2922
      %v3015 = vadd.f32 %v2823, %v2924
      %v3016 = vadd.f32 %v2824, %v2926
      %v3017 = vadd.f32 %v2825, %v2928
      %v3018 = vadd.f32 %v2826, %v2930
      %v3019 = vadd.f32 %v2827, %v2932
      %v3020 = vadd.f32 %v2828, %v2934
      %v3021 = vadd.f32 %v2829, %v2936
      %v3022 = vadd.f32 %v2830, %v2938
      %v3023 = vadd.f32 %v2831, %v2940
      %v3024 = vadd.f32 %v2832, %v2942
      %v3025 = vadd.f32 %v2833, %v2944
      %v3026 = vadd.f32 %v2834, %v2946
      %v3027 = vadd.f32 %v2835, %v2948
      %v3028 = vadd.f32 %v2836, %v2950
      %v3029 = vadd.f32 %v2837, %v2952
      %v3030 = vadd.f32 %v2838, %v2954
      %v3031 = vadd.f32 %v2839, %v2956
      %v3032 = vadd.f32 %v2840, %v2958
      %v3033 = vadd.f32 %v2841, %v2960
      %v3034 = vadd.f32 %v2842, %v2962
      %v3035 = vadd.f32 %v2843, %v2964
      %v3036 = vadd.f32 %v2844, %v2966
      %v3037 = vadd.f32 %v2845, %v2968
      %v3038 = vadd.f32 %v2846, %v2970
      %v3039 = vadd.f32 %v2847, %v2972
      %v3040 = vadd.f32 %v2848, %v2974
      %v3041 = vadd.f32 %v2849, %v2976
      %v3042 = vadd.f32 %v2850, %v2978
      %3075 = vrot.lane.b32.xlu0 %v3011, 4
      %v3076 = vpop.permute.xlu0 %3075
      %3077 = vrot.lane.b32.xlu0 %v3012, 4
      %v3078 = vpop.permute.xlu0 %3077
      %3079 = vrot.lane.b32.xlu0 %v3013, 4
      %v3080 = vpop.permute.xlu0 %3079
      %3081 = vrot.lane.b32.xlu0 %v3014, 4
      %v3082 = vpop.permute.xlu0 %3081
      %3083 = vrot.lane.b32.xlu0 %v3015, 4
      %v3084 = vpop.permute.xlu0 %3083
      %3085 = vrot.lane.b32.xlu0 %v3016, 4
      %v3086 = vpop.permute.xlu0 %3085
      %3087 = vrot.lane.b32.xlu0 %v3017, 4
      %v3088 = vpop.permute.xlu0 %3087
      %3089 = vrot.lane.b32.xlu0 %v3018, 4
      %v3090 = vpop.permute.xlu0 %3089
      %3091 = vrot.lane.b32.xlu0 %v3019, 4
      %v3092 = vpop.permute.xlu0 %3091
      %3093 = vrot.lane.b32.xlu0 %v3020, 4
      %v3094 = vpop.permute.xlu0 %3093
      %3095 = vrot.lane.b32.xlu0 %v3021, 4
      %v3096 = vpop.permute.xlu0 %3095
      %3097 = vrot.lane.b32.xlu0 %v3022, 4
      %v3098 = vpop.permute.xlu0 %3097
      %3099 = vrot.lane.b32.xlu0 %v3023, 4
      %v3100 = vpop.permute.xlu0 %3099
      %3101 = vrot.lane.b32.xlu0 %v3024, 4
      %v3102 = vpop.permute.xlu0 %3101
      %3103 = vrot.lane.b32.xlu0 %v3025, 4
      %v3104 = vpop.permute.xlu0 %3103
      %3105 = vrot.lane.b32.xlu0 %v3026, 4
      %v3106 = vpop.permute.xlu0 %3105
      %3107 = vrot.lane.b32.xlu0 %v3027, 4
      %v3108 = vpop.permute.xlu0 %3107
      %3109 = vrot.lane.b32.xlu0 %v3028, 4
      %v3110 = vpop.permute.xlu0 %3109
      %3111 = vrot.lane.b32.xlu0 %v3029, 4
      %v3112 = vpop.permute.xlu0 %3111
      %3113 = vrot.lane.b32.xlu0 %v3030, 4
      %v3114 = vpop.permute.xlu0 %3113
      %3115 = vrot.lane.b32.xlu0 %v3031, 4
      %v3116 = vpop.permute.xlu0 %3115
      %3117 = vrot.lane.b32.xlu0 %v3032, 4
      %v3118 = vpop.permute.xlu0 %3117
      %3119 = vrot.lane.b32.xlu0 %v3033, 4
      %v3120 = vpop.permute.xlu0 %3119
      %3121 = vrot.lane.b32.xlu0 %v3034, 4
      %v3122 = vpop.permute.xlu0 %3121
      %3123 = vrot.lane.b32.xlu0 %v3035, 4
      %v3124 = vpop.permute.xlu0 %3123
      %3125 = vrot.lane.b32.xlu0 %v3036, 4
      %v3126 = vpop.permute.xlu0 %3125
      %3127 = vrot.lane.b32.xlu0 %v3037, 4
      %v3128 = vpop.permute.xlu0 %3127
      %3129 = vrot.lane.b32.xlu0 %v3038, 4
      %v3130 = vpop.permute.xlu0 %3129
      %3131 = vrot.lane.b32.xlu0 %v3039, 4
      %v3132 = vpop.permute.xlu0 %3131
      %3133 = vrot.lane.b32.xlu0 %v3040, 4
      %v3134 = vpop.permute.xlu0 %3133
      %3135 = vrot.lane.b32.xlu0 %v3041, 4
      %v3136 = vpop.permute.xlu0 %3135
      %3137 = vrot.lane.b32.xlu0 %v3042, 4
      %v3138 = vpop.permute.xlu0 %3137
      %vm3171 = vcmask 64544
      %3172 = vst.msk [vmem:[%s602] sm:$0xff] %vm3171, %v3076
      %3173 = vst.msk [vmem:[%s602 + $0x8] sm:$0xff] %vm3171, %v3078
      %3174 = vst.msk [vmem:[%s602 + $0x10] sm:$0xff] %vm3171, %v3080
      %3175 = vst.msk [vmem:[%s602 + $0x18] sm:$0xff] %vm3171, %v3082
      %3176 = vst.msk [vmem:[%s602 + $0x20] sm:$0xff] %vm3171, %v3084
      %3177 = vst.msk [vmem:[%s602 + $0x28] sm:$0xff] %vm3171, %v3086
      %3178 = vst.msk [vmem:[%s602 + $0x30] sm:$0xff] %vm3171, %v3088
      %3179 = vst.msk [vmem:[%s602 + $0x38] sm:$0xff] %vm3171, %v3090
      %3180 = vst.msk [vmem:[%s602 + $0x40] sm:$0xff] %vm3171, %v3092
      %3181 = vst.msk [vmem:[%s602 + $0x48] sm:$0xff] %vm3171, %v3094
      %3182 = vst.msk [vmem:[%s602 + $0x50] sm:$0xff] %vm3171, %v3096
      %3183 = vst.msk [vmem:[%s602 + $0x58] sm:$0xff] %vm3171, %v3098
      %3184 = vst.msk [vmem:[%s602 + $0x60] sm:$0xff] %vm3171, %v3100
      %3185 = vst.msk [vmem:[%s602 + $0x68] sm:$0xff] %vm3171, %v3102
      %3186 = vst.msk [vmem:[%s602 + $0x70] sm:$0xff] %vm3171, %v3104
      %3187 = vst.msk [vmem:[%s602 + $0x78] sm:$0xff] %vm3171, %v3106
      %3188 = vst.msk [vmem:[%s602 + $0x80] sm:$0xff] %vm3171, %v3108
      %3189 = vst.msk [vmem:[%s602 + $0x88] sm:$0xff] %vm3171, %v3110
      %3190 = vst.msk [vmem:[%s602 + $0x90] sm:$0xff] %vm3171, %v3112
      %3191 = vst.msk [vmem:[%s602 + $0x98] sm:$0xff] %vm3171, %v3114
      %3192 = vst.msk [vmem:[%s602 + $0xa0] sm:$0xff] %vm3171, %v3116
      %3193 = vst.msk [vmem:[%s602 + $0xa8] sm:$0xff] %vm3171, %v3118
      %3194 = vst.msk [vmem:[%s602 + $0xb0] sm:$0xff] %vm3171, %v3120
      %3195 = vst.msk [vmem:[%s602 + $0xb8] sm:$0xff] %vm3171, %v3122
      %3196 = vst.msk [vmem:[%s602 + $0xc0] sm:$0xff] %vm3171, %v3124
      %3197 = vst.msk [vmem:[%s602 + $0xc8] sm:$0xff] %vm3171, %v3126
      %3198 = vst.msk [vmem:[%s602 + $0xd0] sm:$0xff] %vm3171, %v3128
      %3199 = vst.msk [vmem:[%s602 + $0xd8] sm:$0xff] %vm3171, %v3130
      %3200 = vst.msk [vmem:[%s602 + $0xe0] sm:$0xff] %vm3171, %v3132
      %3201 = vst.msk [vmem:[%s602 + $0xe8] sm:$0xff] %vm3171, %v3134
      %3202 = vst.msk [vmem:[%s602 + $0xf0] sm:$0xff] %vm3171, %v3136
      %3203 = vst.msk [vmem:[%s602 + $0xf8] sm:$0xff] %vm3171, %v3138
      %v3204 = vld [vmem:[%s602] sm:$0xff]
      %v3205 = vld [vmem:[%s602 + $0x8] sm:$0xff]
      %v3206 = vld [vmem:[%s602 + $0x10] sm:$0xff]
      %v3207 = vld [vmem:[%s602 + $0x18] sm:$0xff]
      %v3208 = vld [vmem:[%s602 + $0x20] sm:$0xff]
      %v3209 = vld [vmem:[%s602 + $0x28] sm:$0xff]
      %v3210 = vld [vmem:[%s602 + $0x30] sm:$0xff]
      %v3211 = vld [vmem:[%s602 + $0x38] sm:$0xff]
      %v3212 = vld [vmem:[%s602 + $0x40] sm:$0xff]
      %v3213 = vld [vmem:[%s602 + $0x48] sm:$0xff]
      %v3214 = vld [vmem:[%s602 + $0x50] sm:$0xff]
      %v3215 = vld [vmem:[%s602 + $0x58] sm:$0xff]
      %v3216 = vld [vmem:[%s602 + $0x60] sm:$0xff]
      %v3217 = vld [vmem:[%s602 + $0x68] sm:$0xff]
      %v3218 = vld [vmem:[%s602 + $0x70] sm:$0xff]
      %v3219 = vld [vmem:[%s602 + $0x78] sm:$0xff]
      %v3220 = vld [vmem:[%s602 + $0x80] sm:$0xff]
      %v3221 = vld [vmem:[%s602 + $0x88] sm:$0xff]
      %v3222 = vld [vmem:[%s602 + $0x90] sm:$0xff]
      %v3223 = vld [vmem:[%s602 + $0x98] sm:$0xff]
      %v3224 = vld [vmem:[%s602 + $0xa0] sm:$0xff]
      %v3225 = vld [vmem:[%s602 + $0xa8] sm:$0xff]
      %v3226 = vld [vmem:[%s602 + $0xb0] sm:$0xff]
      %v3227 = vld [vmem:[%s602 + $0xb8] sm:$0xff]
      %v3228 = vld [vmem:[%s602 + $0xc0] sm:$0xff]
      %v3229 = vld [vmem:[%s602 + $0xc8] sm:$0xff]
      %v3230 = vld [vmem:[%s602 + $0xd0] sm:$0xff]
      %v3231 = vld [vmem:[%s602 + $0xd8] sm:$0xff]
      %v3232 = vld [vmem:[%s602 + $0xe0] sm:$0xff]
      %v3233 = vld [vmem:[%s602 + $0xe8] sm:$0xff]
      %v3234 = vld [vmem:[%s602 + $0xf0] sm:$0xff]
      %v3235 = vld [vmem:[%s602 + $0xf8] sm:$0xff]
      %v3236 = vld [vmem:[%s7] sm:$0x1]
      %v3238 = vlaneseq
      %v3239 = vshrl.u32 %v3238, 7
      %v3240 = vsub.s32 0, %v3239
      %v3241 = vrot.slane %v3236, %v3240
      %v3243 = vmul.f32 %v3204, %v3241
      %v3244 = vmul.f32 %v3205, %v3241
      %v3245 = vmul.f32 %v3206, %v3241
      %v3246 = vmul.f32 %v3207, %v3241
      %v3247 = vmul.f32 %v3208, %v3241
      %v3248 = vmul.f32 %v3209, %v3241
      %v3249 = vmul.f32 %v3210, %v3241
      %v3250 = vmul.f32 %v3211, %v3241
      %v3251 = vmul.f32 %v3212, %v3241
      %v3252 = vmul.f32 %v3213, %v3241
      %v3253 = vmul.f32 %v3214, %v3241
      %v3254 = vmul.f32 %v3215, %v3241
      %v3255 = vmul.f32 %v3216, %v3241
      %v3256 = vmul.f32 %v3217, %v3241
      %v3257 = vmul.f32 %v3218, %v3241
      %v3258 = vmul.f32 %v3219, %v3241
      %v3259 = vmul.f32 %v3220, %v3241
      %v3260 = vmul.f32 %v3221, %v3241
      %v3261 = vmul.f32 %v3222, %v3241
      %v3262 = vmul.f32 %v3223, %v3241
      %v3263 = vmul.f32 %v3224, %v3241
      %v3264 = vmul.f32 %v3225, %v3241
      %v3265 = vmul.f32 %v3226, %v3241
      %v3266 = vmul.f32 %v3227, %v3241
      %v3267 = vmul.f32 %v3228, %v3241
      %v3268 = vmul.f32 %v3229, %v3241
      %v3269 = vmul.f32 %v3230, %v3241
      %v3270 = vmul.f32 %v3231, %v3241
      %v3271 = vmul.f32 %v3232, %v3241
      %v3272 = vmul.f32 %v3233, %v3241
      %v3273 = vmul.f32 %v3234, %v3241
      %v3274 = vmul.f32 %v3235, %v3241
      %v3275 = vld [vmem:[%s8] sm:$0x1]
      %v3277 = vlaneseq
      %v3278 = vshrl.u32 %v3277, 7
      %v3279 = vsub.s32 0, %v3278
      %v3280 = vrot.slane %v3275, %v3279
      %v3282 = vadd.f32 %v3243, %v3280
      %v3283 = vadd.f32 %v3244, %v3280
      %v3284 = vadd.f32 %v3245, %v3280
      %v3285 = vadd.f32 %v3246, %v3280
      %v3286 = vadd.f32 %v3247, %v3280
      %v3287 = vadd.f32 %v3248, %v3280
      %v3288 = vadd.f32 %v3249, %v3280
      %v3289 = vadd.f32 %v3250, %v3280
      %v3290 = vadd.f32 %v3251, %v3280
      %v3291 = vadd.f32 %v3252, %v3280
      %v3292 = vadd.f32 %v3253, %v3280
      %v3293 = vadd.f32 %v3254, %v3280
      %v3294 = vadd.f32 %v3255, %v3280
      %v3295 = vadd.f32 %v3256, %v3280
      %v3296 = vadd.f32 %v3257, %v3280
      %v3297 = vadd.f32 %v3258, %v3280
      %v3298 = vadd.f32 %v3259, %v3280
      %v3299 = vadd.f32 %v3260, %v3280
      %v3300 = vadd.f32 %v3261, %v3280
      %v3301 = vadd.f32 %v3262, %v3280
      %v3302 = vadd.f32 %v3263, %v3280
      %v3303 = vadd.f32 %v3264, %v3280
      %v3304 = vadd.f32 %v3265, %v3280
      %v3305 = vadd.f32 %v3266, %v3280
      %v3306 = vadd.f32 %v3267, %v3280
      %v3307 = vadd.f32 %v3268, %v3280
      %v3308 = vadd.f32 %v3269, %v3280
      %v3309 = vadd.f32 %v3270, %v3280
      %v3310 = vadd.f32 %v3271, %v3280
      %v3311 = vadd.f32 %v3272, %v3280
      %v3312 = vadd.f32 %v3273, %v3280
      %v3313 = vadd.f32 %v3274, %v3280
      %v3314 = vmax.f32 %v3282, 0.0
      %v3315 = vmax.f32 %v3283, 0.0
      %v3316 = vmax.f32 %v3284, 0.0
      %v3317 = vmax.f32 %v3285, 0.0
      %v3318 = vmax.f32 %v3286, 0.0
      %v3319 = vmax.f32 %v3287, 0.0
      %v3320 = vmax.f32 %v3288, 0.0
      %v3321 = vmax.f32 %v3289, 0.0
      %v3322 = vmax.f32 %v3290, 0.0
      %v3323 = vmax.f32 %v3291, 0.0
      %v3324 = vmax.f32 %v3292, 0.0
      %v3325 = vmax.f32 %v3293, 0.0
      %v3326 = vmax.f32 %v3294, 0.0
      %v3327 = vmax.f32 %v3295, 0.0
      %v3328 = vmax.f32 %v3296, 0.0
      %v3329 = vmax.f32 %v3297, 0.0
      %v3330 = vmax.f32 %v3298, 0.0
      %v3331 = vmax.f32 %v3299, 0.0
      %v3332 = vmax.f32 %v3300, 0.0
      %v3333 = vmax.f32 %v3301, 0.0
      %v3334 = vmax.f32 %v3302, 0.0
      %v3335 = vmax.f32 %v3303, 0.0
      %v3336 = vmax.f32 %v3304, 0.0
      %v3337 = vmax.f32 %v3305, 0.0
      %v3338 = vmax.f32 %v3306, 0.0
      %v3339 = vmax.f32 %v3307, 0.0
      %v3340 = vmax.f32 %v3308, 0.0
      %v3341 = vmax.f32 %v3309, 0.0
      %v3342 = vmax.f32 %v3310, 0.0
      %v3343 = vmax.f32 %v3311, 0.0
      %v3344 = vmax.f32 %v3312, 0.0
      %v3345 = vmax.f32 %v3313, 0.0
      %v3346 = vpack.c.bf16 %v3315, %v3314
      %v3347 = vpack.c.bf16 %v3317, %v3316
      %v3348 = vpack.c.bf16 %v3319, %v3318
      %v3349 = vpack.c.bf16 %v3321, %v3320
      %v3350 = vpack.c.bf16 %v3323, %v3322
      %v3351 = vpack.c.bf16 %v3325, %v3324
      %v3352 = vpack.c.bf16 %v3327, %v3326
      %v3353 = vpack.c.bf16 %v3329, %v3328
      %v3354 = vpack.c.bf16 %v3331, %v3330
      %v3355 = vpack.c.bf16 %v3333, %v3332
      %v3356 = vpack.c.bf16 %v3335, %v3334
      %v3357 = vpack.c.bf16 %v3337, %v3336
      %v3358 = vpack.c.bf16 %v3339, %v3338
      %v3359 = vpack.c.bf16 %v3341, %v3340
      %v3360 = vpack.c.bf16 %v3343, %v3342
      %v3361 = vpack.c.bf16 %v3345, %v3344
      %v3362 = vld [vmem:[%s9] sm:$0xf]
      %vm3363 = vcmask 64512
      %v3365 = vsel %vm3363, %v3346, 0
      %v3368 = vsel %vm3363, %v3347, 0
      %v3371 = vsel %vm3363, %v3348, 0
      %v3374 = vsel %vm3363, %v3349, 0
      %v3377 = vsel %vm3363, %v3350, 0
      %v3380 = vsel %vm3363, %v3351, 0
      %v3383 = vsel %vm3363, %v3352, 0
      %v3386 = vsel %vm3363, %v3353, 0
      %v3389 = vsel %vm3363, %v3354, 0
      %v3392 = vsel %vm3363, %v3355, 0
      %v3395 = vsel %vm3363, %v3356, 0
      %v3398 = vsel %vm3363, %v3357, 0
      %v3401 = vsel %vm3363, %v3358, 0
      %v3404 = vsel %vm3363, %v3359, 0
      %v3407 = vsel %vm3363, %v3360, 0
      %v3410 = vsel %vm3363, %v3361, 0
      %vm3412 = vcmask 1043456
      %v3414 = vsel %vm3412, %v3362, 0
      %3416 = vmatprep.subr.bf16.mxu0 0
      %3417 = vmatpush1.bf16.msra.mxu0 %v3414
      %3418 = vmatprep.subr.bf16.mxu0 0
      %3419 = vmatpush1.bf16.msra.mxu0 0
      %3420 = vmatprep.subr.bf16.mxu0 0
      %3421 = vmatpush1.bf16.msra.mxu0 0
      %3422 = vmatprep.subr.bf16.mxu0 0
      %3423 = vmatpush1.bf16.msra.mxu0 0
      %3424 = vmatprep.subr.bf16.mxu0 0
      %3425 = vmatpush1.bf16.msra.mxu0 0
      %3426 = vmatprep.subr.bf16.mxu0 0
      %3427 = vmatpush1.bf16.msra.mxu0 0
      %3428 = vmatprep.subr.bf16.mxu0 0
      %3429 = vmatpush1.bf16.msra.mxu0 0
      %3430 = vmatprep.subr.bf16.mxu0 0
      %3431 = vmatpush1.bf16.msra.mxu0 0
      %3432 = vmatprep.subr.bf16.mxu0 0
      %3433 = vmatpush1.bf16.msra.mxu0 0
      %3434 = vmatprep.subr.bf16.mxu0 0
      %3435 = vmatpush1.bf16.msra.mxu0 0
      %3436 = vmatprep.subr.bf16.mxu0 0
      %3437 = vmatpush1.bf16.msra.mxu0 0
      %3438 = vmatprep.subr.bf16.mxu0 0
      %3439 = vmatpush1.bf16.msra.mxu0 0
      %3440 = vmatprep.subr.bf16.mxu0 0
      %3441 = vmatpush1.bf16.msra.mxu0 0
      %3442 = vmatprep.subr.bf16.mxu0 0
      %3443 = vmatpush1.bf16.msra.mxu0 0
      %3444 = vmatprep.subr.bf16.mxu0 0
      %3445 = vmatpush1.bf16.msra.mxu0 0
      %3446 = vmatprep.subr.bf16.mxu0 0
      %3447 = vmatpush1.bf16.msra.mxu0 0
      %3448 = vmatprep.mubr.bf16.mxu0 0
      %3449 = vmatmul.mubr.bf16.gmra.mrb[0].mxu0 %v3365
      %v3450 = vpop.f32.mrb[0].mxu0
      %v3451 = vadd.f32 0.0, %v3450
      %v3452 = vpop.f32.mrb[0].mxu0
      %v3453 = vpop.f32.mrb[0].mxu0
      %v3454 = vadd.f32 0.0, %v3453
      %v3455 = vpop.f32.mrb[0].mxu0
      %3456 = vmatprep.mubr.bf16.mxu0 0
      %3457 = vmatmul.mubr.bf16.gmra.mrb[0].mxu0 %v3368
      %v3458 = vpop.f32.mrb[0].mxu0
      %v3459 = vadd.f32 0.0, %v3458
      %v3460 = vpop.f32.mrb[0].mxu0
      %v3461 = vpop.f32.mrb[0].mxu0
      %v3462 = vadd.f32 0.0, %v3461
      %v3463 = vpop.f32.mrb[0].mxu0
      %3464 = vmatprep.mubr.bf16.mxu0 0
      %3465 = vmatmul.mubr.bf16.gmra.mrb[0].mxu0 %v3371
      %v3466 = vpop.f32.mrb[0].mxu0
      %v3467 = vadd.f32 0.0, %v3466
      %v3468 = vpop.f32.mrb[0].mxu0
      %v3469 = vpop.f32.mrb[0].mxu0
      %v3470 = vadd.f32 0.0, %v3469
      %v3471 = vpop.f32.mrb[0].mxu0
      %3472 = vmatprep.mubr.bf16.mxu0 0
      %3473 = vmatmul.mubr.bf16.gmra.mrb[0].mxu0 %v3374
      %v3474 = vpop.f32.mrb[0].mxu0
      %v3475 = vadd.f32 0.0, %v3474
      %v3476 = vpop.f32.mrb[0].mxu0
      %v3477 = vpop.f32.mrb[0].mxu0
      %v3478 = vadd.f32 0.0, %v3477
      %v3479 = vpop.f32.mrb[0].mxu0
      %3480 = vmatprep.mubr.bf16.mxu0 0
      %3481 = vmatmul.mubr.bf16.gmra.mrb[0].mxu0 %v3377
      %v3482 = vpop.f32.mrb[0].mxu0
      %v3483 = vadd.f32 0.0, %v3482
      %v3484 = vpop.f32.mrb[0].mxu0
      %v3485 = vpop.f32.mrb[0].mxu0
      %v3486 = vadd.f32 0.0, %v3485
      %v3487 = vpop.f32.mrb[0].mxu0
      %3488 = vmatprep.mubr.bf16.mxu0 0
      %3489 = vmatmul.mubr.bf16.gmra.mrb[0].mxu0 %v3380
      %v3490 = vpop.f32.mrb[0].mxu0
      %v3491 = vadd.f32 0.0, %v3490
      %v3492 = vpop.f32.mrb[0].mxu0
      %v3493 = vpop.f32.mrb[0].mxu0
      %v3494 = vadd.f32 0.0, %v3493
      %v3495 = vpop.f32.mrb[0].mxu0
      %3496 = vmatprep.mubr.bf16.mxu0 0
      %3497 = vmatmul.mubr.bf16.gmra.mrb[0].mxu0 %v3383
      %v3498 = vpop.f32.mrb[0].mxu0
      %v3499 = vadd.f32 0.0, %v3498
      %v3500 = vpop.f32.mrb[0].mxu0
      %v3501 = vpop.f32.mrb[0].mxu0
      %v3502 = vadd.f32 0.0, %v3501
      %v3503 = vpop.f32.mrb[0].mxu0
      %3504 = vmatprep.mubr.bf16.mxu0 0
      %3505 = vmatmul.mubr.bf16.gmra.mrb[0].mxu0 %v3386
      %v3506 = vpop.f32.mrb[0].mxu0
      %v3507 = vadd.f32 0.0, %v3506
      %v3508 = vpop.f32.mrb[0].mxu0
      %v3509 = vpop.f32.mrb[0].mxu0
      %v3510 = vadd.f32 0.0, %v3509
      %v3511 = vpop.f32.mrb[0].mxu0
      %3512 = vmatprep.mubr.bf16.mxu0 0
      %3513 = vmatmul.mubr.bf16.gmra.mrb[0].mxu0 %v3389
      %v3514 = vpop.f32.mrb[0].mxu0
      %v3515 = vadd.f32 0.0, %v3514
      %v3516 = vpop.f32.mrb[0].mxu0
      %v3517 = vpop.f32.mrb[0].mxu0
      %v3518 = vadd.f32 0.0, %v3517
      %v3519 = vpop.f32.mrb[0].mxu0
      %3520 = vmatprep.mubr.bf16.mxu0 0
      %3521 = vmatmul.mubr.bf16.gmra.mrb[0].mxu0 %v3392
      %v3522 = vpop.f32.mrb[0].mxu0
      %v3523 = vadd.f32 0.0, %v3522
      %v3524 = vpop.f32.mrb[0].mxu0
      %v3525 = vpop.f32.mrb[0].mxu0
      %v3526 = vadd.f32 0.0, %v3525
      %v3527 = vpop.f32.mrb[0].mxu0
      %3528 = vmatprep.mubr.bf16.mxu0 0
      %3529 = vmatmul.mubr.bf16.gmra.mrb[0].mxu0 %v3395
      %v3530 = vpop.f32.mrb[0].mxu0
      %v3531 = vadd.f32 0.0, %v3530
      %v3532 = vpop.f32.mrb[0].mxu0
      %v3533 = vpop.f32.mrb[0].mxu0
      %v3534 = vadd.f32 0.0, %v3533
      %v3535 = vpop.f32.mrb[0].mxu0
      %3536 = vmatprep.mubr.bf16.mxu0 0
      %3537 = vmatmul.mubr.bf16.gmra.mrb[0].mxu0 %v3398
      %v3538 = vpop.f32.mrb[0].mxu0
      %v3539 = vadd.f32 0.0, %v3538
      %v3540 = vpop.f32.mrb[0].mxu0
      %v3541 = vpop.f32.mrb[0].mxu0
      %v3542 = vadd.f32 0.0, %v3541
      %v3543 = vpop.f32.mrb[0].mxu0
      %3544 = vmatprep.mubr.bf16.mxu0 0
      %3545 = vmatmul.mubr.bf16.gmra.mrb[0].mxu0 %v3401
      %v3546 = vpop.f32.mrb[0].mxu0
      %v3547 = vadd.f32 0.0, %v3546
      %v3548 = vpop.f32.mrb[0].mxu0
      %v3549 = vpop.f32.mrb[0].mxu0
      %v3550 = vadd.f32 0.0, %v3549
      %v3551 = vpop.f32.mrb[0].mxu0
      %3552 = vmatprep.mubr.bf16.mxu0 0
      %3553 = vmatmul.mubr.bf16.gmra.mrb[0].mxu0 %v3404
      %v3554 = vpop.f32.mrb[0].mxu0
      %v3555 = vadd.f32 0.0, %v3554
      %v3556 = vpop.f32.mrb[0].mxu0
      %v3557 = vpop.f32.mrb[0].mxu0
      %v3558 = vadd.f32 0.0, %v3557
      %v3559 = vpop.f32.mrb[0].mxu0
      %3560 = vmatprep.mubr.bf16.mxu0 0
      %3561 = vmatmul.mubr.bf16.gmra.mrb[0].mxu0 %v3407
      %v3562 = vpop.f32.mrb[0].mxu0
      %v3563 = vadd.f32 0.0, %v3562
      %v3564 = vpop.f32.mrb[0].mxu0
      %v3565 = vpop.f32.mrb[0].mxu0
      %v3566 = vadd.f32 0.0, %v3565
      %v3567 = vpop.f32.mrb[0].mxu0
      %3568 = vmatprep.mubr.bf16.mxu0 0
      %3569 = vmatmul.mubr.bf16.gmra.mrb[0].mxu0 %v3410
      %v3570 = vpop.f32.mrb[0].mxu0
      %v3571 = vadd.f32 0.0, %v3570
      %v3572 = vpop.f32.mrb[0].mxu0
      %v3573 = vpop.f32.mrb[0].mxu0
      %v3574 = vadd.f32 0.0, %v3573
      %v3575 = vpop.f32.mrb[0].mxu0
      %3576 = vdwg.mxu0
      %v3577 = vld [vmem:[%s10] sm:$0x1]
      %v3579 = vlaneseq
      %v3580 = vshrl.u32 %v3579, 7
      %v3581 = vsub.s32 0, %v3580
      %v3582 = vrot.slane %v3577, %v3581
      %v3584 = vmul.f32 %v3451, %v3582
      %v3585 = vmul.f32 %v3454, %v3582
      %v3586 = vmul.f32 %v3459, %v3582
      %v3587 = vmul.f32 %v3462, %v3582
      %v3588 = vmul.f32 %v3467, %v3582
      %v3589 = vmul.f32 %v3470, %v3582
      %v3590 = vmul.f32 %v3475, %v3582
      %v3591 = vmul.f32 %v3478, %v3582
      %v3592 = vmul.f32 %v3483, %v3582
      %v3593 = vmul.f32 %v3486, %v3582
      %v3594 = vmul.f32 %v3491, %v3582
      %v3595 = vmul.f32 %v3494, %v3582
      %v3596 = vmul.f32 %v3499, %v3582
      %v3597 = vmul.f32 %v3502, %v3582
      %v3598 = vmul.f32 %v3507, %v3582
      %v3599 = vmul.f32 %v3510, %v3582
      %v3600 = vmul.f32 %v3515, %v3582
      %v3601 = vmul.f32 %v3518, %v3582
      %v3602 = vmul.f32 %v3523, %v3582
      %v3603 = vmul.f32 %v3526, %v3582
      %v3604 = vmul.f32 %v3531, %v3582
      %v3605 = vmul.f32 %v3534, %v3582
      %v3606 = vmul.f32 %v3539, %v3582
      %v3607 = vmul.f32 %v3542, %v3582
      %v3608 = vmul.f32 %v3547, %v3582
      %v3609 = vmul.f32 %v3550, %v3582
      %v3610 = vmul.f32 %v3555, %v3582
      %v3611 = vmul.f32 %v3558, %v3582
      %v3612 = vmul.f32 %v3563, %v3582
      %v3613 = vmul.f32 %v3566, %v3582
      %v3614 = vmul.f32 %v3571, %v3582
      %v3615 = vmul.f32 %v3574, %v3582
      %v3616 = vld [vmem:[%s11] sm:$0x1]
      %v3618 = vlaneseq
      %v3619 = vshrl.u32 %v3618, 7
      %v3620 = vsub.s32 0, %v3619
      %v3621 = vrot.slane %v3616, %v3620
      %v3623 = vadd.f32 %v3584, %v3621
      %v3624 = vadd.f32 %v3585, %v3621
      %v3625 = vadd.f32 %v3586, %v3621
      %v3626 = vadd.f32 %v3587, %v3621
      %v3627 = vadd.f32 %v3588, %v3621
      %v3628 = vadd.f32 %v3589, %v3621
      %v3629 = vadd.f32 %v3590, %v3621
      %v3630 = vadd.f32 %v3591, %v3621
      %v3631 = vadd.f32 %v3592, %v3621
      %v3632 = vadd.f32 %v3593, %v3621
      %v3633 = vadd.f32 %v3594, %v3621
      %v3634 = vadd.f32 %v3595, %v3621
      %v3635 = vadd.f32 %v3596, %v3621
      %v3636 = vadd.f32 %v3597, %v3621
      %v3637 = vadd.f32 %v3598, %v3621
      %v3638 = vadd.f32 %v3599, %v3621
      %v3639 = vadd.f32 %v3600, %v3621
      %v3640 = vadd.f32 %v3601, %v3621
      %v3641 = vadd.f32 %v3602, %v3621
      %v3642 = vadd.f32 %v3603, %v3621
      %v3643 = vadd.f32 %v3604, %v3621
      %v3644 = vadd.f32 %v3605, %v3621
      %v3645 = vadd.f32 %v3606, %v3621
      %v3646 = vadd.f32 %v3607, %v3621
      %v3647 = vadd.f32 %v3608, %v3621
      %v3648 = vadd.f32 %v3609, %v3621
      %v3649 = vadd.f32 %v3610, %v3621
      %v3650 = vadd.f32 %v3611, %v3621
      %v3651 = vadd.f32 %v3612, %v3621
      %v3652 = vadd.f32 %v3613, %v3621
      %v3653 = vadd.f32 %v3614, %v3621
      %v3654 = vadd.f32 %v3615, %v3621
      %v3655 = vmax.f32 %v3623, 0.0
      %v3656 = vmax.f32 %v3624, 0.0
      %v3657 = vmax.f32 %v3625, 0.0
      %v3658 = vmax.f32 %v3626, 0.0
      %v3659 = vmax.f32 %v3627, 0.0
      %v3660 = vmax.f32 %v3628, 0.0
      %v3661 = vmax.f32 %v3629, 0.0
      %v3662 = vmax.f32 %v3630, 0.0
      %v3663 = vmax.f32 %v3631, 0.0
      %v3664 = vmax.f32 %v3632, 0.0
      %v3665 = vmax.f32 %v3633, 0.0
      %v3666 = vmax.f32 %v3634, 0.0
      %v3667 = vmax.f32 %v3635, 0.0
      %v3668 = vmax.f32 %v3636, 0.0
      %v3669 = vmax.f32 %v3637, 0.0
      %v3670 = vmax.f32 %v3638, 0.0
      %v3671 = vmax.f32 %v3639, 0.0
      %v3672 = vmax.f32 %v3640, 0.0
      %v3673 = vmax.f32 %v3641, 0.0
      %v3674 = vmax.f32 %v3642, 0.0
      %v3675 = vmax.f32 %v3643, 0.0
      %v3676 = vmax.f32 %v3644, 0.0
      %v3677 = vmax.f32 %v3645, 0.0
      %v3678 = vmax.f32 %v3646, 0.0
      %v3679 = vmax.f32 %v3647, 0.0
      %v3680 = vmax.f32 %v3648, 0.0
      %v3681 = vmax.f32 %v3649, 0.0
      %v3682 = vmax.f32 %v3650, 0.0
      %v3683 = vmax.f32 %v3651, 0.0
      %v3684 = vmax.f32 %v3652, 0.0
      %v3685 = vmax.f32 %v3653, 0.0
      %v3686 = vmax.f32 %v3654, 0.0
      %v3687 = vpack.c.bf16 %v3656, %v3655
      %v3688 = vpack.c.bf16 %v3658, %v3657
      %v3689 = vpack.c.bf16 %v3660, %v3659
      %v3690 = vpack.c.bf16 %v3662, %v3661
      %v3691 = vpack.c.bf16 %v3664, %v3663
      %v3692 = vpack.c.bf16 %v3666, %v3665
      %v3693 = vpack.c.bf16 %v3668, %v3667
      %v3694 = vpack.c.bf16 %v3670, %v3669
      %v3695 = vpack.c.bf16 %v3672, %v3671
      %v3696 = vpack.c.bf16 %v3674, %v3673
      %v3697 = vpack.c.bf16 %v3676, %v3675
      %v3698 = vpack.c.bf16 %v3678, %v3677
      %v3699 = vpack.c.bf16 %v3680, %v3679
      %v3700 = vpack.c.bf16 %v3682, %v3681
      %v3701 = vpack.c.bf16 %v3684, %v3683
      %v3702 = vpack.c.bf16 %v3686, %v3685
      %v3703 = vld [vmem:[%s12] sm:$0xf]
      %v3704 = vld [vmem:[%s12 + $0x4] sm:$0xf]
      %v3707 = vunpack.c.l.b16 %v3703
      %v3708 = vunpack.c.l.b16 %v3704
      %v3709 = vpack.c.b16 %v3708, %v3707
      %v3712 = vsel %vm1231, %v3687, 0
      %v3715 = vsel %vm1231, %v3688, 0
      %v3718 = vsel %vm1231, %v3689, 0
      %v3721 = vsel %vm1231, %v3690, 0
      %v3724 = vsel %vm1231, %v3691, 0
      %v3727 = vsel %vm1231, %v3692, 0
      %v3730 = vsel %vm1231, %v3693, 0
      %v3733 = vsel %vm1231, %v3694, 0
      %v3736 = vsel %vm1231, %v3695, 0
      %v3739 = vsel %vm1231, %v3696, 0
      %v3742 = vsel %vm1231, %v3697, 0
      %v3745 = vsel %vm1231, %v3698, 0
      %v3748 = vsel %vm1231, %v3699, 0
      %v3751 = vsel %vm1231, %v3700, 0
      %v3754 = vsel %vm1231, %v3701, 0
      %v3757 = vsel %vm1231, %v3702, 0
      %3759 = vmatprep.subr.bf16.mxu0 0
      %3760 = vmatpush1.bf16.msra.mxu0 %v3709
      %3761 = vmatprep.subr.bf16.mxu0 0
      %3762 = vmatpush1.bf16.msra.mxu0 0
      %3763 = vmatprep.subr.bf16.mxu0 0
      %3764 = vmatpush1.bf16.msra.mxu0 0
      %3765 = vmatprep.subr.bf16.mxu0 0
      %3766 = vmatpush1.bf16.msra.mxu0 0
      %3767 = vmatprep.subr.bf16.mxu0 0
      %3768 = vmatpush1.bf16.msra.mxu0 0
      %3769 = vmatprep.subr.bf16.mxu0 0
      %3770 = vmatpush1.bf16.msra.mxu0 0
      %3771 = vmatprep.subr.bf16.mxu0 0
      %3772 = vmatpush1.bf16.msra.mxu0 0
      %3773 = vmatprep.subr.bf16.mxu0 0
      %3774 = vmatpush1.bf16.msra.mxu0 0
      %3775 = vmatprep.subr.bf16.mxu0 0
      %3776 = vmatpush1.bf16.msra.mxu0 0
      %3777 = vmatprep.subr.bf16.mxu0 0
      %3778 = vmatpush1.bf16.msra.mxu0 0
      %3779 = vmatprep.subr.bf16.mxu0 0
      %3780 = vmatpush1.bf16.msra.mxu0 0
      %3781 = vmatprep.subr.bf16.mxu0 0
      %3782 = vmatpush1.bf16.msra.mxu0 0
      %3783 = vmatprep.subr.bf16.mxu0 0
      %3784 = vmatpush1.bf16.msra.mxu0 0
      %3785 = vmatprep.subr.bf16.mxu0 0
      %3786 = vmatpush1.bf16.msra.mxu0 0
      %3787 = vmatprep.subr.bf16.mxu0 0
      %3788 = vmatpush1.bf16.msra.mxu0 0
      %3789 = vmatprep.subr.bf16.mxu0 0
      %3790 = vmatpush1.bf16.msra.mxu0 0
      %3791 = vmatprep.mubr.bf16.mxu0 0
      %3792 = vmatmul.mubr.bf16.gmra.mrb[0].mxu0 %v3712
      %v3793 = vpop.f32.mrb[0].mxu0
      %v3794 = vadd.f32 0.0, %v3793
      %v3795 = vpop.f32.mrb[0].mxu0
      %v3796 = vpop.f32.mrb[0].mxu0
      %v3797 = vadd.f32 0.0, %v3796
      %v3798 = vpop.f32.mrb[0].mxu0
      %3799 = vmatprep.mubr.bf16.mxu0 0
      %3800 = vmatmul.mubr.bf16.gmra.mrb[0].mxu0 %v3715
      %v3801 = vpop.f32.mrb[0].mxu0
      %v3802 = vadd.f32 0.0, %v3801
      %v3803 = vpop.f32.mrb[0].mxu0
      %v3804 = vpop.f32.mrb[0].mxu0
      %v3805 = vadd.f32 0.0, %v3804
      %v3806 = vpop.f32.mrb[0].mxu0
      %3807 = vmatprep.mubr.bf16.mxu0 0
      %3808 = vmatmul.mubr.bf16.gmra.mrb[0].mxu0 %v3718
      %v3809 = vpop.f32.mrb[0].mxu0
      %v3810 = vadd.f32 0.0, %v3809
      %v3811 = vpop.f32.mrb[0].mxu0
      %v3812 = vpop.f32.mrb[0].mxu0
      %v3813 = vadd.f32 0.0, %v3812
      %v3814 = vpop.f32.mrb[0].mxu0
      %3815 = vmatprep.mubr.bf16.mxu0 0
      %3816 = vmatmul.mubr.bf16.gmra.mrb[0].mxu0 %v3721
      %v3817 = vpop.f32.mrb[0].mxu0
      %v3818 = vadd.f32 0.0, %v3817
      %v3819 = vpop.f32.mrb[0].mxu0
      %v3820 = vpop.f32.mrb[0].mxu0
      %v3821 = vadd.f32 0.0, %v3820
      %v3822 = vpop.f32.mrb[0].mxu0
      %3823 = vmatprep.mubr.bf16.mxu0 0
      %3824 = vmatmul.mubr.bf16.gmra.mrb[0].mxu0 %v3724
      %v3825 = vpop.f32.mrb[0].mxu0
      %v3826 = vadd.f32 0.0, %v3825
      %v3827 = vpop.f32.mrb[0].mxu0
      %v3828 = vpop.f32.mrb[0].mxu0
      %v3829 = vadd.f32 0.0, %v3828
      %v3830 = vpop.f32.mrb[0].mxu0
      %3831 = vmatprep.mubr.bf16.mxu0 0
      %3832 = vmatmul.mubr.bf16.gmra.mrb[0].mxu0 %v3727
      %v3833 = vpop.f32.mrb[0].mxu0
      %v3834 = vadd.f32 0.0, %v3833
      %v3835 = vpop.f32.mrb[0].mxu0
      %v3836 = vpop.f32.mrb[0].mxu0
      %v3837 = vadd.f32 0.0, %v3836
      %v3838 = vpop.f32.mrb[0].mxu0
      %3839 = vmatprep.mubr.bf16.mxu0 0
      %3840 = vmatmul.mubr.bf16.gmra.mrb[0].mxu0 %v3730
      %v3841 = vpop.f32.mrb[0].mxu0
      %v3842 = vadd.f32 0.0, %v3841
      %v3843 = vpop.f32.mrb[0].mxu0
      %v3844 = vpop.f32.mrb[0].mxu0
      %v3845 = vadd.f32 0.0, %v3844
      %v3846 = vpop.f32.mrb[0].mxu0
      %3847 = vmatprep.mubr.bf16.mxu0 0
      %3848 = vmatmul.mubr.bf16.gmra.mrb[0].mxu0 %v3733
      %v3849 = vpop.f32.mrb[0].mxu0
      %v3850 = vadd.f32 0.0, %v3849
      %v3851 = vpop.f32.mrb[0].mxu0
      %v3852 = vpop.f32.mrb[0].mxu0
      %v3853 = vadd.f32 0.0, %v3852
      %v3854 = vpop.f32.mrb[0].mxu0
      %3855 = vmatprep.mubr.bf16.mxu0 0
      %3856 = vmatmul.mubr.bf16.gmra.mrb[0].mxu0 %v3736
      %v3857 = vpop.f32.mrb[0].mxu0
      %v3858 = vadd.f32 0.0, %v3857
      %v3859 = vpop.f32.mrb[0].mxu0
      %v3860 = vpop.f32.mrb[0].mxu0
      %v3861 = vadd.f32 0.0, %v3860
      %v3862 = vpop.f32.mrb[0].mxu0
      %3863 = vmatprep.mubr.bf16.mxu0 0
      %3864 = vmatmul.mubr.bf16.gmra.mrb[0].mxu0 %v3739
      %v3865 = vpop.f32.mrb[0].mxu0
      %v3866 = vadd.f32 0.0, %v3865
      %v3867 = vpop.f32.mrb[0].mxu0
      %v3868 = vpop.f32.mrb[0].mxu0
      %v3869 = vadd.f32 0.0, %v3868
      %v3870 = vpop.f32.mrb[0].mxu0
      %3871 = vmatprep.mubr.bf16.mxu0 0
      %3872 = vmatmul.mubr.bf16.gmra.mrb[0].mxu0 %v3742
      %v3873 = vpop.f32.mrb[0].mxu0
      %v3874 = vadd.f32 0.0, %v3873
      %v3875 = vpop.f32.mrb[0].mxu0
      %v3876 = vpop.f32.mrb[0].mxu0
      %v3877 = vadd.f32 0.0, %v3876
      %v3878 = vpop.f32.mrb[0].mxu0
      %3879 = vmatprep.mubr.bf16.mxu0 0
      %3880 = vmatmul.mubr.bf16.gmra.mrb[0].mxu0 %v3745
      %v3881 = vpop.f32.mrb[0].mxu0
      %v3882 = vadd.f32 0.0, %v3881
      %v3883 = vpop.f32.mrb[0].mxu0
      %v3884 = vpop.f32.mrb[0].mxu0
      %v3885 = vadd.f32 0.0, %v3884
      %v3886 = vpop.f32.mrb[0].mxu0
      %3887 = vmatprep.mubr.bf16.mxu0 0
      %3888 = vmatmul.mubr.bf16.gmra.mrb[0].mxu0 %v3748
      %v3889 = vpop.f32.mrb[0].mxu0
      %v3890 = vadd.f32 0.0, %v3889
      %v3891 = vpop.f32.mrb[0].mxu0
      %v3892 = vpop.f32.mrb[0].mxu0
      %v3893 = vadd.f32 0.0, %v3892
      %v3894 = vpop.f32.mrb[0].mxu0
      %3895 = vmatprep.mubr.bf16.mxu0 0
      %3896 = vmatmul.mubr.bf16.gmra.mrb[0].mxu0 %v3751
      %v3897 = vpop.f32.mrb[0].mxu0
      %v3898 = vadd.f32 0.0, %v3897
      %v3899 = vpop.f32.mrb[0].mxu0
      %v3900 = vpop.f32.mrb[0].mxu0
      %v3901 = vadd.f32 0.0, %v3900
      %v3902 = vpop.f32.mrb[0].mxu0
      %3903 = vmatprep.mubr.bf16.mxu0 0
      %3904 = vmatmul.mubr.bf16.gmra.mrb[0].mxu0 %v3754
      %v3905 = vpop.f32.mrb[0].mxu0
      %v3906 = vadd.f32 0.0, %v3905
      %v3907 = vpop.f32.mrb[0].mxu0
      %v3908 = vpop.f32.mrb[0].mxu0
      %v3909 = vadd.f32 0.0, %v3908
      %v3910 = vpop.f32.mrb[0].mxu0
      %3911 = vmatprep.mubr.bf16.mxu0 0
      %3912 = vmatmul.mubr.bf16.gmra.mrb[0].mxu0 %v3757
      %v3913 = vpop.f32.mrb[0].mxu0
      %v3914 = vadd.f32 0.0, %v3913
      %v3915 = vpop.f32.mrb[0].mxu0
      %v3916 = vpop.f32.mrb[0].mxu0
      %v3917 = vadd.f32 0.0, %v3916
      %v3918 = vpop.f32.mrb[0].mxu0
      %3919 = vdwg.mxu0
      %3920 = vst.msk [vmem:[%s1441 + $0x1] sm:$0xff] %vm604, %v3794
      %3921 = vst.msk [vmem:[%s1441 + $0x9] sm:$0xff] %vm604, %v3797
      %3922 = vst.msk [vmem:[%s1441 + $0x19] sm:$0xff] %vm604, %v3802
      %3923 = vst.msk [vmem:[%s1441 + $0x21] sm:$0xff] %vm604, %v3805
      %3924 = vst.msk [vmem:[%s1441 + $0x31] sm:$0xff] %vm604, %v3810
      %3925 = vst.msk [vmem:[%s1441 + $0x39] sm:$0xff] %vm604, %v3813
      %3926 = vst.msk [vmem:[%s1441 + $0x49] sm:$0xff] %vm604, %v3818
      %3927 = vst.msk [vmem:[%s1441 + $0x51] sm:$0xff] %vm604, %v3821
      %3928 = vst.msk [vmem:[%s1441 + $0x61] sm:$0xff] %vm604, %v3826
      %3929 = vst.msk [vmem:[%s1441 + $0x69] sm:$0xff] %vm604, %v3829
      %3930 = vst.msk [vmem:[%s1441 + $0x79] sm:$0xff] %vm604, %v3834
      %3931 = vst.msk [vmem:[%s1441 + $0x81] sm:$0xff] %vm604, %v3837
      %3932 = vst.msk [vmem:[%s1441 + $0x91] sm:$0xff] %vm604, %v3842
      %3933 = vst.msk [vmem:[%s1441 + $0x99] sm:$0xff] %vm604, %v3845
      %3934 = vst.msk [vmem:[%s1441 + $0xa9] sm:$0xff] %vm604, %v3850
      %3935 = vst.msk [vmem:[%s1441 + $0xb1] sm:$0xff] %vm604, %v3853
      %3936 = vst.msk [vmem:[%s1441 + $0xc1] sm:$0xff] %vm604, %v3858
      %3937 = vst.msk [vmem:[%s1441 + $0xc9] sm:$0xff] %vm604, %v3861
      %3938 = vst.msk [vmem:[%s1441 + $0xd9] sm:$0xff] %vm604, %v3866
      %3939 = vst.msk [vmem:[%s1441 + $0xe1] sm:$0xff] %vm604, %v3869
      %3940 = vst.msk [vmem:[%s1441 + $0xf1] sm:$0xff] %vm604, %v3874
      %3941 = vst.msk [vmem:[%s1441 + $0xf9] sm:$0xff] %vm604, %v3877
      %3942 = vst.msk [vmem:[%s1441 + $0x109] sm:$0xff] %vm604, %v3882
      %3943 = vst.msk [vmem:[%s1441 + $0x111] sm:$0xff] %vm604, %v3885
      %3944 = vst.msk [vmem:[%s1441 + $0x121] sm:$0xff] %vm604, %v3890
      %3945 = vst.msk [vmem:[%s1441 + $0x129] sm:$0xff] %vm604, %v3893
      %3946 = vst.msk [vmem:[%s1441 + $0x139] sm:$0xff] %vm604, %v3898
      %3947 = vst.msk [vmem:[%s1441 + $0x141] sm:$0xff] %vm604, %v3901
      %3948 = vst.msk [vmem:[%s1441 + $0x151] sm:$0xff] %vm604, %v3906
      %3949 = vst.msk [vmem:[%s1441 + $0x159] sm:$0xff] %vm604, %v3909
      %3950 = vst.msk [vmem:[%s1441 + $0x169] sm:$0xff] %vm604, %v3914
      %3951 = vst.msk [vmem:[%s1441 + $0x171] sm:$0xff] %vm604, %v3917
      %v3952 = vld [vmem:[#allocation2] sm:$0xff]
      %v3953 = vld [vmem:[#allocation2 + $0x8] sm:$0xff]
      %v3954 = vld [vmem:[#allocation2 + $0x18] sm:$0xff]
      %v3955 = vld [vmem:[#allocation2 + $0x20] sm:$0xff]
      %v3956 = vld [vmem:[#allocation2 + $0x30] sm:$0xff]
      %v3957 = vld [vmem:[#allocation2 + $0x38] sm:$0xff]
      %v3958 = vld [vmem:[#allocation2 + $0x48] sm:$0xff]
      %v3959 = vld [vmem:[#allocation2 + $0x50] sm:$0xff]
      %v3960 = vld [vmem:[#allocation2 + $0x60] sm:$0xff]
      %v3961 = vld [vmem:[#allocation2 + $0x68] sm:$0xff]
      %v3962 = vld [vmem:[#allocation2 + $0x78] sm:$0xff]
      %v3963 = vld [vmem:[#allocation2 + $0x80] sm:$0xff]
      %v3964 = vld [vmem:[#allocation2 + $0x90] sm:$0xff]
      %v3965 = vld [vmem:[#allocation2 + $0x98] sm:$0xff]
      %v3966 = vld [vmem:[#allocation2 + $0xa8] sm:$0xff]
      %v3967 = vld [vmem:[#allocation2 + $0xb0] sm:$0xff]
      %v3968 = vld [vmem:[#allocation2 + $0xc0] sm:$0xff]
      %v3969 = vld [vmem:[#allocation2 + $0xc8] sm:$0xff]
      %v3970 = vld [vmem:[#allocation2 + $0xd8] sm:$0xff]
      %v3971 = vld [vmem:[#allocation2 + $0xe0] sm:$0xff]
      %v3972 = vld [vmem:[#allocation2 + $0xf0] sm:$0xff]
      %v3973 = vld [vmem:[#allocation2 + $0xf8] sm:$0xff]
      %v3974 = vld [vmem:[#allocation2 + $0x108] sm:$0xff]
      %v3975 = vld [vmem:[#allocation2 + $0x110] sm:$0xff]
      %v3976 = vld [vmem:[#allocation2 + $0x120] sm:$0xff]
      %v3977 = vld [vmem:[#allocation2 + $0x128] sm:$0xff]
      %v3978 = vld [vmem:[#allocation2 + $0x138] sm:$0xff]
      %v3979 = vld [vmem:[#allocation2 + $0x140] sm:$0xff]
      %v3980 = vld [vmem:[#allocation2 + $0x150] sm:$0xff]
      %v3981 = vld [vmem:[#allocation2 + $0x158] sm:$0xff]
      %v3982 = vld [vmem:[#allocation2 + $0x168] sm:$0xff]
      %v3983 = vld [vmem:[#allocation2 + $0x170] sm:$0xff]
      %v3984 = vld [vmem:[#allocation2 + $0x1] sm:$0xff]
      %v3985 = vld [vmem:[#allocation2 + $0x9] sm:$0xff]
      %v3986 = vld [vmem:[#allocation2 + $0x19] sm:$0xff]
      %v3987 = vld [vmem:[#allocation2 + $0x21] sm:$0xff]
      %v3988 = vld [vmem:[#allocation2 + $0x31] sm:$0xff]
      %v3989 = vld [vmem:[#allocation2 + $0x39] sm:$0xff]
      %v3990 = vld [vmem:[#allocation2 + $0x49] sm:$0xff]
      %v3991 = vld [vmem:[#allocation2 + $0x51] sm:$0xff]
      %v3992 = vld [vmem:[#allocation2 + $0x61] sm:$0xff]
      %v3993 = vld [vmem:[#allocation2 + $0x69] sm:$0xff]
      %v3994 = vld [vmem:[#allocation2 + $0x79] sm:$0xff]
      %v3995 = vld [vmem:[#allocation2 + $0x81] sm:$0xff]
      %v3996 = vld [vmem:[#allocation2 + $0x91] sm:$0xff]
      %v3997 = vld [vmem:[#allocation2 + $0x99] sm:$0xff]
      %v3998 = vld [vmem:[#allocation2 + $0xa9] sm:$0xff]
      %v3999 = vld [vmem:[#allocation2 + $0xb1] sm:$0xff]
      %v4000 = vld [vmem:[#allocation2 + $0xc1] sm:$0xff]
      %v4001 = vld [vmem:[#allocation2 + $0xc9] sm:$0xff]
      %v4002 = vld [vmem:[#allocation2 + $0xd9] sm:$0xff]
      %v4003 = vld [vmem:[#allocation2 + $0xe1] sm:$0xff]
      %v4004 = vld [vmem:[#allocation2 + $0xf1] sm:$0xff]
      %v4005 = vld [vmem:[#allocation2 + $0xf9] sm:$0xff]
      %v4006 = vld [vmem:[#allocation2 + $0x109] sm:$0xff]
      %v4007 = vld [vmem:[#allocation2 + $0x111] sm:$0xff]
      %v4008 = vld [vmem:[#allocation2 + $0x121] sm:$0xff]
      %v4009 = vld [vmem:[#allocation2 + $0x129] sm:$0xff]
      %v4010 = vld [vmem:[#allocation2 + $0x139] sm:$0xff]
      %v4011 = vld [vmem:[#allocation2 + $0x141] sm:$0xff]
      %v4012 = vld [vmem:[#allocation2 + $0x151] sm:$0xff]
      %v4013 = vld [vmem:[#allocation2 + $0x159] sm:$0xff]
      %v4014 = vld [vmem:[#allocation2 + $0x169] sm:$0xff]
      %v4015 = vld [vmem:[#allocation2 + $0x171] sm:$0xff]
      %4048 = vrot.lane.b32.xlu0 %v3984, 124
      %v4049 = vpop.permute.xlu0 %4048
      %4050 = vrot.lane.b32.xlu0 %v3985, 124
      %v4051 = vpop.permute.xlu0 %4050
      %4052 = vrot.lane.b32.xlu0 %v3986, 124
      %v4053 = vpop.permute.xlu0 %4052
      %4054 = vrot.lane.b32.xlu0 %v3987, 124
      %v4055 = vpop.permute.xlu0 %4054
      %4056 = vrot.lane.b32.xlu0 %v3988, 124
      %v4057 = vpop.permute.xlu0 %4056
      %4058 = vrot.lane.b32.xlu0 %v3989, 124
      %v4059 = vpop.permute.xlu0 %4058
      %4060 = vrot.lane.b32.xlu0 %v3990, 124
      %v4061 = vpop.permute.xlu0 %4060
      %4062 = vrot.lane.b32.xlu0 %v3991, 124
      %v4063 = vpop.permute.xlu0 %4062
      %4064 = vrot.lane.b32.xlu0 %v3992, 124
      %v4065 = vpop.permute.xlu0 %4064
      %4066 = vrot.lane.b32.xlu0 %v3993, 124
      %v4067 = vpop.permute.xlu0 %4066
      %4068 = vrot.lane.b32.xlu0 %v3994, 124
      %v4069 = vpop.permute.xlu0 %4068
      %4070 = vrot.lane.b32.xlu0 %v3995, 124
      %v4071 = vpop.permute.xlu0 %4070
      %4072 = vrot.lane.b32.xlu0 %v3996, 124
      %v4073 = vpop.permute.xlu0 %4072
      %4074 = vrot.lane.b32.xlu0 %v3997, 124
      %v4075 = vpop.permute.xlu0 %4074
      %4076 = vrot.lane.b32.xlu0 %v3998, 124
      %v4077 = vpop.permute.xlu0 %4076
      %4078 = vrot.lane.b32.xlu0 %v3999, 124
      %v4079 = vpop.permute.xlu0 %4078
      %4080 = vrot.lane.b32.xlu0 %v4000, 124
      %v4081 = vpop.permute.xlu0 %4080
      %4082 = vrot.lane.b32.xlu0 %v4001, 124
      %v4083 = vpop.permute.xlu0 %4082
      %4084 = vrot.lane.b32.xlu0 %v4002, 124
      %v4085 = vpop.permute.xlu0 %4084
      %4086 = vrot.lane.b32.xlu0 %v4003, 124
      %v4087 = vpop.permute.xlu0 %4086
      %4088 = vrot.lane.b32.xlu0 %v4004, 124
      %v4089 = vpop.permute.xlu0 %4088
      %4090 = vrot.lane.b32.xlu0 %v4005, 124
      %v4091 = vpop.permute.xlu0 %4090
      %4092 = vrot.lane.b32.xlu0 %v4006, 124
      %v4093 = vpop.permute.xlu0 %4092
      %4094 = vrot.lane.b32.xlu0 %v4007, 124
      %v4095 = vpop.permute.xlu0 %4094
      %4096 = vrot.lane.b32.xlu0 %v4008, 124
      %v4097 = vpop.permute.xlu0 %4096
      %4098 = vrot.lane.b32.xlu0 %v4009, 124
      %v4099 = vpop.permute.xlu0 %4098
      %4100 = vrot.lane.b32.xlu0 %v4010, 124
      %v4101 = vpop.permute.xlu0 %4100
      %4102 = vrot.lane.b32.xlu0 %v4011, 124
      %v4103 = vpop.permute.xlu0 %4102
      %4104 = vrot.lane.b32.xlu0 %v4012, 124
      %v4105 = vpop.permute.xlu0 %4104
      %4106 = vrot.lane.b32.xlu0 %v4013, 124
      %v4107 = vpop.permute.xlu0 %4106
      %4108 = vrot.lane.b32.xlu0 %v4014, 124
      %v4109 = vpop.permute.xlu0 %4108
      %4110 = vrot.lane.b32.xlu0 %v4015, 124
      %v4111 = vpop.permute.xlu0 %4110
      %v4144 = vadd.f32 %v3952, %v4049
      %v4145 = vadd.f32 %v3953, %v4051
      %v4146 = vadd.f32 %v3954, %v4053
      %v4147 = vadd.f32 %v3955, %v4055
      %v4148 = vadd.f32 %v3956, %v4057
      %v4149 = vadd.f32 %v3957, %v4059
      %v4150 = vadd.f32 %v3958, %v4061
      %v4151 = vadd.f32 %v3959, %v4063
      %v4152 = vadd.f32 %v3960, %v4065
      %v4153 = vadd.f32 %v3961, %v4067
      %v4154 = vadd.f32 %v3962, %v4069
      %v4155 = vadd.f32 %v3963, %v4071
      %v4156 = vadd.f32 %v3964, %v4073
      %v4157 = vadd.f32 %v3965, %v4075
      %v4158 = vadd.f32 %v3966, %v4077
      %v4159 = vadd.f32 %v3967, %v4079
      %v4160 = vadd.f32 %v3968, %v4081
      %v4161 = vadd.f32 %v3969, %v4083
      %v4162 = vadd.f32 %v3970, %v4085
      %v4163 = vadd.f32 %v3971, %v4087
      %v4164 = vadd.f32 %v3972, %v4089
      %v4165 = vadd.f32 %v3973, %v4091
      %v4166 = vadd.f32 %v3974, %v4093
      %v4167 = vadd.f32 %v3975, %v4095
      %v4168 = vadd.f32 %v3976, %v4097
      %v4169 = vadd.f32 %v3977, %v4099
      %v4170 = vadd.f32 %v3978, %v4101
      %v4171 = vadd.f32 %v3979, %v4103
      %v4172 = vadd.f32 %v3980, %v4105
      %v4173 = vadd.f32 %v3981, %v4107
      %v4174 = vadd.f32 %v3982, %v4109
      %v4175 = vadd.f32 %v3983, %v4111
      %v4176 = vld [vmem:[#allocation2 + $0x2] sm:$0xff]
      %v4177 = vld [vmem:[#allocation2 + $0xa] sm:$0xff]
      %v4178 = vld [vmem:[#allocation2 + $0x1a] sm:$0xff]
      %v4179 = vld [vmem:[#allocation2 + $0x22] sm:$0xff]
      %v4180 = vld [vmem:[#allocation2 + $0x32] sm:$0xff]
      %v4181 = vld [vmem:[#allocation2 + $0x3a] sm:$0xff]
      %v4182 = vld [vmem:[#allocation2 + $0x4a] sm:$0xff]
      %v4183 = vld [vmem:[#allocation2 + $0x52] sm:$0xff]
      %v4184 = vld [vmem:[#allocation2 + $0x62] sm:$0xff]
      %v4185 = vld [vmem:[#allocation2 + $0x6a] sm:$0xff]
      %v4186 = vld [vmem:[#allocation2 + $0x7a] sm:$0xff]
      %v4187 = vld [vmem:[#allocation2 + $0x82] sm:$0xff]
      %v4188 = vld [vmem:[#allocation2 + $0x92] sm:$0xff]
      %v4189 = vld [vmem:[#allocation2 + $0x9a] sm:$0xff]
      %v4190 = vld [vmem:[#allocation2 + $0xaa] sm:$0xff]
      %v4191 = vld [vmem:[#allocation2 + $0xb2] sm:$0xff]
      %v4192 = vld [vmem:[#allocation2 + $0xc2] sm:$0xff]
      %v4193 = vld [vmem:[#allocation2 + $0xca] sm:$0xff]
      %v4194 = vld [vmem:[#allocation2 + $0xda] sm:$0xff]
      %v4195 = vld [vmem:[#allocation2 + $0xe2] sm:$0xff]
      %v4196 = vld [vmem:[#allocation2 + $0xf2] sm:$0xff]
      %v4197 = vld [vmem:[#allocation2 + $0xfa] sm:$0xff]
      %v4198 = vld [vmem:[#allocation2 + $0x10a] sm:$0xff]
      %v4199 = vld [vmem:[#allocation2 + $0x112] sm:$0xff]
      %v4200 = vld [vmem:[#allocation2 + $0x122] sm:$0xff]
      %v4201 = vld [vmem:[#allocation2 + $0x12a] sm:$0xff]
      %v4202 = vld [vmem:[#allocation2 + $0x13a] sm:$0xff]
      %v4203 = vld [vmem:[#allocation2 + $0x142] sm:$0xff]
      %v4204 = vld [vmem:[#allocation2 + $0x152] sm:$0xff]
      %v4205 = vld [vmem:[#allocation2 + $0x15a] sm:$0xff]
      %v4206 = vld [vmem:[#allocation2 + $0x16a] sm:$0xff]
      %v4207 = vld [vmem:[#allocation2 + $0x172] sm:$0xff]
      %4240 = vrot.lane.b32.xlu0 %v4176, 120
      %v4241 = vpop.permute.xlu0 %4240
      %4242 = vrot.lane.b32.xlu0 %v4177, 120
      %v4243 = vpop.permute.xlu0 %4242
      %4244 = vrot.lane.b32.xlu0 %v4178, 120
      %v4245 = vpop.permute.xlu0 %4244
      %4246 = vrot.lane.b32.xlu0 %v4179, 120
      %v4247 = vpop.permute.xlu0 %4246
      %4248 = vrot.lane.b32.xlu0 %v4180, 120
      %v4249 = vpop.permute.xlu0 %4248
      %4250 = vrot.lane.b32.xlu0 %v4181, 120
      %v4251 = vpop.permute.xlu0 %4250
      %4252 = vrot.lane.b32.xlu0 %v4182, 120
      %v4253 = vpop.permute.xlu0 %4252
      %4254 = vrot.lane.b32.xlu0 %v4183, 120
      %v4255 = vpop.permute.xlu0 %4254
      %4256 = vrot.lane.b32.xlu0 %v4184, 120
      %v4257 = vpop.permute.xlu0 %4256
      %4258 = vrot.lane.b32.xlu0 %v4185, 120
      %v4259 = vpop.permute.xlu0 %4258
      %4260 = vrot.lane.b32.xlu0 %v4186, 120
      %v4261 = vpop.permute.xlu0 %4260
      %4262 = vrot.lane.b32.xlu0 %v4187, 120
      %v4263 = vpop.permute.xlu0 %4262
      %4264 = vrot.lane.b32.xlu0 %v4188, 120
      %v4265 = vpop.permute.xlu0 %4264
      %4266 = vrot.lane.b32.xlu0 %v4189, 120
      %v4267 = vpop.permute.xlu0 %4266
      %4268 = vrot.lane.b32.xlu0 %v4190, 120
      %v4269 = vpop.permute.xlu0 %4268
      %4270 = vrot.lane.b32.xlu0 %v4191, 120
      %v4271 = vpop.permute.xlu0 %4270
      %4272 = vrot.lane.b32.xlu0 %v4192, 120
      %v4273 = vpop.permute.xlu0 %4272
      %4274 = vrot.lane.b32.xlu0 %v4193, 120
      %v4275 = vpop.permute.xlu0 %4274
      %4276 = vrot.lane.b32.xlu0 %v4194, 120
      %v4277 = vpop.permute.xlu0 %4276
      %4278 = vrot.lane.b32.xlu0 %v4195, 120
      %v4279 = vpop.permute.xlu0 %4278
      %4280 = vrot.lane.b32.xlu0 %v4196, 120
      %v4281 = vpop.permute.xlu0 %4280
      %4282 = vrot.lane.b32.xlu0 %v4197, 120
      %v4283 = vpop.permute.xlu0 %4282
      %4284 = vrot.lane.b32.xlu0 %v4198, 120
      %v4285 = vpop.permute.xlu0 %4284
      %4286 = vrot.lane.b32.xlu0 %v4199, 120
      %v4287 = vpop.permute.xlu0 %4286
      %4288 = vrot.lane.b32.xlu0 %v4200, 120
      %v4289 = vpop.permute.xlu0 %4288
      %4290 = vrot.lane.b32.xlu0 %v4201, 120
      %v4291 = vpop.permute.xlu0 %4290
      %4292 = vrot.lane.b32.xlu0 %v4202, 120
      %v4293 = vpop.permute.xlu0 %4292
      %4294 = vrot.lane.b32.xlu0 %v4203, 120
      %v4295 = vpop.permute.xlu0 %4294
      %4296 = vrot.lane.b32.xlu0 %v4204, 120
      %v4297 = vpop.permute.xlu0 %4296
      %4298 = vrot.lane.b32.xlu0 %v4205, 120
      %v4299 = vpop.permute.xlu0 %4298
      %4300 = vrot.lane.b32.xlu0 %v4206, 120
      %v4301 = vpop.permute.xlu0 %4300
      %4302 = vrot.lane.b32.xlu0 %v4207, 120
      %v4303 = vpop.permute.xlu0 %4302
      %v4336 = vadd.f32 %v4144, %v4241
      %v4337 = vadd.f32 %v4145, %v4243
      %v4338 = vadd.f32 %v4146, %v4245
      %v4339 = vadd.f32 %v4147, %v4247
      %v4340 = vadd.f32 %v4148, %v4249
      %v4341 = vadd.f32 %v4149, %v4251
      %v4342 = vadd.f32 %v4150, %v4253
      %v4343 = vadd.f32 %v4151, %v4255
      %v4344 = vadd.f32 %v4152, %v4257
      %v4345 = vadd.f32 %v4153, %v4259
      %v4346 = vadd.f32 %v4154, %v4261
      %v4347 = vadd.f32 %v4155, %v4263
      %v4348 = vadd.f32 %v4156, %v4265
      %v4349 = vadd.f32 %v4157, %v4267
      %v4350 = vadd.f32 %v4158, %v4269
      %v4351 = vadd.f32 %v4159, %v4271
      %v4352 = vadd.f32 %v4160, %v4273
      %v4353 = vadd.f32 %v4161, %v4275
      %v4354 = vadd.f32 %v4162, %v4277
      %v4355 = vadd.f32 %v4163, %v4279
      %v4356 = vadd.f32 %v4164, %v4281
      %v4357 = vadd.f32 %v4165, %v4283
      %v4358 = vadd.f32 %v4166, %v4285
      %v4359 = vadd.f32 %v4167, %v4287
      %v4360 = vadd.f32 %v4168, %v4289
      %v4361 = vadd.f32 %v4169, %v4291
      %v4362 = vadd.f32 %v4170, %v4293
      %v4363 = vadd.f32 %v4171, %v4295
      %v4364 = vadd.f32 %v4172, %v4297
      %v4365 = vadd.f32 %v4173, %v4299
      %v4366 = vadd.f32 %v4174, %v4301
      %v4367 = vadd.f32 %v4175, %v4303
      %v4368 = vld [vmem:[%s1441] sm:$0xff]
      %v4369 = vld [vmem:[%s1441 + $0x8] sm:$0xff]
      %v4370 = vld [vmem:[%s1441 + $0x18] sm:$0xff]
      %v4371 = vld [vmem:[%s1441 + $0x20] sm:$0xff]
      %v4372 = vld [vmem:[%s1441 + $0x30] sm:$0xff]
      %v4373 = vld [vmem:[%s1441 + $0x38] sm:$0xff]
      %v4374 = vld [vmem:[%s1441 + $0x48] sm:$0xff]
      %v4375 = vld [vmem:[%s1441 + $0x50] sm:$0xff]
      %v4376 = vld [vmem:[%s1441 + $0x60] sm:$0xff]
      %v4377 = vld [vmem:[%s1441 + $0x68] sm:$0xff]
      %v4378 = vld [vmem:[%s1441 + $0x78] sm:$0xff]
      %v4379 = vld [vmem:[%s1441 + $0x80] sm:$0xff]
      %v4380 = vld [vmem:[%s1441 + $0x90] sm:$0xff]
      %v4381 = vld [vmem:[%s1441 + $0x98] sm:$0xff]
      %v4382 = vld [vmem:[%s1441 + $0xa8] sm:$0xff]
      %v4383 = vld [vmem:[%s1441 + $0xb0] sm:$0xff]
      %v4384 = vld [vmem:[%s1441 + $0xc0] sm:$0xff]
      %v4385 = vld [vmem:[%s1441 + $0xc8] sm:$0xff]
      %v4386 = vld [vmem:[%s1441 + $0xd8] sm:$0xff]
      %v4387 = vld [vmem:[%s1441 + $0xe0] sm:$0xff]
      %v4388 = vld [vmem:[%s1441 + $0xf0] sm:$0xff]
      %v4389 = vld [vmem:[%s1441 + $0xf8] sm:$0xff]
      %v4390 = vld [vmem:[%s1441 + $0x108] sm:$0xff]
      %v4391 = vld [vmem:[%s1441 + $0x110] sm:$0xff]
      %v4392 = vld [vmem:[%s1441 + $0x120] sm:$0xff]
      %v4393 = vld [vmem:[%s1441 + $0x128] sm:$0xff]
      %v4394 = vld [vmem:[%s1441 + $0x138] sm:$0xff]
      %v4395 = vld [vmem:[%s1441 + $0x140] sm:$0xff]
      %v4396 = vld [vmem:[%s1441 + $0x150] sm:$0xff]
      %v4397 = vld [vmem:[%s1441 + $0x158] sm:$0xff]
      %v4398 = vld [vmem:[%s1441 + $0x168] sm:$0xff]
      %v4399 = vld [vmem:[%s1441 + $0x170] sm:$0xff]
      %4432 = vrot.lane.b32.xlu0 %v4368, 116
      %v4433 = vpop.permute.xlu0 %4432
      %4434 = vrot.lane.b32.xlu0 %v4369, 116
      %v4435 = vpop.permute.xlu0 %4434
      %4436 = vrot.lane.b32.xlu0 %v4370, 116
      %v4437 = vpop.permute.xlu0 %4436
      %4438 = vrot.lane.b32.xlu0 %v4371, 116
      %v4439 = vpop.permute.xlu0 %4438
      %4440 = vrot.lane.b32.xlu0 %v4372, 116
      %v4441 = vpop.permute.xlu0 %4440
      %4442 = vrot.lane.b32.xlu0 %v4373, 116
      %v4443 = vpop.permute.xlu0 %4442
      %4444 = vrot.lane.b32.xlu0 %v4374, 116
      %v4445 = vpop.permute.xlu0 %4444
      %4446 = vrot.lane.b32.xlu0 %v4375, 116
      %v4447 = vpop.permute.xlu0 %4446
      %4448 = vrot.lane.b32.xlu0 %v4376, 116
      %v4449 = vpop.permute.xlu0 %4448
      %4450 = vrot.lane.b32.xlu0 %v4377, 116
      %v4451 = vpop.permute.xlu0 %4450
      %4452 = vrot.lane.b32.xlu0 %v4378, 116
      %v4453 = vpop.permute.xlu0 %4452
      %4454 = vrot.lane.b32.xlu0 %v4379, 116
      %v4455 = vpop.permute.xlu0 %4454
      %4456 = vrot.lane.b32.xlu0 %v4380, 116
      %v4457 = vpop.permute.xlu0 %4456
      %4458 = vrot.lane.b32.xlu0 %v4381, 116
      %v4459 = vpop.permute.xlu0 %4458
      %4460 = vrot.lane.b32.xlu0 %v4382, 116
      %v4461 = vpop.permute.xlu0 %4460
      %4462 = vrot.lane.b32.xlu0 %v4383, 116
      %v4463 = vpop.permute.xlu0 %4462
      %4464 = vrot.lane.b32.xlu0 %v4384, 116
      %v4465 = vpop.permute.xlu0 %4464
      %4466 = vrot.lane.b32.xlu0 %v4385, 116
      %v4467 = vpop.permute.xlu0 %4466
      %4468 = vrot.lane.b32.xlu0 %v4386, 116
      %v4469 = vpop.permute.xlu0 %4468
      %4470 = vrot.lane.b32.xlu0 %v4387, 116
      %v4471 = vpop.permute.xlu0 %4470
      %4472 = vrot.lane.b32.xlu0 %v4388, 116
      %v4473 = vpop.permute.xlu0 %4472
      %4474 = vrot.lane.b32.xlu0 %v4389, 116
      %v4475 = vpop.permute.xlu0 %4474
      %4476 = vrot.lane.b32.xlu0 %v4390, 116
      %v4477 = vpop.permute.xlu0 %4476
      %4478 = vrot.lane.b32.xlu0 %v4391, 116
      %v4479 = vpop.permute.xlu0 %4478
      %4480 = vrot.lane.b32.xlu0 %v4392, 116
      %v4481 = vpop.permute.xlu0 %4480
      %4482 = vrot.lane.b32.xlu0 %v4393, 116
      %v4483 = vpop.permute.xlu0 %4482
      %4484 = vrot.lane.b32.xlu0 %v4394, 116
      %v4485 = vpop.permute.xlu0 %4484
      %4486 = vrot.lane.b32.xlu0 %v4395, 116
      %v4487 = vpop.permute.xlu0 %4486
      %4488 = vrot.lane.b32.xlu0 %v4396, 116
      %v4489 = vpop.permute.xlu0 %4488
      %4490 = vrot.lane.b32.xlu0 %v4397, 116
      %v4491 = vpop.permute.xlu0 %4490
      %4492 = vrot.lane.b32.xlu0 %v4398, 116
      %v4493 = vpop.permute.xlu0 %4492
      %4494 = vrot.lane.b32.xlu0 %v4399, 116
      %v4495 = vpop.permute.xlu0 %4494
      %v4528 = vadd.f32 %v4336, %v4433
      %v4529 = vadd.f32 %v4337, %v4435
      %v4530 = vadd.f32 %v4338, %v4437
      %v4531 = vadd.f32 %v4339, %v4439
      %v4532 = vadd.f32 %v4340, %v4441
      %v4533 = vadd.f32 %v4341, %v4443
      %v4534 = vadd.f32 %v4342, %v4445
      %v4535 = vadd.f32 %v4343, %v4447
      %v4536 = vadd.f32 %v4344, %v4449
      %v4537 = vadd.f32 %v4345, %v4451
      %v4538 = vadd.f32 %v4346, %v4453
      %v4539 = vadd.f32 %v4347, %v4455
      %v4540 = vadd.f32 %v4348, %v4457
      %v4541 = vadd.f32 %v4349, %v4459
      %v4542 = vadd.f32 %v4350, %v4461
      %v4543 = vadd.f32 %v4351, %v4463
      %v4544 = vadd.f32 %v4352, %v4465
      %v4545 = vadd.f32 %v4353, %v4467
      %v4546 = vadd.f32 %v4354, %v4469
      %v4547 = vadd.f32 %v4355, %v4471
      %v4548 = vadd.f32 %v4356, %v4473
      %v4549 = vadd.f32 %v4357, %v4475
      %v4550 = vadd.f32 %v4358, %v4477
      %v4551 = vadd.f32 %v4359, %v4479
      %v4552 = vadd.f32 %v4360, %v4481
      %v4553 = vadd.f32 %v4361, %v4483
      %v4554 = vadd.f32 %v4362, %v4485
      %v4555 = vadd.f32 %v4363, %v4487
      %v4556 = vadd.f32 %v4364, %v4489
      %v4557 = vadd.f32 %v4365, %v4491
      %v4558 = vadd.f32 %v4366, %v4493
      %v4559 = vadd.f32 %v4367, %v4495
      %v4560 = vld [vmem:[%s1441 + $0x1] sm:$0xff]
      %v4561 = vld [vmem:[%s1441 + $0x9] sm:$0xff]
      %v4562 = vld [vmem:[%s1441 + $0x19] sm:$0xff]
      %v4563 = vld [vmem:[%s1441 + $0x21] sm:$0xff]
      %v4564 = vld [vmem:[%s1441 + $0x31] sm:$0xff]
      %v4565 = vld [vmem:[%s1441 + $0x39] sm:$0xff]
      %v4566 = vld [vmem:[%s1441 + $0x49] sm:$0xff]
      %v4567 = vld [vmem:[%s1441 + $0x51] sm:$0xff]
      %v4568 = vld [vmem:[%s1441 + $0x61] sm:$0xff]
      %v4569 = vld [vmem:[%s1441 + $0x69] sm:$0xff]
      %v4570 = vld [vmem:[%s1441 + $0x79] sm:$0xff]
      %v4571 = vld [vmem:[%s1441 + $0x81] sm:$0xff]
      %v4572 = vld [vmem:[%s1441 + $0x91] sm:$0xff]
      %v4573 = vld [vmem:[%s1441 + $0x99] sm:$0xff]
      %v4574 = vld [vmem:[%s1441 + $0xa9] sm:$0xff]
      %v4575 = vld [vmem:[%s1441 + $0xb1] sm:$0xff]
      %v4576 = vld [vmem:[%s1441 + $0xc1] sm:$0xff]
      %v4577 = vld [vmem:[%s1441 + $0xc9] sm:$0xff]
      %v4578 = vld [vmem:[%s1441 + $0xd9] sm:$0xff]
      %v4579 = vld [vmem:[%s1441 + $0xe1] sm:$0xff]
      %v4580 = vld [vmem:[%s1441 + $0xf1] sm:$0xff]
      %v4581 = vld [vmem:[%s1441 + $0xf9] sm:$0xff]
      %v4582 = vld [vmem:[%s1441 + $0x109] sm:$0xff]
      %v4583 = vld [vmem:[%s1441 + $0x111] sm:$0xff]
      %v4584 = vld [vmem:[%s1441 + $0x121] sm:$0xff]
      %v4585 = vld [vmem:[%s1441 + $0x129] sm:$0xff]
      %v4586 = vld [vmem:[%s1441 + $0x139] sm:$0xff]
      %v4587 = vld [vmem:[%s1441 + $0x141] sm:$0xff]
      %v4588 = vld [vmem:[%s1441 + $0x151] sm:$0xff]
      %v4589 = vld [vmem:[%s1441 + $0x159] sm:$0xff]
      %v4590 = vld [vmem:[%s1441 + $0x169] sm:$0xff]
      %v4591 = vld [vmem:[%s1441 + $0x171] sm:$0xff]
      %4624 = vrot.lane.b32.xlu0 %v4560, 112
      %v4625 = vpop.permute.xlu0 %4624
      %4626 = vrot.lane.b32.xlu0 %v4561, 112
      %v4627 = vpop.permute.xlu0 %4626
      %4628 = vrot.lane.b32.xlu0 %v4562, 112
      %v4629 = vpop.permute.xlu0 %4628
      %4630 = vrot.lane.b32.xlu0 %v4563, 112
      %v4631 = vpop.permute.xlu0 %4630
      %4632 = vrot.lane.b32.xlu0 %v4564, 112
      %v4633 = vpop.permute.xlu0 %4632
      %4634 = vrot.lane.b32.xlu0 %v4565, 112
      %v4635 = vpop.permute.xlu0 %4634
      %4636 = vrot.lane.b32.xlu0 %v4566, 112
      %v4637 = vpop.permute.xlu0 %4636
      %4638 = vrot.lane.b32.xlu0 %v4567, 112
      %v4639 = vpop.permute.xlu0 %4638
      %4640 = vrot.lane.b32.xlu0 %v4568, 112
      %v4641 = vpop.permute.xlu0 %4640
      %4642 = vrot.lane.b32.xlu0 %v4569, 112
      %v4643 = vpop.permute.xlu0 %4642
      %4644 = vrot.lane.b32.xlu0 %v4570, 112
      %v4645 = vpop.permute.xlu0 %4644
      %4646 = vrot.lane.b32.xlu0 %v4571, 112
      %v4647 = vpop.permute.xlu0 %4646
      %4648 = vrot.lane.b32.xlu0 %v4572, 112
      %v4649 = vpop.permute.xlu0 %4648
      %4650 = vrot.lane.b32.xlu0 %v4573, 112
      %v4651 = vpop.permute.xlu0 %4650
      %4652 = vrot.lane.b32.xlu0 %v4574, 112
      %v4653 = vpop.permute.xlu0 %4652
      %4654 = vrot.lane.b32.xlu0 %v4575, 112
      %v4655 = vpop.permute.xlu0 %4654
      %4656 = vrot.lane.b32.xlu0 %v4576, 112
      %v4657 = vpop.permute.xlu0 %4656
      %4658 = vrot.lane.b32.xlu0 %v4577, 112
      %v4659 = vpop.permute.xlu0 %4658
      %4660 = vrot.lane.b32.xlu0 %v4578, 112
      %v4661 = vpop.permute.xlu0 %4660
      %4662 = vrot.lane.b32.xlu0 %v4579, 112
      %v4663 = vpop.permute.xlu0 %4662
      %4664 = vrot.lane.b32.xlu0 %v4580, 112
      %v4665 = vpop.permute.xlu0 %4664
      %4666 = vrot.lane.b32.xlu0 %v4581, 112
      %v4667 = vpop.permute.xlu0 %4666
      %4668 = vrot.lane.b32.xlu0 %v4582, 112
      %v4669 = vpop.permute.xlu0 %4668
      %4670 = vrot.lane.b32.xlu0 %v4583, 112
      %v4671 = vpop.permute.xlu0 %4670
      %4672 = vrot.lane.b32.xlu0 %v4584, 112
      %v4673 = vpop.permute.xlu0 %4672
      %4674 = vrot.lane.b32.xlu0 %v4585, 112
      %v4675 = vpop.permute.xlu0 %4674
      %4676 = vrot.lane.b32.xlu0 %v4586, 112
      %v4677 = vpop.permute.xlu0 %4676
      %4678 = vrot.lane.b32.xlu0 %v4587, 112
      %v4679 = vpop.permute.xlu0 %4678
      %4680 = vrot.lane.b32.xlu0 %v4588, 112
      %v4681 = vpop.permute.xlu0 %4680
      %4682 = vrot.lane.b32.xlu0 %v4589, 112
      %v4683 = vpop.permute.xlu0 %4682
      %4684 = vrot.lane.b32.xlu0 %v4590, 112
      %v4685 = vpop.permute.xlu0 %4684
      %4686 = vrot.lane.b32.xlu0 %v4591, 112
      %v4687 = vpop.permute.xlu0 %4686
      %v4720 = vadd.f32 %v4528, %v4625
      %v4721 = vadd.f32 %v4529, %v4627
      %v4722 = vadd.f32 %v4530, %v4629
      %v4723 = vadd.f32 %v4531, %v4631
      %v4724 = vadd.f32 %v4532, %v4633
      %v4725 = vadd.f32 %v4533, %v4635
      %v4726 = vadd.f32 %v4534, %v4637
      %v4727 = vadd.f32 %v4535, %v4639
      %v4728 = vadd.f32 %v4536, %v4641
      %v4729 = vadd.f32 %v4537, %v4643
      %v4730 = vadd.f32 %v4538, %v4645
      %v4731 = vadd.f32 %v4539, %v4647
      %v4732 = vadd.f32 %v4540, %v4649
      %v4733 = vadd.f32 %v4541, %v4651
      %v4734 = vadd.f32 %v4542, %v4653
      %v4735 = vadd.f32 %v4543, %v4655
      %v4736 = vadd.f32 %v4544, %v4657
      %v4737 = vadd.f32 %v4545, %v4659
      %v4738 = vadd.f32 %v4546, %v4661
      %v4739 = vadd.f32 %v4547, %v4663
      %v4740 = vadd.f32 %v4548, %v4665
      %v4741 = vadd.f32 %v4549, %v4667
      %v4742 = vadd.f32 %v4550, %v4669
      %v4743 = vadd.f32 %v4551, %v4671
      %v4744 = vadd.f32 %v4552, %v4673
      %v4745 = vadd.f32 %v4553, %v4675
      %v4746 = vadd.f32 %v4554, %v4677
      %v4747 = vadd.f32 %v4555, %v4679
      %v4748 = vadd.f32 %v4556, %v4681
      %v4749 = vadd.f32 %v4557, %v4683
      %v4750 = vadd.f32 %v4558, %v4685
      %v4751 = vadd.f32 %v4559, %v4687
      %v4752 = vld [vmem:[%s1441 + $0x2] sm:$0xff]
      %v4753 = vld [vmem:[%s1441 + $0xa] sm:$0xff]
      %v4754 = vld [vmem:[%s1441 + $0x1a] sm:$0xff]
      %v4755 = vld [vmem:[%s1441 + $0x22] sm:$0xff]
      %v4756 = vld [vmem:[%s1441 + $0x32] sm:$0xff]
      %v4757 = vld [vmem:[%s1441 + $0x3a] sm:$0xff]
      %v4758 = vld [vmem:[%s1441 + $0x4a] sm:$0xff]
      %v4759 = vld [vmem:[%s1441 + $0x52] sm:$0xff]
      %v4760 = vld [vmem:[%s1441 + $0x62] sm:$0xff]
      %v4761 = vld [vmem:[%s1441 + $0x6a] sm:$0xff]
      %v4762 = vld [vmem:[%s1441 + $0x7a] sm:$0xff]
      %v4763 = vld [vmem:[%s1441 + $0x82] sm:$0xff]
      %v4764 = vld [vmem:[%s1441 + $0x92] sm:$0xff]
      %v4765 = vld [vmem:[%s1441 + $0x9a] sm:$0xff]
      %v4766 = vld [vmem:[%s1441 + $0xaa] sm:$0xff]
      %v4767 = vld [vmem:[%s1441 + $0xb2] sm:$0xff]
      %v4768 = vld [vmem:[%s1441 + $0xc2] sm:$0xff]
      %v4769 = vld [vmem:[%s1441 + $0xca] sm:$0xff]
      %v4770 = vld [vmem:[%s1441 + $0xda] sm:$0xff]
      %v4771 = vld [vmem:[%s1441 + $0xe2] sm:$0xff]
      %v4772 = vld [vmem:[%s1441 + $0xf2] sm:$0xff]
      %v4773 = vld [vmem:[%s1441 + $0xfa] sm:$0xff]
      %v4774 = vld [vmem:[%s1441 + $0x10a] sm:$0xff]
      %v4775 = vld [vmem:[%s1441 + $0x112] sm:$0xff]
      %v4776 = vld [vmem:[%s1441 + $0x122] sm:$0xff]
      %v4777 = vld [vmem:[%s1441 + $0x12a] sm:$0xff]
      %v4778 = vld [vmem:[%s1441 + $0x13a] sm:$0xff]
      %v4779 = vld [vmem:[%s1441 + $0x142] sm:$0xff]
      %v4780 = vld [vmem:[%s1441 + $0x152] sm:$0xff]
      %v4781 = vld [vmem:[%s1441 + $0x15a] sm:$0xff]
      %v4782 = vld [vmem:[%s1441 + $0x16a] sm:$0xff]
      %v4783 = vld [vmem:[%s1441 + $0x172] sm:$0xff]
      %4816 = vrot.lane.b32.xlu0 %v4752, 108
      %v4817 = vpop.permute.xlu0 %4816
      %4818 = vrot.lane.b32.xlu0 %v4753, 108
      %v4819 = vpop.permute.xlu0 %4818
      %4820 = vrot.lane.b32.xlu0 %v4754, 108
      %v4821 = vpop.permute.xlu0 %4820
      %4822 = vrot.lane.b32.xlu0 %v4755, 108
      %v4823 = vpop.permute.xlu0 %4822
      %4824 = vrot.lane.b32.xlu0 %v4756, 108
      %v4825 = vpop.permute.xlu0 %4824
      %4826 = vrot.lane.b32.xlu0 %v4757, 108
      %v4827 = vpop.permute.xlu0 %4826
      %4828 = vrot.lane.b32.xlu0 %v4758, 108
      %v4829 = vpop.permute.xlu0 %4828
      %4830 = vrot.lane.b32.xlu0 %v4759, 108
      %v4831 = vpop.permute.xlu0 %4830
      %4832 = vrot.lane.b32.xlu0 %v4760, 108
      %v4833 = vpop.permute.xlu0 %4832
      %4834 = vrot.lane.b32.xlu0 %v4761, 108
      %v4835 = vpop.permute.xlu0 %4834
      %4836 = vrot.lane.b32.xlu0 %v4762, 108
      %v4837 = vpop.permute.xlu0 %4836
      %4838 = vrot.lane.b32.xlu0 %v4763, 108
      %v4839 = vpop.permute.xlu0 %4838
      %4840 = vrot.lane.b32.xlu0 %v4764, 108
      %v4841 = vpop.permute.xlu0 %4840
      %4842 = vrot.lane.b32.xlu0 %v4765, 108
      %v4843 = vpop.permute.xlu0 %4842
      %4844 = vrot.lane.b32.xlu0 %v4766, 108
      %v4845 = vpop.permute.xlu0 %4844
      %4846 = vrot.lane.b32.xlu0 %v4767, 108
      %v4847 = vpop.permute.xlu0 %4846
      %4848 = vrot.lane.b32.xlu0 %v4768, 108
      %v4849 = vpop.permute.xlu0 %4848
      %4850 = vrot.lane.b32.xlu0 %v4769, 108
      %v4851 = vpop.permute.xlu0 %4850
      %4852 = vrot.lane.b32.xlu0 %v4770, 108
      %v4853 = vpop.permute.xlu0 %4852
      %4854 = vrot.lane.b32.xlu0 %v4771, 108
      %v4855 = vpop.permute.xlu0 %4854
      %4856 = vrot.lane.b32.xlu0 %v4772, 108
      %v4857 = vpop.permute.xlu0 %4856
      %4858 = vrot.lane.b32.xlu0 %v4773, 108
      %v4859 = vpop.permute.xlu0 %4858
      %4860 = vrot.lane.b32.xlu0 %v4774, 108
      %v4861 = vpop.permute.xlu0 %4860
      %4862 = vrot.lane.b32.xlu0 %v4775, 108
      %v4863 = vpop.permute.xlu0 %4862
      %4864 = vrot.lane.b32.xlu0 %v4776, 108
      %v4865 = vpop.permute.xlu0 %4864
      %4866 = vrot.lane.b32.xlu0 %v4777, 108
      %v4867 = vpop.permute.xlu0 %4866
      %4868 = vrot.lane.b32.xlu0 %v4778, 108
      %v4869 = vpop.permute.xlu0 %4868
      %4870 = vrot.lane.b32.xlu0 %v4779, 108
      %v4871 = vpop.permute.xlu0 %4870
      %4872 = vrot.lane.b32.xlu0 %v4780, 108
      %v4873 = vpop.permute.xlu0 %4872
      %4874 = vrot.lane.b32.xlu0 %v4781, 108
      %v4875 = vpop.permute.xlu0 %4874
      %4876 = vrot.lane.b32.xlu0 %v4782, 108
      %v4877 = vpop.permute.xlu0 %4876
      %4878 = vrot.lane.b32.xlu0 %v4783, 108
      %v4879 = vpop.permute.xlu0 %4878
      %v4912 = vadd.f32 %v4720, %v4817
      %v4913 = vadd.f32 %v4721, %v4819
      %v4914 = vadd.f32 %v4722, %v4821
      %v4915 = vadd.f32 %v4723, %v4823
      %v4916 = vadd.f32 %v4724, %v4825
      %v4917 = vadd.f32 %v4725, %v4827
      %v4918 = vadd.f32 %v4726, %v4829
      %v4919 = vadd.f32 %v4727, %v4831
      %v4920 = vadd.f32 %v4728, %v4833
      %v4921 = vadd.f32 %v4729, %v4835
      %v4922 = vadd.f32 %v4730, %v4837
      %v4923 = vadd.f32 %v4731, %v4839
      %v4924 = vadd.f32 %v4732, %v4841
      %v4925 = vadd.f32 %v4733, %v4843
      %v4926 = vadd.f32 %v4734, %v4845
      %v4927 = vadd.f32 %v4735, %v4847
      %v4928 = vadd.f32 %v4736, %v4849
      %v4929 = vadd.f32 %v4737, %v4851
      %v4930 = vadd.f32 %v4738, %v4853
      %v4931 = vadd.f32 %v4739, %v4855
      %v4932 = vadd.f32 %v4740, %v4857
      %v4933 = vadd.f32 %v4741, %v4859
      %v4934 = vadd.f32 %v4742, %v4861
      %v4935 = vadd.f32 %v4743, %v4863
      %v4936 = vadd.f32 %v4744, %v4865
      %v4937 = vadd.f32 %v4745, %v4867
      %v4938 = vadd.f32 %v4746, %v4869
      %v4939 = vadd.f32 %v4747, %v4871
      %v4940 = vadd.f32 %v4748, %v4873
      %v4941 = vadd.f32 %v4749, %v4875
      %v4942 = vadd.f32 %v4750, %v4877
      %v4943 = vadd.f32 %v4751, %v4879
      %v4944 = vld [vmem:[%s2466] sm:$0xff]
      %v4945 = vld [vmem:[%s2466 + $0x8] sm:$0xff]
      %v4946 = vld [vmem:[%s2466 + $0x18] sm:$0xff]
      %v4947 = vld [vmem:[%s2466 + $0x20] sm:$0xff]
      %v4948 = vld [vmem:[%s2466 + $0x30] sm:$0xff]
      %v4949 = vld [vmem:[%s2466 + $0x38] sm:$0xff]
      %v4950 = vld [vmem:[%s2466 + $0x48] sm:$0xff]
      %v4951 = vld [vmem:[%s2466 + $0x50] sm:$0xff]
      %v4952 = vld [vmem:[%s2466 + $0x60] sm:$0xff]
      %v4953 = vld [vmem:[%s2466 + $0x68] sm:$0xff]
      %v4954 = vld [vmem:[%s2466 + $0x78] sm:$0xff]
      %v4955 = vld [vmem:[%s2466 + $0x80] sm:$0xff]
      %v4956 = vld [vmem:[%s2466 + $0x90] sm:$0xff]
      %v4957 = vld [vmem:[%s2466 + $0x98] sm:$0xff]
      %v4958 = vld [vmem:[%s2466 + $0xa8] sm:$0xff]
      %v4959 = vld [vmem:[%s2466 + $0xb0] sm:$0xff]
      %v4960 = vld [vmem:[%s2466 + $0xc0] sm:$0xff]
      %v4961 = vld [vmem:[%s2466 + $0xc8] sm:$0xff]
      %v4962 = vld [vmem:[%s2466 + $0xd8] sm:$0xff]
      %v4963 = vld [vmem:[%s2466 + $0xe0] sm:$0xff]
      %v4964 = vld [vmem:[%s2466 + $0xf0] sm:$0xff]
      %v4965 = vld [vmem:[%s2466 + $0xf8] sm:$0xff]
      %v4966 = vld [vmem:[%s2466 + $0x108] sm:$0xff]
      %v4967 = vld [vmem:[%s2466 + $0x110] sm:$0xff]
      %v4968 = vld [vmem:[%s2466 + $0x120] sm:$0xff]
      %v4969 = vld [vmem:[%s2466 + $0x128] sm:$0xff]
      %v4970 = vld [vmem:[%s2466 + $0x138] sm:$0xff]
      %v4971 = vld [vmem:[%s2466 + $0x140] sm:$0xff]
      %v4972 = vld [vmem:[%s2466 + $0x150] sm:$0xff]
      %v4973 = vld [vmem:[%s2466 + $0x158] sm:$0xff]
      %v4974 = vld [vmem:[%s2466 + $0x168] sm:$0xff]
      %v4975 = vld [vmem:[%s2466 + $0x170] sm:$0xff]
      %5008 = vrot.lane.b32.xlu0 %v4944, 104
      %v5009 = vpop.permute.xlu0 %5008
      %5010 = vrot.lane.b32.xlu0 %v4945, 104
      %v5011 = vpop.permute.xlu0 %5010
      %5012 = vrot.lane.b32.xlu0 %v4946, 104
      %v5013 = vpop.permute.xlu0 %5012
      %5014 = vrot.lane.b32.xlu0 %v4947, 104
      %v5015 = vpop.permute.xlu0 %5014
      %5016 = vrot.lane.b32.xlu0 %v4948, 104
      %v5017 = vpop.permute.xlu0 %5016
      %5018 = vrot.lane.b32.xlu0 %v4949, 104
      %v5019 = vpop.permute.xlu0 %5018
      %5020 = vrot.lane.b32.xlu0 %v4950, 104
      %v5021 = vpop.permute.xlu0 %5020
      %5022 = vrot.lane.b32.xlu0 %v4951, 104
      %v5023 = vpop.permute.xlu0 %5022
      %5024 = vrot.lane.b32.xlu0 %v4952, 104
      %v5025 = vpop.permute.xlu0 %5024
      %5026 = vrot.lane.b32.xlu0 %v4953, 104
      %v5027 = vpop.permute.xlu0 %5026
      %5028 = vrot.lane.b32.xlu0 %v4954, 104
      %v5029 = vpop.permute.xlu0 %5028
      %5030 = vrot.lane.b32.xlu0 %v4955, 104
      %v5031 = vpop.permute.xlu0 %5030
      %5032 = vrot.lane.b32.xlu0 %v4956, 104
      %v5033 = vpop.permute.xlu0 %5032
      %5034 = vrot.lane.b32.xlu0 %v4957, 104
      %v5035 = vpop.permute.xlu0 %5034
      %5036 = vrot.lane.b32.xlu0 %v4958, 104
      %v5037 = vpop.permute.xlu0 %5036
      %5038 = vrot.lane.b32.xlu0 %v4959, 104
      %v5039 = vpop.permute.xlu0 %5038
      %5040 = vrot.lane.b32.xlu0 %v4960, 104
      %v5041 = vpop.permute.xlu0 %5040
      %5042 = vrot.lane.b32.xlu0 %v4961, 104
      %v5043 = vpop.permute.xlu0 %5042
      %5044 = vrot.lane.b32.xlu0 %v4962, 104
      %v5045 = vpop.permute.xlu0 %5044
      %5046 = vrot.lane.b32.xlu0 %v4963, 104
      %v5047 = vpop.permute.xlu0 %5046
      %5048 = vrot.lane.b32.xlu0 %v4964, 104
      %v5049 = vpop.permute.xlu0 %5048
      %5050 = vrot.lane.b32.xlu0 %v4965, 104
      %v5051 = vpop.permute.xlu0 %5050
      %5052 = vrot.lane.b32.xlu0 %v4966, 104
      %v5053 = vpop.permute.xlu0 %5052
      %5054 = vrot.lane.b32.xlu0 %v4967, 104
      %v5055 = vpop.permute.xlu0 %5054
      %5056 = vrot.lane.b32.xlu0 %v4968, 104
      %v5057 = vpop.permute.xlu0 %5056
      %5058 = vrot.lane.b32.xlu0 %v4969, 104
      %v5059 = vpop.permute.xlu0 %5058
      %5060 = vrot.lane.b32.xlu0 %v4970, 104
      %v5061 = vpop.permute.xlu0 %5060
      %5062 = vrot.lane.b32.xlu0 %v4971, 104
      %v5063 = vpop.permute.xlu0 %5062
      %5064 = vrot.lane.b32.xlu0 %v4972, 104
      %v5065 = vpop.permute.xlu0 %5064
      %5066 = vrot.lane.b32.xlu0 %v4973, 104
      %v5067 = vpop.permute.xlu0 %5066
      %5068 = vrot.lane.b32.xlu0 %v4974, 104
      %v5069 = vpop.permute.xlu0 %5068
      %5070 = vrot.lane.b32.xlu0 %v4975, 104
      %v5071 = vpop.permute.xlu0 %5070
      %v5104 = vadd.f32 %v4912, %v5009
      %v5105 = vadd.f32 %v4913, %v5011
      %v5106 = vadd.f32 %v4914, %v5013
      %v5107 = vadd.f32 %v4915, %v5015
      %v5108 = vadd.f32 %v4916, %v5017
      %v5109 = vadd.f32 %v4917, %v5019
      %v5110 = vadd.f32 %v4918, %v5021
      %v5111 = vadd.f32 %v4919, %v5023
      %v5112 = vadd.f32 %v4920, %v5025
      %v5113 = vadd.f32 %v4921, %v5027
      %v5114 = vadd.f32 %v4922, %v5029
      %v5115 = vadd.f32 %v4923, %v5031
      %v5116 = vadd.f32 %v4924, %v5033
      %v5117 = vadd.f32 %v4925, %v5035
      %v5118 = vadd.f32 %v4926, %v5037
      %v5119 = vadd.f32 %v4927, %v5039
      %v5120 = vadd.f32 %v4928, %v5041
      %v5121 = vadd.f32 %v4929, %v5043
      %v5122 = vadd.f32 %v4930, %v5045
      %v5123 = vadd.f32 %v4931, %v5047
      %v5124 = vadd.f32 %v4932, %v5049
      %v5125 = vadd.f32 %v4933, %v5051
      %v5126 = vadd.f32 %v4934, %v5053
      %v5127 = vadd.f32 %v4935, %v5055
      %v5128 = vadd.f32 %v4936, %v5057
      %v5129 = vadd.f32 %v4937, %v5059
      %v5130 = vadd.f32 %v4938, %v5061
      %v5131 = vadd.f32 %v4939, %v5063
      %v5132 = vadd.f32 %v4940, %v5065
      %v5133 = vadd.f32 %v4941, %v5067
      %v5134 = vadd.f32 %v4942, %v5069
      %v5135 = vadd.f32 %v4943, %v5071
      %v5136 = vld [vmem:[%s2466 + $0x1] sm:$0xff]
      %v5137 = vld [vmem:[%s2466 + $0x9] sm:$0xff]
      %v5138 = vld [vmem:[%s2466 + $0x19] sm:$0xff]
      %v5139 = vld [vmem:[%s2466 + $0x21] sm:$0xff]
      %v5140 = vld [vmem:[%s2466 + $0x31] sm:$0xff]
      %v5141 = vld [vmem:[%s2466 + $0x39] sm:$0xff]
      %v5142 = vld [vmem:[%s2466 + $0x49] sm:$0xff]
      %v5143 = vld [vmem:[%s2466 + $0x51] sm:$0xff]
      %v5144 = vld [vmem:[%s2466 + $0x61] sm:$0xff]
      %v5145 = vld [vmem:[%s2466 + $0x69] sm:$0xff]
      %v5146 = vld [vmem:[%s2466 + $0x79] sm:$0xff]
      %v5147 = vld [vmem:[%s2466 + $0x81] sm:$0xff]
      %v5148 = vld [vmem:[%s2466 + $0x91] sm:$0xff]
      %v5149 = vld [vmem:[%s2466 + $0x99] sm:$0xff]
      %v5150 = vld [vmem:[%s2466 + $0xa9] sm:$0xff]
      %v5151 = vld [vmem:[%s2466 + $0xb1] sm:$0xff]
      %v5152 = vld [vmem:[%s2466 + $0xc1] sm:$0xff]
      %v5153 = vld [vmem:[%s2466 + $0xc9] sm:$0xff]
      %v5154 = vld [vmem:[%s2466 + $0xd9] sm:$0xff]
      %v5155 = vld [vmem:[%s2466 + $0xe1] sm:$0xff]
      %v5156 = vld [vmem:[%s2466 + $0xf1] sm:$0xff]
      %v5157 = vld [vmem:[%s2466 + $0xf9] sm:$0xff]
      %v5158 = vld [vmem:[%s2466 + $0x109] sm:$0xff]
      %v5159 = vld [vmem:[%s2466 + $0x111] sm:$0xff]
      %v5160 = vld [vmem:[%s2466 + $0x121] sm:$0xff]
      %v5161 = vld [vmem:[%s2466 + $0x129] sm:$0xff]
      %v5162 = vld [vmem:[%s2466 + $0x139] sm:$0xff]
      %v5163 = vld [vmem:[%s2466 + $0x141] sm:$0xff]
      %v5164 = vld [vmem:[%s2466 + $0x151] sm:$0xff]
      %v5165 = vld [vmem:[%s2466 + $0x159] sm:$0xff]
      %v5166 = vld [vmem:[%s2466 + $0x169] sm:$0xff]
      %v5167 = vld [vmem:[%s2466 + $0x171] sm:$0xff]
      %5200 = vrot.lane.b32.xlu0 %v5136, 100
      %v5201 = vpop.permute.xlu0 %5200
      %5202 = vrot.lane.b32.xlu0 %v5137, 100
      %v5203 = vpop.permute.xlu0 %5202
      %5204 = vrot.lane.b32.xlu0 %v5138, 100
      %v5205 = vpop.permute.xlu0 %5204
      %5206 = vrot.lane.b32.xlu0 %v5139, 100
      %v5207 = vpop.permute.xlu0 %5206
      %5208 = vrot.lane.b32.xlu0 %v5140, 100
      %v5209 = vpop.permute.xlu0 %5208
      %5210 = vrot.lane.b32.xlu0 %v5141, 100
      %v5211 = vpop.permute.xlu0 %5210
      %5212 = vrot.lane.b32.xlu0 %v5142, 100
      %v5213 = vpop.permute.xlu0 %5212
      %5214 = vrot.lane.b32.xlu0 %v5143, 100
      %v5215 = vpop.permute.xlu0 %5214
      %5216 = vrot.lane.b32.xlu0 %v5144, 100
      %v5217 = vpop.permute.xlu0 %5216
      %5218 = vrot.lane.b32.xlu0 %v5145, 100
      %v5219 = vpop.permute.xlu0 %5218
      %5220 = vrot.lane.b32.xlu0 %v5146, 100
      %v5221 = vpop.permute.xlu0 %5220
      %5222 = vrot.lane.b32.xlu0 %v5147, 100
      %v5223 = vpop.permute.xlu0 %5222
      %5224 = vrot.lane.b32.xlu0 %v5148, 100
      %v5225 = vpop.permute.xlu0 %5224
      %5226 = vrot.lane.b32.xlu0 %v5149, 100
      %v5227 = vpop.permute.xlu0 %5226
      %5228 = vrot.lane.b32.xlu0 %v5150, 100
      %v5229 = vpop.permute.xlu0 %5228
      %5230 = vrot.lane.b32.xlu0 %v5151, 100
      %v5231 = vpop.permute.xlu0 %5230
      %5232 = vrot.lane.b32.xlu0 %v5152, 100
      %v5233 = vpop.permute.xlu0 %5232
      %5234 = vrot.lane.b32.xlu0 %v5153, 100
      %v5235 = vpop.permute.xlu0 %5234
      %5236 = vrot.lane.b32.xlu0 %v5154, 100
      %v5237 = vpop.permute.xlu0 %5236
      %5238 = vrot.lane.b32.xlu0 %v5155, 100
      %v5239 = vpop.permute.xlu0 %5238
      %5240 = vrot.lane.b32.xlu0 %v5156, 100
      %v5241 = vpop.permute.xlu0 %5240
      %5242 = vrot.lane.b32.xlu0 %v5157, 100
      %v5243 = vpop.permute.xlu0 %5242
      %5244 = vrot.lane.b32.xlu0 %v5158, 100
      %v5245 = vpop.permute.xlu0 %5244
      %5246 = vrot.lane.b32.xlu0 %v5159, 100
      %v5247 = vpop.permute.xlu0 %5246
      %5248 = vrot.lane.b32.xlu0 %v5160, 100
      %v5249 = vpop.permute.xlu0 %5248
      %5250 = vrot.lane.b32.xlu0 %v5161, 100
      %v5251 = vpop.permute.xlu0 %5250
      %5252 = vrot.lane.b32.xlu0 %v5162, 100
      %v5253 = vpop.permute.xlu0 %5252
      %5254 = vrot.lane.b32.xlu0 %v5163, 100
      %v5255 = vpop.permute.xlu0 %5254
      %5256 = vrot.lane.b32.xlu0 %v5164, 100
      %v5257 = vpop.permute.xlu0 %5256
      %5258 = vrot.lane.b32.xlu0 %v5165, 100
      %v5259 = vpop.permute.xlu0 %5258
      %5260 = vrot.lane.b32.xlu0 %v5166, 100
      %v5261 = vpop.permute.xlu0 %5260
      %5262 = vrot.lane.b32.xlu0 %v5167, 100
      %v5263 = vpop.permute.xlu0 %5262
      %v5296 = vadd.f32 %v5104, %v5201
      %v5297 = vadd.f32 %v5105, %v5203
      %v5298 = vadd.f32 %v5106, %v5205
      %v5299 = vadd.f32 %v5107, %v5207
      %v5300 = vadd.f32 %v5108, %v5209
      %v5301 = vadd.f32 %v5109, %v5211
      %v5302 = vadd.f32 %v5110, %v5213
      %v5303 = vadd.f32 %v5111, %v5215
      %v5304 = vadd.f32 %v5112, %v5217
      %v5305 = vadd.f32 %v5113, %v5219
      %v5306 = vadd.f32 %v5114, %v5221
      %v5307 = vadd.f32 %v5115, %v5223
      %v5308 = vadd.f32 %v5116, %v5225
      %v5309 = vadd.f32 %v5117, %v5227
      %v5310 = vadd.f32 %v5118, %v5229
      %v5311 = vadd.f32 %v5119, %v5231
      %v5312 = vadd.f32 %v5120, %v5233
      %v5313 = vadd.f32 %v5121, %v5235
      %v5314 = vadd.f32 %v5122, %v5237
      %v5315 = vadd.f32 %v5123, %v5239
      %v5316 = vadd.f32 %v5124, %v5241
      %v5317 = vadd.f32 %v5125, %v5243
      %v5318 = vadd.f32 %v5126, %v5245
      %v5319 = vadd.f32 %v5127, %v5247
      %v5320 = vadd.f32 %v5128, %v5249
      %v5321 = vadd.f32 %v5129, %v5251
      %v5322 = vadd.f32 %v5130, %v5253
      %v5323 = vadd.f32 %v5131, %v5255
      %v5324 = vadd.f32 %v5132, %v5257
      %v5325 = vadd.f32 %v5133, %v5259
      %v5326 = vadd.f32 %v5134, %v5261
      %v5327 = vadd.f32 %v5135, %v5263
      %v5328 = vld [vmem:[%s2466 + $0x2] sm:$0xff]
      %v5329 = vld [vmem:[%s2466 + $0xa] sm:$0xff]
      %v5330 = vld [vmem:[%s2466 + $0x1a] sm:$0xff]
      %v5331 = vld [vmem:[%s2466 + $0x22] sm:$0xff]
      %v5332 = vld [vmem:[%s2466 + $0x32] sm:$0xff]
      %v5333 = vld [vmem:[%s2466 + $0x3a] sm:$0xff]
      %v5334 = vld [vmem:[%s2466 + $0x4a] sm:$0xff]
      %v5335 = vld [vmem:[%s2466 + $0x52] sm:$0xff]
      %v5336 = vld [vmem:[%s2466 + $0x62] sm:$0xff]
      %v5337 = vld [vmem:[%s2466 + $0x6a] sm:$0xff]
      %v5338 = vld [vmem:[%s2466 + $0x7a] sm:$0xff]
      %v5339 = vld [vmem:[%s2466 + $0x82] sm:$0xff]
      %v5340 = vld [vmem:[%s2466 + $0x92] sm:$0xff]
      %v5341 = vld [vmem:[%s2466 + $0x9a] sm:$0xff]
      %v5342 = vld [vmem:[%s2466 + $0xaa] sm:$0xff]
      %v5343 = vld [vmem:[%s2466 + $0xb2] sm:$0xff]
      %v5344 = vld [vmem:[%s2466 + $0xc2] sm:$0xff]
      %v5345 = vld [vmem:[%s2466 + $0xca] sm:$0xff]
      %v5346 = vld [vmem:[%s2466 + $0xda] sm:$0xff]
      %v5347 = vld [vmem:[%s2466 + $0xe2] sm:$0xff]
      %v5348 = vld [vmem:[%s2466 + $0xf2] sm:$0xff]
      %v5349 = vld [vmem:[%s2466 + $0xfa] sm:$0xff]
      %v5350 = vld [vmem:[%s2466 + $0x10a] sm:$0xff]
      %v5351 = vld [vmem:[%s2466 + $0x112] sm:$0xff]
      %v5352 = vld [vmem:[%s2466 + $0x122] sm:$0xff]
      %v5353 = vld [vmem:[%s2466 + $0x12a] sm:$0xff]
      %v5354 = vld [vmem:[%s2466 + $0x13a] sm:$0xff]
      %v5355 = vld [vmem:[%s2466 + $0x142] sm:$0xff]
      %v5356 = vld [vmem:[%s2466 + $0x152] sm:$0xff]
      %v5357 = vld [vmem:[%s2466 + $0x15a] sm:$0xff]
      %v5358 = vld [vmem:[%s2466 + $0x16a] sm:$0xff]
      %v5359 = vld [vmem:[%s2466 + $0x172] sm:$0xff]
      %5392 = vrot.lane.b32.xlu0 %v5328, 96
      %v5393 = vpop.permute.xlu0 %5392
      %5394 = vrot.lane.b32.xlu0 %v5329, 96
      %v5395 = vpop.permute.xlu0 %5394
      %5396 = vrot.lane.b32.xlu0 %v5330, 96
      %v5397 = vpop.permute.xlu0 %5396
      %5398 = vrot.lane.b32.xlu0 %v5331, 96
      %v5399 = vpop.permute.xlu0 %5398
      %5400 = vrot.lane.b32.xlu0 %v5332, 96
      %v5401 = vpop.permute.xlu0 %5400
      %5402 = vrot.lane.b32.xlu0 %v5333, 96
      %v5403 = vpop.permute.xlu0 %5402
      %5404 = vrot.lane.b32.xlu0 %v5334, 96
      %v5405 = vpop.permute.xlu0 %5404
      %5406 = vrot.lane.b32.xlu0 %v5335, 96
      %v5407 = vpop.permute.xlu0 %5406
      %5408 = vrot.lane.b32.xlu0 %v5336, 96
      %v5409 = vpop.permute.xlu0 %5408
      %5410 = vrot.lane.b32.xlu0 %v5337, 96
      %v5411 = vpop.permute.xlu0 %5410
      %5412 = vrot.lane.b32.xlu0 %v5338, 96
      %v5413 = vpop.permute.xlu0 %5412
      %5414 = vrot.lane.b32.xlu0 %v5339, 96
      %v5415 = vpop.permute.xlu0 %5414
      %5416 = vrot.lane.b32.xlu0 %v5340, 96
      %v5417 = vpop.permute.xlu0 %5416
      %5418 = vrot.lane.b32.xlu0 %v5341, 96
      %v5419 = vpop.permute.xlu0 %5418
      %5420 = vrot.lane.b32.xlu0 %v5342, 96
      %v5421 = vpop.permute.xlu0 %5420
      %5422 = vrot.lane.b32.xlu0 %v5343, 96
      %v5423 = vpop.permute.xlu0 %5422
      %5424 = vrot.lane.b32.xlu0 %v5344, 96
      %v5425 = vpop.permute.xlu0 %5424
      %5426 = vrot.lane.b32.xlu0 %v5345, 96
      %v5427 = vpop.permute.xlu0 %5426
      %5428 = vrot.lane.b32.xlu0 %v5346, 96
      %v5429 = vpop.permute.xlu0 %5428
      %5430 = vrot.lane.b32.xlu0 %v5347, 96
      %v5431 = vpop.permute.xlu0 %5430
      %5432 = vrot.lane.b32.xlu0 %v5348, 96
      %v5433 = vpop.permute.xlu0 %5432
      %5434 = vrot.lane.b32.xlu0 %v5349, 96
      %v5435 = vpop.permute.xlu0 %5434
      %5436 = vrot.lane.b32.xlu0 %v5350, 96
      %v5437 = vpop.permute.xlu0 %5436
      %5438 = vrot.lane.b32.xlu0 %v5351, 96
      %v5439 = vpop.permute.xlu0 %5438
      %5440 = vrot.lane.b32.xlu0 %v5352, 96
      %v5441 = vpop.permute.xlu0 %5440
      %5442 = vrot.lane.b32.xlu0 %v5353, 96
      %v5443 = vpop.permute.xlu0 %5442
      %5444 = vrot.lane.b32.xlu0 %v5354, 96
      %v5445 = vpop.permute.xlu0 %5444
      %5446 = vrot.lane.b32.xlu0 %v5355, 96
      %v5447 = vpop.permute.xlu0 %5446
      %5448 = vrot.lane.b32.xlu0 %v5356, 96
      %v5449 = vpop.permute.xlu0 %5448
      %5450 = vrot.lane.b32.xlu0 %v5357, 96
      %v5451 = vpop.permute.xlu0 %5450
      %5452 = vrot.lane.b32.xlu0 %v5358, 96
      %v5453 = vpop.permute.xlu0 %5452
      %5454 = vrot.lane.b32.xlu0 %v5359, 96
      %v5455 = vpop.permute.xlu0 %5454
      %v5488 = vadd.f32 %v5296, %v5393
      %v5489 = vadd.f32 %v5297, %v5395
      %v5490 = vadd.f32 %v5298, %v5397
      %v5491 = vadd.f32 %v5299, %v5399
      %v5492 = vadd.f32 %v5300, %v5401
      %v5493 = vadd.f32 %v5301, %v5403
      %v5494 = vadd.f32 %v5302, %v5405
      %v5495 = vadd.f32 %v5303, %v5407
      %v5496 = vadd.f32 %v5304, %v5409
      %v5497 = vadd.f32 %v5305, %v5411
      %v5498 = vadd.f32 %v5306, %v5413
      %v5499 = vadd.f32 %v5307, %v5415
      %v5500 = vadd.f32 %v5308, %v5417
      %v5501 = vadd.f32 %v5309, %v5419
      %v5502 = vadd.f32 %v5310, %v5421
      %v5503 = vadd.f32 %v5311, %v5423
      %v5504 = vadd.f32 %v5312, %v5425
      %v5505 = vadd.f32 %v5313, %v5427
      %v5506 = vadd.f32 %v5314, %v5429
      %v5507 = vadd.f32 %v5315, %v5431
      %v5508 = vadd.f32 %v5316, %v5433
      %v5509 = vadd.f32 %v5317, %v5435
      %v5510 = vadd.f32 %v5318, %v5437
      %v5511 = vadd.f32 %v5319, %v5439
      %v5512 = vadd.f32 %v5320, %v5441
      %v5513 = vadd.f32 %v5321, %v5443
      %v5514 = vadd.f32 %v5322, %v5445
      %v5515 = vadd.f32 %v5323, %v5447
      %v5516 = vadd.f32 %v5324, %v5449
      %v5517 = vadd.f32 %v5325, %v5451
      %v5518 = vadd.f32 %v5326, %v5453
      %v5519 = vadd.f32 %v5327, %v5455
      %5552 = vrot.lane.b32.xlu0 %v5488, 8
      %v5553 = vpop.permute.xlu0 %5552
      %5554 = vrot.lane.b32.xlu0 %v5489, 8
      %v5555 = vpop.permute.xlu0 %5554
      %5556 = vrot.lane.b32.xlu0 %v5490, 8
      %v5557 = vpop.permute.xlu0 %5556
      %5558 = vrot.lane.b32.xlu0 %v5491, 8
      %v5559 = vpop.permute.xlu0 %5558
      %5560 = vrot.lane.b32.xlu0 %v5492, 8
      %v5561 = vpop.permute.xlu0 %5560
      %5562 = vrot.lane.b32.xlu0 %v5493, 8
      %v5563 = vpop.permute.xlu0 %5562
      %5564 = vrot.lane.b32.xlu0 %v5494, 8
      %v5565 = vpop.permute.xlu0 %5564
      %5566 = vrot.lane.b32.xlu0 %v5495, 8
      %v5567 = vpop.permute.xlu0 %5566
      %5568 = vrot.lane.b32.xlu0 %v5496, 8
      %v5569 = vpop.permute.xlu0 %5568
      %5570 = vrot.lane.b32.xlu0 %v5497, 8
      %v5571 = vpop.permute.xlu0 %5570
      %5572 = vrot.lane.b32.xlu0 %v5498, 8
      %v5573 = vpop.permute.xlu0 %5572
      %5574 = vrot.lane.b32.xlu0 %v5499, 8
      %v5575 = vpop.permute.xlu0 %5574
      %5576 = vrot.lane.b32.xlu0 %v5500, 8
      %v5577 = vpop.permute.xlu0 %5576
      %5578 = vrot.lane.b32.xlu0 %v5501, 8
      %v5579 = vpop.permute.xlu0 %5578
      %5580 = vrot.lane.b32.xlu0 %v5502, 8
      %v5581 = vpop.permute.xlu0 %5580
      %5582 = vrot.lane.b32.xlu0 %v5503, 8
      %v5583 = vpop.permute.xlu0 %5582
      %5584 = vrot.lane.b32.xlu0 %v5504, 8
      %v5585 = vpop.permute.xlu0 %5584
      %5586 = vrot.lane.b32.xlu0 %v5505, 8
      %v5587 = vpop.permute.xlu0 %5586
      %5588 = vrot.lane.b32.xlu0 %v5506, 8
      %v5589 = vpop.permute.xlu0 %5588
      %5590 = vrot.lane.b32.xlu0 %v5507, 8
      %v5591 = vpop.permute.xlu0 %5590
      %5592 = vrot.lane.b32.xlu0 %v5508, 8
      %v5593 = vpop.permute.xlu0 %5592
      %5594 = vrot.lane.b32.xlu0 %v5509, 8
      %v5595 = vpop.permute.xlu0 %5594
      %5596 = vrot.lane.b32.xlu0 %v5510, 8
      %v5597 = vpop.permute.xlu0 %5596
      %5598 = vrot.lane.b32.xlu0 %v5511, 8
      %v5599 = vpop.permute.xlu0 %5598
      %5600 = vrot.lane.b32.xlu0 %v5512, 8
      %v5601 = vpop.permute.xlu0 %5600
      %5602 = vrot.lane.b32.xlu0 %v5513, 8
      %v5603 = vpop.permute.xlu0 %5602
      %5604 = vrot.lane.b32.xlu0 %v5514, 8
      %v5605 = vpop.permute.xlu0 %5604
      %5606 = vrot.lane.b32.xlu0 %v5515, 8
      %v5607 = vpop.permute.xlu0 %5606
      %5608 = vrot.lane.b32.xlu0 %v5516, 8
      %v5609 = vpop.permute.xlu0 %5608
      %5610 = vrot.lane.b32.xlu0 %v5517, 8
      %v5611 = vpop.permute.xlu0 %5610
      %5612 = vrot.lane.b32.xlu0 %v5518, 8
      %v5613 = vpop.permute.xlu0 %5612
      %5614 = vrot.lane.b32.xlu0 %v5519, 8
      %v5615 = vpop.permute.xlu0 %5614
      %vm5648 = vcmask 97344
      %5649 = vst.msk [vmem:[%s602] sm:$0xff] %vm5648, %v5553
      %5650 = vst.msk [vmem:[%s602 + $0x8] sm:$0xff] %vm5648, %v5555
      %5651 = vst.msk [vmem:[%s602 + $0x10] sm:$0xff] %vm5648, %v5557
      %5652 = vst.msk [vmem:[%s602 + $0x18] sm:$0xff] %vm5648, %v5559
      %5653 = vst.msk [vmem:[%s602 + $0x20] sm:$0xff] %vm5648, %v5561
      %5654 = vst.msk [vmem:[%s602 + $0x28] sm:$0xff] %vm5648, %v5563
      %5655 = vst.msk [vmem:[%s602 + $0x30] sm:$0xff] %vm5648, %v5565
      %5656 = vst.msk [vmem:[%s602 + $0x38] sm:$0xff] %vm5648, %v5567
      %5657 = vst.msk [vmem:[%s602 + $0x40] sm:$0xff] %vm5648, %v5569
      %5658 = vst.msk [vmem:[%s602 + $0x48] sm:$0xff] %vm5648, %v5571
      %5659 = vst.msk [vmem:[%s602 + $0x50] sm:$0xff] %vm5648, %v5573
      %5660 = vst.msk [vmem:[%s602 + $0x58] sm:$0xff] %vm5648, %v5575
      %5661 = vst.msk [vmem:[%s602 + $0x60] sm:$0xff] %vm5648, %v5577
      %5662 = vst.msk [vmem:[%s602 + $0x68] sm:$0xff] %vm5648, %v5579
      %5663 = vst.msk [vmem:[%s602 + $0x70] sm:$0xff] %vm5648, %v5581
      %5664 = vst.msk [vmem:[%s602 + $0x78] sm:$0xff] %vm5648, %v5583
      %5665 = vst.msk [vmem:[%s602 + $0x80] sm:$0xff] %vm5648, %v5585
      %5666 = vst.msk [vmem:[%s602 + $0x88] sm:$0xff] %vm5648, %v5587
      %5667 = vst.msk [vmem:[%s602 + $0x90] sm:$0xff] %vm5648, %v5589
      %5668 = vst.msk [vmem:[%s602 + $0x98] sm:$0xff] %vm5648, %v5591
      %5669 = vst.msk [vmem:[%s602 + $0xa0] sm:$0xff] %vm5648, %v5593
      %5670 = vst.msk [vmem:[%s602 + $0xa8] sm:$0xff] %vm5648, %v5595
      %5671 = vst.msk [vmem:[%s602 + $0xb0] sm:$0xff] %vm5648, %v5597
      %5672 = vst.msk [vmem:[%s602 + $0xb8] sm:$0xff] %vm5648, %v5599
      %5673 = vst.msk [vmem:[%s602 + $0xc0] sm:$0xff] %vm5648, %v5601
      %5674 = vst.msk [vmem:[%s602 + $0xc8] sm:$0xff] %vm5648, %v5603
      %5675 = vst.msk [vmem:[%s602 + $0xd0] sm:$0xff] %vm5648, %v5605
      %5676 = vst.msk [vmem:[%s602 + $0xd8] sm:$0xff] %vm5648, %v5607
      %5677 = vst.msk [vmem:[%s602 + $0xe0] sm:$0xff] %vm5648, %v5609
      %5678 = vst.msk [vmem:[%s602 + $0xe8] sm:$0xff] %vm5648, %v5611
      %5679 = vst.msk [vmem:[%s602 + $0xf0] sm:$0xff] %vm5648, %v5613
      %5680 = vst.msk [vmem:[%s602 + $0xf8] sm:$0xff] %vm5648, %v5615
      %v5681 = vld [vmem:[%s602] sm:$0xff]
      %v5682 = vld [vmem:[%s602 + $0x8] sm:$0xff]
      %v5683 = vld [vmem:[%s602 + $0x10] sm:$0xff]
      %v5684 = vld [vmem:[%s602 + $0x18] sm:$0xff]
      %v5685 = vld [vmem:[%s602 + $0x20] sm:$0xff]
      %v5686 = vld [vmem:[%s602 + $0x28] sm:$0xff]
      %v5687 = vld [vmem:[%s602 + $0x30] sm:$0xff]
      %v5688 = vld [vmem:[%s602 + $0x38] sm:$0xff]
      %v5689 = vld [vmem:[%s602 + $0x40] sm:$0xff]
      %v5690 = vld [vmem:[%s602 + $0x48] sm:$0xff]
      %v5691 = vld [vmem:[%s602 + $0x50] sm:$0xff]
      %v5692 = vld [vmem:[%s602 + $0x58] sm:$0xff]
      %v5693 = vld [vmem:[%s602 + $0x60] sm:$0xff]
      %v5694 = vld [vmem:[%s602 + $0x68] sm:$0xff]
      %v5695 = vld [vmem:[%s602 + $0x70] sm:$0xff]
      %v5696 = vld [vmem:[%s602 + $0x78] sm:$0xff]
      %v5697 = vld [vmem:[%s602 + $0x80] sm:$0xff]
      %v5698 = vld [vmem:[%s602 + $0x88] sm:$0xff]
      %v5699 = vld [vmem:[%s602 + $0x90] sm:$0xff]
      %v5700 = vld [vmem:[%s602 + $0x98] sm:$0xff]
      %v5701 = vld [vmem:[%s602 + $0xa0] sm:$0xff]
      %v5702 = vld [vmem:[%s602 + $0xa8] sm:$0xff]
      %v5703 = vld [vmem:[%s602 + $0xb0] sm:$0xff]
      %v5704 = vld [vmem:[%s602 + $0xb8] sm:$0xff]
      %v5705 = vld [vmem:[%s602 + $0xc0] sm:$0xff]
      %v5706 = vld [vmem:[%s602 + $0xc8] sm:$0xff]
      %v5707 = vld [vmem:[%s602 + $0xd0] sm:$0xff]
      %v5708 = vld [vmem:[%s602 + $0xd8] sm:$0xff]
      %v5709 = vld [vmem:[%s602 + $0xe0] sm:$0xff]
      %v5710 = vld [vmem:[%s602 + $0xe8] sm:$0xff]
      %v5711 = vld [vmem:[%s602 + $0xf0] sm:$0xff]
      %v5712 = vld [vmem:[%s602 + $0xf8] sm:$0xff]
      %v5713 = vld [vmem:[%s13] sm:$0x1]
      %v5715 = vlaneseq
      %v5716 = vshrl.u32 %v5715, 7
      %v5717 = vsub.s32 0, %v5716
      %v5718 = vrot.slane %v5713, %v5717
      %v5720 = vmul.f32 %v5681, %v5718
      %v5721 = vmul.f32 %v5682, %v5718
      %v5722 = vmul.f32 %v5683, %v5718
      %v5723 = vmul.f32 %v5684, %v5718
      %v5724 = vmul.f32 %v5685, %v5718
      %v5725 = vmul.f32 %v5686, %v5718
      %v5726 = vmul.f32 %v5687, %v5718
      %v5727 = vmul.f32 %v5688, %v5718
      %v5728 = vmul.f32 %v5689, %v5718
      %v5729 = vmul.f32 %v5690, %v5718
      %v5730 = vmul.f32 %v5691, %v5718
      %v5731 = vmul.f32 %v5692, %v5718
      %v5732 = vmul.f32 %v5693, %v5718
      %v5733 = vmul.f32 %v5694, %v5718
      %v5734 = vmul.f32 %v5695, %v5718
      %v5735 = vmul.f32 %v5696, %v5718
      %v5736 = vmul.f32 %v5697, %v5718
      %v5737 = vmul.f32 %v5698, %v5718
      %v5738 = vmul.f32 %v5699, %v5718
      %v5739 = vmul.f32 %v5700, %v5718
      %v5740 = vmul.f32 %v5701, %v5718
      %v5741 = vmul.f32 %v5702, %v5718
      %v5742 = vmul.f32 %v5703, %v5718
      %v5743 = vmul.f32 %v5704, %v5718
      %v5744 = vmul.f32 %v5705, %v5718
      %v5745 = vmul.f32 %v5706, %v5718
      %v5746 = vmul.f32 %v5707, %v5718
      %v5747 = vmul.f32 %v5708, %v5718
      %v5748 = vmul.f32 %v5709, %v5718
      %v5749 = vmul.f32 %v5710, %v5718
      %v5750 = vmul.f32 %v5711, %v5718
      %v5751 = vmul.f32 %v5712, %v5718
      %v5752 = vld [vmem:[%s14] sm:$0x1]
      %v5754 = vlaneseq
      %v5755 = vshrl.u32 %v5754, 7
      %v5756 = vsub.s32 0, %v5755
      %v5757 = vrot.slane %v5752, %v5756
      %v5759 = vadd.f32 %v5720, %v5757
      %v5760 = vadd.f32 %v5721, %v5757
      %v5761 = vadd.f32 %v5722, %v5757
      %v5762 = vadd.f32 %v5723, %v5757
      %v5763 = vadd.f32 %v5724, %v5757
      %v5764 = vadd.f32 %v5725, %v5757
      %v5765 = vadd.f32 %v5726, %v5757
      %v5766 = vadd.f32 %v5727, %v5757
      %v5767 = vadd.f32 %v5728, %v5757
      %v5768 = vadd.f32 %v5729, %v5757
      %v5769 = vadd.f32 %v5730, %v5757
      %v5770 = vadd.f32 %v5731, %v5757
      %v5771 = vadd.f32 %v5732, %v5757
      %v5772 = vadd.f32 %v5733, %v5757
      %v5773 = vadd.f32 %v5734, %v5757
      %v5774 = vadd.f32 %v5735, %v5757
      %v5775 = vadd.f32 %v5736, %v5757
      %v5776 = vadd.f32 %v5737, %v5757
      %v5777 = vadd.f32 %v5738, %v5757
      %v5778 = vadd.f32 %v5739, %v5757
      %v5779 = vadd.f32 %v5740, %v5757
      %v5780 = vadd.f32 %v5741, %v5757
      %v5781 = vadd.f32 %v5742, %v5757
      %v5782 = vadd.f32 %v5743, %v5757
      %v5783 = vadd.f32 %v5744, %v5757
      %v5784 = vadd.f32 %v5745, %v5757
      %v5785 = vadd.f32 %v5746, %v5757
      %v5786 = vadd.f32 %v5747, %v5757
      %v5787 = vadd.f32 %v5748, %v5757
      %v5788 = vadd.f32 %v5749, %v5757
      %v5789 = vadd.f32 %v5750, %v5757
      %v5790 = vadd.f32 %v5751, %v5757
      %v5791 = vmax.f32 %v5759, 0.0
      %v5792 = vmax.f32 %v5760, 0.0
      %v5793 = vmax.f32 %v5761, 0.0
      %v5794 = vmax.f32 %v5762, 0.0
      %v5795 = vmax.f32 %v5763, 0.0
      %v5796 = vmax.f32 %v5764, 0.0
      %v5797 = vmax.f32 %v5765, 0.0
      %v5798 = vmax.f32 %v5766, 0.0
      %v5799 = vmax.f32 %v5767, 0.0
      %v5800 = vmax.f32 %v5768, 0.0
      %v5801 = vmax.f32 %v5769, 0.0
      %v5802 = vmax.f32 %v5770, 0.0
      %v5803 = vmax.f32 %v5771, 0.0
      %v5804 = vmax.f32 %v5772, 0.0
      %v5805 = vmax.f32 %v5773, 0.0
      %v5806 = vmax.f32 %v5774, 0.0
      %v5807 = vmax.f32 %v5775, 0.0
      %v5808 = vmax.f32 %v5776, 0.0
      %v5809 = vmax.f32 %v5777, 0.0
      %v5810 = vmax.f32 %v5778, 0.0
      %v5811 = vmax.f32 %v5779, 0.0
      %v5812 = vmax.f32 %v5780, 0.0
      %v5813 = vmax.f32 %v5781, 0.0
      %v5814 = vmax.f32 %v5782, 0.0
      %v5815 = vmax.f32 %v5783, 0.0
      %v5816 = vmax.f32 %v5784, 0.0
      %v5817 = vmax.f32 %v5785, 0.0
      %v5818 = vmax.f32 %v5786, 0.0
      %v5819 = vmax.f32 %v5787, 0.0
      %v5820 = vmax.f32 %v5788, 0.0
      %v5821 = vmax.f32 %v5789, 0.0
      %v5822 = vmax.f32 %v5790, 0.0
      %v5823 = vpack.c.bf16 %v5792, %v5791
      %v5824 = vpack.c.bf16 %v5794, %v5793
      %v5825 = vpack.c.bf16 %v5796, %v5795
      %v5826 = vpack.c.bf16 %v5798, %v5797
      %v5827 = vpack.c.bf16 %v5800, %v5799
      %v5828 = vpack.c.bf16 %v5802, %v5801
      %v5829 = vpack.c.bf16 %v5804, %v5803
      %v5830 = vpack.c.bf16 %v5806, %v5805
      %v5831 = vpack.c.bf16 %v5808, %v5807
      %v5832 = vpack.c.bf16 %v5810, %v5809
      %v5833 = vpack.c.bf16 %v5812, %v5811
      %v5834 = vpack.c.bf16 %v5814, %v5813
      %v5835 = vpack.c.bf16 %v5816, %v5815
      %v5836 = vpack.c.bf16 %v5818, %v5817
      %v5837 = vpack.c.bf16 %v5820, %v5819
      %v5838 = vpack.c.bf16 %v5822, %v5821
      %v5839 = vld [vmem:[%s15] sm:$0xf]
      %v5840 = vld [vmem:[%s15 + $0x4] sm:$0x3]
      %v5843 = vunpack.c.l.b16 %v5839
      %v5844 = vunpack.c.l.b16 %v5840
      %v5845 = vpack.c.b16 %v5844, %v5843
      %vm5846 = vcmask 97280
      %v5848 = vsel %vm5846, %v5823, 0
      %v5851 = vsel %vm5846, %v5824, 0
      %v5854 = vsel %vm5846, %v5825, 0
      %v5857 = vsel %vm5846, %v5826, 0
      %v5860 = vsel %vm5846, %v5827, 0
      %v5863 = vsel %vm5846, %v5828, 0
      %v5866 = vsel %vm5846, %v5829, 0
      %v5869 = vsel %vm5846, %v5830, 0
      %v5872 = vsel %vm5846, %v5831, 0
      %v5875 = vsel %vm5846, %v5832, 0
      %v5878 = vsel %vm5846, %v5833, 0
      %v5881 = vsel %vm5846, %v5834, 0
      %v5884 = vsel %vm5846, %v5835, 0
      %v5887 = vsel %vm5846, %v5836, 0
      %v5890 = vsel %vm5846, %v5837, 0
      %v5893 = vsel %vm5846, %v5838, 0
      %vm5895 = vcmask 1045504
      %v5897 = vsel %vm5895, %v5845, 0
      %5899 = vmatprep.subr.bf16.mxu0 0
      %5900 = vmatpush1.bf16.msra.mxu0 %v5897
      %5901 = vmatprep.subr.bf16.mxu0 0
      %5902 = vmatpush1.bf16.msra.mxu0 0
      %5903 = vmatprep.subr.bf16.mxu0 0
      %5904 = vmatpush1.bf16.msra.mxu0 0
      %5905 = vmatprep.subr.bf16.mxu0 0
      %5906 = vmatpush1.bf16.msra.mxu0 0
      %5907 = vmatprep.subr.bf16.mxu0 0
      %5908 = vmatpush1.bf16.msra.mxu0 0
      %5909 = vmatprep.subr.bf16.mxu0 0
      %5910 = vmatpush1.bf16.msra.mxu0 0
      %5911 = vmatprep.subr.bf16.mxu0 0
      %5912 = vmatpush1.bf16.msra.mxu0 0
      %5913 = vmatprep.subr.bf16.mxu0 0
      %5914 = vmatpush1.bf16.msra.mxu0 0
      %5915 = vmatprep.subr.bf16.mxu0 0
      %5916 = vmatpush1.bf16.msra.mxu0 0
      %5917 = vmatprep.subr.bf16.mxu0 0
      %5918 = vmatpush1.bf16.msra.mxu0 0
      %5919 = vmatprep.subr.bf16.mxu0 0
      %5920 = vmatpush1.bf16.msra.mxu0 0
      %5921 = vmatprep.subr.bf16.mxu0 0
      %5922 = vmatpush1.bf16.msra.mxu0 0
      %5923 = vmatprep.subr.bf16.mxu0 0
      %5924 = vmatpush1.bf16.msra.mxu0 0
      %5925 = vmatprep.subr.bf16.mxu0 0
      %5926 = vmatpush1.bf16.msra.mxu0 0
      %5927 = vmatprep.subr.bf16.mxu0 0
      %5928 = vmatpush1.bf16.msra.mxu0 0
      %5929 = vmatprep.subr.bf16.mxu0 0
      %5930 = vmatpush1.bf16.msra.mxu0 0
      %5931 = vmatprep.mubr.bf16.mxu0 0
      %5932 = vmatmul.mubr.bf16.gmra.mrb[0].mxu0 %v5848
      %v5933 = vpop.f32.mrb[0].mxu0
      %v5934 = vadd.f32 0.0, %v5933
      %v5935 = vpop.f32.mrb[0].mxu0
      %v5936 = vpop.f32.mrb[0].mxu0
      %v5937 = vadd.f32 0.0, %v5936
      %v5938 = vpop.f32.mrb[0].mxu0
      %5939 = vmatprep.mubr.bf16.mxu0 0
      %5940 = vmatmul.mubr.bf16.gmra.mrb[0].mxu0 %v5851
      %v5941 = vpop.f32.mrb[0].mxu0
      %v5942 = vadd.f32 0.0, %v5941
      %v5943 = vpop.f32.mrb[0].mxu0
      %v5944 = vpop.f32.mrb[0].mxu0
      %v5945 = vadd.f32 0.0, %v5944
      %v5946 = vpop.f32.mrb[0].mxu0
      %5947 = vmatprep.mubr.bf16.mxu0 0
      %5948 = vmatmul.mubr.bf16.gmra.mrb[0].mxu0 %v5854
      %v5949 = vpop.f32.mrb[0].mxu0
      %v5950 = vadd.f32 0.0, %v5949
      %v5951 = vpop.f32.mrb[0].mxu0
      %v5952 = vpop.f32.mrb[0].mxu0
      %v5953 = vadd.f32 0.0, %v5952
      %v5954 = vpop.f32.mrb[0].mxu0
      %5955 = vmatprep.mubr.bf16.mxu0 0
      %5956 = vmatmul.mubr.bf16.gmra.mrb[0].mxu0 %v5857
      %v5957 = vpop.f32.mrb[0].mxu0
      %v5958 = vadd.f32 0.0, %v5957
      %v5959 = vpop.f32.mrb[0].mxu0
      %v5960 = vpop.f32.mrb[0].mxu0
      %v5961 = vadd.f32 0.0, %v5960
      %v5962 = vpop.f32.mrb[0].mxu0
      %5963 = vmatprep.mubr.bf16.mxu0 0
      %5964 = vmatmul.mubr.bf16.gmra.mrb[0].mxu0 %v5860
      %v5965 = vpop.f32.mrb[0].mxu0
      %v5966 = vadd.f32 0.0, %v5965
      %v5967 = vpop.f32.mrb[0].mxu0
      %v5968 = vpop.f32.mrb[0].mxu0
      %v5969 = vadd.f32 0.0, %v5968
      %v5970 = vpop.f32.mrb[0].mxu0
      %5971 = vmatprep.mubr.bf16.mxu0 0
      %5972 = vmatmul.mubr.bf16.gmra.mrb[0].mxu0 %v5863
      %v5973 = vpop.f32.mrb[0].mxu0
      %v5974 = vadd.f32 0.0, %v5973
      %v5975 = vpop.f32.mrb[0].mxu0
      %v5976 = vpop.f32.mrb[0].mxu0
      %v5977 = vadd.f32 0.0, %v5976
      %v5978 = vpop.f32.mrb[0].mxu0
      %5979 = vmatprep.mubr.bf16.mxu0 0
      %5980 = vmatmul.mubr.bf16.gmra.mrb[0].mxu0 %v5866
      %v5981 = vpop.f32.mrb[0].mxu0
      %v5982 = vadd.f32 0.0, %v5981
      %v5983 = vpop.f32.mrb[0].mxu0
      %v5984 = vpop.f32.mrb[0].mxu0
      %v5985 = vadd.f32 0.0, %v5984
      %v5986 = vpop.f32.mrb[0].mxu0
      %5987 = vmatprep.mubr.bf16.mxu0 0
      %5988 = vmatmul.mubr.bf16.gmra.mrb[0].mxu0 %v5869
      %v5989 = vpop.f32.mrb[0].mxu0
      %v5990 = vadd.f32 0.0, %v5989
      %v5991 = vpop.f32.mrb[0].mxu0
      %v5992 = vpop.f32.mrb[0].mxu0
      %v5993 = vadd.f32 0.0, %v5992
      %v5994 = vpop.f32.mrb[0].mxu0
      %5995 = vmatprep.mubr.bf16.mxu0 0
      %5996 = vmatmul.mubr.bf16.gmra.mrb[0].mxu0 %v5872
      %v5997 = vpop.f32.mrb[0].mxu0
      %v5998 = vadd.f32 0.0, %v5997
      %v5999 = vpop.f32.mrb[0].mxu0
      %v6000 = vpop.f32.mrb[0].mxu0
      %v6001 = vadd.f32 0.0, %v6000
      %v6002 = vpop.f32.mrb[0].mxu0
      %6003 = vmatprep.mubr.bf16.mxu0 0
      %6004 = vmatmul.mubr.bf16.gmra.mrb[0].mxu0 %v5875
      %v6005 = vpop.f32.mrb[0].mxu0
      %v6006 = vadd.f32 0.0, %v6005
      %v6007 = vpop.f32.mrb[0].mxu0
      %v6008 = vpop.f32.mrb[0].mxu0
      %v6009 = vadd.f32 0.0, %v6008
      %v6010 = vpop.f32.mrb[0].mxu0
      %6011 = vmatprep.mubr.bf16.mxu0 0
      %6012 = vmatmul.mubr.bf16.gmra.mrb[0].mxu0 %v5878
      %v6013 = vpop.f32.mrb[0].mxu0
      %v6014 = vadd.f32 0.0, %v6013
      %v6015 = vpop.f32.mrb[0].mxu0
      %v6016 = vpop.f32.mrb[0].mxu0
      %v6017 = vadd.f32 0.0, %v6016
      %v6018 = vpop.f32.mrb[0].mxu0
      %6019 = vmatprep.mubr.bf16.mxu0 0
      %6020 = vmatmul.mubr.bf16.gmra.mrb[0].mxu0 %v5881
      %v6021 = vpop.f32.mrb[0].mxu0
      %v6022 = vadd.f32 0.0, %v6021
      %v6023 = vpop.f32.mrb[0].mxu0
      %v6024 = vpop.f32.mrb[0].mxu0
      %v6025 = vadd.f32 0.0, %v6024
      %v6026 = vpop.f32.mrb[0].mxu0
      %6027 = vmatprep.mubr.bf16.mxu0 0
      %6028 = vmatmul.mubr.bf16.gmra.mrb[0].mxu0 %v5884
      %v6029 = vpop.f32.mrb[0].mxu0
      %v6030 = vadd.f32 0.0, %v6029
      %v6031 = vpop.f32.mrb[0].mxu0
      %v6032 = vpop.f32.mrb[0].mxu0
      %v6033 = vadd.f32 0.0, %v6032
      %v6034 = vpop.f32.mrb[0].mxu0
      %6035 = vmatprep.mubr.bf16.mxu0 0
      %6036 = vmatmul.mubr.bf16.gmra.mrb[0].mxu0 %v5887
      %v6037 = vpop.f32.mrb[0].mxu0
      %v6038 = vadd.f32 0.0, %v6037
      %v6039 = vpop.f32.mrb[0].mxu0
      %v6040 = vpop.f32.mrb[0].mxu0
      %v6041 = vadd.f32 0.0, %v6040
      %v6042 = vpop.f32.mrb[0].mxu0
      %6043 = vmatprep.mubr.bf16.mxu0 0
      %6044 = vmatmul.mubr.bf16.gmra.mrb[0].mxu0 %v5890
      %v6045 = vpop.f32.mrb[0].mxu0
      %v6046 = vadd.f32 0.0, %v6045
      %v6047 = vpop.f32.mrb[0].mxu0
      %v6048 = vpop.f32.mrb[0].mxu0
      %v6049 = vadd.f32 0.0, %v6048
      %v6050 = vpop.f32.mrb[0].mxu0
      %6051 = vmatprep.mubr.bf16.mxu0 0
      %6052 = vmatmul.mubr.bf16.gmra.mrb[0].mxu0 %v5893
      %v6053 = vpop.f32.mrb[0].mxu0
      %v6054 = vadd.f32 0.0, %v6053
      %v6055 = vpop.f32.mrb[0].mxu0
      %v6056 = vpop.f32.mrb[0].mxu0
      %v6057 = vadd.f32 0.0, %v6056
      %v6058 = vpop.f32.mrb[0].mxu0
      %6059 = vdwg.mxu0
      %v6060 = vld [vmem:[%s16] sm:$0x1]
      %v6062 = vlaneseq
      %v6063 = vshrl.u32 %v6062, 7
      %v6064 = vsub.s32 0, %v6063
      %v6065 = vrot.slane %v6060, %v6064
      %v6067 = vmul.f32 %v5934, %v6065
      %v6068 = vmul.f32 %v5937, %v6065
      %v6069 = vmul.f32 %v5942, %v6065
      %v6070 = vmul.f32 %v5945, %v6065
      %v6071 = vmul.f32 %v5950, %v6065
      %v6072 = vmul.f32 %v5953, %v6065
      %v6073 = vmul.f32 %v5958, %v6065
      %v6074 = vmul.f32 %v5961, %v6065
      %v6075 = vmul.f32 %v5966, %v6065
      %v6076 = vmul.f32 %v5969, %v6065
      %v6077 = vmul.f32 %v5974, %v6065
      %v6078 = vmul.f32 %v5977, %v6065
      %v6079 = vmul.f32 %v5982, %v6065
      %v6080 = vmul.f32 %v5985, %v6065
      %v6081 = vmul.f32 %v5990, %v6065
      %v6082 = vmul.f32 %v5993, %v6065
      %v6083 = vmul.f32 %v5998, %v6065
      %v6084 = vmul.f32 %v6001, %v6065
      %v6085 = vmul.f32 %v6006, %v6065
      %v6086 = vmul.f32 %v6009, %v6065
      %v6087 = vmul.f32 %v6014, %v6065
      %v6088 = vmul.f32 %v6017, %v6065
      %v6089 = vmul.f32 %v6022, %v6065
      %v6090 = vmul.f32 %v6025, %v6065
      %v6091 = vmul.f32 %v6030, %v6065
      %v6092 = vmul.f32 %v6033, %v6065
      %v6093 = vmul.f32 %v6038, %v6065
      %v6094 = vmul.f32 %v6041, %v6065
      %v6095 = vmul.f32 %v6046, %v6065
      %v6096 = vmul.f32 %v6049, %v6065
      %v6097 = vmul.f32 %v6054, %v6065
      %v6098 = vmul.f32 %v6057, %v6065
      %v6099 = vld [vmem:[%s17] sm:$0x1]
      %v6101 = vlaneseq
      %v6102 = vshrl.u32 %v6101, 7
      %v6103 = vsub.s32 0, %v6102
      %v6104 = vrot.slane %v6099, %v6103
      %v6106 = vadd.f32 %v6067, %v6104
      %v6107 = vadd.f32 %v6068, %v6104
      %v6108 = vadd.f32 %v6069, %v6104
      %v6109 = vadd.f32 %v6070, %v6104
      %v6110 = vadd.f32 %v6071, %v6104
      %v6111 = vadd.f32 %v6072, %v6104
      %v6112 = vadd.f32 %v6073, %v6104
      %v6113 = vadd.f32 %v6074, %v6104
      %v6114 = vadd.f32 %v6075, %v6104
      %v6115 = vadd.f32 %v6076, %v6104
      %v6116 = vadd.f32 %v6077, %v6104
      %v6117 = vadd.f32 %v6078, %v6104
      %v6118 = vadd.f32 %v6079, %v6104
      %v6119 = vadd.f32 %v6080, %v6104
      %v6120 = vadd.f32 %v6081, %v6104
      %v6121 = vadd.f32 %v6082, %v6104
      %v6122 = vadd.f32 %v6083, %v6104
      %v6123 = vadd.f32 %v6084, %v6104
      %v6124 = vadd.f32 %v6085, %v6104
      %v6125 = vadd.f32 %v6086, %v6104
      %v6126 = vadd.f32 %v6087, %v6104
      %v6127 = vadd.f32 %v6088, %v6104
      %v6128 = vadd.f32 %v6089, %v6104
      %v6129 = vadd.f32 %v6090, %v6104
      %v6130 = vadd.f32 %v6091, %v6104
      %v6131 = vadd.f32 %v6092, %v6104
      %v6132 = vadd.f32 %v6093, %v6104
      %v6133 = vadd.f32 %v6094, %v6104
      %v6134 = vadd.f32 %v6095, %v6104
      %v6135 = vadd.f32 %v6096, %v6104
      %v6136 = vadd.f32 %v6097, %v6104
      %v6137 = vadd.f32 %v6098, %v6104
      %v6138 = vmax.f32 %v6106, 0.0
      %v6139 = vmax.f32 %v6107, 0.0
      %v6140 = vmax.f32 %v6108, 0.0
      %v6141 = vmax.f32 %v6109, 0.0
      %v6142 = vmax.f32 %v6110, 0.0
      %v6143 = vmax.f32 %v6111, 0.0
      %v6144 = vmax.f32 %v6112, 0.0
      %v6145 = vmax.f32 %v6113, 0.0
      %v6146 = vmax.f32 %v6114, 0.0
      %v6147 = vmax.f32 %v6115, 0.0
      %v6148 = vmax.f32 %v6116, 0.0
      %v6149 = vmax.f32 %v6117, 0.0
      %v6150 = vmax.f32 %v6118, 0.0
      %v6151 = vmax.f32 %v6119, 0.0
      %v6152 = vmax.f32 %v6120, 0.0
      %v6153 = vmax.f32 %v6121, 0.0
      %v6154 = vmax.f32 %v6122, 0.0
      %v6155 = vmax.f32 %v6123, 0.0
      %v6156 = vmax.f32 %v6124, 0.0
      %v6157 = vmax.f32 %v6125, 0.0
      %v6158 = vmax.f32 %v6126, 0.0
      %v6159 = vmax.f32 %v6127, 0.0
      %v6160 = vmax.f32 %v6128, 0.0
      %v6161 = vmax.f32 %v6129, 0.0
      %v6162 = vmax.f32 %v6130, 0.0
      %v6163 = vmax.f32 %v6131, 0.0
      %v6164 = vmax.f32 %v6132, 0.0
      %v6165 = vmax.f32 %v6133, 0.0
      %v6166 = vmax.f32 %v6134, 0.0
      %v6167 = vmax.f32 %v6135, 0.0
      %v6168 = vmax.f32 %v6136, 0.0
      %v6169 = vmax.f32 %v6137, 0.0
      %v6170 = vpack.c.bf16 %v6139, %v6138
      %v6171 = vpack.c.bf16 %v6141, %v6140
      %v6172 = vpack.c.bf16 %v6143, %v6142
      %v6173 = vpack.c.bf16 %v6145, %v6144
      %v6174 = vpack.c.bf16 %v6147, %v6146
      %v6175 = vpack.c.bf16 %v6149, %v6148
      %v6176 = vpack.c.bf16 %v6151, %v6150
      %v6177 = vpack.c.bf16 %v6153, %v6152
      %v6178 = vpack.c.bf16 %v6155, %v6154
      %v6179 = vpack.c.bf16 %v6157, %v6156
      %v6180 = vpack.c.bf16 %v6159, %v6158
      %v6181 = vpack.c.bf16 %v6161, %v6160
      %v6182 = vpack.c.bf16 %v6163, %v6162
      %v6183 = vpack.c.bf16 %v6165, %v6164
      %v6184 = vpack.c.bf16 %v6167, %v6166
      %v6185 = vpack.c.bf16 %v6169, %v6168
      %v6186 = vld [vmem:[%s18] sm:$0xf]
      %v6187 = vld [vmem:[%s18 + $0x4] sm:$0xf]
      %v6190 = vunpack.c.l.b16 %v6186
      %v6191 = vunpack.c.l.b16 %v6187
      %v6192 = vpack.c.b16 %v6191, %v6190
      %v6195 = vsel %vm1231, %v6170, 0
      %v6198 = vsel %vm1231, %v6171, 0
      %v6201 = vsel %vm1231, %v6172, 0
      %v6204 = vsel %vm1231, %v6173, 0
      %v6207 = vsel %vm1231, %v6174, 0
      %v6210 = vsel %vm1231, %v6175, 0
      %v6213 = vsel %vm1231, %v6176, 0
      %v6216 = vsel %vm1231, %v6177, 0
      %v6219 = vsel %vm1231, %v6178, 0
      %v6222 = vsel %vm1231, %v6179, 0
      %v6225 = vsel %vm1231, %v6180, 0
      %v6228 = vsel %vm1231, %v6181, 0
      %v6231 = vsel %vm1231, %v6182, 0
      %v6234 = vsel %vm1231, %v6183, 0
      %v6237 = vsel %vm1231, %v6184, 0
      %v6240 = vsel %vm1231, %v6185, 0
      %6242 = vmatprep.subr.bf16.mxu0 0
      %6243 = vmatpush1.bf16.msra.mxu0 %v6192
      %6244 = vmatprep.subr.bf16.mxu0 0
      %6245 = vmatpush1.bf16.msra.mxu0 0
      %6246 = vmatprep.subr.bf16.mxu0 0
      %6247 = vmatpush1.bf16.msra.mxu0 0
      %6248 = vmatprep.subr.bf16.mxu0 0
      %6249 = vmatpush1.bf16.msra.mxu0 0
      %6250 = vmatprep.subr.bf16.mxu0 0
      %6251 = vmatpush1.bf16.msra.mxu0 0
      %6252 = vmatprep.subr.bf16.mxu0 0
      %6253 = vmatpush1.bf16.msra.mxu0 0
      %6254 = vmatprep.subr.bf16.mxu0 0
      %6255 = vmatpush1.bf16.msra.mxu0 0
      %6256 = vmatprep.subr.bf16.mxu0 0
      %6257 = vmatpush1.bf16.msra.mxu0 0
      %6258 = vmatprep.subr.bf16.mxu0 0
      %6259 = vmatpush1.bf16.msra.mxu0 0
      %6260 = vmatprep.subr.bf16.mxu0 0
      %6261 = vmatpush1.bf16.msra.mxu0 0
      %6262 = vmatprep.subr.bf16.mxu0 0
      %6263 = vmatpush1.bf16.msra.mxu0 0
      %6264 = vmatprep.subr.bf16.mxu0 0
      %6265 = vmatpush1.bf16.msra.mxu0 0
      %6266 = vmatprep.subr.bf16.mxu0 0
      %6267 = vmatpush1.bf16.msra.mxu0 0
      %6268 = vmatprep.subr.bf16.mxu0 0
      %6269 = vmatpush1.bf16.msra.mxu0 0
      %6270 = vmatprep.subr.bf16.mxu0 0
      %6271 = vmatpush1.bf16.msra.mxu0 0
      %6272 = vmatprep.subr.bf16.mxu0 0
      %6273 = vmatpush1.bf16.msra.mxu0 0
      %6274 = vmatprep.mubr.bf16.mxu0 0
      %6275 = vmatmul.mubr.bf16.gmra.mrb[0].mxu0 %v6195
      %v6276 = vpop.f32.mrb[0].mxu0
      %v6277 = vadd.f32 0.0, %v6276
      %v6278 = vpop.f32.mrb[0].mxu0
      %v6279 = vpop.f32.mrb[0].mxu0
      %v6280 = vadd.f32 0.0, %v6279
      %v6281 = vpop.f32.mrb[0].mxu0
      %6282 = vmatprep.mubr.bf16.mxu0 0
      %6283 = vmatmul.mubr.bf16.gmra.mrb[0].mxu0 %v6198
      %v6284 = vpop.f32.mrb[0].mxu0
      %v6285 = vadd.f32 0.0, %v6284
      %v6286 = vpop.f32.mrb[0].mxu0
      %v6287 = vpop.f32.mrb[0].mxu0
      %v6288 = vadd.f32 0.0, %v6287
      %v6289 = vpop.f32.mrb[0].mxu0
      %6290 = vmatprep.mubr.bf16.mxu0 0
      %6291 = vmatmul.mubr.bf16.gmra.mrb[0].mxu0 %v6201
      %v6292 = vpop.f32.mrb[0].mxu0
      %v6293 = vadd.f32 0.0, %v6292
      %v6294 = vpop.f32.mrb[0].mxu0
      %v6295 = vpop.f32.mrb[0].mxu0
      %v6296 = vadd.f32 0.0, %v6295
      %v6297 = vpop.f32.mrb[0].mxu0
      %6298 = vmatprep.mubr.bf16.mxu0 0
      %6299 = vmatmul.mubr.bf16.gmra.mrb[0].mxu0 %v6204
      %v6300 = vpop.f32.mrb[0].mxu0
      %v6301 = vadd.f32 0.0, %v6300
      %v6302 = vpop.f32.mrb[0].mxu0
      %v6303 = vpop.f32.mrb[0].mxu0
      %v6304 = vadd.f32 0.0, %v6303
      %v6305 = vpop.f32.mrb[0].mxu0
      %6306 = vmatprep.mubr.bf16.mxu0 0
      %6307 = vmatmul.mubr.bf16.gmra.mrb[0].mxu0 %v6207
      %v6308 = vpop.f32.mrb[0].mxu0
      %v6309 = vadd.f32 0.0, %v6308
      %v6310 = vpop.f32.mrb[0].mxu0
      %v6311 = vpop.f32.mrb[0].mxu0
      %v6312 = vadd.f32 0.0, %v6311
      %v6313 = vpop.f32.mrb[0].mxu0
      %6314 = vmatprep.mubr.bf16.mxu0 0
      %6315 = vmatmul.mubr.bf16.gmra.mrb[0].mxu0 %v6210
      %v6316 = vpop.f32.mrb[0].mxu0
      %v6317 = vadd.f32 0.0, %v6316
      %v6318 = vpop.f32.mrb[0].mxu0
      %v6319 = vpop.f32.mrb[0].mxu0
      %v6320 = vadd.f32 0.0, %v6319
      %v6321 = vpop.f32.mrb[0].mxu0
      %6322 = vmatprep.mubr.bf16.mxu0 0
      %6323 = vmatmul.mubr.bf16.gmra.mrb[0].mxu0 %v6213
      %v6324 = vpop.f32.mrb[0].mxu0
      %v6325 = vadd.f32 0.0, %v6324
      %v6326 = vpop.f32.mrb[0].mxu0
      %v6327 = vpop.f32.mrb[0].mxu0
      %v6328 = vadd.f32 0.0, %v6327
      %v6329 = vpop.f32.mrb[0].mxu0
      %6330 = vmatprep.mubr.bf16.mxu0 0
      %6331 = vmatmul.mubr.bf16.gmra.mrb[0].mxu0 %v6216
      %v6332 = vpop.f32.mrb[0].mxu0
      %v6333 = vadd.f32 0.0, %v6332
      %v6334 = vpop.f32.mrb[0].mxu0
      %v6335 = vpop.f32.mrb[0].mxu0
      %v6336 = vadd.f32 0.0, %v6335
      %v6337 = vpop.f32.mrb[0].mxu0
      %6338 = vmatprep.mubr.bf16.mxu0 0
      %6339 = vmatmul.mubr.bf16.gmra.mrb[0].mxu0 %v6219
      %v6340 = vpop.f32.mrb[0].mxu0
      %v6341 = vadd.f32 0.0, %v6340
      %v6342 = vpop.f32.mrb[0].mxu0
      %v6343 = vpop.f32.mrb[0].mxu0
      %v6344 = vadd.f32 0.0, %v6343
      %v6345 = vpop.f32.mrb[0].mxu0
      %6346 = vmatprep.mubr.bf16.mxu0 0
      %6347 = vmatmul.mubr.bf16.gmra.mrb[0].mxu0 %v6222
      %v6348 = vpop.f32.mrb[0].mxu0
      %v6349 = vadd.f32 0.0, %v6348
      %v6350 = vpop.f32.mrb[0].mxu0
      %v6351 = vpop.f32.mrb[0].mxu0
      %v6352 = vadd.f32 0.0, %v6351
      %v6353 = vpop.f32.mrb[0].mxu0
      %6354 = vmatprep.mubr.bf16.mxu0 0
      %6355 = vmatmul.mubr.bf16.gmra.mrb[0].mxu0 %v6225
      %v6356 = vpop.f32.mrb[0].mxu0
      %v6357 = vadd.f32 0.0, %v6356
      %v6358 = vpop.f32.mrb[0].mxu0
      %v6359 = vpop.f32.mrb[0].mxu0
      %v6360 = vadd.f32 0.0, %v6359
      %v6361 = vpop.f32.mrb[0].mxu0
      %6362 = vmatprep.mubr.bf16.mxu0 0
      %6363 = vmatmul.mubr.bf16.gmra.mrb[0].mxu0 %v6228
      %v6364 = vpop.f32.mrb[0].mxu0
      %v6365 = vadd.f32 0.0, %v6364
      %v6366 = vpop.f32.mrb[0].mxu0
      %v6367 = vpop.f32.mrb[0].mxu0
      %v6368 = vadd.f32 0.0, %v6367
      %v6369 = vpop.f32.mrb[0].mxu0
      %6370 = vmatprep.mubr.bf16.mxu0 0
      %6371 = vmatmul.mubr.bf16.gmra.mrb[0].mxu0 %v6231
      %v6372 = vpop.f32.mrb[0].mxu0
      %v6373 = vadd.f32 0.0, %v6372
      %v6374 = vpop.f32.mrb[0].mxu0
      %v6375 = vpop.f32.mrb[0].mxu0
      %v6376 = vadd.f32 0.0, %v6375
      %v6377 = vpop.f32.mrb[0].mxu0
      %6378 = vmatprep.mubr.bf16.mxu0 0
      %6379 = vmatmul.mubr.bf16.gmra.mrb[0].mxu0 %v6234
      %v6380 = vpop.f32.mrb[0].mxu0
      %v6381 = vadd.f32 0.0, %v6380
      %v6382 = vpop.f32.mrb[0].mxu0
      %v6383 = vpop.f32.mrb[0].mxu0
      %v6384 = vadd.f32 0.0, %v6383
      %v6385 = vpop.f32.mrb[0].mxu0
      %6386 = vmatprep.mubr.bf16.mxu0 0
      %6387 = vmatmul.mubr.bf16.gmra.mrb[0].mxu0 %v6237
      %v6388 = vpop.f32.mrb[0].mxu0
      %v6389 = vadd.f32 0.0, %v6388
      %v6390 = vpop.f32.mrb[0].mxu0
      %v6391 = vpop.f32.mrb[0].mxu0
      %v6392 = vadd.f32 0.0, %v6391
      %v6393 = vpop.f32.mrb[0].mxu0
      %6394 = vmatprep.mubr.bf16.mxu0 0
      %6395 = vmatmul.mubr.bf16.gmra.mrb[0].mxu0 %v6240
      %v6396 = vpop.f32.mrb[0].mxu0
      %v6397 = vadd.f32 0.0, %v6396
      %v6398 = vpop.f32.mrb[0].mxu0
      %v6399 = vpop.f32.mrb[0].mxu0
      %v6400 = vadd.f32 0.0, %v6399
      %v6401 = vpop.f32.mrb[0].mxu0
      %6402 = vdwg.mxu0
      %6403 = vst.msk [vmem:[%s1441 + $0x1] sm:$0xff] %vm604, %v6277
      %6404 = vst.msk [vmem:[%s1441 + $0x9] sm:$0xff] %vm604, %v6280
      %6405 = vst.msk [vmem:[%s1441 + $0x19] sm:$0xff] %vm604, %v6285
      %6406 = vst.msk [vmem:[%s1441 + $0x21] sm:$0xff] %vm604, %v6288
      %6407 = vst.msk [vmem:[%s1441 + $0x31] sm:$0xff] %vm604, %v6293
      %6408 = vst.msk [vmem:[%s1441 + $0x39] sm:$0xff] %vm604, %v6296
      %6409 = vst.msk [vmem:[%s1441 + $0x49] sm:$0xff] %vm604, %v6301
      %6410 = vst.msk [vmem:[%s1441 + $0x51] sm:$0xff] %vm604, %v6304
      %6411 = vst.msk [vmem:[%s1441 + $0x61] sm:$0xff] %vm604, %v6309
      %6412 = vst.msk [vmem:[%s1441 + $0x69] sm:$0xff] %vm604, %v6312
      %6413 = vst.msk [vmem:[%s1441 + $0x79] sm:$0xff] %vm604, %v6317
      %6414 = vst.msk [vmem:[%s1441 + $0x81] sm:$0xff] %vm604, %v6320
      %6415 = vst.msk [vmem:[%s1441 + $0x91] sm:$0xff] %vm604, %v6325
      %6416 = vst.msk [vmem:[%s1441 + $0x99] sm:$0xff] %vm604, %v6328
      %6417 = vst.msk [vmem:[%s1441 + $0xa9] sm:$0xff] %vm604, %v6333
      %6418 = vst.msk [vmem:[%s1441 + $0xb1] sm:$0xff] %vm604, %v6336
      %6419 = vst.msk [vmem:[%s1441 + $0xc1] sm:$0xff] %vm604, %v6341
      %6420 = vst.msk [vmem:[%s1441 + $0xc9] sm:$0xff] %vm604, %v6344
      %6421 = vst.msk [vmem:[%s1441 + $0xd9] sm:$0xff] %vm604, %v6349
      %6422 = vst.msk [vmem:[%s1441 + $0xe1] sm:$0xff] %vm604, %v6352
      %6423 = vst.msk [vmem:[%s1441 + $0xf1] sm:$0xff] %vm604, %v6357
      %6424 = vst.msk [vmem:[%s1441 + $0xf9] sm:$0xff] %vm604, %v6360
      %6425 = vst.msk [vmem:[%s1441 + $0x109] sm:$0xff] %vm604, %v6365
      %6426 = vst.msk [vmem:[%s1441 + $0x111] sm:$0xff] %vm604, %v6368
      %6427 = vst.msk [vmem:[%s1441 + $0x121] sm:$0xff] %vm604, %v6373
      %6428 = vst.msk [vmem:[%s1441 + $0x129] sm:$0xff] %vm604, %v6376
      %6429 = vst.msk [vmem:[%s1441 + $0x139] sm:$0xff] %vm604, %v6381
      %6430 = vst.msk [vmem:[%s1441 + $0x141] sm:$0xff] %vm604, %v6384
      %6431 = vst.msk [vmem:[%s1441 + $0x151] sm:$0xff] %vm604, %v6389
      %6432 = vst.msk [vmem:[%s1441 + $0x159] sm:$0xff] %vm604, %v6392
      %6433 = vst.msk [vmem:[%s1441 + $0x169] sm:$0xff] %vm604, %v6397
      %6434 = vst.msk [vmem:[%s1441 + $0x171] sm:$0xff] %vm604, %v6400
      %v6435 = vld [vmem:[#allocation2] sm:$0xff]
      %v6436 = vld [vmem:[#allocation2 + $0x8] sm:$0xff]
      %v6437 = vld [vmem:[#allocation2 + $0x18] sm:$0xff]
      %v6438 = vld [vmem:[#allocation2 + $0x20] sm:$0xff]
      %v6439 = vld [vmem:[#allocation2 + $0x30] sm:$0xff]
      %v6440 = vld [vmem:[#allocation2 + $0x38] sm:$0xff]
      %v6441 = vld [vmem:[#allocation2 + $0x48] sm:$0xff]
      %v6442 = vld [vmem:[#allocation2 + $0x50] sm:$0xff]
      %v6443 = vld [vmem:[#allocation2 + $0x60] sm:$0xff]
      %v6444 = vld [vmem:[#allocation2 + $0x68] sm:$0xff]
      %v6445 = vld [vmem:[#allocation2 + $0x78] sm:$0xff]
      %v6446 = vld [vmem:[#allocation2 + $0x80] sm:$0xff]
      %v6447 = vld [vmem:[#allocation2 + $0x90] sm:$0xff]
      %v6448 = vld [vmem:[#allocation2 + $0x98] sm:$0xff]
      %v6449 = vld [vmem:[#allocation2 + $0xa8] sm:$0xff]
      %v6450 = vld [vmem:[#allocation2 + $0xb0] sm:$0xff]
      %v6451 = vld [vmem:[#allocation2 + $0xc0] sm:$0xff]
      %v6452 = vld [vmem:[#allocation2 + $0xc8] sm:$0xff]
      %v6453 = vld [vmem:[#allocation2 + $0xd8] sm:$0xff]
      %v6454 = vld [vmem:[#allocation2 + $0xe0] sm:$0xff]
      %v6455 = vld [vmem:[#allocation2 + $0xf0] sm:$0xff]
      %v6456 = vld [vmem:[#allocation2 + $0xf8] sm:$0xff]
      %v6457 = vld [vmem:[#allocation2 + $0x108] sm:$0xff]
      %v6458 = vld [vmem:[#allocation2 + $0x110] sm:$0xff]
      %v6459 = vld [vmem:[#allocation2 + $0x120] sm:$0xff]
      %v6460 = vld [vmem:[#allocation2 + $0x128] sm:$0xff]
      %v6461 = vld [vmem:[#allocation2 + $0x138] sm:$0xff]
      %v6462 = vld [vmem:[#allocation2 + $0x140] sm:$0xff]
      %v6463 = vld [vmem:[#allocation2 + $0x150] sm:$0xff]
      %v6464 = vld [vmem:[#allocation2 + $0x158] sm:$0xff]
      %v6465 = vld [vmem:[#allocation2 + $0x168] sm:$0xff]
      %v6466 = vld [vmem:[#allocation2 + $0x170] sm:$0xff]
      %v6467 = vld [vmem:[#allocation2 + $0x1] sm:$0xff]
      %v6468 = vld [vmem:[#allocation2 + $0x9] sm:$0xff]
      %v6469 = vld [vmem:[#allocation2 + $0x19] sm:$0xff]
      %v6470 = vld [vmem:[#allocation2 + $0x21] sm:$0xff]
      %v6471 = vld [vmem:[#allocation2 + $0x31] sm:$0xff]
      %v6472 = vld [vmem:[#allocation2 + $0x39] sm:$0xff]
      %v6473 = vld [vmem:[#allocation2 + $0x49] sm:$0xff]
      %v6474 = vld [vmem:[#allocation2 + $0x51] sm:$0xff]
      %v6475 = vld [vmem:[#allocation2 + $0x61] sm:$0xff]
      %v6476 = vld [vmem:[#allocation2 + $0x69] sm:$0xff]
      %v6477 = vld [vmem:[#allocation2 + $0x79] sm:$0xff]
      %v6478 = vld [vmem:[#allocation2 + $0x81] sm:$0xff]
      %v6479 = vld [vmem:[#allocation2 + $0x91] sm:$0xff]
      %v6480 = vld [vmem:[#allocation2 + $0x99] sm:$0xff]
      %v6481 = vld [vmem:[#allocation2 + $0xa9] sm:$0xff]
      %v6482 = vld [vmem:[#allocation2 + $0xb1] sm:$0xff]
      %v6483 = vld [vmem:[#allocation2 + $0xc1] sm:$0xff]
      %v6484 = vld [vmem:[#allocation2 + $0xc9] sm:$0xff]
      %v6485 = vld [vmem:[#allocation2 + $0xd9] sm:$0xff]
      %v6486 = vld [vmem:[#allocation2 + $0xe1] sm:$0xff]
      %v6487 = vld [vmem:[#allocation2 + $0xf1] sm:$0xff]
      %v6488 = vld [vmem:[#allocation2 + $0xf9] sm:$0xff]
      %v6489 = vld [vmem:[#allocation2 + $0x109] sm:$0xff]
      %v6490 = vld [vmem:[#allocation2 + $0x111] sm:$0xff]
      %v6491 = vld [vmem:[#allocation2 + $0x121] sm:$0xff]
      %v6492 = vld [vmem:[#allocation2 + $0x129] sm:$0xff]
      %v6493 = vld [vmem:[#allocation2 + $0x139] sm:$0xff]
      %v6494 = vld [vmem:[#allocation2 + $0x141] sm:$0xff]
      %v6495 = vld [vmem:[#allocation2 + $0x151] sm:$0xff]
      %v6496 = vld [vmem:[#allocation2 + $0x159] sm:$0xff]
      %v6497 = vld [vmem:[#allocation2 + $0x169] sm:$0xff]
      %v6498 = vld [vmem:[#allocation2 + $0x171] sm:$0xff]
      %6531 = vrot.lane.b32.xlu0 %v6467, 124
      %v6532 = vpop.permute.xlu0 %6531
      %6533 = vrot.lane.b32.xlu0 %v6468, 124
      %v6534 = vpop.permute.xlu0 %6533
      %6535 = vrot.lane.b32.xlu0 %v6469, 124
      %v6536 = vpop.permute.xlu0 %6535
      %6537 = vrot.lane.b32.xlu0 %v6470, 124
      %v6538 = vpop.permute.xlu0 %6537
      %6539 = vrot.lane.b32.xlu0 %v6471, 124
      %v6540 = vpop.permute.xlu0 %6539
      %6541 = vrot.lane.b32.xlu0 %v6472, 124
      %v6542 = vpop.permute.xlu0 %6541
      %6543 = vrot.lane.b32.xlu0 %v6473, 124
      %v6544 = vpop.permute.xlu0 %6543
      %6545 = vrot.lane.b32.xlu0 %v6474, 124
      %v6546 = vpop.permute.xlu0 %6545
      %6547 = vrot.lane.b32.xlu0 %v6475, 124
      %v6548 = vpop.permute.xlu0 %6547
      %6549 = vrot.lane.b32.xlu0 %v6476, 124
      %v6550 = vpop.permute.xlu0 %6549
      %6551 = vrot.lane.b32.xlu0 %v6477, 124
      %v6552 = vpop.permute.xlu0 %6551
      %6553 = vrot.lane.b32.xlu0 %v6478, 124
      %v6554 = vpop.permute.xlu0 %6553
      %6555 = vrot.lane.b32.xlu0 %v6479, 124
      %v6556 = vpop.permute.xlu0 %6555
      %6557 = vrot.lane.b32.xlu0 %v6480, 124
      %v6558 = vpop.permute.xlu0 %6557
      %6559 = vrot.lane.b32.xlu0 %v6481, 124
      %v6560 = vpop.permute.xlu0 %6559
      %6561 = vrot.lane.b32.xlu0 %v6482, 124
      %v6562 = vpop.permute.xlu0 %6561
      %6563 = vrot.lane.b32.xlu0 %v6483, 124
      %v6564 = vpop.permute.xlu0 %6563
      %6565 = vrot.lane.b32.xlu0 %v6484, 124
      %v6566 = vpop.permute.xlu0 %6565
      %6567 = vrot.lane.b32.xlu0 %v6485, 124
      %v6568 = vpop.permute.xlu0 %6567
      %6569 = vrot.lane.b32.xlu0 %v6486, 124
      %v6570 = vpop.permute.xlu0 %6569
      %6571 = vrot.lane.b32.xlu0 %v6487, 124
      %v6572 = vpop.permute.xlu0 %6571
      %6573 = vrot.lane.b32.xlu0 %v6488, 124
      %v6574 = vpop.permute.xlu0 %6573
      %6575 = vrot.lane.b32.xlu0 %v6489, 124
      %v6576 = vpop.permute.xlu0 %6575
      %6577 = vrot.lane.b32.xlu0 %v6490, 124
      %v6578 = vpop.permute.xlu0 %6577
      %6579 = vrot.lane.b32.xlu0 %v6491, 124
      %v6580 = vpop.permute.xlu0 %6579
      %6581 = vrot.lane.b32.xlu0 %v6492, 124
      %v6582 = vpop.permute.xlu0 %6581
      %6583 = vrot.lane.b32.xlu0 %v6493, 124
      %v6584 = vpop.permute.xlu0 %6583
      %6585 = vrot.lane.b32.xlu0 %v6494, 124
      %v6586 = vpop.permute.xlu0 %6585
      %6587 = vrot.lane.b32.xlu0 %v6495, 124
      %v6588 = vpop.permute.xlu0 %6587
      %6589 = vrot.lane.b32.xlu0 %v6496, 124
      %v6590 = vpop.permute.xlu0 %6589
      %6591 = vrot.lane.b32.xlu0 %v6497, 124
      %v6592 = vpop.permute.xlu0 %6591
      %6593 = vrot.lane.b32.xlu0 %v6498, 124
      %v6594 = vpop.permute.xlu0 %6593
      %v6627 = vadd.f32 %v6435, %v6532
      %v6628 = vadd.f32 %v6436, %v6534
      %v6629 = vadd.f32 %v6437, %v6536
      %v6630 = vadd.f32 %v6438, %v6538
      %v6631 = vadd.f32 %v6439, %v6540
      %v6632 = vadd.f32 %v6440, %v6542
      %v6633 = vadd.f32 %v6441, %v6544
      %v6634 = vadd.f32 %v6442, %v6546
      %v6635 = vadd.f32 %v6443, %v6548
      %v6636 = vadd.f32 %v6444, %v6550
      %v6637 = vadd.f32 %v6445, %v6552
      %v6638 = vadd.f32 %v6446, %v6554
      %v6639 = vadd.f32 %v6447, %v6556
      %v6640 = vadd.f32 %v6448, %v6558
      %v6641 = vadd.f32 %v6449, %v6560
      %v6642 = vadd.f32 %v6450, %v6562
      %v6643 = vadd.f32 %v6451, %v6564
      %v6644 = vadd.f32 %v6452, %v6566
      %v6645 = vadd.f32 %v6453, %v6568
      %v6646 = vadd.f32 %v6454, %v6570
      %v6647 = vadd.f32 %v6455, %v6572
      %v6648 = vadd.f32 %v6456, %v6574
      %v6649 = vadd.f32 %v6457, %v6576
      %v6650 = vadd.f32 %v6458, %v6578
      %v6651 = vadd.f32 %v6459, %v6580
      %v6652 = vadd.f32 %v6460, %v6582
      %v6653 = vadd.f32 %v6461, %v6584
      %v6654 = vadd.f32 %v6462, %v6586
      %v6655 = vadd.f32 %v6463, %v6588
      %v6656 = vadd.f32 %v6464, %v6590
      %v6657 = vadd.f32 %v6465, %v6592
      %v6658 = vadd.f32 %v6466, %v6594
      %v6659 = vld [vmem:[#allocation2 + $0x2] sm:$0xff]
      %v6660 = vld [vmem:[#allocation2 + $0xa] sm:$0xff]
      %v6661 = vld [vmem:[#allocation2 + $0x1a] sm:$0xff]
      %v6662 = vld [vmem:[#allocation2 + $0x22] sm:$0xff]
      %v6663 = vld [vmem:[#allocation2 + $0x32] sm:$0xff]
      %v6664 = vld [vmem:[#allocation2 + $0x3a] sm:$0xff]
      %v6665 = vld [vmem:[#allocation2 + $0x4a] sm:$0xff]
      %v6666 = vld [vmem:[#allocation2 + $0x52] sm:$0xff]
      %v6667 = vld [vmem:[#allocation2 + $0x62] sm:$0xff]
      %v6668 = vld [vmem:[#allocation2 + $0x6a] sm:$0xff]
      %v6669 = vld [vmem:[#allocation2 + $0x7a] sm:$0xff]
      %v6670 = vld [vmem:[#allocation2 + $0x82] sm:$0xff]
      %v6671 = vld [vmem:[#allocation2 + $0x92] sm:$0xff]
      %v6672 = vld [vmem:[#allocation2 + $0x9a] sm:$0xff]
      %v6673 = vld [vmem:[#allocation2 + $0xaa] sm:$0xff]
      %v6674 = vld [vmem:[#allocation2 + $0xb2] sm:$0xff]
      %v6675 = vld [vmem:[#allocation2 + $0xc2] sm:$0xff]
      %v6676 = vld [vmem:[#allocation2 + $0xca] sm:$0xff]
      %v6677 = vld [vmem:[#allocation2 + $0xda] sm:$0xff]
      %v6678 = vld [vmem:[#allocation2 + $0xe2] sm:$0xff]
      %v6679 = vld [vmem:[#allocation2 + $0xf2] sm:$0xff]
      %v6680 = vld [vmem:[#allocation2 + $0xfa] sm:$0xff]
      %v6681 = vld [vmem:[#allocation2 + $0x10a] sm:$0xff]
      %v6682 = vld [vmem:[#allocation2 + $0x112] sm:$0xff]
      %v6683 = vld [vmem:[#allocation2 + $0x122] sm:$0xff]
      %v6684 = vld [vmem:[#allocation2 + $0x12a] sm:$0xff]
      %v6685 = vld [vmem:[#allocation2 + $0x13a] sm:$0xff]
      %v6686 = vld [vmem:[#allocation2 + $0x142] sm:$0xff]
      %v6687 = vld [vmem:[#allocation2 + $0x152] sm:$0xff]
      %v6688 = vld [vmem:[#allocation2 + $0x15a] sm:$0xff]
      %v6689 = vld [vmem:[#allocation2 + $0x16a] sm:$0xff]
      %v6690 = vld [vmem:[#allocation2 + $0x172] sm:$0xff]
      %6723 = vrot.lane.b32.xlu0 %v6659, 120
      %v6724 = vpop.permute.xlu0 %6723
      %6725 = vrot.lane.b32.xlu0 %v6660, 120
      %v6726 = vpop.permute.xlu0 %6725
      %6727 = vrot.lane.b32.xlu0 %v6661, 120
      %v6728 = vpop.permute.xlu0 %6727
      %6729 = vrot.lane.b32.xlu0 %v6662, 120
      %v6730 = vpop.permute.xlu0 %6729
      %6731 = vrot.lane.b32.xlu0 %v6663, 120
      %v6732 = vpop.permute.xlu0 %6731
      %6733 = vrot.lane.b32.xlu0 %v6664, 120
      %v6734 = vpop.permute.xlu0 %6733
      %6735 = vrot.lane.b32.xlu0 %v6665, 120
      %v6736 = vpop.permute.xlu0 %6735
      %6737 = vrot.lane.b32.xlu0 %v6666, 120
      %v6738 = vpop.permute.xlu0 %6737
      %6739 = vrot.lane.b32.xlu0 %v6667, 120
      %v6740 = vpop.permute.xlu0 %6739
      %6741 = vrot.lane.b32.xlu0 %v6668, 120
      %v6742 = vpop.permute.xlu0 %6741
      %6743 = vrot.lane.b32.xlu0 %v6669, 120
      %v6744 = vpop.permute.xlu0 %6743
      %6745 = vrot.lane.b32.xlu0 %v6670, 120
      %v6746 = vpop.permute.xlu0 %6745
      %6747 = vrot.lane.b32.xlu0 %v6671, 120
      %v6748 = vpop.permute.xlu0 %6747
      %6749 = vrot.lane.b32.xlu0 %v6672, 120
      %v6750 = vpop.permute.xlu0 %6749
      %6751 = vrot.lane.b32.xlu0 %v6673, 120
      %v6752 = vpop.permute.xlu0 %6751
      %6753 = vrot.lane.b32.xlu0 %v6674, 120
      %v6754 = vpop.permute.xlu0 %6753
      %6755 = vrot.lane.b32.xlu0 %v6675, 120
      %v6756 = vpop.permute.xlu0 %6755
      %6757 = vrot.lane.b32.xlu0 %v6676, 120
      %v6758 = vpop.permute.xlu0 %6757
      %6759 = vrot.lane.b32.xlu0 %v6677, 120
      %v6760 = vpop.permute.xlu0 %6759
      %6761 = vrot.lane.b32.xlu0 %v6678, 120
      %v6762 = vpop.permute.xlu0 %6761
      %6763 = vrot.lane.b32.xlu0 %v6679, 120
      %v6764 = vpop.permute.xlu0 %6763
      %6765 = vrot.lane.b32.xlu0 %v6680, 120
      %v6766 = vpop.permute.xlu0 %6765
      %6767 = vrot.lane.b32.xlu0 %v6681, 120
      %v6768 = vpop.permute.xlu0 %6767
      %6769 = vrot.lane.b32.xlu0 %v6682, 120
      %v6770 = vpop.permute.xlu0 %6769
      %6771 = vrot.lane.b32.xlu0 %v6683, 120
      %v6772 = vpop.permute.xlu0 %6771
      %6773 = vrot.lane.b32.xlu0 %v6684, 120
      %v6774 = vpop.permute.xlu0 %6773
      %6775 = vrot.lane.b32.xlu0 %v6685, 120
      %v6776 = vpop.permute.xlu0 %6775
      %6777 = vrot.lane.b32.xlu0 %v6686, 120
      %v6778 = vpop.permute.xlu0 %6777
      %6779 = vrot.lane.b32.xlu0 %v6687, 120
      %v6780 = vpop.permute.xlu0 %6779
      %6781 = vrot.lane.b32.xlu0 %v6688, 120
      %v6782 = vpop.permute.xlu0 %6781
      %6783 = vrot.lane.b32.xlu0 %v6689, 120
      %v6784 = vpop.permute.xlu0 %6783
      %6785 = vrot.lane.b32.xlu0 %v6690, 120
      %v6786 = vpop.permute.xlu0 %6785
      %v6819 = vadd.f32 %v6627, %v6724
      %v6820 = vadd.f32 %v6628, %v6726
      %v6821 = vadd.f32 %v6629, %v6728
      %v6822 = vadd.f32 %v6630, %v6730
      %v6823 = vadd.f32 %v6631, %v6732
      %v6824 = vadd.f32 %v6632, %v6734
      %v6825 = vadd.f32 %v6633, %v6736
      %v6826 = vadd.f32 %v6634, %v6738
      %v6827 = vadd.f32 %v6635, %v6740
      %v6828 = vadd.f32 %v6636, %v6742
      %v6829 = vadd.f32 %v6637, %v6744
      %v6830 = vadd.f32 %v6638, %v6746
      %v6831 = vadd.f32 %v6639, %v6748
      %v6832 = vadd.f32 %v6640, %v6750
      %v6833 = vadd.f32 %v6641, %v6752
      %v6834 = vadd.f32 %v6642, %v6754
      %v6835 = vadd.f32 %v6643, %v6756
      %v6836 = vadd.f32 %v6644, %v6758
      %v6837 = vadd.f32 %v6645, %v6760
      %v6838 = vadd.f32 %v6646, %v6762
      %v6839 = vadd.f32 %v6647, %v6764
      %v6840 = vadd.f32 %v6648, %v6766
      %v6841 = vadd.f32 %v6649, %v6768
      %v6842 = vadd.f32 %v6650, %v6770
      %v6843 = vadd.f32 %v6651, %v6772
      %v6844 = vadd.f32 %v6652, %v6774
      %v6845 = vadd.f32 %v6653, %v6776
      %v6846 = vadd.f32 %v6654, %v6778
      %v6847 = vadd.f32 %v6655, %v6780
      %v6848 = vadd.f32 %v6656, %v6782
      %v6849 = vadd.f32 %v6657, %v6784
      %v6850 = vadd.f32 %v6658, %v6786
      %v6851 = vld [vmem:[%s1441] sm:$0xff]
      %v6852 = vld [vmem:[%s1441 + $0x8] sm:$0xff]
      %v6853 = vld [vmem:[%s1441 + $0x18] sm:$0xff]
      %v6854 = vld [vmem:[%s1441 + $0x20] sm:$0xff]
      %v6855 = vld [vmem:[%s1441 + $0x30] sm:$0xff]
      %v6856 = vld [vmem:[%s1441 + $0x38] sm:$0xff]
      %v6857 = vld [vmem:[%s1441 + $0x48] sm:$0xff]
      %v6858 = vld [vmem:[%s1441 + $0x50] sm:$0xff]
      %v6859 = vld [vmem:[%s1441 + $0x60] sm:$0xff]
      %v6860 = vld [vmem:[%s1441 + $0x68] sm:$0xff]
      %v6861 = vld [vmem:[%s1441 + $0x78] sm:$0xff]
      %v6862 = vld [vmem:[%s1441 + $0x80] sm:$0xff]
      %v6863 = vld [vmem:[%s1441 + $0x90] sm:$0xff]
      %v6864 = vld [vmem:[%s1441 + $0x98] sm:$0xff]
      %v6865 = vld [vmem:[%s1441 + $0xa8] sm:$0xff]
      %v6866 = vld [vmem:[%s1441 + $0xb0] sm:$0xff]
      %v6867 = vld [vmem:[%s1441 + $0xc0] sm:$0xff]
      %v6868 = vld [vmem:[%s1441 + $0xc8] sm:$0xff]
      %v6869 = vld [vmem:[%s1441 + $0xd8] sm:$0xff]
      %v6870 = vld [vmem:[%s1441 + $0xe0] sm:$0xff]
      %v6871 = vld [vmem:[%s1441 + $0xf0] sm:$0xff]
      %v6872 = vld [vmem:[%s1441 + $0xf8] sm:$0xff]
      %v6873 = vld [vmem:[%s1441 + $0x108] sm:$0xff]
      %v6874 = vld [vmem:[%s1441 + $0x110] sm:$0xff]
      %v6875 = vld [vmem:[%s1441 + $0x120] sm:$0xff]
      %v6876 = vld [vmem:[%s1441 + $0x128] sm:$0xff]
      %v6877 = vld [vmem:[%s1441 + $0x138] sm:$0xff]
      %v6878 = vld [vmem:[%s1441 + $0x140] sm:$0xff]
      %v6879 = vld [vmem:[%s1441 + $0x150] sm:$0xff]
      %v6880 = vld [vmem:[%s1441 + $0x158] sm:$0xff]
      %v6881 = vld [vmem:[%s1441 + $0x168] sm:$0xff]
      %v6882 = vld [vmem:[%s1441 + $0x170] sm:$0xff]
      %6915 = vrot.lane.b32.xlu0 %v6851, 116
      %v6916 = vpop.permute.xlu0 %6915
      %6917 = vrot.lane.b32.xlu0 %v6852, 116
      %v6918 = vpop.permute.xlu0 %6917
      %6919 = vrot.lane.b32.xlu0 %v6853, 116
      %v6920 = vpop.permute.xlu0 %6919
      %6921 = vrot.lane.b32.xlu0 %v6854, 116
      %v6922 = vpop.permute.xlu0 %6921
      %6923 = vrot.lane.b32.xlu0 %v6855, 116
      %v6924 = vpop.permute.xlu0 %6923
      %6925 = vrot.lane.b32.xlu0 %v6856, 116
      %v6926 = vpop.permute.xlu0 %6925
      %6927 = vrot.lane.b32.xlu0 %v6857, 116
      %v6928 = vpop.permute.xlu0 %6927
      %6929 = vrot.lane.b32.xlu0 %v6858, 116
      %v6930 = vpop.permute.xlu0 %6929
      %6931 = vrot.lane.b32.xlu0 %v6859, 116
      %v6932 = vpop.permute.xlu0 %6931
      %6933 = vrot.lane.b32.xlu0 %v6860, 116
      %v6934 = vpop.permute.xlu0 %6933
      %6935 = vrot.lane.b32.xlu0 %v6861, 116
      %v6936 = vpop.permute.xlu0 %6935
      %6937 = vrot.lane.b32.xlu0 %v6862, 116
      %v6938 = vpop.permute.xlu0 %6937
      %6939 = vrot.lane.b32.xlu0 %v6863, 116
      %v6940 = vpop.permute.xlu0 %6939
      %6941 = vrot.lane.b32.xlu0 %v6864, 116
      %v6942 = vpop.permute.xlu0 %6941
      %6943 = vrot.lane.b32.xlu0 %v6865, 116
      %v6944 = vpop.permute.xlu0 %6943
      %6945 = vrot.lane.b32.xlu0 %v6866, 116
      %v6946 = vpop.permute.xlu0 %6945
      %6947 = vrot.lane.b32.xlu0 %v6867, 116
      %v6948 = vpop.permute.xlu0 %6947
      %6949 = vrot.lane.b32.xlu0 %v6868, 116
      %v6950 = vpop.permute.xlu0 %6949
      %6951 = vrot.lane.b32.xlu0 %v6869, 116
      %v6952 = vpop.permute.xlu0 %6951
      %6953 = vrot.lane.b32.xlu0 %v6870, 116
      %v6954 = vpop.permute.xlu0 %6953
      %6955 = vrot.lane.b32.xlu0 %v6871, 116
      %v6956 = vpop.permute.xlu0 %6955
      %6957 = vrot.lane.b32.xlu0 %v6872, 116
      %v6958 = vpop.permute.xlu0 %6957
      %6959 = vrot.lane.b32.xlu0 %v6873, 116
      %v6960 = vpop.permute.xlu0 %6959
      %6961 = vrot.lane.b32.xlu0 %v6874, 116
      %v6962 = vpop.permute.xlu0 %6961
      %6963 = vrot.lane.b32.xlu0 %v6875, 116
      %v6964 = vpop.permute.xlu0 %6963
      %6965 = vrot.lane.b32.xlu0 %v6876, 116
      %v6966 = vpop.permute.xlu0 %6965
      %6967 = vrot.lane.b32.xlu0 %v6877, 116
      %v6968 = vpop.permute.xlu0 %6967
      %6969 = vrot.lane.b32.xlu0 %v6878, 116
      %v6970 = vpop.permute.xlu0 %6969
      %6971 = vrot.lane.b32.xlu0 %v6879, 116
      %v6972 = vpop.permute.xlu0 %6971
      %6973 = vrot.lane.b32.xlu0 %v6880, 116
      %v6974 = vpop.permute.xlu0 %6973
      %6975 = vrot.lane.b32.xlu0 %v6881, 116
      %v6976 = vpop.permute.xlu0 %6975
      %6977 = vrot.lane.b32.xlu0 %v6882, 116
      %v6978 = vpop.permute.xlu0 %6977
      %v7011 = vadd.f32 %v6819, %v6916
      %v7012 = vadd.f32 %v6820, %v6918
      %v7013 = vadd.f32 %v6821, %v6920
      %v7014 = vadd.f32 %v6822, %v6922
      %v7015 = vadd.f32 %v6823, %v6924
      %v7016 = vadd.f32 %v6824, %v6926
      %v7017 = vadd.f32 %v6825, %v6928
      %v7018 = vadd.f32 %v6826, %v6930
      %v7019 = vadd.f32 %v6827, %v6932
      %v7020 = vadd.f32 %v6828, %v6934
      %v7021 = vadd.f32 %v6829, %v6936
      %v7022 = vadd.f32 %v6830, %v6938
      %v7023 = vadd.f32 %v6831, %v6940
      %v7024 = vadd.f32 %v6832, %v6942
      %v7025 = vadd.f32 %v6833, %v6944
      %v7026 = vadd.f32 %v6834, %v6946
      %v7027 = vadd.f32 %v6835, %v6948
      %v7028 = vadd.f32 %v6836, %v6950
      %v7029 = vadd.f32 %v6837, %v6952
      %v7030 = vadd.f32 %v6838, %v6954
      %v7031 = vadd.f32 %v6839, %v6956
      %v7032 = vadd.f32 %v6840, %v6958
      %v7033 = vadd.f32 %v6841, %v6960
      %v7034 = vadd.f32 %v6842, %v6962
      %v7035 = vadd.f32 %v6843, %v6964
      %v7036 = vadd.f32 %v6844, %v6966
      %v7037 = vadd.f32 %v6845, %v6968
      %v7038 = vadd.f32 %v6846, %v6970
      %v7039 = vadd.f32 %v6847, %v6972
      %v7040 = vadd.f32 %v6848, %v6974
      %v7041 = vadd.f32 %v6849, %v6976
      %v7042 = vadd.f32 %v6850, %v6978
      %v7043 = vld [vmem:[%s1441 + $0x1] sm:$0xff]
      %v7044 = vld [vmem:[%s1441 + $0x9] sm:$0xff]
      %v7045 = vld [vmem:[%s1441 + $0x19] sm:$0xff]
      %v7046 = vld [vmem:[%s1441 + $0x21] sm:$0xff]
      %v7047 = vld [vmem:[%s1441 + $0x31] sm:$0xff]
      %v7048 = vld [vmem:[%s1441 + $0x39] sm:$0xff]
      %v7049 = vld [vmem:[%s1441 + $0x49] sm:$0xff]
      %v7050 = vld [vmem:[%s1441 + $0x51] sm:$0xff]
      %v7051 = vld [vmem:[%s1441 + $0x61] sm:$0xff]
      %v7052 = vld [vmem:[%s1441 + $0x69] sm:$0xff]
      %v7053 = vld [vmem:[%s1441 + $0x79] sm:$0xff]
      %v7054 = vld [vmem:[%s1441 + $0x81] sm:$0xff]
      %v7055 = vld [vmem:[%s1441 + $0x91] sm:$0xff]
      %v7056 = vld [vmem:[%s1441 + $0x99] sm:$0xff]
      %v7057 = vld [vmem:[%s1441 + $0xa9] sm:$0xff]
      %v7058 = vld [vmem:[%s1441 + $0xb1] sm:$0xff]
      %v7059 = vld [vmem:[%s1441 + $0xc1] sm:$0xff]
      %v7060 = vld [vmem:[%s1441 + $0xc9] sm:$0xff]
      %v7061 = vld [vmem:[%s1441 + $0xd9] sm:$0xff]
      %v7062 = vld [vmem:[%s1441 + $0xe1] sm:$0xff]
      %v7063 = vld [vmem:[%s1441 + $0xf1] sm:$0xff]
      %v7064 = vld [vmem:[%s1441 + $0xf9] sm:$0xff]
      %v7065 = vld [vmem:[%s1441 + $0x109] sm:$0xff]
      %v7066 = vld [vmem:[%s1441 + $0x111] sm:$0xff]
      %v7067 = vld [vmem:[%s1441 + $0x121] sm:$0xff]
      %v7068 = vld [vmem:[%s1441 + $0x129] sm:$0xff]
      %v7069 = vld [vmem:[%s1441 + $0x139] sm:$0xff]
      %v7070 = vld [vmem:[%s1441 + $0x141] sm:$0xff]
      %v7071 = vld [vmem:[%s1441 + $0x151] sm:$0xff]
      %v7072 = vld [vmem:[%s1441 + $0x159] sm:$0xff]
      %v7073 = vld [vmem:[%s1441 + $0x169] sm:$0xff]
      %v7074 = vld [vmem:[%s1441 + $0x171] sm:$0xff]
      %7107 = vrot.lane.b32.xlu0 %v7043, 112
      %v7108 = vpop.permute.xlu0 %7107
      %7109 = vrot.lane.b32.xlu0 %v7044, 112
      %v7110 = vpop.permute.xlu0 %7109
      %7111 = vrot.lane.b32.xlu0 %v7045, 112
      %v7112 = vpop.permute.xlu0 %7111
      %7113 = vrot.lane.b32.xlu0 %v7046, 112
      %v7114 = vpop.permute.xlu0 %7113
      %7115 = vrot.lane.b32.xlu0 %v7047, 112
      %v7116 = vpop.permute.xlu0 %7115
      %7117 = vrot.lane.b32.xlu0 %v7048, 112
      %v7118 = vpop.permute.xlu0 %7117
      %7119 = vrot.lane.b32.xlu0 %v7049, 112
      %v7120 = vpop.permute.xlu0 %7119
      %7121 = vrot.lane.b32.xlu0 %v7050, 112
      %v7122 = vpop.permute.xlu0 %7121
      %7123 = vrot.lane.b32.xlu0 %v7051, 112
      %v7124 = vpop.permute.xlu0 %7123
      %7125 = vrot.lane.b32.xlu0 %v7052, 112
      %v7126 = vpop.permute.xlu0 %7125
      %7127 = vrot.lane.b32.xlu0 %v7053, 112
      %v7128 = vpop.permute.xlu0 %7127
      %7129 = vrot.lane.b32.xlu0 %v7054, 112
      %v7130 = vpop.permute.xlu0 %7129
      %7131 = vrot.lane.b32.xlu0 %v7055, 112
      %v7132 = vpop.permute.xlu0 %7131
      %7133 = vrot.lane.b32.xlu0 %v7056, 112
      %v7134 = vpop.permute.xlu0 %7133
      %7135 = vrot.lane.b32.xlu0 %v7057, 112
      %v7136 = vpop.permute.xlu0 %7135
      %7137 = vrot.lane.b32.xlu0 %v7058, 112
      %v7138 = vpop.permute.xlu0 %7137
      %7139 = vrot.lane.b32.xlu0 %v7059, 112
      %v7140 = vpop.permute.xlu0 %7139
      %7141 = vrot.lane.b32.xlu0 %v7060, 112
      %v7142 = vpop.permute.xlu0 %7141
      %7143 = vrot.lane.b32.xlu0 %v7061, 112
      %v7144 = vpop.permute.xlu0 %7143
      %7145 = vrot.lane.b32.xlu0 %v7062, 112
      %v7146 = vpop.permute.xlu0 %7145
      %7147 = vrot.lane.b32.xlu0 %v7063, 112
      %v7148 = vpop.permute.xlu0 %7147
      %7149 = vrot.lane.b32.xlu0 %v7064, 112
      %v7150 = vpop.permute.xlu0 %7149
      %7151 = vrot.lane.b32.xlu0 %v7065, 112
      %v7152 = vpop.permute.xlu0 %7151
      %7153 = vrot.lane.b32.xlu0 %v7066, 112
      %v7154 = vpop.permute.xlu0 %7153
      %7155 = vrot.lane.b32.xlu0 %v7067, 112
      %v7156 = vpop.permute.xlu0 %7155
      %7157 = vrot.lane.b32.xlu0 %v7068, 112
      %v7158 = vpop.permute.xlu0 %7157
      %7159 = vrot.lane.b32.xlu0 %v7069, 112
      %v7160 = vpop.permute.xlu0 %7159
      %7161 = vrot.lane.b32.xlu0 %v7070, 112
      %v7162 = vpop.permute.xlu0 %7161
      %7163 = vrot.lane.b32.xlu0 %v7071, 112
      %v7164 = vpop.permute.xlu0 %7163
      %7165 = vrot.lane.b32.xlu0 %v7072, 112
      %v7166 = vpop.permute.xlu0 %7165
      %7167 = vrot.lane.b32.xlu0 %v7073, 112
      %v7168 = vpop.permute.xlu0 %7167
      %7169 = vrot.lane.b32.xlu0 %v7074, 112
      %v7170 = vpop.permute.xlu0 %7169
      %v7203 = vadd.f32 %v7011, %v7108
      %v7204 = vadd.f32 %v7012, %v7110
      %v7205 = vadd.f32 %v7013, %v7112
      %v7206 = vadd.f32 %v7014, %v7114
      %v7207 = vadd.f32 %v7015, %v7116
      %v7208 = vadd.f32 %v7016, %v7118
      %v7209 = vadd.f32 %v7017, %v7120
      %v7210 = vadd.f32 %v7018, %v7122
      %v7211 = vadd.f32 %v7019, %v7124
      %v7212 = vadd.f32 %v7020, %v7126
      %v7213 = vadd.f32 %v7021, %v7128
      %v7214 = vadd.f32 %v7022, %v7130
      %v7215 = vadd.f32 %v7023, %v7132
      %v7216 = vadd.f32 %v7024, %v7134
      %v7217 = vadd.f32 %v7025, %v7136
      %v7218 = vadd.f32 %v7026, %v7138
      %v7219 = vadd.f32 %v7027, %v7140
      %v7220 = vadd.f32 %v7028, %v7142
      %v7221 = vadd.f32 %v7029, %v7144
      %v7222 = vadd.f32 %v7030, %v7146
      %v7223 = vadd.f32 %v7031, %v7148
      %v7224 = vadd.f32 %v7032, %v7150
      %v7225 = vadd.f32 %v7033, %v7152
      %v7226 = vadd.f32 %v7034, %v7154
      %v7227 = vadd.f32 %v7035, %v7156
      %v7228 = vadd.f32 %v7036, %v7158
      %v7229 = vadd.f32 %v7037, %v7160
      %v7230 = vadd.f32 %v7038, %v7162
      %v7231 = vadd.f32 %v7039, %v7164
      %v7232 = vadd.f32 %v7040, %v7166
      %v7233 = vadd.f32 %v7041, %v7168
      %v7234 = vadd.f32 %v7042, %v7170
      %v7235 = vld [vmem:[%s1441 + $0x2] sm:$0xff]
      %v7236 = vld [vmem:[%s1441 + $0xa] sm:$0xff]
      %v7237 = vld [vmem:[%s1441 + $0x1a] sm:$0xff]
      %v7238 = vld [vmem:[%s1441 + $0x22] sm:$0xff]
      %v7239 = vld [vmem:[%s1441 + $0x32] sm:$0xff]
      %v7240 = vld [vmem:[%s1441 + $0x3a] sm:$0xff]
      %v7241 = vld [vmem:[%s1441 + $0x4a] sm:$0xff]
      %v7242 = vld [vmem:[%s1441 + $0x52] sm:$0xff]
      %v7243 = vld [vmem:[%s1441 + $0x62] sm:$0xff]
      %v7244 = vld [vmem:[%s1441 + $0x6a] sm:$0xff]
      %v7245 = vld [vmem:[%s1441 + $0x7a] sm:$0xff]
      %v7246 = vld [vmem:[%s1441 + $0x82] sm:$0xff]
      %v7247 = vld [vmem:[%s1441 + $0x92] sm:$0xff]
      %v7248 = vld [vmem:[%s1441 + $0x9a] sm:$0xff]
      %v7249 = vld [vmem:[%s1441 + $0xaa] sm:$0xff]
      %v7250 = vld [vmem:[%s1441 + $0xb2] sm:$0xff]
      %v7251 = vld [vmem:[%s1441 + $0xc2] sm:$0xff]
      %v7252 = vld [vmem:[%s1441 + $0xca] sm:$0xff]
      %v7253 = vld [vmem:[%s1441 + $0xda] sm:$0xff]
      %v7254 = vld [vmem:[%s1441 + $0xe2] sm:$0xff]
      %v7255 = vld [vmem:[%s1441 + $0xf2] sm:$0xff]
      %v7256 = vld [vmem:[%s1441 + $0xfa] sm:$0xff]
      %v7257 = vld [vmem:[%s1441 + $0x10a] sm:$0xff]
      %v7258 = vld [vmem:[%s1441 + $0x112] sm:$0xff]
      %v7259 = vld [vmem:[%s1441 + $0x122] sm:$0xff]
      %v7260 = vld [vmem:[%s1441 + $0x12a] sm:$0xff]
      %v7261 = vld [vmem:[%s1441 + $0x13a] sm:$0xff]
      %v7262 = vld [vmem:[%s1441 + $0x142] sm:$0xff]
      %v7263 = vld [vmem:[%s1441 + $0x152] sm:$0xff]
      %v7264 = vld [vmem:[%s1441 + $0x15a] sm:$0xff]
      %v7265 = vld [vmem:[%s1441 + $0x16a] sm:$0xff]
      %v7266 = vld [vmem:[%s1441 + $0x172] sm:$0xff]
      %7299 = vrot.lane.b32.xlu0 %v7235, 108
      %v7300 = vpop.permute.xlu0 %7299
      %7301 = vrot.lane.b32.xlu0 %v7236, 108
      %v7302 = vpop.permute.xlu0 %7301
      %7303 = vrot.lane.b32.xlu0 %v7237, 108
      %v7304 = vpop.permute.xlu0 %7303
      %7305 = vrot.lane.b32.xlu0 %v7238, 108
      %v7306 = vpop.permute.xlu0 %7305
      %7307 = vrot.lane.b32.xlu0 %v7239, 108
      %v7308 = vpop.permute.xlu0 %7307
      %7309 = vrot.lane.b32.xlu0 %v7240, 108
      %v7310 = vpop.permute.xlu0 %7309
      %7311 = vrot.lane.b32.xlu0 %v7241, 108
      %v7312 = vpop.permute.xlu0 %7311
      %7313 = vrot.lane.b32.xlu0 %v7242, 108
      %v7314 = vpop.permute.xlu0 %7313
      %7315 = vrot.lane.b32.xlu0 %v7243, 108
      %v7316 = vpop.permute.xlu0 %7315
      %7317 = vrot.lane.b32.xlu0 %v7244, 108
      %v7318 = vpop.permute.xlu0 %7317
      %7319 = vrot.lane.b32.xlu0 %v7245, 108
      %v7320 = vpop.permute.xlu0 %7319
      %7321 = vrot.lane.b32.xlu0 %v7246, 108
      %v7322 = vpop.permute.xlu0 %7321
      %7323 = vrot.lane.b32.xlu0 %v7247, 108
      %v7324 = vpop.permute.xlu0 %7323
      %7325 = vrot.lane.b32.xlu0 %v7248, 108
      %v7326 = vpop.permute.xlu0 %7325
      %7327 = vrot.lane.b32.xlu0 %v7249, 108
      %v7328 = vpop.permute.xlu0 %7327
      %7329 = vrot.lane.b32.xlu0 %v7250, 108
      %v7330 = vpop.permute.xlu0 %7329
      %7331 = vrot.lane.b32.xlu0 %v7251, 108
      %v7332 = vpop.permute.xlu0 %7331
      %7333 = vrot.lane.b32.xlu0 %v7252, 108
      %v7334 = vpop.permute.xlu0 %7333
      %7335 = vrot.lane.b32.xlu0 %v7253, 108
      %v7336 = vpop.permute.xlu0 %7335
      %7337 = vrot.lane.b32.xlu0 %v7254, 108
      %v7338 = vpop.permute.xlu0 %7337
      %7339 = vrot.lane.b32.xlu0 %v7255, 108
      %v7340 = vpop.permute.xlu0 %7339
      %7341 = vrot.lane.b32.xlu0 %v7256, 108
      %v7342 = vpop.permute.xlu0 %7341
      %7343 = vrot.lane.b32.xlu0 %v7257, 108
      %v7344 = vpop.permute.xlu0 %7343
      %7345 = vrot.lane.b32.xlu0 %v7258, 108
      %v7346 = vpop.permute.xlu0 %7345
      %7347 = vrot.lane.b32.xlu0 %v7259, 108
      %v7348 = vpop.permute.xlu0 %7347
      %7349 = vrot.lane.b32.xlu0 %v7260, 108
      %v7350 = vpop.permute.xlu0 %7349
      %7351 = vrot.lane.b32.xlu0 %v7261, 108
      %v7352 = vpop.permute.xlu0 %7351
      %7353 = vrot.lane.b32.xlu0 %v7262, 108
      %v7354 = vpop.permute.xlu0 %7353
      %7355 = vrot.lane.b32.xlu0 %v7263, 108
      %v7356 = vpop.permute.xlu0 %7355
      %7357 = vrot.lane.b32.xlu0 %v7264, 108
      %v7358 = vpop.permute.xlu0 %7357
      %7359 = vrot.lane.b32.xlu0 %v7265, 108
      %v7360 = vpop.permute.xlu0 %7359
      %7361 = vrot.lane.b32.xlu0 %v7266, 108
      %v7362 = vpop.permute.xlu0 %7361
      %v7395 = vadd.f32 %v7203, %v7300
      %v7396 = vadd.f32 %v7204, %v7302
      %v7397 = vadd.f32 %v7205, %v7304
      %v7398 = vadd.f32 %v7206, %v7306
      %v7399 = vadd.f32 %v7207, %v7308
      %v7400 = vadd.f32 %v7208, %v7310
      %v7401 = vadd.f32 %v7209, %v7312
      %v7402 = vadd.f32 %v7210, %v7314
      %v7403 = vadd.f32 %v7211, %v7316
      %v7404 = vadd.f32 %v7212, %v7318
      %v7405 = vadd.f32 %v7213, %v7320
      %v7406 = vadd.f32 %v7214, %v7322
      %v7407 = vadd.f32 %v7215, %v7324
      %v7408 = vadd.f32 %v7216, %v7326
      %v7409 = vadd.f32 %v7217, %v7328
      %v7410 = vadd.f32 %v7218, %v7330
      %v7411 = vadd.f32 %v7219, %v7332
      %v7412 = vadd.f32 %v7220, %v7334
      %v7413 = vadd.f32 %v7221, %v7336
      %v7414 = vadd.f32 %v7222, %v7338
      %v7415 = vadd.f32 %v7223, %v7340
      %v7416 = vadd.f32 %v7224, %v7342
      %v7417 = vadd.f32 %v7225, %v7344
      %v7418 = vadd.f32 %v7226, %v7346
      %v7419 = vadd.f32 %v7227, %v7348
      %v7420 = vadd.f32 %v7228, %v7350
      %v7421 = vadd.f32 %v7229, %v7352
      %v7422 = vadd.f32 %v7230, %v7354
      %v7423 = vadd.f32 %v7231, %v7356
      %v7424 = vadd.f32 %v7232, %v7358
      %v7425 = vadd.f32 %v7233, %v7360
      %v7426 = vadd.f32 %v7234, %v7362
      %v7427 = vld [vmem:[%s2466] sm:$0xff]
      %v7428 = vld [vmem:[%s2466 + $0x8] sm:$0xff]
      %v7429 = vld [vmem:[%s2466 + $0x18] sm:$0xff]
      %v7430 = vld [vmem:[%s2466 + $0x20] sm:$0xff]
      %v7431 = vld [vmem:[%s2466 + $0x30] sm:$0xff]
      %v7432 = vld [vmem:[%s2466 + $0x38] sm:$0xff]
      %v7433 = vld [vmem:[%s2466 + $0x48] sm:$0xff]
      %v7434 = vld [vmem:[%s2466 + $0x50] sm:$0xff]
      %v7435 = vld [vmem:[%s2466 + $0x60] sm:$0xff]
      %v7436 = vld [vmem:[%s2466 + $0x68] sm:$0xff]
      %v7437 = vld [vmem:[%s2466 + $0x78] sm:$0xff]
      %v7438 = vld [vmem:[%s2466 + $0x80] sm:$0xff]
      %v7439 = vld [vmem:[%s2466 + $0x90] sm:$0xff]
      %v7440 = vld [vmem:[%s2466 + $0x98] sm:$0xff]
      %v7441 = vld [vmem:[%s2466 + $0xa8] sm:$0xff]
      %v7442 = vld [vmem:[%s2466 + $0xb0] sm:$0xff]
      %v7443 = vld [vmem:[%s2466 + $0xc0] sm:$0xff]
      %v7444 = vld [vmem:[%s2466 + $0xc8] sm:$0xff]
      %v7445 = vld [vmem:[%s2466 + $0xd8] sm:$0xff]
      %v7446 = vld [vmem:[%s2466 + $0xe0] sm:$0xff]
      %v7447 = vld [vmem:[%s2466 + $0xf0] sm:$0xff]
      %v7448 = vld [vmem:[%s2466 + $0xf8] sm:$0xff]
      %v7449 = vld [vmem:[%s2466 + $0x108] sm:$0xff]
      %v7450 = vld [vmem:[%s2466 + $0x110] sm:$0xff]
      %v7451 = vld [vmem:[%s2466 + $0x120] sm:$0xff]
      %v7452 = vld [vmem:[%s2466 + $0x128] sm:$0xff]
      %v7453 = vld [vmem:[%s2466 + $0x138] sm:$0xff]
      %v7454 = vld [vmem:[%s2466 + $0x140] sm:$0xff]
      %v7455 = vld [vmem:[%s2466 + $0x150] sm:$0xff]
      %v7456 = vld [vmem:[%s2466 + $0x158] sm:$0xff]
      %v7457 = vld [vmem:[%s2466 + $0x168] sm:$0xff]
      %v7458 = vld [vmem:[%s2466 + $0x170] sm:$0xff]
      %7491 = vrot.lane.b32.xlu0 %v7427, 104
      %v7492 = vpop.permute.xlu0 %7491
      %7493 = vrot.lane.b32.xlu0 %v7428, 104
      %v7494 = vpop.permute.xlu0 %7493
      %7495 = vrot.lane.b32.xlu0 %v7429, 104
      %v7496 = vpop.permute.xlu0 %7495
      %7497 = vrot.lane.b32.xlu0 %v7430, 104
      %v7498 = vpop.permute.xlu0 %7497
      %7499 = vrot.lane.b32.xlu0 %v7431, 104
      %v7500 = vpop.permute.xlu0 %7499
      %7501 = vrot.lane.b32.xlu0 %v7432, 104
      %v7502 = vpop.permute.xlu0 %7501
      %7503 = vrot.lane.b32.xlu0 %v7433, 104
      %v7504 = vpop.permute.xlu0 %7503
      %7505 = vrot.lane.b32.xlu0 %v7434, 104
      %v7506 = vpop.permute.xlu0 %7505
      %7507 = vrot.lane.b32.xlu0 %v7435, 104
      %v7508 = vpop.permute.xlu0 %7507
      %7509 = vrot.lane.b32.xlu0 %v7436, 104
      %v7510 = vpop.permute.xlu0 %7509
      %7511 = vrot.lane.b32.xlu0 %v7437, 104
      %v7512 = vpop.permute.xlu0 %7511
      %7513 = vrot.lane.b32.xlu0 %v7438, 104
      %v7514 = vpop.permute.xlu0 %7513
      %7515 = vrot.lane.b32.xlu0 %v7439, 104
      %v7516 = vpop.permute.xlu0 %7515
      %7517 = vrot.lane.b32.xlu0 %v7440, 104
      %v7518 = vpop.permute.xlu0 %7517
      %7519 = vrot.lane.b32.xlu0 %v7441, 104
      %v7520 = vpop.permute.xlu0 %7519
      %7521 = vrot.lane.b32.xlu0 %v7442, 104
      %v7522 = vpop.permute.xlu0 %7521
      %7523 = vrot.lane.b32.xlu0 %v7443, 104
      %v7524 = vpop.permute.xlu0 %7523
      %7525 = vrot.lane.b32.xlu0 %v7444, 104
      %v7526 = vpop.permute.xlu0 %7525
      %7527 = vrot.lane.b32.xlu0 %v7445, 104
      %v7528 = vpop.permute.xlu0 %7527
      %7529 = vrot.lane.b32.xlu0 %v7446, 104
      %v7530 = vpop.permute.xlu0 %7529
      %7531 = vrot.lane.b32.xlu0 %v7447, 104
      %v7532 = vpop.permute.xlu0 %7531
      %7533 = vrot.lane.b32.xlu0 %v7448, 104
      %v7534 = vpop.permute.xlu0 %7533
      %7535 = vrot.lane.b32.xlu0 %v7449, 104
      %v7536 = vpop.permute.xlu0 %7535
      %7537 = vrot.lane.b32.xlu0 %v7450, 104
      %v7538 = vpop.permute.xlu0 %7537
      %7539 = vrot.lane.b32.xlu0 %v7451, 104
      %v7540 = vpop.permute.xlu0 %7539
      %7541 = vrot.lane.b32.xlu0 %v7452, 104
      %v7542 = vpop.permute.xlu0 %7541
      %7543 = vrot.lane.b32.xlu0 %v7453, 104
      %v7544 = vpop.permute.xlu0 %7543
      %7545 = vrot.lane.b32.xlu0 %v7454, 104
      %v7546 = vpop.permute.xlu0 %7545
      %7547 = vrot.lane.b32.xlu0 %v7455, 104
      %v7548 = vpop.permute.xlu0 %7547
      %7549 = vrot.lane.b32.xlu0 %v7456, 104
      %v7550 = vpop.permute.xlu0 %7549
      %7551 = vrot.lane.b32.xlu0 %v7457, 104
      %v7552 = vpop.permute.xlu0 %7551
      %7553 = vrot.lane.b32.xlu0 %v7458, 104
      %v7554 = vpop.permute.xlu0 %7553
      %v7587 = vadd.f32 %v7395, %v7492
      %v7588 = vadd.f32 %v7396, %v7494
      %v7589 = vadd.f32 %v7397, %v7496
      %v7590 = vadd.f32 %v7398, %v7498
      %v7591 = vadd.f32 %v7399, %v7500
      %v7592 = vadd.f32 %v7400, %v7502
      %v7593 = vadd.f32 %v7401, %v7504
      %v7594 = vadd.f32 %v7402, %v7506
      %v7595 = vadd.f32 %v7403, %v7508
      %v7596 = vadd.f32 %v7404, %v7510
      %v7597 = vadd.f32 %v7405, %v7512
      %v7598 = vadd.f32 %v7406, %v7514
      %v7599 = vadd.f32 %v7407, %v7516
      %v7600 = vadd.f32 %v7408, %v7518
      %v7601 = vadd.f32 %v7409, %v7520
      %v7602 = vadd.f32 %v7410, %v7522
      %v7603 = vadd.f32 %v7411, %v7524
      %v7604 = vadd.f32 %v7412, %v7526
      %v7605 = vadd.f32 %v7413, %v7528
      %v7606 = vadd.f32 %v7414, %v7530
      %v7607 = vadd.f32 %v7415, %v7532
      %v7608 = vadd.f32 %v7416, %v7534
      %v7609 = vadd.f32 %v7417, %v7536
      %v7610 = vadd.f32 %v7418, %v7538
      %v7611 = vadd.f32 %v7419, %v7540
      %v7612 = vadd.f32 %v7420, %v7542
      %v7613 = vadd.f32 %v7421, %v7544
      %v7614 = vadd.f32 %v7422, %v7546
      %v7615 = vadd.f32 %v7423, %v7548
      %v7616 = vadd.f32 %v7424, %v7550
      %v7617 = vadd.f32 %v7425, %v7552
      %v7618 = vadd.f32 %v7426, %v7554
      %v7619 = vld [vmem:[%s2466 + $0x1] sm:$0xff]
      %v7620 = vld [vmem:[%s2466 + $0x9] sm:$0xff]
      %v7621 = vld [vmem:[%s2466 + $0x19] sm:$0xff]
      %v7622 = vld [vmem:[%s2466 + $0x21] sm:$0xff]
      %v7623 = vld [vmem:[%s2466 + $0x31] sm:$0xff]
      %v7624 = vld [vmem:[%s2466 + $0x39] sm:$0xff]
      %v7625 = vld [vmem:[%s2466 + $0x49] sm:$0xff]
      %v7626 = vld [vmem:[%s2466 + $0x51] sm:$0xff]
      %v7627 = vld [vmem:[%s2466 + $0x61] sm:$0xff]
      %v7628 = vld [vmem:[%s2466 + $0x69] sm:$0xff]
      %v7629 = vld [vmem:[%s2466 + $0x79] sm:$0xff]
      %v7630 = vld [vmem:[%s2466 + $0x81] sm:$0xff]
      %v7631 = vld [vmem:[%s2466 + $0x91] sm:$0xff]
      %v7632 = vld [vmem:[%s2466 + $0x99] sm:$0xff]
      %v7633 = vld [vmem:[%s2466 + $0xa9] sm:$0xff]
      %v7634 = vld [vmem:[%s2466 + $0xb1] sm:$0xff]
      %v7635 = vld [vmem:[%s2466 + $0xc1] sm:$0xff]
      %v7636 = vld [vmem:[%s2466 + $0xc9] sm:$0xff]
      %v7637 = vld [vmem:[%s2466 + $0xd9] sm:$0xff]
      %v7638 = vld [vmem:[%s2466 + $0xe1] sm:$0xff]
      %v7639 = vld [vmem:[%s2466 + $0xf1] sm:$0xff]
      %v7640 = vld [vmem:[%s2466 + $0xf9] sm:$0xff]
      %v7641 = vld [vmem:[%s2466 + $0x109] sm:$0xff]
      %v7642 = vld [vmem:[%s2466 + $0x111] sm:$0xff]
      %v7643 = vld [vmem:[%s2466 + $0x121] sm:$0xff]
      %v7644 = vld [vmem:[%s2466 + $0x129] sm:$0xff]
      %v7645 = vld [vmem:[%s2466 + $0x139] sm:$0xff]
      %v7646 = vld [vmem:[%s2466 + $0x141] sm:$0xff]
      %v7647 = vld [vmem:[%s2466 + $0x151] sm:$0xff]
      %v7648 = vld [vmem:[%s2466 + $0x159] sm:$0xff]
      %v7649 = vld [vmem:[%s2466 + $0x169] sm:$0xff]
      %v7650 = vld [vmem:[%s2466 + $0x171] sm:$0xff]
      %7683 = vrot.lane.b32.xlu0 %v7619, 100
      %v7684 = vpop.permute.xlu0 %7683
      %7685 = vrot.lane.b32.xlu0 %v7620, 100
      %v7686 = vpop.permute.xlu0 %7685
      %7687 = vrot.lane.b32.xlu0 %v7621, 100
      %v7688 = vpop.permute.xlu0 %7687
      %7689 = vrot.lane.b32.xlu0 %v7622, 100
      %v7690 = vpop.permute.xlu0 %7689
      %7691 = vrot.lane.b32.xlu0 %v7623, 100
      %v7692 = vpop.permute.xlu0 %7691
      %7693 = vrot.lane.b32.xlu0 %v7624, 100
      %v7694 = vpop.permute.xlu0 %7693
      %7695 = vrot.lane.b32.xlu0 %v7625, 100
      %v7696 = vpop.permute.xlu0 %7695
      %7697 = vrot.lane.b32.xlu0 %v7626, 100
      %v7698 = vpop.permute.xlu0 %7697
      %7699 = vrot.lane.b32.xlu0 %v7627, 100
      %v7700 = vpop.permute.xlu0 %7699
      %7701 = vrot.lane.b32.xlu0 %v7628, 100
      %v7702 = vpop.permute.xlu0 %7701
      %7703 = vrot.lane.b32.xlu0 %v7629, 100
      %v7704 = vpop.permute.xlu0 %7703
      %7705 = vrot.lane.b32.xlu0 %v7630, 100
      %v7706 = vpop.permute.xlu0 %7705
      %7707 = vrot.lane.b32.xlu0 %v7631, 100
      %v7708 = vpop.permute.xlu0 %7707
      %7709 = vrot.lane.b32.xlu0 %v7632, 100
      %v7710 = vpop.permute.xlu0 %7709
      %7711 = vrot.lane.b32.xlu0 %v7633, 100
      %v7712 = vpop.permute.xlu0 %7711
      %7713 = vrot.lane.b32.xlu0 %v7634, 100
      %v7714 = vpop.permute.xlu0 %7713
      %7715 = vrot.lane.b32.xlu0 %v7635, 100
      %v7716 = vpop.permute.xlu0 %7715
      %7717 = vrot.lane.b32.xlu0 %v7636, 100
      %v7718 = vpop.permute.xlu0 %7717
      %7719 = vrot.lane.b32.xlu0 %v7637, 100
      %v7720 = vpop.permute.xlu0 %7719
      %7721 = vrot.lane.b32.xlu0 %v7638, 100
      %v7722 = vpop.permute.xlu0 %7721
      %7723 = vrot.lane.b32.xlu0 %v7639, 100
      %v7724 = vpop.permute.xlu0 %7723
      %7725 = vrot.lane.b32.xlu0 %v7640, 100
      %v7726 = vpop.permute.xlu0 %7725
      %7727 = vrot.lane.b32.xlu0 %v7641, 100
      %v7728 = vpop.permute.xlu0 %7727
      %7729 = vrot.lane.b32.xlu0 %v7642, 100
      %v7730 = vpop.permute.xlu0 %7729
      %7731 = vrot.lane.b32.xlu0 %v7643, 100
      %v7732 = vpop.permute.xlu0 %7731
      %7733 = vrot.lane.b32.xlu0 %v7644, 100
      %v7734 = vpop.permute.xlu0 %7733
      %7735 = vrot.lane.b32.xlu0 %v7645, 100
      %v7736 = vpop.permute.xlu0 %7735
      %7737 = vrot.lane.b32.xlu0 %v7646, 100
      %v7738 = vpop.permute.xlu0 %7737
      %7739 = vrot.lane.b32.xlu0 %v7647, 100
      %v7740 = vpop.permute.xlu0 %7739
      %7741 = vrot.lane.b32.xlu0 %v7648, 100
      %v7742 = vpop.permute.xlu0 %7741
      %7743 = vrot.lane.b32.xlu0 %v7649, 100
      %v7744 = vpop.permute.xlu0 %7743
      %7745 = vrot.lane.b32.xlu0 %v7650, 100
      %v7746 = vpop.permute.xlu0 %7745
      %v7779 = vadd.f32 %v7587, %v7684
      %v7780 = vadd.f32 %v7588, %v7686
      %v7781 = vadd.f32 %v7589, %v7688
      %v7782 = vadd.f32 %v7590, %v7690
      %v7783 = vadd.f32 %v7591, %v7692
      %v7784 = vadd.f32 %v7592, %v7694
      %v7785 = vadd.f32 %v7593, %v7696
      %v7786 = vadd.f32 %v7594, %v7698
      %v7787 = vadd.f32 %v7595, %v7700
      %v7788 = vadd.f32 %v7596, %v7702
      %v7789 = vadd.f32 %v7597, %v7704
      %v7790 = vadd.f32 %v7598, %v7706
      %v7791 = vadd.f32 %v7599, %v7708
      %v7792 = vadd.f32 %v7600, %v7710
      %v7793 = vadd.f32 %v7601, %v7712
      %v7794 = vadd.f32 %v7602, %v7714
      %v7795 = vadd.f32 %v7603, %v7716
      %v7796 = vadd.f32 %v7604, %v7718
      %v7797 = vadd.f32 %v7605, %v7720
      %v7798 = vadd.f32 %v7606, %v7722
      %v7799 = vadd.f32 %v7607, %v7724
      %v7800 = vadd.f32 %v7608, %v7726
      %v7801 = vadd.f32 %v7609, %v7728
      %v7802 = vadd.f32 %v7610, %v7730
      %v7803 = vadd.f32 %v7611, %v7732
      %v7804 = vadd.f32 %v7612, %v7734
      %v7805 = vadd.f32 %v7613, %v7736
      %v7806 = vadd.f32 %v7614, %v7738
      %v7807 = vadd.f32 %v7615, %v7740
      %v7808 = vadd.f32 %v7616, %v7742
      %v7809 = vadd.f32 %v7617, %v7744
      %v7810 = vadd.f32 %v7618, %v7746
      %v7811 = vld [vmem:[%s2466 + $0x2] sm:$0xff]
      %v7812 = vld [vmem:[%s2466 + $0xa] sm:$0xff]
      %v7813 = vld [vmem:[%s2466 + $0x1a] sm:$0xff]
      %v7814 = vld [vmem:[%s2466 + $0x22] sm:$0xff]
      %v7815 = vld [vmem:[%s2466 + $0x32] sm:$0xff]
      %v7816 = vld [vmem:[%s2466 + $0x3a] sm:$0xff]
      %v7817 = vld [vmem:[%s2466 + $0x4a] sm:$0xff]
      %v7818 = vld [vmem:[%s2466 + $0x52] sm:$0xff]
      %v7819 = vld [vmem:[%s2466 + $0x62] sm:$0xff]
      %v7820 = vld [vmem:[%s2466 + $0x6a] sm:$0xff]
      %v7821 = vld [vmem:[%s2466 + $0x7a] sm:$0xff]
      %v7822 = vld [vmem:[%s2466 + $0x82] sm:$0xff]
      %v7823 = vld [vmem:[%s2466 + $0x92] sm:$0xff]
      %v7824 = vld [vmem:[%s2466 + $0x9a] sm:$0xff]
      %v7825 = vld [vmem:[%s2466 + $0xaa] sm:$0xff]
      %v7826 = vld [vmem:[%s2466 + $0xb2] sm:$0xff]
      %v7827 = vld [vmem:[%s2466 + $0xc2] sm:$0xff]
      %v7828 = vld [vmem:[%s2466 + $0xca] sm:$0xff]
      %v7829 = vld [vmem:[%s2466 + $0xda] sm:$0xff]
      %v7830 = vld [vmem:[%s2466 + $0xe2] sm:$0xff]
      %v7831 = vld [vmem:[%s2466 + $0xf2] sm:$0xff]
      %v7832 = vld [vmem:[%s2466 + $0xfa] sm:$0xff]
      %v7833 = vld [vmem:[%s2466 + $0x10a] sm:$0xff]
      %v7834 = vld [vmem:[%s2466 + $0x112] sm:$0xff]
      %v7835 = vld [vmem:[%s2466 + $0x122] sm:$0xff]
      %v7836 = vld [vmem:[%s2466 + $0x12a] sm:$0xff]
      %v7837 = vld [vmem:[%s2466 + $0x13a] sm:$0xff]
      %v7838 = vld [vmem:[%s2466 + $0x142] sm:$0xff]
      %v7839 = vld [vmem:[%s2466 + $0x152] sm:$0xff]
      %v7840 = vld [vmem:[%s2466 + $0x15a] sm:$0xff]
      %v7841 = vld [vmem:[%s2466 + $0x16a] sm:$0xff]
      %v7842 = vld [vmem:[%s2466 + $0x172] sm:$0xff]
      %7875 = vrot.lane.b32.xlu0 %v7811, 96
      %v7876 = vpop.permute.xlu0 %7875
      %7877 = vrot.lane.b32.xlu0 %v7812, 96
      %v7878 = vpop.permute.xlu0 %7877
      %7879 = vrot.lane.b32.xlu0 %v7813, 96
      %v7880 = vpop.permute.xlu0 %7879
      %7881 = vrot.lane.b32.xlu0 %v7814, 96
      %v7882 = vpop.permute.xlu0 %7881
      %7883 = vrot.lane.b32.xlu0 %v7815, 96
      %v7884 = vpop.permute.xlu0 %7883
      %7885 = vrot.lane.b32.xlu0 %v7816, 96
      %v7886 = vpop.permute.xlu0 %7885
      %7887 = vrot.lane.b32.xlu0 %v7817, 96
      %v7888 = vpop.permute.xlu0 %7887
      %7889 = vrot.lane.b32.xlu0 %v7818, 96
      %v7890 = vpop.permute.xlu0 %7889
      %7891 = vrot.lane.b32.xlu0 %v7819, 96
      %v7892 = vpop.permute.xlu0 %7891
      %7893 = vrot.lane.b32.xlu0 %v7820, 96
      %v7894 = vpop.permute.xlu0 %7893
      %7895 = vrot.lane.b32.xlu0 %v7821, 96
      %v7896 = vpop.permute.xlu0 %7895
      %7897 = vrot.lane.b32.xlu0 %v7822, 96
      %v7898 = vpop.permute.xlu0 %7897
      %7899 = vrot.lane.b32.xlu0 %v7823, 96
      %v7900 = vpop.permute.xlu0 %7899
      %7901 = vrot.lane.b32.xlu0 %v7824, 96
      %v7902 = vpop.permute.xlu0 %7901
      %7903 = vrot.lane.b32.xlu0 %v7825, 96
      %v7904 = vpop.permute.xlu0 %7903
      %7905 = vrot.lane.b32.xlu0 %v7826, 96
      %v7906 = vpop.permute.xlu0 %7905
      %7907 = vrot.lane.b32.xlu0 %v7827, 96
      %v7908 = vpop.permute.xlu0 %7907
      %7909 = vrot.lane.b32.xlu0 %v7828, 96
      %v7910 = vpop.permute.xlu0 %7909
      %7911 = vrot.lane.b32.xlu0 %v7829, 96
      %v7912 = vpop.permute.xlu0 %7911
      %7913 = vrot.lane.b32.xlu0 %v7830, 96
      %v7914 = vpop.permute.xlu0 %7913
      %7915 = vrot.lane.b32.xlu0 %v7831, 96
      %v7916 = vpop.permute.xlu0 %7915
      %7917 = vrot.lane.b32.xlu0 %v7832, 96
      %v7918 = vpop.permute.xlu0 %7917
      %7919 = vrot.lane.b32.xlu0 %v7833, 96
      %v7920 = vpop.permute.xlu0 %7919
      %7921 = vrot.lane.b32.xlu0 %v7834, 96
      %v7922 = vpop.permute.xlu0 %7921
      %7923 = vrot.lane.b32.xlu0 %v7835, 96
      %v7924 = vpop.permute.xlu0 %7923
      %7925 = vrot.lane.b32.xlu0 %v7836, 96
      %v7926 = vpop.permute.xlu0 %7925
      %7927 = vrot.lane.b32.xlu0 %v7837, 96
      %v7928 = vpop.permute.xlu0 %7927
      %7929 = vrot.lane.b32.xlu0 %v7838, 96
      %v7930 = vpop.permute.xlu0 %7929
      %7931 = vrot.lane.b32.xlu0 %v7839, 96
      %v7932 = vpop.permute.xlu0 %7931
      %7933 = vrot.lane.b32.xlu0 %v7840, 96
      %v7934 = vpop.permute.xlu0 %7933
      %7935 = vrot.lane.b32.xlu0 %v7841, 96
      %v7936 = vpop.permute.xlu0 %7935
      %7937 = vrot.lane.b32.xlu0 %v7842, 96
      %v7938 = vpop.permute.xlu0 %7937
      %v7971 = vadd.f32 %v7779, %v7876
      %v7972 = vadd.f32 %v7780, %v7878
      %v7973 = vadd.f32 %v7781, %v7880
      %v7974 = vadd.f32 %v7782, %v7882
      %v7975 = vadd.f32 %v7783, %v7884
      %v7976 = vadd.f32 %v7784, %v7886
      %v7977 = vadd.f32 %v7785, %v7888
      %v7978 = vadd.f32 %v7786, %v7890
      %v7979 = vadd.f32 %v7787, %v7892
      %v7980 = vadd.f32 %v7788, %v7894
      %v7981 = vadd.f32 %v7789, %v7896
      %v7982 = vadd.f32 %v7790, %v7898
      %v7983 = vadd.f32 %v7791, %v7900
      %v7984 = vadd.f32 %v7792, %v7902
      %v7985 = vadd.f32 %v7793, %v7904
      %v7986 = vadd.f32 %v7794, %v7906
      %v7987 = vadd.f32 %v7795, %v7908
      %v7988 = vadd.f32 %v7796, %v7910
      %v7989 = vadd.f32 %v7797, %v7912
      %v7990 = vadd.f32 %v7798, %v7914
      %v7991 = vadd.f32 %v7799, %v7916
      %v7992 = vadd.f32 %v7800, %v7918
      %v7993 = vadd.f32 %v7801, %v7920
      %v7994 = vadd.f32 %v7802, %v7922
      %v7995 = vadd.f32 %v7803, %v7924
      %v7996 = vadd.f32 %v7804, %v7926
      %v7997 = vadd.f32 %v7805, %v7928
      %v7998 = vadd.f32 %v7806, %v7930
      %v7999 = vadd.f32 %v7807, %v7932
      %v8000 = vadd.f32 %v7808, %v7934
      %v8001 = vadd.f32 %v7809, %v7936
      %v8002 = vadd.f32 %v7810, %v7938
      %8035 = vrot.lane.b32.xlu0 %v7971, 12
      %v8036 = vpop.permute.xlu0 %8035
      %8037 = vrot.lane.b32.xlu0 %v7972, 12
      %v8038 = vpop.permute.xlu0 %8037
      %8039 = vrot.lane.b32.xlu0 %v7973, 12
      %v8040 = vpop.permute.xlu0 %8039
      %8041 = vrot.lane.b32.xlu0 %v7974, 12
      %v8042 = vpop.permute.xlu0 %8041
      %8043 = vrot.lane.b32.xlu0 %v7975, 12
      %v8044 = vpop.permute.xlu0 %8043
      %8045 = vrot.lane.b32.xlu0 %v7976, 12
      %v8046 = vpop.permute.xlu0 %8045
      %8047 = vrot.lane.b32.xlu0 %v7977, 12
      %v8048 = vpop.permute.xlu0 %8047
      %8049 = vrot.lane.b32.xlu0 %v7978, 12
      %v8050 = vpop.permute.xlu0 %8049
      %8051 = vrot.lane.b32.xlu0 %v7979, 12
      %v8052 = vpop.permute.xlu0 %8051
      %8053 = vrot.lane.b32.xlu0 %v7980, 12
      %v8054 = vpop.permute.xlu0 %8053
      %8055 = vrot.lane.b32.xlu0 %v7981, 12
      %v8056 = vpop.permute.xlu0 %8055
      %8057 = vrot.lane.b32.xlu0 %v7982, 12
      %v8058 = vpop.permute.xlu0 %8057
      %8059 = vrot.lane.b32.xlu0 %v7983, 12
      %v8060 = vpop.permute.xlu0 %8059
      %8061 = vrot.lane.b32.xlu0 %v7984, 12
      %v8062 = vpop.permute.xlu0 %8061
      %8063 = vrot.lane.b32.xlu0 %v7985, 12
      %v8064 = vpop.permute.xlu0 %8063
      %8065 = vrot.lane.b32.xlu0 %v7986, 12
      %v8066 = vpop.permute.xlu0 %8065
      %8067 = vrot.lane.b32.xlu0 %v7987, 12
      %v8068 = vpop.permute.xlu0 %8067
      %8069 = vrot.lane.b32.xlu0 %v7988, 12
      %v8070 = vpop.permute.xlu0 %8069
      %8071 = vrot.lane.b32.xlu0 %v7989, 12
      %v8072 = vpop.permute.xlu0 %8071
      %8073 = vrot.lane.b32.xlu0 %v7990, 12
      %v8074 = vpop.permute.xlu0 %8073
      %8075 = vrot.lane.b32.xlu0 %v7991, 12
      %v8076 = vpop.permute.xlu0 %8075
      %8077 = vrot.lane.b32.xlu0 %v7992, 12
      %v8078 = vpop.permute.xlu0 %8077
      %8079 = vrot.lane.b32.xlu0 %v7993, 12
      %v8080 = vpop.permute.xlu0 %8079
      %8081 = vrot.lane.b32.xlu0 %v7994, 12
      %v8082 = vpop.permute.xlu0 %8081
      %8083 = vrot.lane.b32.xlu0 %v7995, 12
      %v8084 = vpop.permute.xlu0 %8083
      %8085 = vrot.lane.b32.xlu0 %v7996, 12
      %v8086 = vpop.permute.xlu0 %8085
      %8087 = vrot.lane.b32.xlu0 %v7997, 12
      %v8088 = vpop.permute.xlu0 %8087
      %8089 = vrot.lane.b32.xlu0 %v7998, 12
      %v8090 = vpop.permute.xlu0 %8089
      %8091 = vrot.lane.b32.xlu0 %v7999, 12
      %v8092 = vpop.permute.xlu0 %8091
      %8093 = vrot.lane.b32.xlu0 %v8000, 12
      %v8094 = vpop.permute.xlu0 %8093
      %8095 = vrot.lane.b32.xlu0 %v8001, 12
      %v8096 = vpop.permute.xlu0 %8095
      %8097 = vrot.lane.b32.xlu0 %v8002, 12
      %v8098 = vpop.permute.xlu0 %8097
      %vm8131 = vcmask 130144
      %8132 = vst.msk [vmem:[%s602] sm:$0xff] %vm8131, %v8036
      %8133 = vst.msk [vmem:[%s602 + $0x8] sm:$0xff] %vm8131, %v8038
      %8134 = vst.msk [vmem:[%s602 + $0x10] sm:$0xff] %vm8131, %v8040
      %8135 = vst.msk [vmem:[%s602 + $0x18] sm:$0xff] %vm8131, %v8042
      %8136 = vst.msk [vmem:[%s602 + $0x20] sm:$0xff] %vm8131, %v8044
      %8137 = vst.msk [vmem:[%s602 + $0x28] sm:$0xff] %vm8131, %v8046
      %8138 = vst.msk [vmem:[%s602 + $0x30] sm:$0xff] %vm8131, %v8048
      %8139 = vst.msk [vmem:[%s602 + $0x38] sm:$0xff] %vm8131, %v8050
      %8140 = vst.msk [vmem:[%s602 + $0x40] sm:$0xff] %vm8131, %v8052
      %8141 = vst.msk [vmem:[%s602 + $0x48] sm:$0xff] %vm8131, %v8054
      %8142 = vst.msk [vmem:[%s602 + $0x50] sm:$0xff] %vm8131, %v8056
      %8143 = vst.msk [vmem:[%s602 + $0x58] sm:$0xff] %vm8131, %v8058
      %8144 = vst.msk [vmem:[%s602 + $0x60] sm:$0xff] %vm8131, %v8060
      %8145 = vst.msk [vmem:[%s602 + $0x68] sm:$0xff] %vm8131, %v8062
      %8146 = vst.msk [vmem:[%s602 + $0x70] sm:$0xff] %vm8131, %v8064
      %8147 = vst.msk [vmem:[%s602 + $0x78] sm:$0xff] %vm8131, %v8066
      %8148 = vst.msk [vmem:[%s602 + $0x80] sm:$0xff] %vm8131, %v8068
      %8149 = vst.msk [vmem:[%s602 + $0x88] sm:$0xff] %vm8131, %v8070
      %8150 = vst.msk [vmem:[%s602 + $0x90] sm:$0xff] %vm8131, %v8072
      %8151 = vst.msk [vmem:[%s602 + $0x98] sm:$0xff] %vm8131, %v8074
      %8152 = vst.msk [vmem:[%s602 + $0xa0] sm:$0xff] %vm8131, %v8076
      %8153 = vst.msk [vmem:[%s602 + $0xa8] sm:$0xff] %vm8131, %v8078
      %8154 = vst.msk [vmem:[%s602 + $0xb0] sm:$0xff] %vm8131, %v8080
      %8155 = vst.msk [vmem:[%s602 + $0xb8] sm:$0xff] %vm8131, %v8082
      %8156 = vst.msk [vmem:[%s602 + $0xc0] sm:$0xff] %vm8131, %v8084
      %8157 = vst.msk [vmem:[%s602 + $0xc8] sm:$0xff] %vm8131, %v8086
      %8158 = vst.msk [vmem:[%s602 + $0xd0] sm:$0xff] %vm8131, %v8088
      %8159 = vst.msk [vmem:[%s602 + $0xd8] sm:$0xff] %vm8131, %v8090
      %8160 = vst.msk [vmem:[%s602 + $0xe0] sm:$0xff] %vm8131, %v8092
      %8161 = vst.msk [vmem:[%s602 + $0xe8] sm:$0xff] %vm8131, %v8094
      %8162 = vst.msk [vmem:[%s602 + $0xf0] sm:$0xff] %vm8131, %v8096
      %8163 = vst.msk [vmem:[%s602 + $0xf8] sm:$0xff] %vm8131, %v8098
      %p8164 = scmp.lt.s32.totalorder %s30, 1
      %s8165 = scalar_select %p8164, %s30, 1
      %s8166 = smul.addr %s8165, 32
      %s8167 = smul.addr %s8166, 8
      %s8168 = scalar_lea.vmem %s19, %s8167
      // Predicated region
      $region97: #{dense_block_pallas.1} parent=95 // pred_check
        %p8169 = pneg %p452
      $region98: #{dense_block_pallas.1} parent=95 // pred_check_branch
        %8171 = sbr.rel (%p8169) target = $region100
      $region99: #{dense_block_pallas.1} parent=95 // pred_region
        _
      $region100: #{dense_block_pallas.1} parent=95 // pred_fallthru
        _
    $region96: #{dense_block_pallas.1} parent=5 // pred_fallthru
      _
    %p8172 = scmp.le.s32.totalorder 2, %s25
    // Predicated region
    $region101: #{dense_block_pallas.1} parent=5 // pred_check
      %p8173 = pneg %p8172
    $region102: #{dense_block_pallas.1} parent=5 // pred_check_branch
      %8175 = sbr.rel (%p8173) target = $region104
    $region103: #{dense_block_pallas.1} parent=5 // pred_region
      %s8176 = ssub.s32 %s25, 2
      // Predicated region
      $region105: #{dense_block_pallas.1} parent=103 // pred_check
        %p8177 = pneg %p458
      $region106: #{dense_block_pallas.1} parent=103 // pred_check_branch
        %8179 = sbr.rel (%p8177) target = $region108
      $region107: #{dense_block_pallas.1} parent=103 // pred_region
        %p8180 = scmp.lt.s32.totalorder %s31, 1
        %s8181 = scalar_select %p8180, %s31, 1
        %s8182 = smul.addr %s8181, 32
        %s8183 = smul.addr %s8182, 8
        %s8184 = scalar_lea.vmem %s19, %s8183
      $region108: #{dense_block_pallas.1} parent=103 // pred_fallthru
        _
    $region104: #{dense_block_pallas.1} parent=5 // pred_fallthru
      _
  $region6: #{dense_block_pallas.1} parent=0 // loop_footer
    %s29 = sadd.s32 1, %s25
  $region7: #{dense_block_pallas.1} parent=0 // loop_footer_branch
    %24 = sbr.rel target = $region3
  $region8: #{dense_block_pallas.1} parent=0 // loop_exit
    _

</llo_original>
